<compile_context>
chip_gen: v6e
topology: v6e:2x2x1
jax: 0.10.0
libtpu: 0.0.40
codegen_flags: <defaults>
</compile_context>

<pallas_src>
import jax
import jax.numpy as jnp
from jax.experimental import pallas as pl
from jax.experimental.pallas import tpu as pltpu

# ----------------------------- config ---------------------------------------
VOCAB = 128
HIDDEN = 32
N_LAYERS = 2
N_HEADS = 4
HEAD_DIM = HIDDEN // N_HEADS
FFN = 64
MAX_POS = 32
TYPE_VOCAB = 2
LN_EPS = 1e-12
BATCH = 2
SEQ = 8

# Row indices inside the packed (NUM_VEC, 1, HIDDEN) small-vector slab.
VEC_EMB_LN_G = 0
VEC_EMB_LN_B = 1
VEC_TYPE0 = 2          # token-type embedding row 0 (token_type_ids assumed all zero)
VEC_MLM_B = 3
VEC_MLM_LN_G = 4
VEC_MLM_LN_B = 5
VEC_LAYER_BASE = 6
VEC_PER_LAYER = 6      # per-layer rows: o_b, ln1_g, ln1_b, fc2_b, ln2_g, ln2_b
VEC_O_B, VEC_LN1_G, VEC_LN1_B, VEC_FC2_B, VEC_LN2_G, VEC_LN2_B = range(6)
NUM_VEC = VEC_LAYER_BASE + VEC_PER_LAYER * N_LAYERS


def _spec(shape):
    nd = len(shape)
    return pl.BlockSpec(shape, lambda i, _nd=nd: (0,) * _nd)


def _qkv_idx(l, t, hh):      # flattened leading index into the per-head QKV slabs
    return (l * 3 + t) * N_HEADS + hh


# --------------------------- in-kernel helpers -------------------------------
def _gelu(x):
    # TODO(synk): torch/HF BERT default gelu is the exact erf form; tanh approx here (~1e-3).
    return 0.5 * x * (1.0 + jnp.tanh(0.7978845608028654 * (x + 0.044715 * x * x * x)))


def _layernorm(x, g, b, eps=LN_EPS):
    mu = jnp.mean(x, axis=-1, keepdims=True)
    xc = x - mu
    var = jnp.mean(xc * xc, axis=-1, keepdims=True)
    return xc * jax.lax.rsqrt(var + eps) * g + b


# ----------------------------- fused kernel ----------------------------------
def _bert_fused_kernel(
    ids_ref, labels_ref, emb_ref,
    qkv_w_ref, qkv_b_ref, o_w_ref, fc1_w_ref, fc2_w_ref, mlm_w_ref,
    vec_ref, wide_ref,
    loss_ref,
):
    f32 = jnp.float32
    M = BATCH * SEQ

    def vec(i):                       # (1, HIDDEN) row of the packed small-vector slab
        return vec_ref[i]

    word = emb_ref[0:VOCAB, :]                    # (V, H) token embedding / tied decoder
    pos = emb_ref[VOCAB:VOCAB + SEQ, :]           # (S, H)

    # ---- embeddings: token gather via one-hot matmul, broadcast pos/type add ----
    ids = ids_ref[...]                            # (M, 1) int32
    vocab_iota = jax.lax.broadcasted_iota(jnp.int32, (M, VOCAB), 1)
    tok = jnp.dot((vocab_iota == ids).astype(f32), word, preferred_element_type=f32)
    emb = (tok.reshape(BATCH, SEQ, HIDDEN) + pos + vec(VEC_TYPE0)).reshape(M, HIDDEN)
    h = _layernorm(emb, vec(VEC_EMB_LN_G), vec(VEC_EMB_LN_B))

    scale = 1.0 / (HEAD_DIM ** 0.5)

    # ---- transformer encoder layers (fully unrolled, VMEM-resident) ----
    # TODO(synk): no attention_mask is applied (reference forward passes none here).
    for l in range(N_LAYERS):
        base = VEC_LAYER_BASE + VEC_PER_LAYER * l

        # Self-attention. Per-head weights are pre-split (leading-axis loads only);
        # merge-heads is fused into the output projection as a per-head accumulate.
        acc = h + vec(base + VEC_O_B)             # residual + o-projection bias
        for hh in range(N_HEADS):
            wq = qkv_w_ref[_qkv_idx(l, 0, hh)]    # (H, HD)
            wk = qkv_w_ref[_qkv_idx(l, 1, hh)]
            wv = qkv_w_ref[_qkv_idx(l, 2, hh)]
            bq = qkv_b_ref[_qkv_idx(l, 0, hh)]    # (1, HD)
            bk = qkv_b_ref[_qkv_idx(l, 1, hh)]
            bv = qkv_b_ref[_qkv_idx(l, 2, hh)]

            qh = (jnp.dot(h, wq, preferred_element_type=f32) + bq).reshape(
                BATCH, SEQ, HEAD_DIM)
            kh = (jnp.dot(h, wk, preferred_element_type=f32) + bk).reshape(
                BATCH, SEQ, HEAD_DIM)
            vh = (jnp.dot(h, wv, preferred_element_type=f32) + bv).reshape(
                BATCH, SEQ, HEAD_DIM)

            s = jnp.einsum('bqd,bkd->bqk', qh, kh,
                           preferred_element_type=f32) * scale
            s = s - jnp.max(s, axis=-1, keepdims=True)
            p = jnp.exp(s)
            p = p * pl.reciprocal(jnp.sum(p, axis=-1, keepdims=True), approx=True)
            ctx = jnp.einsum('bqk,bkd->bqd', p, vh, preferred_element_type=f32)

            acc = acc + jnp.dot(ctx.reshape(M, HEAD_DIM),
                                o_w_ref[l * N_HEADS + hh],
                                preferred_element_type=f32)
        h = _layernorm(acc, vec(base + VEC_LN1_G), vec(base + VEC_LN1_B))

        # Feed-forward.
        fc1_b = wide_ref[1 + l][:, 0:FFN]         # (1, FFN) from packed wide slab
        ffn = _gelu(jnp.dot(h, fc1_w_ref[l], preferred_element_type=f32) + fc1_b)
        ffn = jnp.dot(ffn, fc2_w_ref[l], preferred_element_type=f32) + vec(base + VEC_FC2_B)
        h = _layernorm(ffn + h, vec(base + VEC_LN2_G), vec(base + VEC_LN2_B))

    # NOTE: pooler dense is computed-but-unused in PretrainedBert.forward -> skipped.
    # TODO(synk): torch train-mode dropout RNG cannot be reproduced; eval semantics (identity).

    # ---- MLM head: transform + tied decoder (contract hidden dim, no .T copy) ----
    t = _gelu(jnp.dot(h, mlm_w_ref[...], preferred_element_type=f32) + vec(VEC_MLM_B))
    t = _layernorm(t, vec(VEC_MLM_LN_G), vec(VEC_MLM_LN_B))
    dec_b = wide_ref[0]                           # (1, VOCAB)
    logits = jax.lax.dot_general(t, word, (((1,), (1,)), ((), ())),
                                 preferred_element_type=f32) + dec_b
    # logits stay internal: the module wrapper never returns them, so no HBM writeback.

    # ---- CE loss (ignore_index = -1) -> per-sample mean -> batch mean ----
    labels = labels_ref[...]                      # (M, 1) int32
    mx = jnp.max(logits, axis=-1, keepdims=True)
    lse = jnp.log(jnp.sum(jnp.exp(logits - mx), axis=-1, keepdims=True)) + mx
    gold = jnp.sum(jnp.where(vocab_iota == labels, logits, 0.0),
                   axis=-1, keepdims=True)
    tok_loss = jnp.where(labels >= 0, lse - gold, 0.0)
    # TODO(synk): per-sample mean is over all seq positions (ignored positions contribute
    # 0); torch CrossEntropyLoss(ignore_index=-1, reduction='mean') normalizes by the
    # count of non-ignored tokens.
    loss_ref[...] = jnp.sum(tok_loss, axis=0, keepdims=True) * (1.0 / M)


# --------------------------- parameters -------------------------------------
def init_params(key):
    keys = iter(jax.random.split(key, 16))

    def nrm(shape, std=0.02):
        return (std * jax.random.normal(next(keys), shape)).astype(jnp.float32)

    zeros = lambda s: jnp.zeros(s, jnp.float32)
    ones = lambda s: jnp.ones(s, jnp.float32)

    word = nrm((VOCAB, HIDDEN))
    pos = nrm((MAX_POS, HIDDEN))
    typ = nrm((TYPE_VOCAB, HIDDEN))

    # Packed small (1, H) vectors: global rows then 6 rows per layer.
    rows = [ones((1, HIDDEN)), zeros((1, HIDDEN)), typ[0:1, :],      # emb LN g/b, type0
            zeros((1, HIDDEN)), ones((1, HIDDEN)), zeros((1, HIDDEN))]  # mlm b, mlm LN g/b
    for _ in range(N_LAYERS):
        rows += [zeros((1, HIDDEN)),                     # o_b
                 ones((1, HIDDEN)), zeros((1, HIDDEN)),  # ln1 g/b
                 zeros((1, HIDDEN)),                     # fc2_b
                 ones((1, HIDDEN)), zeros((1, HIDDEN))]  # ln2 g/b
    vec_h = jnp.stack(rows, axis=0)                      # (NUM_VEC, 1, H)
    assert vec_h.shape[0] == NUM_VEC

    # VOCAB-wide slab: row 0 = tied-decoder bias, row 1+l = fc1 bias (lanes [0:FFN]).
    wide_vec = jnp.stack([zeros((1, VOCAB))] * (1 + N_LAYERS), axis=0)

    return {
        "emb": jnp.concatenate([word, pos], axis=0),     # (VOCAB + MAX_POS, H)
        # Q/K/V and output-projection weights pre-split per head (leading-axis index).
        "qkv_w": nrm((N_LAYERS * 3 * N_HEADS, HIDDEN, HEAD_DIM)),
        "qkv_b": zeros((N_LAYERS * 3 * N_HEADS, 1, HEAD_DIM)),
        "o_w": nrm((N_LAYERS * N_HEADS, HEAD_DIM, HIDDEN)),
        "fc1_w": nrm((N_LAYERS, HIDDEN, FFN)),
        "fc2_w": nrm((N_LAYERS, FFN, HIDDEN)),
        "mlm_w": nrm((HIDDEN, HIDDEN)),
        "vec_h": vec_h,
        "wide_vec": wide_vec,
    }


# ----------------------------- forward --------------------------------------
@jax.jit
def pretrained_bert_forward(params, input_ids, masked_lm_labels):
    B, S = input_ids.shape
    ids = input_ids.reshape(B * S, 1).astype(jnp.int32)
    labels = masked_lm_labels.reshape(B * S, 1).astype(jnp.int32)

    in_arrays = [
        ids, labels, params["emb"],
        params["qkv_w"], params["qkv_b"], params["o_w"],
        params["fc1_w"], params["fc2_w"], params["mlm_w"],
        params["vec_h"], params["wide_vec"],
    ]

    loss_out = pl.pallas_call(
        _bert_fused_kernel,
        grid=(1,),
        in_specs=[_spec(a.shape) for a in in_arrays],
        out_specs=_spec((1, 1)),
        out_shape=jax.ShapeDtypeStruct((1, 1), jnp.float32),
        compiler_params=pltpu.CompilerParams(dimension_semantics=("arbitrary",)),
        cost_estimate=pl.CostEstimate(flops=900_000, transcendentals=5_000,
                                      bytes_accessed=80_000),
    )(*in_arrays)

    loss = loss_out[0, 0]
    predicts = {}
    metrics = {"loss": loss}
    return predicts, loss, metrics


# ------------------------------ main -----------------------------------------
if __name__ == "__main__":
    root = jax.random.PRNGKey(0)
    k_param, k_ids, k_mask, k_lbl = jax.random.split(root, 4)

    params = init_params(k_param)

    input_ids = jax.random.randint(k_ids, (BATCH, SEQ), 0, VOCAB, dtype=jnp.int32)
    mask = jax.random.bernoulli(k_mask, 0.3, (BATCH, SEQ))
    rand_labels = jax.random.randint(k_lbl, (BATCH, SEQ), 0, VOCAB, dtype=jnp.int32)
    masked_lm_labels = jnp.where(mask, rand_labels, jnp.full_like(rand_labels, -1))

    predicts, loss, metrics = pretrained_bert_forward(params, input_ids, masked_lm_labels)
    loss = jax.block_until_ready(loss)
    jax.block_until_ready(metrics["loss"])

    assert jnp.isfinite(loss)
    print("KERNEL_OK")
</pallas_src>

<mosaic_0001>
module attributes {stable_mosaic.version = 11 : i64} {
  func.func @_bert_fused_kernel(%arg0: i32, %arg1: memref<16x1xi32, #tpu.memory_space<vmem>>, %arg2: memref<16x1xi32, #tpu.memory_space<vmem>>, %arg3: memref<160x32xf32, #tpu.memory_space<vmem>>, %arg4: memref<24x32x8xf32, #tpu.memory_space<vmem>>, %arg5: memref<24x1x8xf32, #tpu.memory_space<vmem>>, %arg6: memref<8x8x32xf32, #tpu.memory_space<vmem>>, %arg7: memref<2x32x64xf32, #tpu.memory_space<vmem>>, %arg8: memref<2x64x32xf32, #tpu.memory_space<vmem>>, %arg9: memref<32x32xf32, #tpu.memory_space<vmem>>, %arg10: memref<18x1x32xf32, #tpu.memory_space<vmem>>, %arg11: memref<3x1x128xf32, #tpu.memory_space<vmem>>, %arg12: memref<1x1xf32, #tpu.memory_space<vmem>>) attributes {dimension_semantics = [#tpu.dimension_semantics<arbitrary>], iteration_bounds = array<i64: 1>, scalar_prefetch = 0 : i64, scratch_operands = 0 : i64, tpu.core_type = #tpu.core_type<tc>, window_params = [{pipeline_mode = #tpu.pipeline_mode<synchronous>, transform_indices = @transform_0, window_bounds = array<i64: 16, 1>}, {pipeline_mode = #tpu.pipeline_mode<synchronous>, transform_indices = @transform_1, window_bounds = array<i64: 16, 1>}, {pipeline_mode = #tpu.pipeline_mode<synchronous>, transform_indices = @transform_2, window_bounds = array<i64: 160, 32>}, {pipeline_mode = #tpu.pipeline_mode<synchronous>, transform_indices = @transform_3, window_bounds = array<i64: 24, 32, 8>}, {pipeline_mode = #tpu.pipeline_mode<synchronous>, transform_indices = @transform_4, window_bounds = array<i64: 24, 1, 8>}, {pipeline_mode = #tpu.pipeline_mode<synchronous>, transform_indices = @transform_5, window_bounds = array<i64: 8, 8, 32>}, {pipeline_mode = #tpu.pipeline_mode<synchronous>, transform_indices = @transform_6, window_bounds = array<i64: 2, 32, 64>}, {pipeline_mode = #tpu.pipeline_mode<synchronous>, transform_indices = @transform_7, window_bounds = array<i64: 2, 64, 32>}, {pipeline_mode = #tpu.pipeline_mode<synchronous>, transform_indices = @transform_8, window_bounds = array<i64: 32, 32>}, {pipeline_mode = #tpu.pipeline_mode<synchronous>, transform_indices = @transform_9, window_bounds = array<i64: 18, 1, 32>}, {pipeline_mode = #tpu.pipeline_mode<synchronous>, transform_indices = @transform_10, window_bounds = array<i64: 3, 1, 128>}, {pipeline_mode = #tpu.pipeline_mode<synchronous>, transform_indices = @transform_11, window_bounds = array<i64: 1, 1>}]} {
    %c0 = arith.constant 0 : index
    %c0_0 = arith.constant 0 : index
    %0 = vector.load %arg3[%c0, %c0_0] : memref<160x32xf32, #tpu.memory_space<vmem>>, vector<128x32xf32>
    %c128 = arith.constant 128 : index
    %c0_1 = arith.constant 0 : index
    %1 = vector.load %arg3[%c128, %c0_1] : memref<160x32xf32, #tpu.memory_space<vmem>>, vector<8x32xf32>
    %c0_2 = arith.constant 0 : index
    %c0_3 = arith.constant 0 : index
    %2 = vector.load %arg1[%c0_2, %c0_3] : memref<16x1xi32, #tpu.memory_space<vmem>>, vector<16x1xi32>
    %3 = tpu.iota {dimensions = array<i32: 1>} : vector<16x128xi32>
    %4 = vector.broadcast %2 : vector<16x1xi32> to vector<16x128xi32>
    %5 = arith.cmpi eq, %3, %4 : vector<16x128xi32>
    %6 = arith.extui %5 : vector<16x128xi1> to vector<16x128xi32>
    %7 = arith.sitofp %6 : vector<16x128xi32> to vector<16x128xf32>
    %cst = arith.constant dense<0.000000e+00> : vector<16x32xf32>
    %8 = tpu.matmul %7, %0, %cst {dimension_numbers = #tpu.dot_dimension_numbers<[1], [0], [0], [1], [0, 0, 1, 1], [], []>} : vector<16x128xf32>, vector<128x32xf32>, vector<16x32xf32> -> vector<16x32xf32>
    %9 = vector.shape_cast %8 : vector<16x32xf32> to vector<2x8x32xf32>
    %10 = vector.shape_cast %1 : vector<8x32xf32> to vector<1x8x32xf32>
    %11 = vector.broadcast %10 : vector<1x8x32xf32> to vector<2x8x32xf32>
    %12 = arith.addf %9, %11 : vector<2x8x32xf32>
    %c2 = arith.constant 2 : index
    %c0_4 = arith.constant 0 : index
    %c0_5 = arith.constant 0 : index
    %13 = vector.load %arg10[%c2, %c0_4, %c0_5] : memref<18x1x32xf32, #tpu.memory_space<vmem>>, vector<1x1x32xf32>
    %14 = vector.shape_cast %13 : vector<1x1x32xf32> to vector<1x32xf32>
    %15 = vector.shape_cast %14 : vector<1x32xf32> to vector<1x1x32xf32>
    %16 = vector.broadcast %15 : vector<1x1x32xf32> to vector<2x8x32xf32>
    %17 = arith.addf %12, %16 : vector<2x8x32xf32>
    %18 = vector.shape_cast %17 : vector<2x8x32xf32> to vector<16x32xf32>
    %c0_6 = arith.constant 0 : index
    %c0_7 = arith.constant 0 : index
    %c0_8 = arith.constant 0 : index
    %19 = vector.load %arg10[%c0_6, %c0_7, %c0_8] : memref<18x1x32xf32, #tpu.memory_space<vmem>>, vector<1x1x32xf32>
    %20 = vector.shape_cast %19 : vector<1x1x32xf32> to vector<1x32xf32>
    %c1 = arith.constant 1 : index
    %c0_9 = arith.constant 0 : index
    %c0_10 = arith.constant 0 : index
    %21 = vector.load %arg10[%c1, %c0_9, %c0_10] : memref<18x1x32xf32, #tpu.memory_space<vmem>>, vector<1x1x32xf32>
    %22 = vector.shape_cast %21 : vector<1x1x32xf32> to vector<1x32xf32>
    %cst_11 = arith.constant dense<0.000000e+00> : vector<16xf32>
    %23 = vector.multi_reduction <add>, %18, %cst_11 [1] : vector<16x32xf32> to vector<16xf32>
    %24 = vector.shape_cast %23 : vector<16xf32> to vector<16x1xf32>
    %cst_12 = arith.constant 3.200000e+01 : f32
    %25 = vector.broadcast %cst_12 : f32 to vector<16x1xf32>
    %26 = arith.divf %24, %25 : vector<16x1xf32>
    %27 = vector.broadcast %26 : vector<16x1xf32> to vector<16x32xf32>
    %28 = arith.subf %18, %27 : vector<16x32xf32>
    %29 = arith.mulf %28, %28 : vector<16x32xf32>
    %cst_13 = arith.constant dense<0.000000e+00> : vector<16xf32>
    %30 = vector.multi_reduction <add>, %29, %cst_13 [1] : vector<16x32xf32> to vector<16xf32>
    %31 = vector.shape_cast %30 : vector<16xf32> to vector<16x1xf32>
    %cst_14 = arith.constant 3.200000e+01 : f32
    %32 = vector.broadcast %cst_14 : f32 to vector<16x1xf32>
    %33 = arith.divf %31, %32 : vector<16x1xf32>
    %cst_15 = arith.constant 9.99999996E-13 : f32
    %34 = vector.broadcast %cst_15 : f32 to vector<16x1xf32>
    %35 = arith.addf %33, %34 : vector<16x1xf32>
    %36 = math.rsqrt %35 : vector<16x1xf32>
    %37 = vector.broadcast %36 : vector<16x1xf32> to vector<16x32xf32>
    %38 = arith.mulf %28, %37 : vector<16x32xf32>
    %39 = vector.broadcast %20 : vector<1x32xf32> to vector<16x32xf32>
    %40 = arith.mulf %38, %39 : vector<16x32xf32>
    %41 = vector.broadcast %22 : vector<1x32xf32> to vector<16x32xf32>
    %42 = arith.addf %40, %41 : vector<16x32xf32>
    %c6 = arith.constant 6 : index
    %c0_16 = arith.constant 0 : index
    %c0_17 = arith.constant 0 : index
    %43 = vector.load %arg10[%c6, %c0_16, %c0_17] : memref<18x1x32xf32, #tpu.memory_space<vmem>>, vector<1x1x32xf32>
    %44 = vector.shape_cast %43 : vector<1x1x32xf32> to vector<1x32xf32>
    %45 = vector.broadcast %44 : vector<1x32xf32> to vector<16x32xf32>
    %46 = arith.addf %42, %45 : vector<16x32xf32>
    %c0_18 = arith.constant 0 : index
    %c0_19 = arith.constant 0 : index
    %c0_20 = arith.constant 0 : index
    %47 = vector.load %arg4[%c0_18, %c0_19, %c0_20] : memref<24x32x8xf32, #tpu.memory_space<vmem>>, vector<1x32x8xf32>
    %48 = vector.shape_cast %47 : vector<1x32x8xf32> to vector<32x8xf32>
    %c4 = arith.constant 4 : index
    %c0_21 = arith.constant 0 : index
    %c0_22 = arith.constant 0 : index
    %49 = vector.load %arg4[%c4, %c0_21, %c0_22] : memref<24x32x8xf32, #tpu.memory_space<vmem>>, vector<1x32x8xf32>
    %50 = vector.shape_cast %49 : vector<1x32x8xf32> to vector<32x8xf32>
    %c8 = arith.constant 8 : index
    %c0_23 = arith.constant 0 : index
    %c0_24 = arith.constant 0 : index
    %51 = vector.load %arg4[%c8, %c0_23, %c0_24] : memref<24x32x8xf32, #tpu.memory_space<vmem>>, vector<1x32x8xf32>
    %52 = vector.shape_cast %51 : vector<1x32x8xf32> to vector<32x8xf32>
    %c0_25 = arith.constant 0 : index
    %c0_26 = arith.constant 0 : index
    %c0_27 = arith.constant 0 : index
    %53 = vector.load %arg5[%c0_25, %c0_26, %c0_27] : memref<24x1x8xf32, #tpu.memory_space<vmem>>, vector<1x1x8xf32>
    %54 = vector.shape_cast %53 : vector<1x1x8xf32> to vector<1x8xf32>
    %c4_28 = arith.constant 4 : index
    %c0_29 = arith.constant 0 : index
    %c0_30 = arith.constant 0 : index
    %55 = vector.load %arg5[%c4_28, %c0_29, %c0_30] : memref<24x1x8xf32, #tpu.memory_space<vmem>>, vector<1x1x8xf32>
    %56 = vector.shape_cast %55 : vector<1x1x8xf32> to vector<1x8xf32>
    %c8_31 = arith.constant 8 : index
    %c0_32 = arith.constant 0 : index
    %c0_33 = arith.constant 0 : index
    %57 = vector.load %arg5[%c8_31, %c0_32, %c0_33] : memref<24x1x8xf32, #tpu.memory_space<vmem>>, vector<1x1x8xf32>
    %58 = vector.shape_cast %57 : vector<1x1x8xf32> to vector<1x8xf32>
    %cst_34 = arith.constant dense<0.000000e+00> : vector<16x8xf32>
    %59 = tpu.matmul %42, %48, %cst_34 {dimension_numbers = #tpu.dot_dimension_numbers<[1], [0], [0], [1], [0, 0, 1, 1], [], []>} : vector<16x32xf32>, vector<32x8xf32>, vector<16x8xf32> -> vector<16x8xf32>
    %60 = vector.broadcast %54 : vector<1x8xf32> to vector<16x8xf32>
    %61 = arith.addf %59, %60 : vector<16x8xf32>
    %62 = vector.shape_cast %61 : vector<16x8xf32> to vector<2x8x8xf32>
    %cst_35 = arith.constant dense<0.000000e+00> : vector<16x8xf32>
    %63 = tpu.matmul %42, %50, %cst_35 {dimension_numbers = #tpu.dot_dimension_numbers<[1], [0], [0], [1], [0, 0, 1, 1], [], []>} : vector<16x32xf32>, vector<32x8xf32>, vector<16x8xf32> -> vector<16x8xf32>
    %64 = vector.broadcast %56 : vector<1x8xf32> to vector<16x8xf32>
    %65 = arith.addf %63, %64 : vector<16x8xf32>
    %66 = vector.shape_cast %65 : vector<16x8xf32> to vector<2x8x8xf32>
    %cst_36 = arith.constant dense<0.000000e+00> : vector<16x8xf32>
    %67 = tpu.matmul %42, %52, %cst_36 {dimension_numbers = #tpu.dot_dimension_numbers<[1], [0], [0], [1], [0, 0, 1, 1], [], []>} : vector<16x32xf32>, vector<32x8xf32>, vector<16x8xf32> -> vector<16x8xf32>
    %68 = vector.broadcast %58 : vector<1x8xf32> to vector<16x8xf32>
    %69 = arith.addf %67, %68 : vector<16x8xf32>
    %70 = vector.shape_cast %69 : vector<16x8xf32> to vector<2x8x8xf32>
    "tpu.trace_start"() <{level = 10 : i32, message = "bqd,bkd->bqk"}> : () -> ()
    %cst_37 = arith.constant dense<0.000000e+00> : vector<2x8x8xf32>
    %71 = tpu.matmul %62, %66, %cst_37 {dimension_numbers = #tpu.dot_dimension_numbers<[2], [2], [1], [1], [0, 0, 0, 1, 1, 1], [0], [0]>} : vector<2x8x8xf32>, vector<2x8x8xf32>, vector<2x8x8xf32> -> vector<2x8x8xf32>
    "tpu.trace_stop"() : () -> ()
    %cst_38 = arith.constant 0.353553385 : f32
    %72 = vector.broadcast %cst_38 : f32 to vector<2x8x8xf32>
    %73 = arith.mulf %71, %72 : vector<2x8x8xf32>
    %cst_39 = arith.constant dense<0xFF800000> : vector<2x8xf32>
    %74 = vector.multi_reduction <maximumf>, %73, %cst_39 [2] : vector<2x8x8xf32> to vector<2x8xf32>
    %75 = vector.shape_cast %74 : vector<2x8xf32> to vector<2x8x1xf32>
    %76 = vector.broadcast %75 : vector<2x8x1xf32> to vector<2x8x8xf32>
    %77 = arith.subf %73, %76 : vector<2x8x8xf32>
    %78 = math.exp %77 : vector<2x8x8xf32>
    %cst_40 = arith.constant dense<0.000000e+00> : vector<2x8xf32>
    %79 = vector.multi_reduction <add>, %78, %cst_40 [2] : vector<2x8x8xf32> to vector<2x8xf32>
    %80 = vector.shape_cast %79 : vector<2x8xf32> to vector<2x8x1xf32>
    %81 = tpu.reciprocal %80 {approx = true} : vector<2x8x1xf32> -> vector<2x8x1xf32>
    %82 = vector.broadcast %81 : vector<2x8x1xf32> to vector<2x8x8xf32>
    %83 = arith.mulf %78, %82 : vector<2x8x8xf32>
    "tpu.trace_start"() <{level = 10 : i32, message = "bqk,bkd->bqd"}> : () -> ()
    %cst_41 = arith.constant dense<0.000000e+00> : vector<2x8x8xf32>
    %84 = tpu.matmul %83, %70, %cst_41 {dimension_numbers = #tpu.dot_dimension_numbers<[2], [1], [1], [2], [0, 0, 0, 1, 1, 2], [0], [0]>} : vector<2x8x8xf32>, vector<2x8x8xf32>, vector<2x8x8xf32> -> vector<2x8x8xf32>
    "tpu.trace_stop"() : () -> ()
    %85 = vector.shape_cast %84 : vector<2x8x8xf32> to vector<16x8xf32>
    %c0_42 = arith.constant 0 : index
    %c0_43 = arith.constant 0 : index
    %c0_44 = arith.constant 0 : index
    %86 = vector.load %arg6[%c0_42, %c0_43, %c0_44] : memref<8x8x32xf32, #tpu.memory_space<vmem>>, vector<1x8x32xf32>
    %87 = vector.shape_cast %86 : vector<1x8x32xf32> to vector<8x32xf32>
    %cst_45 = arith.constant dense<0.000000e+00> : vector<16x32xf32>
    %88 = tpu.matmul %85, %87, %cst_45 {dimension_numbers = #tpu.dot_dimension_numbers<[1], [0], [0], [1], [0, 0, 1, 1], [], []>} : vector<16x8xf32>, vector<8x32xf32>, vector<16x32xf32> -> vector<16x32xf32>
    %89 = arith.addf %46, %88 : vector<16x32xf32>
    %c1_46 = arith.constant 1 : index
    %c0_47 = arith.constant 0 : index
    %c0_48 = arith.constant 0 : index
    %90 = vector.load %arg4[%c1_46, %c0_47, %c0_48] : memref<24x32x8xf32, #tpu.memory_space<vmem>>, vector<1x32x8xf32>
    %91 = vector.shape_cast %90 : vector<1x32x8xf32> to vector<32x8xf32>
    %c5 = arith.constant 5 : index
    %c0_49 = arith.constant 0 : index
    %c0_50 = arith.constant 0 : index
    %92 = vector.load %arg4[%c5, %c0_49, %c0_50] : memref<24x32x8xf32, #tpu.memory_space<vmem>>, vector<1x32x8xf32>
    %93 = vector.shape_cast %92 : vector<1x32x8xf32> to vector<32x8xf32>
    %c9 = arith.constant 9 : index
    %c0_51 = arith.constant 0 : index
    %c0_52 = arith.constant 0 : index
    %94 = vector.load %arg4[%c9, %c0_51, %c0_52] : memref<24x32x8xf32, #tpu.memory_space<vmem>>, vector<1x32x8xf32>
    %95 = vector.shape_cast %94 : vector<1x32x8xf32> to vector<32x8xf32>
    %c1_53 = arith.constant 1 : index
    %c0_54 = arith.constant 0 : index
    %c0_55 = arith.constant 0 : index
    %96 = vector.load %arg5[%c1_53, %c0_54, %c0_55] : memref<24x1x8xf32, #tpu.memory_space<vmem>>, vector<1x1x8xf32>
    %97 = vector.shape_cast %96 : vector<1x1x8xf32> to vector<1x8xf32>
    %c5_56 = arith.constant 5 : index
    %c0_57 = arith.constant 0 : index
    %c0_58 = arith.constant 0 : index
    %98 = vector.load %arg5[%c5_56, %c0_57, %c0_58] : memref<24x1x8xf32, #tpu.memory_space<vmem>>, vector<1x1x8xf32>
    %99 = vector.shape_cast %98 : vector<1x1x8xf32> to vector<1x8xf32>
    %c9_59 = arith.constant 9 : index
    %c0_60 = arith.constant 0 : index
    %c0_61 = arith.constant 0 : index
    %100 = vector.load %arg5[%c9_59, %c0_60, %c0_61] : memref<24x1x8xf32, #tpu.memory_space<vmem>>, vector<1x1x8xf32>
    %101 = vector.shape_cast %100 : vector<1x1x8xf32> to vector<1x8xf32>
    %cst_62 = arith.constant dense<0.000000e+00> : vector<16x8xf32>
    %102 = tpu.matmul %42, %91, %cst_62 {dimension_numbers = #tpu.dot_dimension_numbers<[1], [0], [0], [1], [0, 0, 1, 1], [], []>} : vector<16x32xf32>, vector<32x8xf32>, vector<16x8xf32> -> vector<16x8xf32>
    %103 = vector.broadcast %97 : vector<1x8xf32> to vector<16x8xf32>
    %104 = arith.addf %102, %103 : vector<16x8xf32>
    %105 = vector.shape_cast %104 : vector<16x8xf32> to vector<2x8x8xf32>
    %cst_63 = arith.constant dense<0.000000e+00> : vector<16x8xf32>
    %106 = tpu.matmul %42, %93, %cst_63 {dimension_numbers = #tpu.dot_dimension_numbers<[1], [0], [0], [1], [0, 0, 1, 1], [], []>} : vector<16x32xf32>, vector<32x8xf32>, vector<16x8xf32> -> vector<16x8xf32>
    %107 = vector.broadcast %99 : vector<1x8xf32> to vector<16x8xf32>
    %108 = arith.addf %106, %107 : vector<16x8xf32>
    %109 = vector.shape_cast %108 : vector<16x8xf32> to vector<2x8x8xf32>
    %cst_64 = arith.constant dense<0.000000e+00> : vector<16x8xf32>
    %110 = tpu.matmul %42, %95, %cst_64 {dimension_numbers = #tpu.dot_dimension_numbers<[1], [0], [0], [1], [0, 0, 1, 1], [], []>} : vector<16x32xf32>, vector<32x8xf32>, vector<16x8xf32> -> vector<16x8xf32>
    %111 = vector.broadcast %101 : vector<1x8xf32> to vector<16x8xf32>
    %112 = arith.addf %110, %111 : vector<16x8xf32>
    %113 = vector.shape_cast %112 : vector<16x8xf32> to vector<2x8x8xf32>
    "tpu.trace_start"() <{level = 10 : i32, message = "bqd,bkd->bqk"}> : () -> ()
    %cst_65 = arith.constant dense<0.000000e+00> : vector<2x8x8xf32>
    %114 = tpu.matmul %105, %109, %cst_65 {dimension_numbers = #tpu.dot_dimension_numbers<[2], [2], [1], [1], [0, 0, 0, 1, 1, 1], [0], [0]>} : vector<2x8x8xf32>, vector<2x8x8xf32>, vector<2x8x8xf32> -> vector<2x8x8xf32>
    "tpu.trace_stop"() : () -> ()
    %cst_66 = arith.constant 0.353553385 : f32
    %115 = vector.broadcast %cst_66 : f32 to vector<2x8x8xf32>
    %116 = arith.mulf %114, %115 : vector<2x8x8xf32>
    %cst_67 = arith.constant dense<0xFF800000> : vector<2x8xf32>
    %117 = vector.multi_reduction <maximumf>, %116, %cst_67 [2] : vector<2x8x8xf32> to vector<2x8xf32>
    %118 = vector.shape_cast %117 : vector<2x8xf32> to vector<2x8x1xf32>
    %119 = vector.broadcast %118 : vector<2x8x1xf32> to vector<2x8x8xf32>
    %120 = arith.subf %116, %119 : vector<2x8x8xf32>
    %121 = math.exp %120 : vector<2x8x8xf32>
    %cst_68 = arith.constant dense<0.000000e+00> : vector<2x8xf32>
    %122 = vector.multi_reduction <add>, %121, %cst_68 [2] : vector<2x8x8xf32> to vector<2x8xf32>
    %123 = vector.shape_cast %122 : vector<2x8xf32> to vector<2x8x1xf32>
    %124 = tpu.reciprocal %123 {approx = true} : vector<2x8x1xf32> -> vector<2x8x1xf32>
    %125 = vector.broadcast %124 : vector<2x8x1xf32> to vector<2x8x8xf32>
    %126 = arith.mulf %121, %125 : vector<2x8x8xf32>
    "tpu.trace_start"() <{level = 10 : i32, message = "bqk,bkd->bqd"}> : () -> ()
    %cst_69 = arith.constant dense<0.000000e+00> : vector<2x8x8xf32>
    %127 = tpu.matmul %126, %113, %cst_69 {dimension_numbers = #tpu.dot_dimension_numbers<[2], [1], [1], [2], [0, 0, 0, 1, 1, 2], [0], [0]>} : vector<2x8x8xf32>, vector<2x8x8xf32>, vector<2x8x8xf32> -> vector<2x8x8xf32>
    "tpu.trace_stop"() : () -> ()
    %128 = vector.shape_cast %127 : vector<2x8x8xf32> to vector<16x8xf32>
    %c1_70 = arith.constant 1 : index
    %c0_71 = arith.constant 0 : index
    %c0_72 = arith.constant 0 : index
    %129 = vector.load %arg6[%c1_70, %c0_71, %c0_72] : memref<8x8x32xf32, #tpu.memory_space<vmem>>, vector<1x8x32xf32>
    %130 = vector.shape_cast %129 : vector<1x8x32xf32> to vector<8x32xf32>
    %cst_73 = arith.constant dense<0.000000e+00> : vector<16x32xf32>
    %131 = tpu.matmul %128, %130, %cst_73 {dimension_numbers = #tpu.dot_dimension_numbers<[1], [0], [0], [1], [0, 0, 1, 1], [], []>} : vector<16x8xf32>, vector<8x32xf32>, vector<16x32xf32> -> vector<16x32xf32>
    %132 = arith.addf %89, %131 : vector<16x32xf32>
    %c2_74 = arith.constant 2 : index
    %c0_75 = arith.constant 0 : index
    %c0_76 = arith.constant 0 : index
    %133 = vector.load %arg4[%c2_74, %c0_75, %c0_76] : memref<24x32x8xf32, #tpu.memory_space<vmem>>, vector<1x32x8xf32>
    %134 = vector.shape_cast %133 : vector<1x32x8xf32> to vector<32x8xf32>
    %c6_77 = arith.constant 6 : index
    %c0_78 = arith.constant 0 : index
    %c0_79 = arith.constant 0 : index
    %135 = vector.load %arg4[%c6_77, %c0_78, %c0_79] : memref<24x32x8xf32, #tpu.memory_space<vmem>>, vector<1x32x8xf32>
    %136 = vector.shape_cast %135 : vector<1x32x8xf32> to vector<32x8xf32>
    %c10 = arith.constant 10 : index
    %c0_80 = arith.constant 0 : index
    %c0_81 = arith.constant 0 : index
    %137 = vector.load %arg4[%c10, %c0_80, %c0_81] : memref<24x32x8xf32, #tpu.memory_space<vmem>>, vector<1x32x8xf32>
    %138 = vector.shape_cast %137 : vector<1x32x8xf32> to vector<32x8xf32>
    %c2_82 = arith.constant 2 : index
    %c0_83 = arith.constant 0 : index
    %c0_84 = arith.constant 0 : index
    %139 = vector.load %arg5[%c2_82, %c0_83, %c0_84] : memref<24x1x8xf32, #tpu.memory_space<vmem>>, vector<1x1x8xf32>
    %140 = vector.shape_cast %139 : vector<1x1x8xf32> to vector<1x8xf32>
    %c6_85 = arith.constant 6 : index
    %c0_86 = arith.constant 0 : index
    %c0_87 = arith.constant 0 : index
    %141 = vector.load %arg5[%c6_85, %c0_86, %c0_87] : memref<24x1x8xf32, #tpu.memory_space<vmem>>, vector<1x1x8xf32>
    %142 = vector.shape_cast %141 : vector<1x1x8xf32> to vector<1x8xf32>
    %c10_88 = arith.constant 10 : index
    %c0_89 = arith.constant 0 : index
    %c0_90 = arith.constant 0 : index
    %143 = vector.load %arg5[%c10_88, %c0_89, %c0_90] : memref<24x1x8xf32, #tpu.memory_space<vmem>>, vector<1x1x8xf32>
    %144 = vector.shape_cast %143 : vector<1x1x8xf32> to vector<1x8xf32>
    %cst_91 = arith.constant dense<0.000000e+00> : vector<16x8xf32>
    %145 = tpu.matmul %42, %134, %cst_91 {dimension_numbers = #tpu.dot_dimension_numbers<[1], [0], [0], [1], [0, 0, 1, 1], [], []>} : vector<16x32xf32>, vector<32x8xf32>, vector<16x8xf32> -> vector<16x8xf32>
    %146 = vector.broadcast %140 : vector<1x8xf32> to vector<16x8xf32>
    %147 = arith.addf %145, %146 : vector<16x8xf32>
    %148 = vector.shape_cast %147 : vector<16x8xf32> to vector<2x8x8xf32>
    %cst_92 = arith.constant dense<0.000000e+00> : vector<16x8xf32>
    %149 = tpu.matmul %42, %136, %cst_92 {dimension_numbers = #tpu.dot_dimension_numbers<[1], [0], [0], [1], [0, 0, 1, 1], [], []>} : vector<16x32xf32>, vector<32x8xf32>, vector<16x8xf32> -> vector<16x8xf32>
    %150 = vector.broadcast %142 : vector<1x8xf32> to vector<16x8xf32>
    %151 = arith.addf %149, %150 : vector<16x8xf32>
    %152 = vector.shape_cast %151 : vector<16x8xf32> to vector<2x8x8xf32>
    %cst_93 = arith.constant dense<0.000000e+00> : vector<16x8xf32>
    %153 = tpu.matmul %42, %138, %cst_93 {dimension_numbers = #tpu.dot_dimension_numbers<[1], [0], [0], [1], [0, 0, 1, 1], [], []>} : vector<16x32xf32>, vector<32x8xf32>, vector<16x8xf32> -> vector<16x8xf32>
    %154 = vector.broadcast %144 : vector<1x8xf32> to vector<16x8xf32>
    %155 = arith.addf %153, %154 : vector<16x8xf32>
    %156 = vector.shape_cast %155 : vector<16x8xf32> to vector<2x8x8xf32>
    "tpu.trace_start"() <{level = 10 : i32, message = "bqd,bkd->bqk"}> : () -> ()
    %cst_94 = arith.constant dense<0.000000e+00> : vector<2x8x8xf32>
    %157 = tpu.matmul %148, %152, %cst_94 {dimension_numbers = #tpu.dot_dimension_numbers<[2], [2], [1], [1], [0, 0, 0, 1, 1, 1], [0], [0]>} : vector<2x8x8xf32>, vector<2x8x8xf32>, vector<2x8x8xf32> -> vector<2x8x8xf32>
    "tpu.trace_stop"() : () -> ()
    %cst_95 = arith.constant 0.353553385 : f32
    %158 = vector.broadcast %cst_95 : f32 to vector<2x8x8xf32>
    %159 = arith.mulf %157, %158 : vector<2x8x8xf32>
    %cst_96 = arith.constant dense<0xFF800000> : vector<2x8xf32>
    %160 = vector.multi_reduction <maximumf>, %159, %cst_96 [2] : vector<2x8x8xf32> to vector<2x8xf32>
    %161 = vector.shape_cast %160 : vector<2x8xf32> to vector<2x8x1xf32>
    %162 = vector.broadcast %161 : vector<2x8x1xf32> to vector<2x8x8xf32>
    %163 = arith.subf %159, %162 : vector<2x8x8xf32>
    %164 = math.exp %163 : vector<2x8x8xf32>
    %cst_97 = arith.constant dense<0.000000e+00> : vector<2x8xf32>
    %165 = vector.multi_reduction <add>, %164, %cst_97 [2] : vector<2x8x8xf32> to vector<2x8xf32>
    %166 = vector.shape_cast %165 : vector<2x8xf32> to vector<2x8x1xf32>
    %167 = tpu.reciprocal %166 {approx = true} : vector<2x8x1xf32> -> vector<2x8x1xf32>
    %168 = vector.broadcast %167 : vector<2x8x1xf32> to vector<2x8x8xf32>
    %169 = arith.mulf %164, %168 : vector<2x8x8xf32>
    "tpu.trace_start"() <{level = 10 : i32, message = "bqk,bkd->bqd"}> : () -> ()
    %cst_98 = arith.constant dense<0.000000e+00> : vector<2x8x8xf32>
    %170 = tpu.matmul %169, %156, %cst_98 {dimension_numbers = #tpu.dot_dimension_numbers<[2], [1], [1], [2], [0, 0, 0, 1, 1, 2], [0], [0]>} : vector<2x8x8xf32>, vector<2x8x8xf32>, vector<2x8x8xf32> -> vector<2x8x8xf32>
    "tpu.trace_stop"() : () -> ()
    %171 = vector.shape_cast %170 : vector<2x8x8xf32> to vector<16x8xf32>
    %c2_99 = arith.constant 2 : index
    %c0_100 = arith.constant 0 : index
    %c0_101 = arith.constant 0 : index
    %172 = vector.load %arg6[%c2_99, %c0_100, %c0_101] : memref<8x8x32xf32, #tpu.memory_space<vmem>>, vector<1x8x32xf32>
    %173 = vector.shape_cast %172 : vector<1x8x32xf32> to vector<8x32xf32>
    %cst_102 = arith.constant dense<0.000000e+00> : vector<16x32xf32>
    %174 = tpu.matmul %171, %173, %cst_102 {dimension_numbers = #tpu.dot_dimension_numbers<[1], [0], [0], [1], [0, 0, 1, 1], [], []>} : vector<16x8xf32>, vector<8x32xf32>, vector<16x32xf32> -> vector<16x32xf32>
    %175 = arith.addf %132, %174 : vector<16x32xf32>
    %c3 = arith.constant 3 : index
    %c0_103 = arith.constant 0 : index
    %c0_104 = arith.constant 0 : index
    %176 = vector.load %arg4[%c3, %c0_103, %c0_104] : memref<24x32x8xf32, #tpu.memory_space<vmem>>, vector<1x32x8xf32>
    %177 = vector.shape_cast %176 : vector<1x32x8xf32> to vector<32x8xf32>
    %c7 = arith.constant 7 : index
    %c0_105 = arith.constant 0 : index
    %c0_106 = arith.constant 0 : index
    %178 = vector.load %arg4[%c7, %c0_105, %c0_106] : memref<24x32x8xf32, #tpu.memory_space<vmem>>, vector<1x32x8xf32>
    %179 = vector.shape_cast %178 : vector<1x32x8xf32> to vector<32x8xf32>
    %c11 = arith.constant 11 : index
    %c0_107 = arith.constant 0 : index
    %c0_108 = arith.constant 0 : index
    %180 = vector.load %arg4[%c11, %c0_107, %c0_108] : memref<24x32x8xf32, #tpu.memory_space<vmem>>, vector<1x32x8xf32>
    %181 = vector.shape_cast %180 : vector<1x32x8xf32> to vector<32x8xf32>
    %c3_109 = arith.constant 3 : index
    %c0_110 = arith.constant 0 : index
    %c0_111 = arith.constant 0 : index
    %182 = vector.load %arg5[%c3_109, %c0_110, %c0_111] : memref<24x1x8xf32, #tpu.memory_space<vmem>>, vector<1x1x8xf32>
    %183 = vector.shape_cast %182 : vector<1x1x8xf32> to vector<1x8xf32>
    %c7_112 = arith.constant 7 : index
    %c0_113 = arith.constant 0 : index
    %c0_114 = arith.constant 0 : index
    %184 = vector.load %arg5[%c7_112, %c0_113, %c0_114] : memref<24x1x8xf32, #tpu.memory_space<vmem>>, vector<1x1x8xf32>
    %185 = vector.shape_cast %184 : vector<1x1x8xf32> to vector<1x8xf32>
    %c11_115 = arith.constant 11 : index
    %c0_116 = arith.constant 0 : index
    %c0_117 = arith.constant 0 : index
    %186 = vector.load %arg5[%c11_115, %c0_116, %c0_117] : memref<24x1x8xf32, #tpu.memory_space<vmem>>, vector<1x1x8xf32>
    %187 = vector.shape_cast %186 : vector<1x1x8xf32> to vector<1x8xf32>
    %cst_118 = arith.constant dense<0.000000e+00> : vector<16x8xf32>
    %188 = tpu.matmul %42, %177, %cst_118 {dimension_numbers = #tpu.dot_dimension_numbers<[1], [0], [0], [1], [0, 0, 1, 1], [], []>} : vector<16x32xf32>, vector<32x8xf32>, vector<16x8xf32> -> vector<16x8xf32>
    %189 = vector.broadcast %183 : vector<1x8xf32> to vector<16x8xf32>
    %190 = arith.addf %188, %189 : vector<16x8xf32>
    %191 = vector.shape_cast %190 : vector<16x8xf32> to vector<2x8x8xf32>
    %cst_119 = arith.constant dense<0.000000e+00> : vector<16x8xf32>
    %192 = tpu.matmul %42, %179, %cst_119 {dimension_numbers = #tpu.dot_dimension_numbers<[1], [0], [0], [1], [0, 0, 1, 1], [], []>} : vector<16x32xf32>, vector<32x8xf32>, vector<16x8xf32> -> vector<16x8xf32>
    %193 = vector.broadcast %185 : vector<1x8xf32> to vector<16x8xf32>
    %194 = arith.addf %192, %193 : vector<16x8xf32>
    %195 = vector.shape_cast %194 : vector<16x8xf32> to vector<2x8x8xf32>
    %cst_120 = arith.constant dense<0.000000e+00> : vector<16x8xf32>
    %196 = tpu.matmul %42, %181, %cst_120 {dimension_numbers = #tpu.dot_dimension_numbers<[1], [0], [0], [1], [0, 0, 1, 1], [], []>} : vector<16x32xf32>, vector<32x8xf32>, vector<16x8xf32> -> vector<16x8xf32>
    %197 = vector.broadcast %187 : vector<1x8xf32> to vector<16x8xf32>
    %198 = arith.addf %196, %197 : vector<16x8xf32>
    %199 = vector.shape_cast %198 : vector<16x8xf32> to vector<2x8x8xf32>
    "tpu.trace_start"() <{level = 10 : i32, message = "bqd,bkd->bqk"}> : () -> ()
    %cst_121 = arith.constant dense<0.000000e+00> : vector<2x8x8xf32>
    %200 = tpu.matmul %191, %195, %cst_121 {dimension_numbers = #tpu.dot_dimension_numbers<[2], [2], [1], [1], [0, 0, 0, 1, 1, 1], [0], [0]>} : vector<2x8x8xf32>, vector<2x8x8xf32>, vector<2x8x8xf32> -> vector<2x8x8xf32>
    "tpu.trace_stop"() : () -> ()
    %cst_122 = arith.constant 0.353553385 : f32
    %201 = vector.broadcast %cst_122 : f32 to vector<2x8x8xf32>
    %202 = arith.mulf %200, %201 : vector<2x8x8xf32>
    %cst_123 = arith.constant dense<0xFF800000> : vector<2x8xf32>
    %203 = vector.multi_reduction <maximumf>, %202, %cst_123 [2] : vector<2x8x8xf32> to vector<2x8xf32>
    %204 = vector.shape_cast %203 : vector<2x8xf32> to vector<2x8x1xf32>
    %205 = vector.broadcast %204 : vector<2x8x1xf32> to vector<2x8x8xf32>
    %206 = arith.subf %202, %205 : vector<2x8x8xf32>
    %207 = math.exp %206 : vector<2x8x8xf32>
    %cst_124 = arith.constant dense<0.000000e+00> : vector<2x8xf32>
    %208 = vector.multi_reduction <add>, %207, %cst_124 [2] : vector<2x8x8xf32> to vector<2x8xf32>
    %209 = vector.shape_cast %208 : vector<2x8xf32> to vector<2x8x1xf32>
    %210 = tpu.reciprocal %209 {approx = true} : vector<2x8x1xf32> -> vector<2x8x1xf32>
    %211 = vector.broadcast %210 : vector<2x8x1xf32> to vector<2x8x8xf32>
    %212 = arith.mulf %207, %211 : vector<2x8x8xf32>
    "tpu.trace_start"() <{level = 10 : i32, message = "bqk,bkd->bqd"}> : () -> ()
    %cst_125 = arith.constant dense<0.000000e+00> : vector<2x8x8xf32>
    %213 = tpu.matmul %212, %199, %cst_125 {dimension_numbers = #tpu.dot_dimension_numbers<[2], [1], [1], [2], [0, 0, 0, 1, 1, 2], [0], [0]>} : vector<2x8x8xf32>, vector<2x8x8xf32>, vector<2x8x8xf32> -> vector<2x8x8xf32>
    "tpu.trace_stop"() : () -> ()
    %214 = vector.shape_cast %213 : vector<2x8x8xf32> to vector<16x8xf32>
    %c3_126 = arith.constant 3 : index
    %c0_127 = arith.constant 0 : index
    %c0_128 = arith.constant 0 : index
    %215 = vector.load %arg6[%c3_126, %c0_127, %c0_128] : memref<8x8x32xf32, #tpu.memory_space<vmem>>, vector<1x8x32xf32>
    %216 = vector.shape_cast %215 : vector<1x8x32xf32> to vector<8x32xf32>
    %cst_129 = arith.constant dense<0.000000e+00> : vector<16x32xf32>
    %217 = tpu.matmul %214, %216, %cst_129 {dimension_numbers = #tpu.dot_dimension_numbers<[1], [0], [0], [1], [0, 0, 1, 1], [], []>} : vector<16x8xf32>, vector<8x32xf32>, vector<16x32xf32> -> vector<16x32xf32>
    %218 = arith.addf %175, %217 : vector<16x32xf32>
    %c7_130 = arith.constant 7 : index
    %c0_131 = arith.constant 0 : index
    %c0_132 = arith.constant 0 : index
    %219 = vector.load %arg10[%c7_130, %c0_131, %c0_132] : memref<18x1x32xf32, #tpu.memory_space<vmem>>, vector<1x1x32xf32>
    %220 = vector.shape_cast %219 : vector<1x1x32xf32> to vector<1x32xf32>
    %c8_133 = arith.constant 8 : index
    %c0_134 = arith.constant 0 : index
    %c0_135 = arith.constant 0 : index
    %221 = vector.load %arg10[%c8_133, %c0_134, %c0_135] : memref<18x1x32xf32, #tpu.memory_space<vmem>>, vector<1x1x32xf32>
    %222 = vector.shape_cast %221 : vector<1x1x32xf32> to vector<1x32xf32>
    %cst_136 = arith.constant dense<0.000000e+00> : vector<16xf32>
    %223 = vector.multi_reduction <add>, %218, %cst_136 [1] : vector<16x32xf32> to vector<16xf32>
    %224 = vector.shape_cast %223 : vector<16xf32> to vector<16x1xf32>
    %cst_137 = arith.constant 3.200000e+01 : f32
    %225 = vector.broadcast %cst_137 : f32 to vector<16x1xf32>
    %226 = arith.divf %224, %225 : vector<16x1xf32>
    %227 = vector.broadcast %226 : vector<16x1xf32> to vector<16x32xf32>
    %228 = arith.subf %218, %227 : vector<16x32xf32>
    %229 = arith.mulf %228, %228 : vector<16x32xf32>
    %cst_138 = arith.constant dense<0.000000e+00> : vector<16xf32>
    %230 = vector.multi_reduction <add>, %229, %cst_138 [1] : vector<16x32xf32> to vector<16xf32>
    %231 = vector.shape_cast %230 : vector<16xf32> to vector<16x1xf32>
    %cst_139 = arith.constant 3.200000e+01 : f32
    %232 = vector.broadcast %cst_139 : f32 to vector<16x1xf32>
    %233 = arith.divf %231, %232 : vector<16x1xf32>
    %cst_140 = arith.constant 9.99999996E-13 : f32
    %234 = vector.broadcast %cst_140 : f32 to vector<16x1xf32>
    %235 = arith.addf %233, %234 : vector<16x1xf32>
    %236 = math.rsqrt %235 : vector<16x1xf32>
    %237 = vector.broadcast %236 : vector<16x1xf32> to vector<16x32xf32>
    %238 = arith.mulf %228, %237 : vector<16x32xf32>
    %239 = vector.broadcast %220 : vector<1x32xf32> to vector<16x32xf32>
    %240 = arith.mulf %238, %239 : vector<16x32xf32>
    %241 = vector.broadcast %222 : vector<1x32xf32> to vector<16x32xf32>
    %242 = arith.addf %240, %241 : vector<16x32xf32>
    %c1_141 = arith.constant 1 : index
    %c0_142 = arith.constant 0 : index
    %c0_143 = arith.constant 0 : index
    %243 = vector.load %arg11[%c1_141, %c0_142, %c0_143] : memref<3x1x128xf32, #tpu.memory_space<vmem>>, vector<1x1x128xf32>
    %244 = vector.shape_cast %243 : vector<1x1x128xf32> to vector<1x128xf32>
    %245 = vector.extract_strided_slice %244 {offsets = [0, 0], sizes = [1, 64], strides = [1, 1]} : vector<1x128xf32> to vector<1x64xf32>
    %c0_144 = arith.constant 0 : index
    %c0_145 = arith.constant 0 : index
    %c0_146 = arith.constant 0 : index
    %246 = vector.load %arg7[%c0_144, %c0_145, %c0_146] : memref<2x32x64xf32, #tpu.memory_space<vmem>>, vector<1x32x64xf32>
    %247 = vector.shape_cast %246 : vector<1x32x64xf32> to vector<32x64xf32>
    %cst_147 = arith.constant dense<0.000000e+00> : vector<16x64xf32>
    %248 = tpu.matmul %242, %247, %cst_147 {dimension_numbers = #tpu.dot_dimension_numbers<[1], [0], [0], [1], [0, 0, 1, 1], [], []>} : vector<16x32xf32>, vector<32x64xf32>, vector<16x64xf32> -> vector<16x64xf32>
    %249 = vector.broadcast %245 : vector<1x64xf32> to vector<16x64xf32>
    %250 = arith.addf %248, %249 : vector<16x64xf32>
    %cst_148 = arith.constant 5.000000e-01 : f32
    %251 = vector.broadcast %cst_148 : f32 to vector<16x64xf32>
    %252 = arith.mulf %251, %250 : vector<16x64xf32>
    %cst_149 = arith.constant 4.471500e-02 : f32
    %253 = vector.broadcast %cst_149 : f32 to vector<16x64xf32>
    %254 = arith.mulf %253, %250 : vector<16x64xf32>
    %255 = arith.mulf %254, %250 : vector<16x64xf32>
    %256 = arith.mulf %255, %250 : vector<16x64xf32>
    %257 = arith.addf %250, %256 : vector<16x64xf32>
    %cst_150 = arith.constant 0.797884583 : f32
    %258 = vector.broadcast %cst_150 : f32 to vector<16x64xf32>
    %259 = arith.mulf %258, %257 : vector<16x64xf32>
    %260 = math.tanh %259 : vector<16x64xf32>
    %cst_151 = arith.constant 1.000000e+00 : f32
    %261 = vector.broadcast %cst_151 : f32 to vector<16x64xf32>
    %262 = arith.addf %261, %260 : vector<16x64xf32>
    %263 = arith.mulf %252, %262 : vector<16x64xf32>
    %c0_152 = arith.constant 0 : index
    %c0_153 = arith.constant 0 : index
    %c0_154 = arith.constant 0 : index
    %264 = vector.load %arg8[%c0_152, %c0_153, %c0_154] : memref<2x64x32xf32, #tpu.memory_space<vmem>>, vector<1x64x32xf32>
    %265 = vector.shape_cast %264 : vector<1x64x32xf32> to vector<64x32xf32>
    %cst_155 = arith.constant dense<0.000000e+00> : vector<16x32xf32>
    %266 = tpu.matmul %263, %265, %cst_155 {dimension_numbers = #tpu.dot_dimension_numbers<[1], [0], [0], [1], [0, 0, 1, 1], [], []>} : vector<16x64xf32>, vector<64x32xf32>, vector<16x32xf32> -> vector<16x32xf32>
    %c9_156 = arith.constant 9 : index
    %c0_157 = arith.constant 0 : index
    %c0_158 = arith.constant 0 : index
    %267 = vector.load %arg10[%c9_156, %c0_157, %c0_158] : memref<18x1x32xf32, #tpu.memory_space<vmem>>, vector<1x1x32xf32>
    %268 = vector.shape_cast %267 : vector<1x1x32xf32> to vector<1x32xf32>
    %269 = vector.broadcast %268 : vector<1x32xf32> to vector<16x32xf32>
    %270 = arith.addf %266, %269 : vector<16x32xf32>
    %271 = arith.addf %270, %242 : vector<16x32xf32>
    %c10_159 = arith.constant 10 : index
    %c0_160 = arith.constant 0 : index
    %c0_161 = arith.constant 0 : index
    %272 = vector.load %arg10[%c10_159, %c0_160, %c0_161] : memref<18x1x32xf32, #tpu.memory_space<vmem>>, vector<1x1x32xf32>
    %273 = vector.shape_cast %272 : vector<1x1x32xf32> to vector<1x32xf32>
    %c11_162 = arith.constant 11 : index
    %c0_163 = arith.constant 0 : index
    %c0_164 = arith.constant 0 : index
    %274 = vector.load %arg10[%c11_162, %c0_163, %c0_164] : memref<18x1x32xf32, #tpu.memory_space<vmem>>, vector<1x1x32xf32>
    %275 = vector.shape_cast %274 : vector<1x1x32xf32> to vector<1x32xf32>
    %cst_165 = arith.constant dense<0.000000e+00> : vector<16xf32>
    %276 = vector.multi_reduction <add>, %271, %cst_165 [1] : vector<16x32xf32> to vector<16xf32>
    %277 = vector.shape_cast %276 : vector<16xf32> to vector<16x1xf32>
    %cst_166 = arith.constant 3.200000e+01 : f32
    %278 = vector.broadcast %cst_166 : f32 to vector<16x1xf32>
    %279 = arith.divf %277, %278 : vector<16x1xf32>
    %280 = vector.broadcast %279 : vector<16x1xf32> to vector<16x32xf32>
    %281 = arith.subf %271, %280 : vector<16x32xf32>
    %282 = arith.mulf %281, %281 : vector<16x32xf32>
    %cst_167 = arith.constant dense<0.000000e+00> : vector<16xf32>
    %283 = vector.multi_reduction <add>, %282, %cst_167 [1] : vector<16x32xf32> to vector<16xf32>
    %284 = vector.shape_cast %283 : vector<16xf32> to vector<16x1xf32>
    %cst_168 = arith.constant 3.200000e+01 : f32
    %285 = vector.broadcast %cst_168 : f32 to vector<16x1xf32>
    %286 = arith.divf %284, %285 : vector<16x1xf32>
    %cst_169 = arith.constant 9.99999996E-13 : f32
    %287 = vector.broadcast %cst_169 : f32 to vector<16x1xf32>
    %288 = arith.addf %286, %287 : vector<16x1xf32>
    %289 = math.rsqrt %288 : vector<16x1xf32>
    %290 = vector.broadcast %289 : vector<16x1xf32> to vector<16x32xf32>
    %291 = arith.mulf %281, %290 : vector<16x32xf32>
    %292 = vector.broadcast %273 : vector<1x32xf32> to vector<16x32xf32>
    %293 = arith.mulf %291, %292 : vector<16x32xf32>
    %294 = vector.broadcast %275 : vector<1x32xf32> to vector<16x32xf32>
    %295 = arith.addf %293, %294 : vector<16x32xf32>
    %c12 = arith.constant 12 : index
    %c0_170 = arith.constant 0 : index
    %c0_171 = arith.constant 0 : index
    %296 = vector.load %arg10[%c12, %c0_170, %c0_171] : memref<18x1x32xf32, #tpu.memory_space<vmem>>, vector<1x1x32xf32>
    %297 = vector.shape_cast %296 : vector<1x1x32xf32> to vector<1x32xf32>
    %298 = vector.broadcast %297 : vector<1x32xf32> to vector<16x32xf32>
    %299 = arith.addf %295, %298 : vector<16x32xf32>
    %c12_172 = arith.constant 12 : index
    %c0_173 = arith.constant 0 : index
    %c0_174 = arith.constant 0 : index
    %300 = vector.load %arg4[%c12_172, %c0_173, %c0_174] : memref<24x32x8xf32, #tpu.memory_space<vmem>>, vector<1x32x8xf32>
    %301 = vector.shape_cast %300 : vector<1x32x8xf32> to vector<32x8xf32>
    %c16 = arith.constant 16 : index
    %c0_175 = arith.constant 0 : index
    %c0_176 = arith.constant 0 : index
    %302 = vector.load %arg4[%c16, %c0_175, %c0_176] : memref<24x32x8xf32, #tpu.memory_space<vmem>>, vector<1x32x8xf32>
    %303 = vector.shape_cast %302 : vector<1x32x8xf32> to vector<32x8xf32>
    %c20 = arith.constant 20 : index
    %c0_177 = arith.constant 0 : index
    %c0_178 = arith.constant 0 : index
    %304 = vector.load %arg4[%c20, %c0_177, %c0_178] : memref<24x32x8xf32, #tpu.memory_space<vmem>>, vector<1x32x8xf32>
    %305 = vector.shape_cast %304 : vector<1x32x8xf32> to vector<32x8xf32>
    %c12_179 = arith.constant 12 : index
    %c0_180 = arith.constant 0 : index
    %c0_181 = arith.constant 0 : index
    %306 = vector.load %arg5[%c12_179, %c0_180, %c0_181] : memref<24x1x8xf32, #tpu.memory_space<vmem>>, vector<1x1x8xf32>
    %307 = vector.shape_cast %306 : vector<1x1x8xf32> to vector<1x8xf32>
    %c16_182 = arith.constant 16 : index
    %c0_183 = arith.constant 0 : index
    %c0_184 = arith.constant 0 : index
    %308 = vector.load %arg5[%c16_182, %c0_183, %c0_184] : memref<24x1x8xf32, #tpu.memory_space<vmem>>, vector<1x1x8xf32>
    %309 = vector.shape_cast %308 : vector<1x1x8xf32> to vector<1x8xf32>
    %c20_185 = arith.constant 20 : index
    %c0_186 = arith.constant 0 : index
    %c0_187 = arith.constant 0 : index
    %310 = vector.load %arg5[%c20_185, %c0_186, %c0_187] : memref<24x1x8xf32, #tpu.memory_space<vmem>>, vector<1x1x8xf32>
    %311 = vector.shape_cast %310 : vector<1x1x8xf32> to vector<1x8xf32>
    %cst_188 = arith.constant dense<0.000000e+00> : vector<16x8xf32>
    %312 = tpu.matmul %295, %301, %cst_188 {dimension_numbers = #tpu.dot_dimension_numbers<[1], [0], [0], [1], [0, 0, 1, 1], [], []>} : vector<16x32xf32>, vector<32x8xf32>, vector<16x8xf32> -> vector<16x8xf32>
    %313 = vector.broadcast %307 : vector<1x8xf32> to vector<16x8xf32>
    %314 = arith.addf %312, %313 : vector<16x8xf32>
    %315 = vector.shape_cast %314 : vector<16x8xf32> to vector<2x8x8xf32>
    %cst_189 = arith.constant dense<0.000000e+00> : vector<16x8xf32>
    %316 = tpu.matmul %295, %303, %cst_189 {dimension_numbers = #tpu.dot_dimension_numbers<[1], [0], [0], [1], [0, 0, 1, 1], [], []>} : vector<16x32xf32>, vector<32x8xf32>, vector<16x8xf32> -> vector<16x8xf32>
    %317 = vector.broadcast %309 : vector<1x8xf32> to vector<16x8xf32>
    %318 = arith.addf %316, %317 : vector<16x8xf32>
    %319 = vector.shape_cast %318 : vector<16x8xf32> to vector<2x8x8xf32>
    %cst_190 = arith.constant dense<0.000000e+00> : vector<16x8xf32>
    %320 = tpu.matmul %295, %305, %cst_190 {dimension_numbers = #tpu.dot_dimension_numbers<[1], [0], [0], [1], [0, 0, 1, 1], [], []>} : vector<16x32xf32>, vector<32x8xf32>, vector<16x8xf32> -> vector<16x8xf32>
    %321 = vector.broadcast %311 : vector<1x8xf32> to vector<16x8xf32>
    %322 = arith.addf %320, %321 : vector<16x8xf32>
    %323 = vector.shape_cast %322 : vector<16x8xf32> to vector<2x8x8xf32>
    "tpu.trace_start"() <{level = 10 : i32, message = "bqd,bkd->bqk"}> : () -> ()
    %cst_191 = arith.constant dense<0.000000e+00> : vector<2x8x8xf32>
    %324 = tpu.matmul %315, %319, %cst_191 {dimension_numbers = #tpu.dot_dimension_numbers<[2], [2], [1], [1], [0, 0, 0, 1, 1, 1], [0], [0]>} : vector<2x8x8xf32>, vector<2x8x8xf32>, vector<2x8x8xf32> -> vector<2x8x8xf32>
    "tpu.trace_stop"() : () -> ()
    %cst_192 = arith.constant 0.353553385 : f32
    %325 = vector.broadcast %cst_192 : f32 to vector<2x8x8xf32>
    %326 = arith.mulf %324, %325 : vector<2x8x8xf32>
    %cst_193 = arith.constant dense<0xFF800000> : vector<2x8xf32>
    %327 = vector.multi_reduction <maximumf>, %326, %cst_193 [2] : vector<2x8x8xf32> to vector<2x8xf32>
    %328 = vector.shape_cast %327 : vector<2x8xf32> to vector<2x8x1xf32>
    %329 = vector.broadcast %328 : vector<2x8x1xf32> to vector<2x8x8xf32>
    %330 = arith.subf %326, %329 : vector<2x8x8xf32>
    %331 = math.exp %330 : vector<2x8x8xf32>
    %cst_194 = arith.constant dense<0.000000e+00> : vector<2x8xf32>
    %332 = vector.multi_reduction <add>, %331, %cst_194 [2] : vector<2x8x8xf32> to vector<2x8xf32>
    %333 = vector.shape_cast %332 : vector<2x8xf32> to vector<2x8x1xf32>
    %334 = tpu.reciprocal %333 {approx = true} : vector<2x8x1xf32> -> vector<2x8x1xf32>
    %335 = vector.broadcast %334 : vector<2x8x1xf32> to vector<2x8x8xf32>
    %336 = arith.mulf %331, %335 : vector<2x8x8xf32>
    "tpu.trace_start"() <{level = 10 : i32, message = "bqk,bkd->bqd"}> : () -> ()
    %cst_195 = arith.constant dense<0.000000e+00> : vector<2x8x8xf32>
    %337 = tpu.matmul %336, %323, %cst_195 {dimension_numbers = #tpu.dot_dimension_numbers<[2], [1], [1], [2], [0, 0, 0, 1, 1, 2], [0], [0]>} : vector<2x8x8xf32>, vector<2x8x8xf32>, vector<2x8x8xf32> -> vector<2x8x8xf32>
    "tpu.trace_stop"() : () -> ()
    %338 = vector.shape_cast %337 : vector<2x8x8xf32> to vector<16x8xf32>
    %c4_196 = arith.constant 4 : index
    %c0_197 = arith.constant 0 : index
    %c0_198 = arith.constant 0 : index
    %339 = vector.load %arg6[%c4_196, %c0_197, %c0_198] : memref<8x8x32xf32, #tpu.memory_space<vmem>>, vector<1x8x32xf32>
    %340 = vector.shape_cast %339 : vector<1x8x32xf32> to vector<8x32xf32>
    %cst_199 = arith.constant dense<0.000000e+00> : vector<16x32xf32>
    %341 = tpu.matmul %338, %340, %cst_199 {dimension_numbers = #tpu.dot_dimension_numbers<[1], [0], [0], [1], [0, 0, 1, 1], [], []>} : vector<16x8xf32>, vector<8x32xf32>, vector<16x32xf32> -> vector<16x32xf32>
    %342 = arith.addf %299, %341 : vector<16x32xf32>
    %c13 = arith.constant 13 : index
    %c0_200 = arith.constant 0 : index
    %c0_201 = arith.constant 0 : index
    %343 = vector.load %arg4[%c13, %c0_200, %c0_201] : memref<24x32x8xf32, #tpu.memory_space<vmem>>, vector<1x32x8xf32>
    %344 = vector.shape_cast %343 : vector<1x32x8xf32> to vector<32x8xf32>
    %c17 = arith.constant 17 : index
    %c0_202 = arith.constant 0 : index
    %c0_203 = arith.constant 0 : index
    %345 = vector.load %arg4[%c17, %c0_202, %c0_203] : memref<24x32x8xf32, #tpu.memory_space<vmem>>, vector<1x32x8xf32>
    %346 = vector.shape_cast %345 : vector<1x32x8xf32> to vector<32x8xf32>
    %c21 = arith.constant 21 : index
    %c0_204 = arith.constant 0 : index
    %c0_205 = arith.constant 0 : index
    %347 = vector.load %arg4[%c21, %c0_204, %c0_205] : memref<24x32x8xf32, #tpu.memory_space<vmem>>, vector<1x32x8xf32>
    %348 = vector.shape_cast %347 : vector<1x32x8xf32> to vector<32x8xf32>
    %c13_206 = arith.constant 13 : index
    %c0_207 = arith.constant 0 : index
    %c0_208 = arith.constant 0 : index
    %349 = vector.load %arg5[%c13_206, %c0_207, %c0_208] : memref<24x1x8xf32, #tpu.memory_space<vmem>>, vector<1x1x8xf32>
    %350 = vector.shape_cast %349 : vector<1x1x8xf32> to vector<1x8xf32>
    %c17_209 = arith.constant 17 : index
    %c0_210 = arith.constant 0 : index
    %c0_211 = arith.constant 0 : index
    %351 = vector.load %arg5[%c17_209, %c0_210, %c0_211] : memref<24x1x8xf32, #tpu.memory_space<vmem>>, vector<1x1x8xf32>
    %352 = vector.shape_cast %351 : vector<1x1x8xf32> to vector<1x8xf32>
    %c21_212 = arith.constant 21 : index
    %c0_213 = arith.constant 0 : index
    %c0_214 = arith.constant 0 : index
    %353 = vector.load %arg5[%c21_212, %c0_213, %c0_214] : memref<24x1x8xf32, #tpu.memory_space<vmem>>, vector<1x1x8xf32>
    %354 = vector.shape_cast %353 : vector<1x1x8xf32> to vector<1x8xf32>
    %cst_215 = arith.constant dense<0.000000e+00> : vector<16x8xf32>
    %355 = tpu.matmul %295, %344, %cst_215 {dimension_numbers = #tpu.dot_dimension_numbers<[1], [0], [0], [1], [0, 0, 1, 1], [], []>} : vector<16x32xf32>, vector<32x8xf32>, vector<16x8xf32> -> vector<16x8xf32>
    %356 = vector.broadcast %350 : vector<1x8xf32> to vector<16x8xf32>
    %357 = arith.addf %355, %356 : vector<16x8xf32>
    %358 = vector.shape_cast %357 : vector<16x8xf32> to vector<2x8x8xf32>
    %cst_216 = arith.constant dense<0.000000e+00> : vector<16x8xf32>
    %359 = tpu.matmul %295, %346, %cst_216 {dimension_numbers = #tpu.dot_dimension_numbers<[1], [0], [0], [1], [0, 0, 1, 1], [], []>} : vector<16x32xf32>, vector<32x8xf32>, vector<16x8xf32> -> vector<16x8xf32>
    %360 = vector.broadcast %352 : vector<1x8xf32> to vector<16x8xf32>
    %361 = arith.addf %359, %360 : vector<16x8xf32>
    %362 = vector.shape_cast %361 : vector<16x8xf32> to vector<2x8x8xf32>
    %cst_217 = arith.constant dense<0.000000e+00> : vector<16x8xf32>
    %363 = tpu.matmul %295, %348, %cst_217 {dimension_numbers = #tpu.dot_dimension_numbers<[1], [0], [0], [1], [0, 0, 1, 1], [], []>} : vector<16x32xf32>, vector<32x8xf32>, vector<16x8xf32> -> vector<16x8xf32>
    %364 = vector.broadcast %354 : vector<1x8xf32> to vector<16x8xf32>
    %365 = arith.addf %363, %364 : vector<16x8xf32>
    %366 = vector.shape_cast %365 : vector<16x8xf32> to vector<2x8x8xf32>
    "tpu.trace_start"() <{level = 10 : i32, message = "bqd,bkd->bqk"}> : () -> ()
    %cst_218 = arith.constant dense<0.000000e+00> : vector<2x8x8xf32>
    %367 = tpu.matmul %358, %362, %cst_218 {dimension_numbers = #tpu.dot_dimension_numbers<[2], [2], [1], [1], [0, 0, 0, 1, 1, 1], [0], [0]>} : vector<2x8x8xf32>, vector<2x8x8xf32>, vector<2x8x8xf32> -> vector<2x8x8xf32>
    "tpu.trace_stop"() : () -> ()
    %cst_219 = arith.constant 0.353553385 : f32
    %368 = vector.broadcast %cst_219 : f32 to vector<2x8x8xf32>
    %369 = arith.mulf %367, %368 : vector<2x8x8xf32>
    %cst_220 = arith.constant dense<0xFF800000> : vector<2x8xf32>
    %370 = vector.multi_reduction <maximumf>, %369, %cst_220 [2] : vector<2x8x8xf32> to vector<2x8xf32>
    %371 = vector.shape_cast %370 : vector<2x8xf32> to vector<2x8x1xf32>
    %372 = vector.broadcast %371 : vector<2x8x1xf32> to vector<2x8x8xf32>
    %373 = arith.subf %369, %372 : vector<2x8x8xf32>
    %374 = math.exp %373 : vector<2x8x8xf32>
    %cst_221 = arith.constant dense<0.000000e+00> : vector<2x8xf32>
    %375 = vector.multi_reduction <add>, %374, %cst_221 [2] : vector<2x8x8xf32> to vector<2x8xf32>
    %376 = vector.shape_cast %375 : vector<2x8xf32> to vector<2x8x1xf32>
    %377 = tpu.reciprocal %376 {approx = true} : vector<2x8x1xf32> -> vector<2x8x1xf32>
    %378 = vector.broadcast %377 : vector<2x8x1xf32> to vector<2x8x8xf32>
    %379 = arith.mulf %374, %378 : vector<2x8x8xf32>
    "tpu.trace_start"() <{level = 10 : i32, message = "bqk,bkd->bqd"}> : () -> ()
    %cst_222 = arith.constant dense<0.000000e+00> : vector<2x8x8xf32>
    %380 = tpu.matmul %379, %366, %cst_222 {dimension_numbers = #tpu.dot_dimension_numbers<[2], [1], [1], [2], [0, 0, 0, 1, 1, 2], [0], [0]>} : vector<2x8x8xf32>, vector<2x8x8xf32>, vector<2x8x8xf32> -> vector<2x8x8xf32>
    "tpu.trace_stop"() : () -> ()
    %381 = vector.shape_cast %380 : vector<2x8x8xf32> to vector<16x8xf32>
    %c5_223 = arith.constant 5 : index
    %c0_224 = arith.constant 0 : index
    %c0_225 = arith.constant 0 : index
    %382 = vector.load %arg6[%c5_223, %c0_224, %c0_225] : memref<8x8x32xf32, #tpu.memory_space<vmem>>, vector<1x8x32xf32>
    %383 = vector.shape_cast %382 : vector<1x8x32xf32> to vector<8x32xf32>
    %cst_226 = arith.constant dense<0.000000e+00> : vector<16x32xf32>
    %384 = tpu.matmul %381, %383, %cst_226 {dimension_numbers = #tpu.dot_dimension_numbers<[1], [0], [0], [1], [0, 0, 1, 1], [], []>} : vector<16x8xf32>, vector<8x32xf32>, vector<16x32xf32> -> vector<16x32xf32>
    %385 = arith.addf %342, %384 : vector<16x32xf32>
    %c14 = arith.constant 14 : index
    %c0_227 = arith.constant 0 : index
    %c0_228 = arith.constant 0 : index
    %386 = vector.load %arg4[%c14, %c0_227, %c0_228] : memref<24x32x8xf32, #tpu.memory_space<vmem>>, vector<1x32x8xf32>
    %387 = vector.shape_cast %386 : vector<1x32x8xf32> to vector<32x8xf32>
    %c18 = arith.constant 18 : index
    %c0_229 = arith.constant 0 : index
    %c0_230 = arith.constant 0 : index
    %388 = vector.load %arg4[%c18, %c0_229, %c0_230] : memref<24x32x8xf32, #tpu.memory_space<vmem>>, vector<1x32x8xf32>
    %389 = vector.shape_cast %388 : vector<1x32x8xf32> to vector<32x8xf32>
    %c22 = arith.constant 22 : index
    %c0_231 = arith.constant 0 : index
    %c0_232 = arith.constant 0 : index
    %390 = vector.load %arg4[%c22, %c0_231, %c0_232] : memref<24x32x8xf32, #tpu.memory_space<vmem>>, vector<1x32x8xf32>
    %391 = vector.shape_cast %390 : vector<1x32x8xf32> to vector<32x8xf32>
    %c14_233 = arith.constant 14 : index
    %c0_234 = arith.constant 0 : index
    %c0_235 = arith.constant 0 : index
    %392 = vector.load %arg5[%c14_233, %c0_234, %c0_235] : memref<24x1x8xf32, #tpu.memory_space<vmem>>, vector<1x1x8xf32>
    %393 = vector.shape_cast %392 : vector<1x1x8xf32> to vector<1x8xf32>
    %c18_236 = arith.constant 18 : index
    %c0_237 = arith.constant 0 : index
    %c0_238 = arith.constant 0 : index
    %394 = vector.load %arg5[%c18_236, %c0_237, %c0_238] : memref<24x1x8xf32, #tpu.memory_space<vmem>>, vector<1x1x8xf32>
    %395 = vector.shape_cast %394 : vector<1x1x8xf32> to vector<1x8xf32>
    %c22_239 = arith.constant 22 : index
    %c0_240 = arith.constant 0 : index
    %c0_241 = arith.constant 0 : index
    %396 = vector.load %arg5[%c22_239, %c0_240, %c0_241] : memref<24x1x8xf32, #tpu.memory_space<vmem>>, vector<1x1x8xf32>
    %397 = vector.shape_cast %396 : vector<1x1x8xf32> to vector<1x8xf32>
    %cst_242 = arith.constant dense<0.000000e+00> : vector<16x8xf32>
    %398 = tpu.matmul %295, %387, %cst_242 {dimension_numbers = #tpu.dot_dimension_numbers<[1], [0], [0], [1], [0, 0, 1, 1], [], []>} : vector<16x32xf32>, vector<32x8xf32>, vector<16x8xf32> -> vector<16x8xf32>
    %399 = vector.broadcast %393 : vector<1x8xf32> to vector<16x8xf32>
    %400 = arith.addf %398, %399 : vector<16x8xf32>
    %401 = vector.shape_cast %400 : vector<16x8xf32> to vector<2x8x8xf32>
    %cst_243 = arith.constant dense<0.000000e+00> : vector<16x8xf32>
    %402 = tpu.matmul %295, %389, %cst_243 {dimension_numbers = #tpu.dot_dimension_numbers<[1], [0], [0], [1], [0, 0, 1, 1], [], []>} : vector<16x32xf32>, vector<32x8xf32>, vector<16x8xf32> -> vector<16x8xf32>
    %403 = vector.broadcast %395 : vector<1x8xf32> to vector<16x8xf32>
    %404 = arith.addf %402, %403 : vector<16x8xf32>
    %405 = vector.shape_cast %404 : vector<16x8xf32> to vector<2x8x8xf32>
    %cst_244 = arith.constant dense<0.000000e+00> : vector<16x8xf32>
    %406 = tpu.matmul %295, %391, %cst_244 {dimension_numbers = #tpu.dot_dimension_numbers<[1], [0], [0], [1], [0, 0, 1, 1], [], []>} : vector<16x32xf32>, vector<32x8xf32>, vector<16x8xf32> -> vector<16x8xf32>
    %407 = vector.broadcast %397 : vector<1x8xf32> to vector<16x8xf32>
    %408 = arith.addf %406, %407 : vector<16x8xf32>
    %409 = vector.shape_cast %408 : vector<16x8xf32> to vector<2x8x8xf32>
    "tpu.trace_start"() <{level = 10 : i32, message = "bqd,bkd->bqk"}> : () -> ()
    %cst_245 = arith.constant dense<0.000000e+00> : vector<2x8x8xf32>
    %410 = tpu.matmul %401, %405, %cst_245 {dimension_numbers = #tpu.dot_dimension_numbers<[2], [2], [1], [1], [0, 0, 0, 1, 1, 1], [0], [0]>} : vector<2x8x8xf32>, vector<2x8x8xf32>, vector<2x8x8xf32> -> vector<2x8x8xf32>
    "tpu.trace_stop"() : () -> ()
    %cst_246 = arith.constant 0.353553385 : f32
    %411 = vector.broadcast %cst_246 : f32 to vector<2x8x8xf32>
    %412 = arith.mulf %410, %411 : vector<2x8x8xf32>
    %cst_247 = arith.constant dense<0xFF800000> : vector<2x8xf32>
    %413 = vector.multi_reduction <maximumf>, %412, %cst_247 [2] : vector<2x8x8xf32> to vector<2x8xf32>
    %414 = vector.shape_cast %413 : vector<2x8xf32> to vector<2x8x1xf32>
    %415 = vector.broadcast %414 : vector<2x8x1xf32> to vector<2x8x8xf32>
    %416 = arith.subf %412, %415 : vector<2x8x8xf32>
    %417 = math.exp %416 : vector<2x8x8xf32>
    %cst_248 = arith.constant dense<0.000000e+00> : vector<2x8xf32>
    %418 = vector.multi_reduction <add>, %417, %cst_248 [2] : vector<2x8x8xf32> to vector<2x8xf32>
    %419 = vector.shape_cast %418 : vector<2x8xf32> to vector<2x8x1xf32>
    %420 = tpu.reciprocal %419 {approx = true} : vector<2x8x1xf32> -> vector<2x8x1xf32>
    %421 = vector.broadcast %420 : vector<2x8x1xf32> to vector<2x8x8xf32>
    %422 = arith.mulf %417, %421 : vector<2x8x8xf32>
    "tpu.trace_start"() <{level = 10 : i32, message = "bqk,bkd->bqd"}> : () -> ()
    %cst_249 = arith.constant dense<0.000000e+00> : vector<2x8x8xf32>
    %423 = tpu.matmul %422, %409, %cst_249 {dimension_numbers = #tpu.dot_dimension_numbers<[2], [1], [1], [2], [0, 0, 0, 1, 1, 2], [0], [0]>} : vector<2x8x8xf32>, vector<2x8x8xf32>, vector<2x8x8xf32> -> vector<2x8x8xf32>
    "tpu.trace_stop"() : () -> ()
    %424 = vector.shape_cast %423 : vector<2x8x8xf32> to vector<16x8xf32>
    %c6_250 = arith.constant 6 : index
    %c0_251 = arith.constant 0 : index
    %c0_252 = arith.constant 0 : index
    %425 = vector.load %arg6[%c6_250, %c0_251, %c0_252] : memref<8x8x32xf32, #tpu.memory_space<vmem>>, vector<1x8x32xf32>
    %426 = vector.shape_cast %425 : vector<1x8x32xf32> to vector<8x32xf32>
    %cst_253 = arith.constant dense<0.000000e+00> : vector<16x32xf32>
    %427 = tpu.matmul %424, %426, %cst_253 {dimension_numbers = #tpu.dot_dimension_numbers<[1], [0], [0], [1], [0, 0, 1, 1], [], []>} : vector<16x8xf32>, vector<8x32xf32>, vector<16x32xf32> -> vector<16x32xf32>
    %428 = arith.addf %385, %427 : vector<16x32xf32>
    %c15 = arith.constant 15 : index
    %c0_254 = arith.constant 0 : index
    %c0_255 = arith.constant 0 : index
    %429 = vector.load %arg4[%c15, %c0_254, %c0_255] : memref<24x32x8xf32, #tpu.memory_space<vmem>>, vector<1x32x8xf32>
    %430 = vector.shape_cast %429 : vector<1x32x8xf32> to vector<32x8xf32>
    %c19 = arith.constant 19 : index
    %c0_256 = arith.constant 0 : index
    %c0_257 = arith.constant 0 : index
    %431 = vector.load %arg4[%c19, %c0_256, %c0_257] : memref<24x32x8xf32, #tpu.memory_space<vmem>>, vector<1x32x8xf32>
    %432 = vector.shape_cast %431 : vector<1x32x8xf32> to vector<32x8xf32>
    %c23 = arith.constant 23 : index
    %c0_258 = arith.constant 0 : index
    %c0_259 = arith.constant 0 : index
    %433 = vector.load %arg4[%c23, %c0_258, %c0_259] : memref<24x32x8xf32, #tpu.memory_space<vmem>>, vector<1x32x8xf32>
    %434 = vector.shape_cast %433 : vector<1x32x8xf32> to vector<32x8xf32>
    %c15_260 = arith.constant 15 : index
    %c0_261 = arith.constant 0 : index
    %c0_262 = arith.constant 0 : index
    %435 = vector.load %arg5[%c15_260, %c0_261, %c0_262] : memref<24x1x8xf32, #tpu.memory_space<vmem>>, vector<1x1x8xf32>
    %436 = vector.shape_cast %435 : vector<1x1x8xf32> to vector<1x8xf32>
    %c19_263 = arith.constant 19 : index
    %c0_264 = arith.constant 0 : index
    %c0_265 = arith.constant 0 : index
    %437 = vector.load %arg5[%c19_263, %c0_264, %c0_265] : memref<24x1x8xf32, #tpu.memory_space<vmem>>, vector<1x1x8xf32>
    %438 = vector.shape_cast %437 : vector<1x1x8xf32> to vector<1x8xf32>
    %c23_266 = arith.constant 23 : index
    %c0_267 = arith.constant 0 : index
    %c0_268 = arith.constant 0 : index
    %439 = vector.load %arg5[%c23_266, %c0_267, %c0_268] : memref<24x1x8xf32, #tpu.memory_space<vmem>>, vector<1x1x8xf32>
    %440 = vector.shape_cast %439 : vector<1x1x8xf32> to vector<1x8xf32>
    %cst_269 = arith.constant dense<0.000000e+00> : vector<16x8xf32>
    %441 = tpu.matmul %295, %430, %cst_269 {dimension_numbers = #tpu.dot_dimension_numbers<[1], [0], [0], [1], [0, 0, 1, 1], [], []>} : vector<16x32xf32>, vector<32x8xf32>, vector<16x8xf32> -> vector<16x8xf32>
    %442 = vector.broadcast %436 : vector<1x8xf32> to vector<16x8xf32>
    %443 = arith.addf %441, %442 : vector<16x8xf32>
    %444 = vector.shape_cast %443 : vector<16x8xf32> to vector<2x8x8xf32>
    %cst_270 = arith.constant dense<0.000000e+00> : vector<16x8xf32>
    %445 = tpu.matmul %295, %432, %cst_270 {dimension_numbers = #tpu.dot_dimension_numbers<[1], [0], [0], [1], [0, 0, 1, 1], [], []>} : vector<16x32xf32>, vector<32x8xf32>, vector<16x8xf32> -> vector<16x8xf32>
    %446 = vector.broadcast %438 : vector<1x8xf32> to vector<16x8xf32>
    %447 = arith.addf %445, %446 : vector<16x8xf32>
    %448 = vector.shape_cast %447 : vector<16x8xf32> to vector<2x8x8xf32>
    %cst_271 = arith.constant dense<0.000000e+00> : vector<16x8xf32>
    %449 = tpu.matmul %295, %434, %cst_271 {dimension_numbers = #tpu.dot_dimension_numbers<[1], [0], [0], [1], [0, 0, 1, 1], [], []>} : vector<16x32xf32>, vector<32x8xf32>, vector<16x8xf32> -> vector<16x8xf32>
    %450 = vector.broadcast %440 : vector<1x8xf32> to vector<16x8xf32>
    %451 = arith.addf %449, %450 : vector<16x8xf32>
    %452 = vector.shape_cast %451 : vector<16x8xf32> to vector<2x8x8xf32>
    "tpu.trace_start"() <{level = 10 : i32, message = "bqd,bkd->bqk"}> : () -> ()
    %cst_272 = arith.constant dense<0.000000e+00> : vector<2x8x8xf32>
    %453 = tpu.matmul %444, %448, %cst_272 {dimension_numbers = #tpu.dot_dimension_numbers<[2], [2], [1], [1], [0, 0, 0, 1, 1, 1], [0], [0]>} : vector<2x8x8xf32>, vector<2x8x8xf32>, vector<2x8x8xf32> -> vector<2x8x8xf32>
    "tpu.trace_stop"() : () -> ()
    %cst_273 = arith.constant 0.353553385 : f32
    %454 = vector.broadcast %cst_273 : f32 to vector<2x8x8xf32>
    %455 = arith.mulf %453, %454 : vector<2x8x8xf32>
    %cst_274 = arith.constant dense<0xFF800000> : vector<2x8xf32>
    %456 = vector.multi_reduction <maximumf>, %455, %cst_274 [2] : vector<2x8x8xf32> to vector<2x8xf32>
    %457 = vector.shape_cast %456 : vector<2x8xf32> to vector<2x8x1xf32>
    %458 = vector.broadcast %457 : vector<2x8x1xf32> to vector<2x8x8xf32>
    %459 = arith.subf %455, %458 : vector<2x8x8xf32>
    %460 = math.exp %459 : vector<2x8x8xf32>
    %cst_275 = arith.constant dense<0.000000e+00> : vector<2x8xf32>
    %461 = vector.multi_reduction <add>, %460, %cst_275 [2] : vector<2x8x8xf32> to vector<2x8xf32>
    %462 = vector.shape_cast %461 : vector<2x8xf32> to vector<2x8x1xf32>
    %463 = tpu.reciprocal %462 {approx = true} : vector<2x8x1xf32> -> vector<2x8x1xf32>
    %464 = vector.broadcast %463 : vector<2x8x1xf32> to vector<2x8x8xf32>
    %465 = arith.mulf %460, %464 : vector<2x8x8xf32>
    "tpu.trace_start"() <{level = 10 : i32, message = "bqk,bkd->bqd"}> : () -> ()
    %cst_276 = arith.constant dense<0.000000e+00> : vector<2x8x8xf32>
    %466 = tpu.matmul %465, %452, %cst_276 {dimension_numbers = #tpu.dot_dimension_numbers<[2], [1], [1], [2], [0, 0, 0, 1, 1, 2], [0], [0]>} : vector<2x8x8xf32>, vector<2x8x8xf32>, vector<2x8x8xf32> -> vector<2x8x8xf32>
    "tpu.trace_stop"() : () -> ()
    %467 = vector.shape_cast %466 : vector<2x8x8xf32> to vector<16x8xf32>
    %c7_277 = arith.constant 7 : index
    %c0_278 = arith.constant 0 : index
    %c0_279 = arith.constant 0 : index
    %468 = vector.load %arg6[%c7_277, %c0_278, %c0_279] : memref<8x8x32xf32, #tpu.memory_space<vmem>>, vector<1x8x32xf32>
    %469 = vector.shape_cast %468 : vector<1x8x32xf32> to vector<8x32xf32>
    %cst_280 = arith.constant dense<0.000000e+00> : vector<16x32xf32>
    %470 = tpu.matmul %467, %469, %cst_280 {dimension_numbers = #tpu.dot_dimension_numbers<[1], [0], [0], [1], [0, 0, 1, 1], [], []>} : vector<16x8xf32>, vector<8x32xf32>, vector<16x32xf32> -> vector<16x32xf32>
    %471 = arith.addf %428, %470 : vector<16x32xf32>
    %c13_281 = arith.constant 13 : index
    %c0_282 = arith.constant 0 : index
    %c0_283 = arith.constant 0 : index
    %472 = vector.load %arg10[%c13_281, %c0_282, %c0_283] : memref<18x1x32xf32, #tpu.memory_space<vmem>>, vector<1x1x32xf32>
    %473 = vector.shape_cast %472 : vector<1x1x32xf32> to vector<1x32xf32>
    %c14_284 = arith.constant 14 : index
    %c0_285 = arith.constant 0 : index
    %c0_286 = arith.constant 0 : index
    %474 = vector.load %arg10[%c14_284, %c0_285, %c0_286] : memref<18x1x32xf32, #tpu.memory_space<vmem>>, vector<1x1x32xf32>
    %475 = vector.shape_cast %474 : vector<1x1x32xf32> to vector<1x32xf32>
    %cst_287 = arith.constant dense<0.000000e+00> : vector<16xf32>
    %476 = vector.multi_reduction <add>, %471, %cst_287 [1] : vector<16x32xf32> to vector<16xf32>
    %477 = vector.shape_cast %476 : vector<16xf32> to vector<16x1xf32>
    %cst_288 = arith.constant 3.200000e+01 : f32
    %478 = vector.broadcast %cst_288 : f32 to vector<16x1xf32>
    %479 = arith.divf %477, %478 : vector<16x1xf32>
    %480 = vector.broadcast %479 : vector<16x1xf32> to vector<16x32xf32>
    %481 = arith.subf %471, %480 : vector<16x32xf32>
    %482 = arith.mulf %481, %481 : vector<16x32xf32>
    %cst_289 = arith.constant dense<0.000000e+00> : vector<16xf32>
    %483 = vector.multi_reduction <add>, %482, %cst_289 [1] : vector<16x32xf32> to vector<16xf32>
    %484 = vector.shape_cast %483 : vector<16xf32> to vector<16x1xf32>
    %cst_290 = arith.constant 3.200000e+01 : f32
    %485 = vector.broadcast %cst_290 : f32 to vector<16x1xf32>
    %486 = arith.divf %484, %485 : vector<16x1xf32>
    %cst_291 = arith.constant 9.99999996E-13 : f32
    %487 = vector.broadcast %cst_291 : f32 to vector<16x1xf32>
    %488 = arith.addf %486, %487 : vector<16x1xf32>
    %489 = math.rsqrt %488 : vector<16x1xf32>
    %490 = vector.broadcast %489 : vector<16x1xf32> to vector<16x32xf32>
    %491 = arith.mulf %481, %490 : vector<16x32xf32>
    %492 = vector.broadcast %473 : vector<1x32xf32> to vector<16x32xf32>
    %493 = arith.mulf %491, %492 : vector<16x32xf32>
    %494 = vector.broadcast %475 : vector<1x32xf32> to vector<16x32xf32>
    %495 = arith.addf %493, %494 : vector<16x32xf32>
    %c2_292 = arith.constant 2 : index
    %c0_293 = arith.constant 0 : index
    %c0_294 = arith.constant 0 : index
    %496 = vector.load %arg11[%c2_292, %c0_293, %c0_294] : memref<3x1x128xf32, #tpu.memory_space<vmem>>, vector<1x1x128xf32>
    %497 = vector.shape_cast %496 : vector<1x1x128xf32> to vector<1x128xf32>
    %498 = vector.extract_strided_slice %497 {offsets = [0, 0], sizes = [1, 64], strides = [1, 1]} : vector<1x128xf32> to vector<1x64xf32>
    %c1_295 = arith.constant 1 : index
    %c0_296 = arith.constant 0 : index
    %c0_297 = arith.constant 0 : index
    %499 = vector.load %arg7[%c1_295, %c0_296, %c0_297] : memref<2x32x64xf32, #tpu.memory_space<vmem>>, vector<1x32x64xf32>
    %500 = vector.shape_cast %499 : vector<1x32x64xf32> to vector<32x64xf32>
    %cst_298 = arith.constant dense<0.000000e+00> : vector<16x64xf32>
    %501 = tpu.matmul %495, %500, %cst_298 {dimension_numbers = #tpu.dot_dimension_numbers<[1], [0], [0], [1], [0, 0, 1, 1], [], []>} : vector<16x32xf32>, vector<32x64xf32>, vector<16x64xf32> -> vector<16x64xf32>
    %502 = vector.broadcast %498 : vector<1x64xf32> to vector<16x64xf32>
    %503 = arith.addf %501, %502 : vector<16x64xf32>
    %cst_299 = arith.constant 5.000000e-01 : f32
    %504 = vector.broadcast %cst_299 : f32 to vector<16x64xf32>
    %505 = arith.mulf %504, %503 : vector<16x64xf32>
    %cst_300 = arith.constant 4.471500e-02 : f32
    %506 = vector.broadcast %cst_300 : f32 to vector<16x64xf32>
    %507 = arith.mulf %506, %503 : vector<16x64xf32>
    %508 = arith.mulf %507, %503 : vector<16x64xf32>
    %509 = arith.mulf %508, %503 : vector<16x64xf32>
    %510 = arith.addf %503, %509 : vector<16x64xf32>
    %cst_301 = arith.constant 0.797884583 : f32
    %511 = vector.broadcast %cst_301 : f32 to vector<16x64xf32>
    %512 = arith.mulf %511, %510 : vector<16x64xf32>
    %513 = math.tanh %512 : vector<16x64xf32>
    %cst_302 = arith.constant 1.000000e+00 : f32
    %514 = vector.broadcast %cst_302 : f32 to vector<16x64xf32>
    %515 = arith.addf %514, %513 : vector<16x64xf32>
    %516 = arith.mulf %505, %515 : vector<16x64xf32>
    %c1_303 = arith.constant 1 : index
    %c0_304 = arith.constant 0 : index
    %c0_305 = arith.constant 0 : index
    %517 = vector.load %arg8[%c1_303, %c0_304, %c0_305] : memref<2x64x32xf32, #tpu.memory_space<vmem>>, vector<1x64x32xf32>
    %518 = vector.shape_cast %517 : vector<1x64x32xf32> to vector<64x32xf32>
    %cst_306 = arith.constant dense<0.000000e+00> : vector<16x32xf32>
    %519 = tpu.matmul %516, %518, %cst_306 {dimension_numbers = #tpu.dot_dimension_numbers<[1], [0], [0], [1], [0, 0, 1, 1], [], []>} : vector<16x64xf32>, vector<64x32xf32>, vector<16x32xf32> -> vector<16x32xf32>
    %c15_307 = arith.constant 15 : index
    %c0_308 = arith.constant 0 : index
    %c0_309 = arith.constant 0 : index
    %520 = vector.load %arg10[%c15_307, %c0_308, %c0_309] : memref<18x1x32xf32, #tpu.memory_space<vmem>>, vector<1x1x32xf32>
    %521 = vector.shape_cast %520 : vector<1x1x32xf32> to vector<1x32xf32>
    %522 = vector.broadcast %521 : vector<1x32xf32> to vector<16x32xf32>
    %523 = arith.addf %519, %522 : vector<16x32xf32>
    %524 = arith.addf %523, %495 : vector<16x32xf32>
    %c16_310 = arith.constant 16 : index
    %c0_311 = arith.constant 0 : index
    %c0_312 = arith.constant 0 : index
    %525 = vector.load %arg10[%c16_310, %c0_311, %c0_312] : memref<18x1x32xf32, #tpu.memory_space<vmem>>, vector<1x1x32xf32>
    %526 = vector.shape_cast %525 : vector<1x1x32xf32> to vector<1x32xf32>
    %c17_313 = arith.constant 17 : index
    %c0_314 = arith.constant 0 : index
    %c0_315 = arith.constant 0 : index
    %527 = vector.load %arg10[%c17_313, %c0_314, %c0_315] : memref<18x1x32xf32, #tpu.memory_space<vmem>>, vector<1x1x32xf32>
    %528 = vector.shape_cast %527 : vector<1x1x32xf32> to vector<1x32xf32>
    %cst_316 = arith.constant dense<0.000000e+00> : vector<16xf32>
    %529 = vector.multi_reduction <add>, %524, %cst_316 [1] : vector<16x32xf32> to vector<16xf32>
    %530 = vector.shape_cast %529 : vector<16xf32> to vector<16x1xf32>
    %cst_317 = arith.constant 3.200000e+01 : f32
    %531 = vector.broadcast %cst_317 : f32 to vector<16x1xf32>
    %532 = arith.divf %530, %531 : vector<16x1xf32>
    %533 = vector.broadcast %532 : vector<16x1xf32> to vector<16x32xf32>
    %534 = arith.subf %524, %533 : vector<16x32xf32>
    %535 = arith.mulf %534, %534 : vector<16x32xf32>
    %cst_318 = arith.constant dense<0.000000e+00> : vector<16xf32>
    %536 = vector.multi_reduction <add>, %535, %cst_318 [1] : vector<16x32xf32> to vector<16xf32>
    %537 = vector.shape_cast %536 : vector<16xf32> to vector<16x1xf32>
    %cst_319 = arith.constant 3.200000e+01 : f32
    %538 = vector.broadcast %cst_319 : f32 to vector<16x1xf32>
    %539 = arith.divf %537, %538 : vector<16x1xf32>
    %cst_320 = arith.constant 9.99999996E-13 : f32
    %540 = vector.broadcast %cst_320 : f32 to vector<16x1xf32>
    %541 = arith.addf %539, %540 : vector<16x1xf32>
    %542 = math.rsqrt %541 : vector<16x1xf32>
    %543 = vector.broadcast %542 : vector<16x1xf32> to vector<16x32xf32>
    %544 = arith.mulf %534, %543 : vector<16x32xf32>
    %545 = vector.broadcast %526 : vector<1x32xf32> to vector<16x32xf32>
    %546 = arith.mulf %544, %545 : vector<16x32xf32>
    %547 = vector.broadcast %528 : vector<1x32xf32> to vector<16x32xf32>
    %548 = arith.addf %546, %547 : vector<16x32xf32>
    %c0_321 = arith.constant 0 : index
    %c0_322 = arith.constant 0 : index
    %549 = vector.load %arg9[%c0_321, %c0_322] : memref<32x32xf32, #tpu.memory_space<vmem>>, vector<32x32xf32>
    %cst_323 = arith.constant dense<0.000000e+00> : vector<16x32xf32>
    %550 = tpu.matmul %548, %549, %cst_323 {dimension_numbers = #tpu.dot_dimension_numbers<[1], [0], [0], [1], [0, 0, 1, 1], [], []>} : vector<16x32xf32>, vector<32x32xf32>, vector<16x32xf32> -> vector<16x32xf32>
    %c3_324 = arith.constant 3 : index
    %c0_325 = arith.constant 0 : index
    %c0_326 = arith.constant 0 : index
    %551 = vector.load %arg10[%c3_324, %c0_325, %c0_326] : memref<18x1x32xf32, #tpu.memory_space<vmem>>, vector<1x1x32xf32>
    %552 = vector.shape_cast %551 : vector<1x1x32xf32> to vector<1x32xf32>
    %553 = vector.broadcast %552 : vector<1x32xf32> to vector<16x32xf32>
    %554 = arith.addf %550, %553 : vector<16x32xf32>
    %cst_327 = arith.constant 5.000000e-01 : f32
    %555 = vector.broadcast %cst_327 : f32 to vector<16x32xf32>
    %556 = arith.mulf %555, %554 : vector<16x32xf32>
    %cst_328 = arith.constant 4.471500e-02 : f32
    %557 = vector.broadcast %cst_328 : f32 to vector<16x32xf32>
    %558 = arith.mulf %557, %554 : vector<16x32xf32>
    %559 = arith.mulf %558, %554 : vector<16x32xf32>
    %560 = arith.mulf %559, %554 : vector<16x32xf32>
    %561 = arith.addf %554, %560 : vector<16x32xf32>
    %cst_329 = arith.constant 0.797884583 : f32
    %562 = vector.broadcast %cst_329 : f32 to vector<16x32xf32>
    %563 = arith.mulf %562, %561 : vector<16x32xf32>
    %564 = math.tanh %563 : vector<16x32xf32>
    %cst_330 = arith.constant 1.000000e+00 : f32
    %565 = vector.broadcast %cst_330 : f32 to vector<16x32xf32>
    %566 = arith.addf %565, %564 : vector<16x32xf32>
    %567 = arith.mulf %556, %566 : vector<16x32xf32>
    %c4_331 = arith.constant 4 : index
    %c0_332 = arith.constant 0 : index
    %c0_333 = arith.constant 0 : index
    %568 = vector.load %arg10[%c4_331, %c0_332, %c0_333] : memref<18x1x32xf32, #tpu.memory_space<vmem>>, vector<1x1x32xf32>
    %569 = vector.shape_cast %568 : vector<1x1x32xf32> to vector<1x32xf32>
    %c5_334 = arith.constant 5 : index
    %c0_335 = arith.constant 0 : index
    %c0_336 = arith.constant 0 : index
    %570 = vector.load %arg10[%c5_334, %c0_335, %c0_336] : memref<18x1x32xf32, #tpu.memory_space<vmem>>, vector<1x1x32xf32>
    %571 = vector.shape_cast %570 : vector<1x1x32xf32> to vector<1x32xf32>
    %cst_337 = arith.constant dense<0.000000e+00> : vector<16xf32>
    %572 = vector.multi_reduction <add>, %567, %cst_337 [1] : vector<16x32xf32> to vector<16xf32>
    %573 = vector.shape_cast %572 : vector<16xf32> to vector<16x1xf32>
    %cst_338 = arith.constant 3.200000e+01 : f32
    %574 = vector.broadcast %cst_338 : f32 to vector<16x1xf32>
    %575 = arith.divf %573, %574 : vector<16x1xf32>
    %576 = vector.broadcast %575 : vector<16x1xf32> to vector<16x32xf32>
    %577 = arith.subf %567, %576 : vector<16x32xf32>
    %578 = arith.mulf %577, %577 : vector<16x32xf32>
    %cst_339 = arith.constant dense<0.000000e+00> : vector<16xf32>
    %579 = vector.multi_reduction <add>, %578, %cst_339 [1] : vector<16x32xf32> to vector<16xf32>
    %580 = vector.shape_cast %579 : vector<16xf32> to vector<16x1xf32>
    %cst_340 = arith.constant 3.200000e+01 : f32
    %581 = vector.broadcast %cst_340 : f32 to vector<16x1xf32>
    %582 = arith.divf %580, %581 : vector<16x1xf32>
    %cst_341 = arith.constant 9.99999996E-13 : f32
    %583 = vector.broadcast %cst_341 : f32 to vector<16x1xf32>
    %584 = arith.addf %582, %583 : vector<16x1xf32>
    %585 = math.rsqrt %584 : vector<16x1xf32>
    %586 = vector.broadcast %585 : vector<16x1xf32> to vector<16x32xf32>
    %587 = arith.mulf %577, %586 : vector<16x32xf32>
    %588 = vector.broadcast %569 : vector<1x32xf32> to vector<16x32xf32>
    %589 = arith.mulf %587, %588 : vector<16x32xf32>
    %590 = vector.broadcast %571 : vector<1x32xf32> to vector<16x32xf32>
    %591 = arith.addf %589, %590 : vector<16x32xf32>
    %c0_342 = arith.constant 0 : index
    %c0_343 = arith.constant 0 : index
    %c0_344 = arith.constant 0 : index
    %592 = vector.load %arg11[%c0_342, %c0_343, %c0_344] : memref<3x1x128xf32, #tpu.memory_space<vmem>>, vector<1x1x128xf32>
    %593 = vector.shape_cast %592 : vector<1x1x128xf32> to vector<1x128xf32>
    %cst_345 = arith.constant dense<0.000000e+00> : vector<16x128xf32>
    %594 = tpu.matmul %591, %0, %cst_345 {dimension_numbers = #tpu.dot_dimension_numbers<[1], [1], [0], [0], [0, 0, 1, 0], [], []>} : vector<16x32xf32>, vector<128x32xf32>, vector<16x128xf32> -> vector<16x128xf32>
    %595 = vector.broadcast %593 : vector<1x128xf32> to vector<16x128xf32>
    %596 = arith.addf %594, %595 : vector<16x128xf32>
    %c0_346 = arith.constant 0 : index
    %c0_347 = arith.constant 0 : index
    %597 = vector.load %arg2[%c0_346, %c0_347] : memref<16x1xi32, #tpu.memory_space<vmem>>, vector<16x1xi32>
    %cst_348 = arith.constant dense<0xFF800000> : vector<16xf32>
    %598 = vector.multi_reduction <maximumf>, %596, %cst_348 [1] : vector<16x128xf32> to vector<16xf32>
    %599 = vector.shape_cast %598 : vector<16xf32> to vector<16x1xf32>
    %600 = vector.broadcast %599 : vector<16x1xf32> to vector<16x128xf32>
    %601 = arith.subf %596, %600 : vector<16x128xf32>
    %602 = math.exp %601 : vector<16x128xf32>
    %cst_349 = arith.constant dense<0.000000e+00> : vector<16xf32>
    %603 = vector.multi_reduction <add>, %602, %cst_349 [1] : vector<16x128xf32> to vector<16xf32>
    %604 = vector.shape_cast %603 : vector<16xf32> to vector<16x1xf32>
    %605 = math.log %604 : vector<16x1xf32>
    %606 = arith.addf %605, %599 : vector<16x1xf32>
    %607 = vector.broadcast %597 : vector<16x1xi32> to vector<16x128xi32>
    %608 = arith.cmpi eq, %3, %607 : vector<16x128xi32>
    %cst_350 = arith.constant 0.000000e+00 : f32
    %609 = vector.broadcast %cst_350 : f32 to vector<16x128xf32>
    %610 = arith.select %608, %596, %609 : vector<16x128xi1>, vector<16x128xf32>
    %cst_351 = arith.constant dense<0.000000e+00> : vector<16xf32>
    %611 = vector.multi_reduction <add>, %610, %cst_351 [1] : vector<16x128xf32> to vector<16xf32>
    %612 = vector.shape_cast %611 : vector<16xf32> to vector<16x1xf32>
    %c0_i32 = arith.constant 0 : i32
    %613 = vector.broadcast %c0_i32 : i32 to vector<16x1xi32>
    %614 = arith.cmpi sge, %597, %613 : vector<16x1xi32>
    %615 = arith.subf %606, %612 : vector<16x1xf32>
    %cst_352 = arith.constant 0.000000e+00 : f32
    %616 = vector.broadcast %cst_352 : f32 to vector<16x1xf32>
    %617 = arith.select %614, %615, %616 : vector<16x1xi1>, vector<16x1xf32>
    %cst_353 = arith.constant dense<0.000000e+00> : vector<1xf32>
    %618 = vector.multi_reduction <add>, %617, %cst_353 [0] : vector<16x1xf32> to vector<1xf32>
    %619 = vector.shape_cast %618 : vector<1xf32> to vector<1x1xf32>
    %cst_354 = arith.constant 6.250000e-02 : f32
    %620 = vector.broadcast %cst_354 : f32 to vector<1x1xf32>
    %621 = arith.mulf %619, %620 : vector<1x1xf32>
    %c0_355 = arith.constant 0 : index
    %c0_356 = arith.constant 0 : index
    %622 = vector.load %arg12[%c0_355, %c0_356] : memref<1x1xf32, #tpu.memory_space<vmem>>, vector<1x1xf32>
    tpu.vector_store %arg12[%c0_355, %c0_356], %621 {strides = array<i32>} : memref<1x1xf32, #tpu.memory_space<vmem>>, vector<1x1xf32>,
    return
  }
  func.func @transform_0(%arg0: i32) -> (i32, i32) {
    %c0_i32 = arith.constant 0 : i32
    %c0_i32_0 = arith.constant 0 : i32
    %c0_i32_1 = arith.constant 0 : i32
    return %c0_i32, %c0_i32_0 : i32, i32
  }
  func.func @transform_1(%arg0: i32) -> (i32, i32) {
    %c0_i32 = arith.constant 0 : i32
    %c0_i32_0 = arith.constant 0 : i32
    %c0_i32_1 = arith.constant 0 : i32
    return %c0_i32, %c0_i32_0 : i32, i32
  }
  func.func @transform_2(%arg0: i32) -> (i32, i32) {
    %c0_i32 = arith.constant 0 : i32
    %c0_i32_0 = arith.constant 0 : i32
    %c0_i32_1 = arith.constant 0 : i32
    return %c0_i32, %c0_i32_0 : i32, i32
  }
  func.func @transform_3(%arg0: i32) -> (i32, i32, i32) {
    %c0_i32 = arith.constant 0 : i32
    %c0_i32_0 = arith.constant 0 : i32
    %c0_i32_1 = arith.constant 0 : i32
    %c0_i32_2 = arith.constant 0 : i32
    return %c0_i32, %c0_i32_0, %c0_i32_1 : i32, i32, i32
  }
  func.func @transform_4(%arg0: i32) -> (i32, i32, i32) {
    %c0_i32 = arith.constant 0 : i32
    %c0_i32_0 = arith.constant 0 : i32
    %c0_i32_1 = arith.constant 0 : i32
    %c0_i32_2 = arith.constant 0 : i32
    return %c0_i32, %c0_i32_0, %c0_i32_1 : i32, i32, i32
  }
  func.func @transform_5(%arg0: i32) -> (i32, i32, i32) {
    %c0_i32 = arith.constant 0 : i32
    %c0_i32_0 = arith.constant 0 : i32
    %c0_i32_1 = arith.constant 0 : i32
    %c0_i32_2 = arith.constant 0 : i32
    return %c0_i32, %c0_i32_0, %c0_i32_1 : i32, i32, i32
  }
  func.func @transform_6(%arg0: i32) -> (i32, i32, i32) {
    %c0_i32 = arith.constant 0 : i32
    %c0_i32_0 = arith.constant 0 : i32
    %c0_i32_1 = arith.constant 0 : i32
    %c0_i32_2 = arith.constant 0 : i32
    return %c0_i32, %c0_i32_0, %c0_i32_1 : i32, i32, i32
  }
  func.func @transform_7(%arg0: i32) -> (i32, i32, i32) {
    %c0_i32 = arith.constant 0 : i32
    %c0_i32_0 = arith.constant 0 : i32
    %c0_i32_1 = arith.constant 0 : i32
    %c0_i32_2 = arith.constant 0 : i32
    return %c0_i32, %c0_i32_0, %c0_i32_1 : i32, i32, i32
  }
  func.func @transform_8(%arg0: i32) -> (i32, i32) {
    %c0_i32 = arith.constant 0 : i32
    %c0_i32_0 = arith.constant 0 : i32
    %c0_i32_1 = arith.constant 0 : i32
    return %c0_i32, %c0_i32_0 : i32, i32
  }
  func.func @transform_9(%arg0: i32) -> (i32, i32, i32) {
    %c0_i32 = arith.constant 0 : i32
    %c0_i32_0 = arith.constant 0 : i32
    %c0_i32_1 = arith.constant 0 : i32
    %c0_i32_2 = arith.constant 0 : i32
    return %c0_i32, %c0_i32_0, %c0_i32_1 : i32, i32, i32
  }
  func.func @transform_10(%arg0: i32) -> (i32, i32, i32) {
    %c0_i32 = arith.constant 0 : i32
    %c0_i32_0 = arith.constant 0 : i32
    %c0_i32_1 = arith.constant 0 : i32
    %c0_i32_2 = arith.constant 0 : i32
    return %c0_i32, %c0_i32_0, %c0_i32_1 : i32, i32, i32
  }
  func.func @transform_11(%arg0: i32) -> (i32, i32) {
    %c0_i32 = arith.constant 0 : i32
    %c0_i32_0 = arith.constant 0 : i32
    %c0_i32_1 = arith.constant 0 : i32
    return %c0_i32, %c0_i32_0 : i32, i32
  }
}

</mosaic_0001>

<llo_original>
// kernel: pretrained_bert_forward.1
$region0: #{pretrained_bert_forward.1}
  #allocation0 [shape = 'u32[]', space=smem, size = 0x4, offset = 0x4, fixed_abs, tag = 'smem constant byte address 0x4 - core index']
  #allocation1 [shape = 'u32[144,128]{1,0:T(1,128)}', space=vmem, size = 0x12000, scoped, tag = 'internal scratch']
  %s0 = inlined_call_operand.vmem [shape: s32[16,1], index: 0, kind: input, shape index: {}]
  %s1 = inlined_call_operand.vmem [shape: s32[16,1], index: 1, kind: input, shape index: {}]
  %s2 = inlined_call_operand.vmem [shape: f32[160,32], index: 2, kind: input, shape index: {}]
  %s3 = inlined_call_operand.vmem [shape: f32[24,32,8], index: 3, kind: input, shape index: {}]
  %s4 = inlined_call_operand.vmem [shape: f32[24,1,8], index: 4, kind: input, shape index: {}]
  %s5 = inlined_call_operand.vmem [shape: f32[8,8,32], index: 5, kind: input, shape index: {}]
  %s6 = inlined_call_operand.vmem [shape: f32[2,32,64], index: 6, kind: input, shape index: {}]
  %s7 = inlined_call_operand.vmem [shape: f32[2,64,32], index: 7, kind: input, shape index: {}]
  %s8 = inlined_call_operand.vmem [shape: f32[32,32], index: 8, kind: input, shape index: {}]
  %s9 = inlined_call_operand.vmem [shape: f32[18,1,32], index: 9, kind: input, shape index: {}]
  %s10 = inlined_call_operand.vmem [shape: f32[3,1,128], index: 10, kind: input, shape index: {}]
  %s11 = inlined_call_operand.hbm [shape: f32[1,1], index: 11, kind: output, shape index: {}]
  %s12 = sld [smem:[#allocation0]]
  $region54: #{pretrained_bert_forward.1} parent=0
    _
  %s14 = ssub.s32 1, %s12
  %s15 = scalar_select 0, %s14, %s12
  $region1: #{pretrained_bert_forward.1} parent=0
    #allocation2 [shape = 'u8[512]{0}', space=vmem, size = 0x400, scoped, tag = 'output window, operand 0, single buffered']
    #allocation3 [shape = 's32[1]{0}', space=sflag, size = 0x4, scoped, tag = 'scoped memory for pretrained_bert_forward.1']
    %16 = vsyncpa [#allocation3], 0
    // Predicated region
    $region2: #{pretrained_bert_forward.1} parent=1 // pred_check
      _
    $region3: #{pretrained_bert_forward.1} parent=1 // pred_check_branch
      %18 = sbr.rel (0) target = $region5
    $region4: #{pretrained_bert_forward.1} parent=1 // pred_region
      _
    $region5: #{pretrained_bert_forward.1} parent=1 // pred_fallthru
      _
    // Predicated region
    $region6: #{pretrained_bert_forward.1} parent=1 // pred_check
      _
    $region7: #{pretrained_bert_forward.1} parent=1 // pred_check_branch
      %20 = sbr.rel (0) target = $region9
    $region8: #{pretrained_bert_forward.1} parent=1 // pred_region
      _
    $region9: #{pretrained_bert_forward.1} parent=1 // pred_fallthru
      _
    // Predicated region
    $region10: #{pretrained_bert_forward.1} parent=1 // pred_check
      _
    $region11: #{pretrained_bert_forward.1} parent=1 // pred_check_branch
      %22 = sbr.rel (0) target = $region13
    $region12: #{pretrained_bert_forward.1} parent=1 // pred_region
      _
    $region13: #{pretrained_bert_forward.1} parent=1 // pred_fallthru
      _
    // Predicated region
    $region14: #{pretrained_bert_forward.1} parent=1 // pred_check
      _
    $region15: #{pretrained_bert_forward.1} parent=1 // pred_check_branch
      %24 = sbr.rel (0) target = $region17
    $region16: #{pretrained_bert_forward.1} parent=1 // pred_region
      _
    $region17: #{pretrained_bert_forward.1} parent=1 // pred_fallthru
      _
    // Predicated region
    $region18: #{pretrained_bert_forward.1} parent=1 // pred_check
      _
    $region19: #{pretrained_bert_forward.1} parent=1 // pred_check_branch
      %26 = sbr.rel (0) target = $region21
    $region20: #{pretrained_bert_forward.1} parent=1 // pred_region
      _
    $region21: #{pretrained_bert_forward.1} parent=1 // pred_fallthru
      _
    // Predicated region
    $region22: #{pretrained_bert_forward.1} parent=1 // pred_check
      _
    $region23: #{pretrained_bert_forward.1} parent=1 // pred_check_branch
      %28 = sbr.rel (0) target = $region25
    $region24: #{pretrained_bert_forward.1} parent=1 // pred_region
      _
    $region25: #{pretrained_bert_forward.1} parent=1 // pred_fallthru
      _
    // Predicated region
    $region26: #{pretrained_bert_forward.1} parent=1 // pred_check
      _
    $region27: #{pretrained_bert_forward.1} parent=1 // pred_check_branch
      %30 = sbr.rel (0) target = $region29
    $region28: #{pretrained_bert_forward.1} parent=1 // pred_region
      _
    $region29: #{pretrained_bert_forward.1} parent=1 // pred_fallthru
      _
    // Predicated region
    $region30: #{pretrained_bert_forward.1} parent=1 // pred_check
      _
    $region31: #{pretrained_bert_forward.1} parent=1 // pred_check_branch
      %32 = sbr.rel (0) target = $region33
    $region32: #{pretrained_bert_forward.1} parent=1 // pred_region
      _
    $region33: #{pretrained_bert_forward.1} parent=1 // pred_fallthru
      _
    // Predicated region
    $region34: #{pretrained_bert_forward.1} parent=1 // pred_check
      _
    $region35: #{pretrained_bert_forward.1} parent=1 // pred_check_branch
      %34 = sbr.rel (0) target = $region37
    $region36: #{pretrained_bert_forward.1} parent=1 // pred_region
      _
    $region37: #{pretrained_bert_forward.1} parent=1 // pred_fallthru
      _
    // Predicated region
    $region38: #{pretrained_bert_forward.1} parent=1 // pred_check
      _
    $region39: #{pretrained_bert_forward.1} parent=1 // pred_check_branch
      %36 = sbr.rel (0) target = $region41
    $region40: #{pretrained_bert_forward.1} parent=1 // pred_region
      _
    $region41: #{pretrained_bert_forward.1} parent=1 // pred_fallthru
      _
    // Predicated region
    $region42: #{pretrained_bert_forward.1} parent=1 // pred_check
      _
    $region43: #{pretrained_bert_forward.1} parent=1 // pred_check_branch
      %38 = sbr.rel (0) target = $region45
    $region44: #{pretrained_bert_forward.1} parent=1 // pred_region
      _
    $region45: #{pretrained_bert_forward.1} parent=1 // pred_fallthru
      _
    %v39 = vld [vmem:[%s2] sm:$0xff]
    %v40 = vld [vmem:[%s2 + $0x8] sm:$0xff]
    %v41 = vld [vmem:[%s2 + $0x10] sm:$0xff]
    %v42 = vld [vmem:[%s2 + $0x18] sm:$0xff]
    %v43 = vld [vmem:[%s2 + $0x20] sm:$0xff]
    %v44 = vld [vmem:[%s2 + $0x28] sm:$0xff]
    %v45 = vld [vmem:[%s2 + $0x30] sm:$0xff]
    %v46 = vld [vmem:[%s2 + $0x38] sm:$0xff]
    %v47 = vld [vmem:[%s2 + $0x40] sm:$0xff]
    %v48 = vld [vmem:[%s2 + $0x48] sm:$0xff]
    %v49 = vld [vmem:[%s2 + $0x50] sm:$0xff]
    %v50 = vld [vmem:[%s2 + $0x58] sm:$0xff]
    %v51 = vld [vmem:[%s2 + $0x60] sm:$0xff]
    %v52 = vld [vmem:[%s2 + $0x68] sm:$0xff]
    %v53 = vld [vmem:[%s2 + $0x70] sm:$0xff]
    %v54 = vld [vmem:[%s2 + $0x78] sm:$0xff]
    %v55 = vld [vmem:[%s2 + $0x80] sm:$0xff]
    %v56 = vld [vmem:[%s0] sm:$0xff]
    %v57 = vld [vmem:[%s0 + $0x8] sm:$0xff]
    %v58 = vlaneseq
    %v59 = vand.u32 %v58, 127
    %60 = vset.pattern.permute.xlu0 0
    %61 = vperm.xlu0 %60, %v56
    %v62 = vpop.permute.xlu0 %61
    %63 = vset.pattern.permute.xlu0 0
    %64 = vperm.xlu0 %63, %v57
    %v65 = vpop.permute.xlu0 %64
    %vm66 = vcmp.eq.s32.totalorder %v59, %v62
    %vm67 = vcmp.eq.s32.totalorder %v59, %v65
    %v68 = vsel %vm66, 1, 0
    %v69 = vsel %vm67, 1, 0
    %v70 = vcvt.s32.f32 %v68
    %v71 = vcvt.s32.f32 %v69
    %72 = vmatprep.subr.mxu0 0.0
    %73 = vmatpush1.msra.mxu0 %v54
    %74 = vmatprep.subr.mxu0 0.0
    %75 = vmatpush1.msra.mxu0 %v53
    %76 = vmatprep.subr.mxu0 0.0
    %77 = vmatpush1.msra.mxu0 %v52
    %78 = vmatprep.subr.mxu0 0.0
    %79 = vmatpush1.msra.mxu0 %v51
    %80 = vmatprep.subr.mxu0 0.0
    %81 = vmatpush1.msra.mxu0 %v50
    %82 = vmatprep.subr.mxu0 0.0
    %83 = vmatpush1.msra.mxu0 %v49
    %84 = vmatprep.subr.mxu0 0.0
    %85 = vmatpush1.msra.mxu0 %v48
    %86 = vmatprep.subr.mxu0 0.0
    %87 = vmatpush1.msra.mxu0 %v47
    %88 = vmatprep.subr.mxu0 0.0
    %89 = vmatpush1.msra.mxu0 %v46
    %90 = vmatprep.subr.mxu0 0.0
    %91 = vmatpush1.msra.mxu0 %v45
    %92 = vmatprep.subr.mxu0 0.0
    %93 = vmatpush1.msra.mxu0 %v44
    %94 = vmatprep.subr.mxu0 0.0
    %95 = vmatpush1.msra.mxu0 %v43
    %96 = vmatprep.subr.mxu0 0.0
    %97 = vmatpush1.msra.mxu0 %v42
    %98 = vmatprep.subr.mxu0 0.0
    %99 = vmatpush1.msra.mxu0 %v41
    %100 = vmatprep.subr.mxu0 0.0
    %101 = vmatpush1.msra.mxu0 %v40
    %102 = vmatprep.subr.mxu0 0.0
    %103 = vmatpush1.msra.mxu0 %v39
    %104 = vmatprep.subr.mxu0 0.0
    %105 = vmatpush2.msra.mxu0 0.0
    %106 = vmatprep.subr.mxu0 0.0
    %107 = vmatpush2.msra.mxu0 0.0
    %108 = vmatprep.subr.mxu0 0.0
    %109 = vmatpush2.msra.mxu0 0.0
    %110 = vmatprep.subr.mxu0 0.0
    %111 = vmatpush2.msra.mxu0 0.0
    %112 = vmatprep.subr.mxu0 0.0
    %113 = vmatpush2.msra.mxu0 0.0
    %114 = vmatprep.subr.mxu0 0.0
    %115 = vmatpush2.msra.mxu0 0.0
    %116 = vmatprep.subr.mxu0 0.0
    %117 = vmatpush2.msra.mxu0 0.0
    %118 = vmatprep.subr.mxu0 0.0
    %119 = vmatpush2.msra.mxu0 0.0
    %120 = vmatprep.subr.mxu0 0.0
    %121 = vmatpush2.msra.mxu0 0.0
    %122 = vmatprep.subr.mxu0 0.0
    %123 = vmatpush2.msra.mxu0 0.0
    %124 = vmatprep.subr.mxu0 0.0
    %125 = vmatpush2.msra.mxu0 0.0
    %126 = vmatprep.subr.mxu0 0.0
    %127 = vmatpush2.msra.mxu0 0.0
    %128 = vmatprep.subr.mxu0 0.0
    %129 = vmatpush2.msra.mxu0 0.0
    %130 = vmatprep.subr.mxu0 0.0
    %131 = vmatpush2.msra.mxu0 0.0
    %132 = vmatprep.subr.mxu0 0.0
    %133 = vmatpush2.msra.mxu0 0.0
    %134 = vmatprep.subr.mxu0 0.0
    %135 = vmatpush2.msra.mxu0 0.0
    %136 = vmatprep.mubr.f32.mxu0 0.0
    %137 = vmatmul.mubr.f32.gmra.mxu0 %v70
    %v138 = vpop.f32.mrf.mxu0
    %v139 = vadd.f32 0.0, %v138
    %v140 = vpop.f32.mrf.mxu0
    %141 = vmatprep.mubr.f32.mxu0 0.0
    %142 = vmatmul.mubr.f32.gmra.mxu0 %v71
    %v143 = vpop.f32.mrf.mxu0
    %v144 = vadd.f32 0.0, %v143
    %v145 = vpop.f32.mrf.mxu0
    %146 = vdwg.mxu0
    %v147 = vadd.f32 %v139, %v55
    %v148 = vadd.f32 %v144, %v55
    %s149 = scalar_lea.vmem %s9, 2
    %v150 = vld [vmem:[%s149] sm:$0x1]
    %v152 = vlaneseq
    %v153 = vshrl.u32 %v152, 7
    %v154 = vsub.s32 0, %v153
    %v155 = vrot.slane %v150, %v154
    %v157 = vadd.f32 %v147, %v155
    %v158 = vadd.f32 %v148, %v155
    %v159 = vld [vmem:[%s9] sm:$0x1]
    %s160 = scalar_lea.vmem %s9, 1
    %v161 = vld [vmem:[%s160] sm:$0x1]
    %vm162 = vcmask 261120
    %v163 = vsel %vm162, %v157, 0.0
    %164 = vadd.xlane.f32.xlu0 %v163
    %v165 = vpop.xlane.xlu0 %164
    %v166 = vsel %vm162, %v158, 0.0
    %167 = vadd.xlane.f32.xlu0 %v166
    %v168 = vpop.xlane.xlu0 %167
    %v169 = vrcp.pop 32.0
    %v170 = vmul.f32 %v165, %v169
    %v171 = vmul.f32 %v168, %v169
    %v172 = vsub.f32 %v157, %v170
    %v173 = vsub.f32 %v158, %v171
    %v174 = vmul.f32 %v172, %v172
    %v175 = vmul.f32 %v173, %v173
    %v176 = vsel %vm162, %v174, 0.0
    %177 = vadd.xlane.f32.xlu0 %v176
    %v178 = vpop.xlane.xlu0 %177
    %v179 = vsel %vm162, %v175, 0.0
    %180 = vadd.xlane.f32.xlu0 %v179
    %v181 = vpop.xlane.xlu0 %180
    %v182 = vmul.f32 %v178, %v169
    %v183 = vmul.f32 %v181, %v169
    %v184 = vadd.f32 %v182, 1e-12
    %v185 = vadd.f32 %v183, 1e-12
    %v186 = vrsqrt.pop %v184
    %v187 = vrsqrt.pop %v185
    %v188 = vmul.f32 %v172, %v186
    %v189 = vmul.f32 %v173, %v187
    %v191 = vlaneseq
    %v192 = vshrl.u32 %v191, 7
    %v193 = vsub.s32 0, %v192
    %v194 = vrot.slane %v159, %v193
    %v196 = vmul.f32 %v188, %v194
    %v197 = vmul.f32 %v189, %v194
    %v199 = vlaneseq
    %v200 = vshrl.u32 %v199, 7
    %v201 = vsub.s32 0, %v200
    %v202 = vrot.slane %v161, %v201
    %v204 = vadd.f32 %v196, %v202
    %v205 = vadd.f32 %v197, %v202
    %s206 = scalar_lea.vmem %s9, 6
    %v207 = vld [vmem:[%s206] sm:$0x1]
    %v209 = vlaneseq
    %v210 = vshrl.u32 %v209, 7
    %v211 = vsub.s32 0, %v210
    %v212 = vrot.slane %v207, %v211
    %v214 = vadd.f32 %v204, %v212
    %v215 = vadd.f32 %v205, %v212
    %v216 = vld [vmem:[%s3] sm:$0xff]
    %v217 = vld [vmem:[%s3 + $0x8] sm:$0xff]
    %v218 = vld [vmem:[%s3 + $0x10] sm:$0xff]
    %v219 = vld [vmem:[%s3 + $0x18] sm:$0xff]
    %s220 = scalar_lea.vmem %s3, 128
    %v221 = vld [vmem:[%s220] sm:$0xff]
    %v222 = vld [vmem:[%s220 + $0x8] sm:$0xff]
    %v223 = vld [vmem:[%s220 + $0x10] sm:$0xff]
    %v224 = vld [vmem:[%s220 + $0x18] sm:$0xff]
    %s225 = scalar_lea.vmem %s3, 256
    %v226 = vld [vmem:[%s225] sm:$0xff]
    %v227 = vld [vmem:[%s225 + $0x8] sm:$0xff]
    %v228 = vld [vmem:[%s225 + $0x10] sm:$0xff]
    %v229 = vld [vmem:[%s225 + $0x18] sm:$0xff]
    %v230 = vld [vmem:[%s4] sm:$0x1]
    %s231 = scalar_lea.vmem %s4, 4
    %v232 = vld [vmem:[%s231] sm:$0x1]
    %s233 = scalar_lea.vmem %s4, 8
    %v234 = vld [vmem:[%s233] sm:$0x1]
    %v236 = vlaneseq
    %v237 = vshrl.u32 %v236, 7
    %v238 = vsub.s32 0, %v237
    %v239 = vrot.slane %v230, %v238
    %v242 = vsel %vm162, %v204, 0
    %v245 = vsel %vm162, %v205, 0
    %247 = vmatprep.subr.mxu0 0.0
    %248 = vmatpush1.msra.mxu0 0.0
    %249 = vmatprep.subr.mxu0 0.0
    %250 = vmatpush1.msra.mxu0 0.0
    %251 = vmatprep.subr.mxu0 0.0
    %252 = vmatpush1.msra.mxu0 0.0
    %253 = vmatprep.subr.mxu0 0.0
    %254 = vmatpush1.msra.mxu0 0.0
    %255 = vmatprep.subr.mxu0 0.0
    %256 = vmatpush1.msra.mxu0 0.0
    %257 = vmatprep.subr.mxu0 0.0
    %258 = vmatpush1.msra.mxu0 0.0
    %259 = vmatprep.subr.mxu0 0.0
    %260 = vmatpush1.msra.mxu0 0.0
    %261 = vmatprep.subr.mxu0 0.0
    %262 = vmatpush1.msra.mxu0 0.0
    %263 = vmatprep.subr.mxu0 0.0
    %264 = vmatpush1.msra.mxu0 0.0
    %265 = vmatprep.subr.mxu0 0.0
    %266 = vmatpush1.msra.mxu0 0.0
    %267 = vmatprep.subr.mxu0 0.0
    %268 = vmatpush1.msra.mxu0 0.0
    %269 = vmatprep.subr.mxu0 0.0
    %270 = vmatpush1.msra.mxu0 0.0
    %271 = vmatprep.subr.mxu0 0.0
    %272 = vmatpush1.msra.mxu0 %v219
    %273 = vmatprep.subr.mxu0 0.0
    %274 = vmatpush1.msra.mxu0 %v218
    %275 = vmatprep.subr.mxu0 0.0
    %276 = vmatpush1.msra.mxu0 %v217
    %277 = vmatprep.subr.mxu0 0.0
    %278 = vmatpush1.msra.mxu0 %v216
    %279 = vmatprep.subr.mxu0 0.0
    %280 = vmatpush2.msra.mxu0 0.0
    %281 = vmatprep.subr.mxu0 0.0
    %282 = vmatpush2.msra.mxu0 0.0
    %283 = vmatprep.subr.mxu0 0.0
    %284 = vmatpush2.msra.mxu0 0.0
    %285 = vmatprep.subr.mxu0 0.0
    %286 = vmatpush2.msra.mxu0 0.0
    %287 = vmatprep.subr.mxu0 0.0
    %288 = vmatpush2.msra.mxu0 0.0
    %289 = vmatprep.subr.mxu0 0.0
    %290 = vmatpush2.msra.mxu0 0.0
    %291 = vmatprep.subr.mxu0 0.0
    %292 = vmatpush2.msra.mxu0 0.0
    %293 = vmatprep.subr.mxu0 0.0
    %294 = vmatpush2.msra.mxu0 0.0
    %295 = vmatprep.subr.mxu0 0.0
    %296 = vmatpush2.msra.mxu0 0.0
    %297 = vmatprep.subr.mxu0 0.0
    %298 = vmatpush2.msra.mxu0 0.0
    %299 = vmatprep.subr.mxu0 0.0
    %300 = vmatpush2.msra.mxu0 0.0
    %301 = vmatprep.subr.mxu0 0.0
    %302 = vmatpush2.msra.mxu0 0.0
    %303 = vmatprep.subr.mxu0 0.0
    %304 = vmatpush2.msra.mxu0 0.0
    %305 = vmatprep.subr.mxu0 0.0
    %306 = vmatpush2.msra.mxu0 0.0
    %307 = vmatprep.subr.mxu0 0.0
    %308 = vmatpush2.msra.mxu0 0.0
    %309 = vmatprep.subr.mxu0 0.0
    %310 = vmatpush2.msra.mxu0 0.0
    %311 = vmatprep.mubr.f32.mxu0 0.0
    %312 = vmatmul.mubr.f32.gmra.mxu0 %v242
    %v313 = vpop.f32.mrf.mxu0
    %v314 = vadd.f32 %v239, %v313
    %v315 = vpop.f32.mrf.mxu0
    %316 = vmatprep.mubr.f32.mxu0 0.0
    %317 = vmatmul.mubr.f32.gmra.mxu0 %v245
    %v318 = vpop.f32.mrf.mxu0
    %v319 = vadd.f32 %v239, %v318
    %v320 = vpop.f32.mrf.mxu0
    %321 = vdwg.mxu0
    %v323 = vlaneseq
    %v324 = vshrl.u32 %v323, 7
    %v325 = vsub.s32 0, %v324
    %v326 = vrot.slane %v232, %v325
    %328 = vmatprep.subr.mxu0 0.0
    %329 = vmatpush1.msra.mxu0 0.0
    %330 = vmatprep.subr.mxu0 0.0
    %331 = vmatpush1.msra.mxu0 0.0
    %332 = vmatprep.subr.mxu0 0.0
    %333 = vmatpush1.msra.mxu0 0.0
    %334 = vmatprep.subr.mxu0 0.0
    %335 = vmatpush1.msra.mxu0 0.0
    %336 = vmatprep.subr.mxu0 0.0
    %337 = vmatpush1.msra.mxu0 0.0
    %338 = vmatprep.subr.mxu0 0.0
    %339 = vmatpush1.msra.mxu0 0.0
    %340 = vmatprep.subr.mxu0 0.0
    %341 = vmatpush1.msra.mxu0 0.0
    %342 = vmatprep.subr.mxu0 0.0
    %343 = vmatpush1.msra.mxu0 0.0
    %344 = vmatprep.subr.mxu0 0.0
    %345 = vmatpush1.msra.mxu0 0.0
    %346 = vmatprep.subr.mxu0 0.0
    %347 = vmatpush1.msra.mxu0 0.0
    %348 = vmatprep.subr.mxu0 0.0
    %349 = vmatpush1.msra.mxu0 0.0
    %350 = vmatprep.subr.mxu0 0.0
    %351 = vmatpush1.msra.mxu0 0.0
    %352 = vmatprep.subr.mxu0 0.0
    %353 = vmatpush1.msra.mxu0 %v224
    %354 = vmatprep.subr.mxu0 0.0
    %355 = vmatpush1.msra.mxu0 %v223
    %356 = vmatprep.subr.mxu0 0.0
    %357 = vmatpush1.msra.mxu0 %v222
    %358 = vmatprep.subr.mxu0 0.0
    %359 = vmatpush1.msra.mxu0 %v221
    %360 = vmatprep.subr.mxu0 0.0
    %361 = vmatpush2.msra.mxu0 0.0
    %362 = vmatprep.subr.mxu0 0.0
    %363 = vmatpush2.msra.mxu0 0.0
    %364 = vmatprep.subr.mxu0 0.0
    %365 = vmatpush2.msra.mxu0 0.0
    %366 = vmatprep.subr.mxu0 0.0
    %367 = vmatpush2.msra.mxu0 0.0
    %368 = vmatprep.subr.mxu0 0.0
    %369 = vmatpush2.msra.mxu0 0.0
    %370 = vmatprep.subr.mxu0 0.0
    %371 = vmatpush2.msra.mxu0 0.0
    %372 = vmatprep.subr.mxu0 0.0
    %373 = vmatpush2.msra.mxu0 0.0
    %374 = vmatprep.subr.mxu0 0.0
    %375 = vmatpush2.msra.mxu0 0.0
    %376 = vmatprep.subr.mxu0 0.0
    %377 = vmatpush2.msra.mxu0 0.0
    %378 = vmatprep.subr.mxu0 0.0
    %379 = vmatpush2.msra.mxu0 0.0
    %380 = vmatprep.subr.mxu0 0.0
    %381 = vmatpush2.msra.mxu0 0.0
    %382 = vmatprep.subr.mxu0 0.0
    %383 = vmatpush2.msra.mxu0 0.0
    %384 = vmatprep.subr.mxu0 0.0
    %385 = vmatpush2.msra.mxu0 0.0
    %386 = vmatprep.subr.mxu0 0.0
    %387 = vmatpush2.msra.mxu0 0.0
    %388 = vmatprep.subr.mxu0 0.0
    %389 = vmatpush2.msra.mxu0 0.0
    %390 = vmatprep.subr.mxu0 0.0
    %391 = vmatpush2.msra.mxu0 0.0
    %392 = vmatprep.mubr.f32.mxu0 0.0
    %393 = vmatmul.mubr.f32.gmra.mxu0 %v242
    %v394 = vpop.f32.mrf.mxu0
    %v395 = vadd.f32 %v326, %v394
    %v396 = vpop.f32.mrf.mxu0
    %397 = vmatprep.mubr.f32.mxu0 0.0
    %398 = vmatmul.mubr.f32.gmra.mxu0 %v245
    %v399 = vpop.f32.mrf.mxu0
    %v400 = vadd.f32 %v326, %v399
    %v401 = vpop.f32.mrf.mxu0
    %402 = vdwg.mxu0
    %v404 = vlaneseq
    %v405 = vshrl.u32 %v404, 7
    %v406 = vsub.s32 0, %v405
    %v407 = vrot.slane %v234, %v406
    %409 = vmatprep.subr.mxu0 0.0
    %410 = vmatpush1.msra.mxu0 0.0
    %411 = vmatprep.subr.mxu0 0.0
    %412 = vmatpush1.msra.mxu0 0.0
    %413 = vmatprep.subr.mxu0 0.0
    %414 = vmatpush1.msra.mxu0 0.0
    %415 = vmatprep.subr.mxu0 0.0
    %416 = vmatpush1.msra.mxu0 0.0
    %417 = vmatprep.subr.mxu0 0.0
    %418 = vmatpush1.msra.mxu0 0.0
    %419 = vmatprep.subr.mxu0 0.0
    %420 = vmatpush1.msra.mxu0 0.0
    %421 = vmatprep.subr.mxu0 0.0
    %422 = vmatpush1.msra.mxu0 0.0
    %423 = vmatprep.subr.mxu0 0.0
    %424 = vmatpush1.msra.mxu0 0.0
    %425 = vmatprep.subr.mxu0 0.0
    %426 = vmatpush1.msra.mxu0 0.0
    %427 = vmatprep.subr.mxu0 0.0
    %428 = vmatpush1.msra.mxu0 0.0
    %429 = vmatprep.subr.mxu0 0.0
    %430 = vmatpush1.msra.mxu0 0.0
    %431 = vmatprep.subr.mxu0 0.0
    %432 = vmatpush1.msra.mxu0 0.0
    %433 = vmatprep.subr.mxu0 0.0
    %434 = vmatpush1.msra.mxu0 %v229
    %435 = vmatprep.subr.mxu0 0.0
    %436 = vmatpush1.msra.mxu0 %v228
    %437 = vmatprep.subr.mxu0 0.0
    %438 = vmatpush1.msra.mxu0 %v227
    %439 = vmatprep.subr.mxu0 0.0
    %440 = vmatpush1.msra.mxu0 %v226
    %441 = vmatprep.subr.mxu0 0.0
    %442 = vmatpush2.msra.mxu0 0.0
    %443 = vmatprep.subr.mxu0 0.0
    %444 = vmatpush2.msra.mxu0 0.0
    %445 = vmatprep.subr.mxu0 0.0
    %446 = vmatpush2.msra.mxu0 0.0
    %447 = vmatprep.subr.mxu0 0.0
    %448 = vmatpush2.msra.mxu0 0.0
    %449 = vmatprep.subr.mxu0 0.0
    %450 = vmatpush2.msra.mxu0 0.0
    %451 = vmatprep.subr.mxu0 0.0
    %452 = vmatpush2.msra.mxu0 0.0
    %453 = vmatprep.subr.mxu0 0.0
    %454 = vmatpush2.msra.mxu0 0.0
    %455 = vmatprep.subr.mxu0 0.0
    %456 = vmatpush2.msra.mxu0 0.0
    %457 = vmatprep.subr.mxu0 0.0
    %458 = vmatpush2.msra.mxu0 0.0
    %459 = vmatprep.subr.mxu0 0.0
    %460 = vmatpush2.msra.mxu0 0.0
    %461 = vmatprep.subr.mxu0 0.0
    %462 = vmatpush2.msra.mxu0 0.0
    %463 = vmatprep.subr.mxu0 0.0
    %464 = vmatpush2.msra.mxu0 0.0
    %465 = vmatprep.subr.mxu0 0.0
    %466 = vmatpush2.msra.mxu0 0.0
    %467 = vmatprep.subr.mxu0 0.0
    %468 = vmatpush2.msra.mxu0 0.0
    %469 = vmatprep.subr.mxu0 0.0
    %470 = vmatpush2.msra.mxu0 0.0
    %471 = vmatprep.subr.mxu0 0.0
    %472 = vmatpush2.msra.mxu0 0.0
    %473 = vmatprep.mubr.f32.mxu0 0.0
    %474 = vmatmul.mubr.f32.gmra.mxu0 %v242
    %v475 = vpop.f32.mrf.mxu0
    %v476 = vadd.f32 %v407, %v475
    %v477 = vpop.f32.mrf.mxu0
    %478 = vmatprep.mubr.f32.mxu0 0.0
    %479 = vmatmul.mubr.f32.gmra.mxu0 %v245
    %v480 = vpop.f32.mrf.mxu0
    %v481 = vadd.f32 %v407, %v480
    %v482 = vpop.f32.mrf.mxu0
    %483 = vdwg.mxu0
    %vm484 = vcmask 64512
    %v486 = vsel %vm484, %v314, 0
    %v489 = vsel %vm484, %v395, 0
    %491 = vmatprep.subr.mxu0 0.0
    %492 = vmatpush1.xpose.msra.mxu0 0.0
    %493 = vmatprep.subr.mxu0 0.0
    %494 = vmatpush1.xpose.msra.mxu0 0.0
    %495 = vmatprep.subr.mxu0 0.0
    %496 = vmatpush1.xpose.msra.mxu0 0.0
    %497 = vmatprep.subr.mxu0 0.0
    %498 = vmatpush1.xpose.msra.mxu0 0.0
    %499 = vmatprep.subr.mxu0 0.0
    %500 = vmatpush1.xpose.msra.mxu0 0.0
    %501 = vmatprep.subr.mxu0 0.0
    %502 = vmatpush1.xpose.msra.mxu0 0.0
    %503 = vmatprep.subr.mxu0 0.0
    %504 = vmatpush1.xpose.msra.mxu0 0.0
    %505 = vmatprep.subr.mxu0 0.0
    %506 = vmatpush1.xpose.msra.mxu0 0.0
    %507 = vmatprep.subr.mxu0 0.0
    %508 = vmatpush1.xpose.msra.mxu0 0.0
    %509 = vmatprep.subr.mxu0 0.0
    %510 = vmatpush1.xpose.msra.mxu0 0.0
    %511 = vmatprep.subr.mxu0 0.0
    %512 = vmatpush1.xpose.msra.mxu0 0.0
    %513 = vmatprep.subr.mxu0 0.0
    %514 = vmatpush1.xpose.msra.mxu0 0.0
    %515 = vmatprep.subr.mxu0 0.0
    %516 = vmatpush1.xpose.msra.mxu0 0.0
    %517 = vmatprep.subr.mxu0 0.0
    %518 = vmatpush1.xpose.msra.mxu0 0.0
    %519 = vmatprep.subr.mxu0 0.0
    %520 = vmatpush1.xpose.msra.mxu0 0.0
    %521 = vmatprep.subr.mxu0 0.0
    %522 = vmatpush1.xpose.msra.mxu0 %v489
    %523 = vmatprep.subr.mxu0 0.0
    %524 = vmatpush2.xpose.msra.mxu0 0.0
    %525 = vmatprep.subr.mxu0 0.0
    %526 = vmatpush2.xpose.msra.mxu0 0.0
    %527 = vmatprep.subr.mxu0 0.0
    %528 = vmatpush2.xpose.msra.mxu0 0.0
    %529 = vmatprep.subr.mxu0 0.0
    %530 = vmatpush2.xpose.msra.mxu0 0.0
    %531 = vmatprep.subr.mxu0 0.0
    %532 = vmatpush2.xpose.msra.mxu0 0.0
    %533 = vmatprep.subr.mxu0 0.0
    %534 = vmatpush2.xpose.msra.mxu0 0.0
    %535 = vmatprep.subr.mxu0 0.0
    %536 = vmatpush2.xpose.msra.mxu0 0.0
    %537 = vmatprep.subr.mxu0 0.0
    %538 = vmatpush2.xpose.msra.mxu0 0.0
    %539 = vmatprep.subr.mxu0 0.0
    %540 = vmatpush2.xpose.msra.mxu0 0.0
    %541 = vmatprep.subr.mxu0 0.0
    %542 = vmatpush2.xpose.msra.mxu0 0.0
    %543 = vmatprep.subr.mxu0 0.0
    %544 = vmatpush2.xpose.msra.mxu0 0.0
    %545 = vmatprep.subr.mxu0 0.0
    %546 = vmatpush2.xpose.msra.mxu0 0.0
    %547 = vmatprep.subr.mxu0 0.0
    %548 = vmatpush2.xpose.msra.mxu0 0.0
    %549 = vmatprep.subr.mxu0 0.0
    %550 = vmatpush2.xpose.msra.mxu0 0.0
    %551 = vmatprep.subr.mxu0 0.0
    %552 = vmatpush2.xpose.msra.mxu0 0.0
    %553 = vmatprep.subr.mxu0 0.0
    %554 = vmatpush2.xpose.msra.mxu0 0.0
    %555 = vmatprep.mubr.f32.mxu0 0.0
    %556 = vmatmul.mubr.f32.gmra.mxu0 %v486
    %v557 = vpop.f32.mrf.mxu0
    %v558 = vadd.f32 0.0, %v557
    %v559 = vpop.f32.mrf.mxu0
    %560 = vdwg.mxu0
    %v562 = vsel %vm484, %v319, 0
    %v565 = vsel %vm484, %v400, 0
    %567 = vmatprep.subr.mxu0 0.0
    %568 = vmatpush1.xpose.msra.mxu0 0.0
    %569 = vmatprep.subr.mxu0 0.0
    %570 = vmatpush1.xpose.msra.mxu0 0.0
    %571 = vmatprep.subr.mxu0 0.0
    %572 = vmatpush1.xpose.msra.mxu0 0.0
    %573 = vmatprep.subr.mxu0 0.0
    %574 = vmatpush1.xpose.msra.mxu0 0.0
    %575 = vmatprep.subr.mxu0 0.0
    %576 = vmatpush1.xpose.msra.mxu0 0.0
    %577 = vmatprep.subr.mxu0 0.0
    %578 = vmatpush1.xpose.msra.mxu0 0.0
    %579 = vmatprep.subr.mxu0 0.0
    %580 = vmatpush1.xpose.msra.mxu0 0.0
    %581 = vmatprep.subr.mxu0 0.0
    %582 = vmatpush1.xpose.msra.mxu0 0.0
    %583 = vmatprep.subr.mxu0 0.0
    %584 = vmatpush1.xpose.msra.mxu0 0.0
    %585 = vmatprep.subr.mxu0 0.0
    %586 = vmatpush1.xpose.msra.mxu0 0.0
    %587 = vmatprep.subr.mxu0 0.0
    %588 = vmatpush1.xpose.msra.mxu0 0.0
    %589 = vmatprep.subr.mxu0 0.0
    %590 = vmatpush1.xpose.msra.mxu0 0.0
    %591 = vmatprep.subr.mxu0 0.0
    %592 = vmatpush1.xpose.msra.mxu0 0.0
    %593 = vmatprep.subr.mxu0 0.0
    %594 = vmatpush1.xpose.msra.mxu0 0.0
    %595 = vmatprep.subr.mxu0 0.0
    %596 = vmatpush1.xpose.msra.mxu0 0.0
    %597 = vmatprep.subr.mxu0 0.0
    %598 = vmatpush1.xpose.msra.mxu0 %v565
    %599 = vmatprep.subr.mxu0 0.0
    %600 = vmatpush2.xpose.msra.mxu0 0.0
    %601 = vmatprep.subr.mxu0 0.0
    %602 = vmatpush2.xpose.msra.mxu0 0.0
    %603 = vmatprep.subr.mxu0 0.0
    %604 = vmatpush2.xpose.msra.mxu0 0.0
    %605 = vmatprep.subr.mxu0 0.0
    %606 = vmatpush2.xpose.msra.mxu0 0.0
    %607 = vmatprep.subr.mxu0 0.0
    %608 = vmatpush2.xpose.msra.mxu0 0.0
    %609 = vmatprep.subr.mxu0 0.0
    %610 = vmatpush2.xpose.msra.mxu0 0.0
    %611 = vmatprep.subr.mxu0 0.0
    %612 = vmatpush2.xpose.msra.mxu0 0.0
    %613 = vmatprep.subr.mxu0 0.0
    %614 = vmatpush2.xpose.msra.mxu0 0.0
    %615 = vmatprep.subr.mxu0 0.0
    %616 = vmatpush2.xpose.msra.mxu0 0.0
    %617 = vmatprep.subr.mxu0 0.0
    %618 = vmatpush2.xpose.msra.mxu0 0.0
    %619 = vmatprep.subr.mxu0 0.0
    %620 = vmatpush2.xpose.msra.mxu0 0.0
    %621 = vmatprep.subr.mxu0 0.0
    %622 = vmatpush2.xpose.msra.mxu0 0.0
    %623 = vmatprep.subr.mxu0 0.0
    %624 = vmatpush2.xpose.msra.mxu0 0.0
    %625 = vmatprep.subr.mxu0 0.0
    %626 = vmatpush2.xpose.msra.mxu0 0.0
    %627 = vmatprep.subr.mxu0 0.0
    %628 = vmatpush2.xpose.msra.mxu0 0.0
    %629 = vmatprep.subr.mxu0 0.0
    %630 = vmatpush2.xpose.msra.mxu0 0.0
    %631 = vmatprep.mubr.f32.mxu0 0.0
    %632 = vmatmul.mubr.f32.gmra.mxu0 %v562
    %v633 = vpop.f32.mrf.mxu0
    %v634 = vadd.f32 0.0, %v633
    %v635 = vpop.f32.mrf.mxu0
    %636 = vdwg.mxu0
    %v637 = vmul.f32 %v558, 0.35355338
    %v638 = vmul.f32 %v634, 0.35355338
    %v639 = vsel %vm484, %v637, -inf
    %640 = vmax.xlane.f32.xlu0 %v639
    %v641 = vpop.xlane.xlu0 %640
    %v642 = vsel %vm484, %v638, -inf
    %643 = vmax.xlane.f32.xlu0 %v642
    %v644 = vpop.xlane.xlu0 %643
    %v645 = vsub.f32 %v637, %v641
    %v646 = vsub.f32 %v638, %v644
    %v647 = vmul.f32 %v645, 1.442695
    %v648 = vpow.pop %v647
    %v649 = vmul.f32 %v646, 1.442695
    %v650 = vpow.pop %v649
    %v651 = vsel %vm484, %v648, 0.0
    %652 = vadd.xlane.f32.xlu0 %v651
    %v653 = vpop.xlane.xlu0 %652
    %v654 = vsel %vm484, %v650, 0.0
    %655 = vadd.xlane.f32.xlu0 %v654
    %v656 = vpop.xlane.xlu0 %655
    %v657 = vrcp.pop %v653
    %v658 = vrcp.pop %v656
    %v659 = vmul.f32 %v648, %v657
    %v660 = vmul.f32 %v650, %v658
    %v662 = vsel %vm484, %v659, 0
    %664 = vmatprep.subr.mxu0 0.0
    %665 = vmatpush1.msra.mxu0 0.0
    %666 = vmatprep.subr.mxu0 0.0
    %667 = vmatpush1.msra.mxu0 0.0
    %668 = vmatprep.subr.mxu0 0.0
    %669 = vmatpush1.msra.mxu0 0.0
    %670 = vmatprep.subr.mxu0 0.0
    %671 = vmatpush1.msra.mxu0 0.0
    %672 = vmatprep.subr.mxu0 0.0
    %673 = vmatpush1.msra.mxu0 0.0
    %674 = vmatprep.subr.mxu0 0.0
    %675 = vmatpush1.msra.mxu0 0.0
    %676 = vmatprep.subr.mxu0 0.0
    %677 = vmatpush1.msra.mxu0 0.0
    %678 = vmatprep.subr.mxu0 0.0
    %679 = vmatpush1.msra.mxu0 0.0
    %680 = vmatprep.subr.mxu0 0.0
    %681 = vmatpush1.msra.mxu0 0.0
    %682 = vmatprep.subr.mxu0 0.0
    %683 = vmatpush1.msra.mxu0 0.0
    %684 = vmatprep.subr.mxu0 0.0
    %685 = vmatpush1.msra.mxu0 0.0
    %686 = vmatprep.subr.mxu0 0.0
    %687 = vmatpush1.msra.mxu0 0.0
    %688 = vmatprep.subr.mxu0 0.0
    %689 = vmatpush1.msra.mxu0 0.0
    %690 = vmatprep.subr.mxu0 0.0
    %691 = vmatpush1.msra.mxu0 0.0
    %692 = vmatprep.subr.mxu0 0.0
    %693 = vmatpush1.msra.mxu0 0.0
    %694 = vmatprep.subr.mxu0 0.0
    %695 = vmatpush1.msra.mxu0 %v476
    %696 = vmatprep.subr.mxu0 0.0
    %697 = vmatpush2.msra.mxu0 0.0
    %698 = vmatprep.subr.mxu0 0.0
    %699 = vmatpush2.msra.mxu0 0.0
    %700 = vmatprep.subr.mxu0 0.0
    %701 = vmatpush2.msra.mxu0 0.0
    %702 = vmatprep.subr.mxu0 0.0
    %703 = vmatpush2.msra.mxu0 0.0
    %704 = vmatprep.subr.mxu0 0.0
    %705 = vmatpush2.msra.mxu0 0.0
    %706 = vmatprep.subr.mxu0 0.0
    %707 = vmatpush2.msra.mxu0 0.0
    %708 = vmatprep.subr.mxu0 0.0
    %709 = vmatpush2.msra.mxu0 0.0
    %710 = vmatprep.subr.mxu0 0.0
    %711 = vmatpush2.msra.mxu0 0.0
    %712 = vmatprep.subr.mxu0 0.0
    %713 = vmatpush2.msra.mxu0 0.0
    %714 = vmatprep.subr.mxu0 0.0
    %715 = vmatpush2.msra.mxu0 0.0
    %716 = vmatprep.subr.mxu0 0.0
    %717 = vmatpush2.msra.mxu0 0.0
    %718 = vmatprep.subr.mxu0 0.0
    %719 = vmatpush2.msra.mxu0 0.0
    %720 = vmatprep.subr.mxu0 0.0
    %721 = vmatpush2.msra.mxu0 0.0
    %722 = vmatprep.subr.mxu0 0.0
    %723 = vmatpush2.msra.mxu0 0.0
    %724 = vmatprep.subr.mxu0 0.0
    %725 = vmatpush2.msra.mxu0 0.0
    %726 = vmatprep.subr.mxu0 0.0
    %727 = vmatpush2.msra.mxu0 0.0
    %728 = vmatprep.mubr.f32.mxu0 0.0
    %729 = vmatmul.mubr.f32.gmra.mxu0 %v662
    %v730 = vpop.f32.mrf.mxu0
    %v731 = vadd.f32 0.0, %v730
    %v732 = vpop.f32.mrf.mxu0
    %733 = vdwg.mxu0
    %v735 = vsel %vm484, %v660, 0
    %737 = vmatprep.subr.mxu0 0.0
    %738 = vmatpush1.msra.mxu0 0.0
    %739 = vmatprep.subr.mxu0 0.0
    %740 = vmatpush1.msra.mxu0 0.0
    %741 = vmatprep.subr.mxu0 0.0
    %742 = vmatpush1.msra.mxu0 0.0
    %743 = vmatprep.subr.mxu0 0.0
    %744 = vmatpush1.msra.mxu0 0.0
    %745 = vmatprep.subr.mxu0 0.0
    %746 = vmatpush1.msra.mxu0 0.0
    %747 = vmatprep.subr.mxu0 0.0
    %748 = vmatpush1.msra.mxu0 0.0
    %749 = vmatprep.subr.mxu0 0.0
    %750 = vmatpush1.msra.mxu0 0.0
    %751 = vmatprep.subr.mxu0 0.0
    %752 = vmatpush1.msra.mxu0 0.0
    %753 = vmatprep.subr.mxu0 0.0
    %754 = vmatpush1.msra.mxu0 0.0
    %755 = vmatprep.subr.mxu0 0.0
    %756 = vmatpush1.msra.mxu0 0.0
    %757 = vmatprep.subr.mxu0 0.0
    %758 = vmatpush1.msra.mxu0 0.0
    %759 = vmatprep.subr.mxu0 0.0
    %760 = vmatpush1.msra.mxu0 0.0
    %761 = vmatprep.subr.mxu0 0.0
    %762 = vmatpush1.msra.mxu0 0.0
    %763 = vmatprep.subr.mxu0 0.0
    %764 = vmatpush1.msra.mxu0 0.0
    %765 = vmatprep.subr.mxu0 0.0
    %766 = vmatpush1.msra.mxu0 0.0
    %767 = vmatprep.subr.mxu0 0.0
    %768 = vmatpush1.msra.mxu0 %v481
    %769 = vmatprep.subr.mxu0 0.0
    %770 = vmatpush2.msra.mxu0 0.0
    %771 = vmatprep.subr.mxu0 0.0
    %772 = vmatpush2.msra.mxu0 0.0
    %773 = vmatprep.subr.mxu0 0.0
    %774 = vmatpush2.msra.mxu0 0.0
    %775 = vmatprep.subr.mxu0 0.0
    %776 = vmatpush2.msra.mxu0 0.0
    %777 = vmatprep.subr.mxu0 0.0
    %778 = vmatpush2.msra.mxu0 0.0
    %779 = vmatprep.subr.mxu0 0.0
    %780 = vmatpush2.msra.mxu0 0.0
    %781 = vmatprep.subr.mxu0 0.0
    %782 = vmatpush2.msra.mxu0 0.0
    %783 = vmatprep.subr.mxu0 0.0
    %784 = vmatpush2.msra.mxu0 0.0
    %785 = vmatprep.subr.mxu0 0.0
    %786 = vmatpush2.msra.mxu0 0.0
    %787 = vmatprep.subr.mxu0 0.0
    %788 = vmatpush2.msra.mxu0 0.0
    %789 = vmatprep.subr.mxu0 0.0
    %790 = vmatpush2.msra.mxu0 0.0
    %791 = vmatprep.subr.mxu0 0.0
    %792 = vmatpush2.msra.mxu0 0.0
    %793 = vmatprep.subr.mxu0 0.0
    %794 = vmatpush2.msra.mxu0 0.0
    %795 = vmatprep.subr.mxu0 0.0
    %796 = vmatpush2.msra.mxu0 0.0
    %797 = vmatprep.subr.mxu0 0.0
    %798 = vmatpush2.msra.mxu0 0.0
    %799 = vmatprep.subr.mxu0 0.0
    %800 = vmatpush2.msra.mxu0 0.0
    %801 = vmatprep.mubr.f32.mxu0 0.0
    %802 = vmatmul.mubr.f32.gmra.mxu0 %v735
    %v803 = vpop.f32.mrf.mxu0
    %v804 = vadd.f32 0.0, %v803
    %v805 = vpop.f32.mrf.mxu0
    %806 = vdwg.mxu0
    %v807 = vld [vmem:[%s5] sm:$0xff]
    %v809 = vsel %vm484, %v731, 0
    %v812 = vsel %vm484, %v804, 0
    %814 = vmatprep.subr.mxu0 0.0
    %815 = vmatpush1.msra.mxu0 0.0
    %816 = vmatprep.subr.mxu0 0.0
    %817 = vmatpush1.msra.mxu0 0.0
    %818 = vmatprep.subr.mxu0 0.0
    %819 = vmatpush1.msra.mxu0 0.0
    %820 = vmatprep.subr.mxu0 0.0
    %821 = vmatpush1.msra.mxu0 0.0
    %822 = vmatprep.subr.mxu0 0.0
    %823 = vmatpush1.msra.mxu0 0.0
    %824 = vmatprep.subr.mxu0 0.0
    %825 = vmatpush1.msra.mxu0 0.0
    %826 = vmatprep.subr.mxu0 0.0
    %827 = vmatpush1.msra.mxu0 0.0
    %828 = vmatprep.subr.mxu0 0.0
    %829 = vmatpush1.msra.mxu0 0.0
    %830 = vmatprep.subr.mxu0 0.0
    %831 = vmatpush1.msra.mxu0 0.0
    %832 = vmatprep.subr.mxu0 0.0
    %833 = vmatpush1.msra.mxu0 0.0
    %834 = vmatprep.subr.mxu0 0.0
    %835 = vmatpush1.msra.mxu0 0.0
    %836 = vmatprep.subr.mxu0 0.0
    %837 = vmatpush1.msra.mxu0 0.0
    %838 = vmatprep.subr.mxu0 0.0
    %839 = vmatpush1.msra.mxu0 0.0
    %840 = vmatprep.subr.mxu0 0.0
    %841 = vmatpush1.msra.mxu0 0.0
    %842 = vmatprep.subr.mxu0 0.0
    %843 = vmatpush1.msra.mxu0 0.0
    %844 = vmatprep.subr.mxu0 0.0
    %845 = vmatpush1.msra.mxu0 %v807
    %846 = vmatprep.subr.mxu0 0.0
    %847 = vmatpush2.msra.mxu0 0.0
    %848 = vmatprep.subr.mxu0 0.0
    %849 = vmatpush2.msra.mxu0 0.0
    %850 = vmatprep.subr.mxu0 0.0
    %851 = vmatpush2.msra.mxu0 0.0
    %852 = vmatprep.subr.mxu0 0.0
    %853 = vmatpush2.msra.mxu0 0.0
    %854 = vmatprep.subr.mxu0 0.0
    %855 = vmatpush2.msra.mxu0 0.0
    %856 = vmatprep.subr.mxu0 0.0
    %857 = vmatpush2.msra.mxu0 0.0
    %858 = vmatprep.subr.mxu0 0.0
    %859 = vmatpush2.msra.mxu0 0.0
    %860 = vmatprep.subr.mxu0 0.0
    %861 = vmatpush2.msra.mxu0 0.0
    %862 = vmatprep.subr.mxu0 0.0
    %863 = vmatpush2.msra.mxu0 0.0
    %864 = vmatprep.subr.mxu0 0.0
    %865 = vmatpush2.msra.mxu0 0.0
    %866 = vmatprep.subr.mxu0 0.0
    %867 = vmatpush2.msra.mxu0 0.0
    %868 = vmatprep.subr.mxu0 0.0
    %869 = vmatpush2.msra.mxu0 0.0
    %870 = vmatprep.subr.mxu0 0.0
    %871 = vmatpush2.msra.mxu0 0.0
    %872 = vmatprep.subr.mxu0 0.0
    %873 = vmatpush2.msra.mxu0 0.0
    %874 = vmatprep.subr.mxu0 0.0
    %875 = vmatpush2.msra.mxu0 0.0
    %876 = vmatprep.subr.mxu0 0.0
    %877 = vmatpush2.msra.mxu0 0.0
    %878 = vmatprep.mubr.f32.mxu0 0.0
    %879 = vmatmul.mubr.f32.gmra.mxu0 %v809
    %v880 = vpop.f32.mrf.mxu0
    %v881 = vadd.f32 0.0, %v880
    %v882 = vpop.f32.mrf.mxu0
    %883 = vmatprep.mubr.f32.mxu0 0.0
    %884 = vmatmul.mubr.f32.gmra.mxu0 %v812
    %v885 = vpop.f32.mrf.mxu0
    %v886 = vadd.f32 0.0, %v885
    %v887 = vpop.f32.mrf.mxu0
    %888 = vdwg.mxu0
    %v889 = vadd.f32 %v214, %v881
    %v890 = vadd.f32 %v215, %v886
    %s891 = scalar_lea.vmem %s3, 32
    %v892 = vld [vmem:[%s891] sm:$0xff]
    %v893 = vld [vmem:[%s891 + $0x8] sm:$0xff]
    %v894 = vld [vmem:[%s891 + $0x10] sm:$0xff]
    %v895 = vld [vmem:[%s891 + $0x18] sm:$0xff]
    %s896 = scalar_lea.vmem %s3, 160
    %v897 = vld [vmem:[%s896] sm:$0xff]
    %v898 = vld [vmem:[%s896 + $0x8] sm:$0xff]
    %v899 = vld [vmem:[%s896 + $0x10] sm:$0xff]
    %v900 = vld [vmem:[%s896 + $0x18] sm:$0xff]
    %s901 = scalar_lea.vmem %s3, 288
    %v902 = vld [vmem:[%s901] sm:$0xff]
    %v903 = vld [vmem:[%s901 + $0x8] sm:$0xff]
    %v904 = vld [vmem:[%s901 + $0x10] sm:$0xff]
    %v905 = vld [vmem:[%s901 + $0x18] sm:$0xff]
    %s906 = scalar_lea.vmem %s4, 1
    %v907 = vld [vmem:[%s906] sm:$0x1]
    %s908 = scalar_lea.vmem %s4, 5
    %v909 = vld [vmem:[%s908] sm:$0x1]
    %s910 = scalar_lea.vmem %s4, 9
    %v911 = vld [vmem:[%s910] sm:$0x1]
    %v913 = vlaneseq
    %v914 = vshrl.u32 %v913, 7
    %v915 = vsub.s32 0, %v914
    %v916 = vrot.slane %v907, %v915
    %918 = vmatprep.subr.mxu0 0.0
    %919 = vmatpush1.msra.mxu0 0.0
    %920 = vmatprep.subr.mxu0 0.0
    %921 = vmatpush1.msra.mxu0 0.0
    %922 = vmatprep.subr.mxu0 0.0
    %923 = vmatpush1.msra.mxu0 0.0
    %924 = vmatprep.subr.mxu0 0.0
    %925 = vmatpush1.msra.mxu0 0.0
    %926 = vmatprep.subr.mxu0 0.0
    %927 = vmatpush1.msra.mxu0 0.0
    %928 = vmatprep.subr.mxu0 0.0
    %929 = vmatpush1.msra.mxu0 0.0
    %930 = vmatprep.subr.mxu0 0.0
    %931 = vmatpush1.msra.mxu0 0.0
    %932 = vmatprep.subr.mxu0 0.0
    %933 = vmatpush1.msra.mxu0 0.0
    %934 = vmatprep.subr.mxu0 0.0
    %935 = vmatpush1.msra.mxu0 0.0
    %936 = vmatprep.subr.mxu0 0.0
    %937 = vmatpush1.msra.mxu0 0.0
    %938 = vmatprep.subr.mxu0 0.0
    %939 = vmatpush1.msra.mxu0 0.0
    %940 = vmatprep.subr.mxu0 0.0
    %941 = vmatpush1.msra.mxu0 0.0
    %942 = vmatprep.subr.mxu0 0.0
    %943 = vmatpush1.msra.mxu0 %v895
    %944 = vmatprep.subr.mxu0 0.0
    %945 = vmatpush1.msra.mxu0 %v894
    %946 = vmatprep.subr.mxu0 0.0
    %947 = vmatpush1.msra.mxu0 %v893
    %948 = vmatprep.subr.mxu0 0.0
    %949 = vmatpush1.msra.mxu0 %v892
    %950 = vmatprep.subr.mxu0 0.0
    %951 = vmatpush2.msra.mxu0 0.0
    %952 = vmatprep.subr.mxu0 0.0
    %953 = vmatpush2.msra.mxu0 0.0
    %954 = vmatprep.subr.mxu0 0.0
    %955 = vmatpush2.msra.mxu0 0.0
    %956 = vmatprep.subr.mxu0 0.0
    %957 = vmatpush2.msra.mxu0 0.0
    %958 = vmatprep.subr.mxu0 0.0
    %959 = vmatpush2.msra.mxu0 0.0
    %960 = vmatprep.subr.mxu0 0.0
    %961 = vmatpush2.msra.mxu0 0.0
    %962 = vmatprep.subr.mxu0 0.0
    %963 = vmatpush2.msra.mxu0 0.0
    %964 = vmatprep.subr.mxu0 0.0
    %965 = vmatpush2.msra.mxu0 0.0
    %966 = vmatprep.subr.mxu0 0.0
    %967 = vmatpush2.msra.mxu0 0.0
    %968 = vmatprep.subr.mxu0 0.0
    %969 = vmatpush2.msra.mxu0 0.0
    %970 = vmatprep.subr.mxu0 0.0
    %971 = vmatpush2.msra.mxu0 0.0
    %972 = vmatprep.subr.mxu0 0.0
    %973 = vmatpush2.msra.mxu0 0.0
    %974 = vmatprep.subr.mxu0 0.0
    %975 = vmatpush2.msra.mxu0 0.0
    %976 = vmatprep.subr.mxu0 0.0
    %977 = vmatpush2.msra.mxu0 0.0
    %978 = vmatprep.subr.mxu0 0.0
    %979 = vmatpush2.msra.mxu0 0.0
    %980 = vmatprep.subr.mxu0 0.0
    %981 = vmatpush2.msra.mxu0 0.0
    %982 = vmatprep.mubr.f32.mxu0 0.0
    %983 = vmatmul.mubr.f32.gmra.mxu0 %v242
    %v984 = vpop.f32.mrf.mxu0
    %v985 = vadd.f32 %v916, %v984
    %v986 = vpop.f32.mrf.mxu0
    %987 = vmatprep.mubr.f32.mxu0 0.0
    %988 = vmatmul.mubr.f32.gmra.mxu0 %v245
    %v989 = vpop.f32.mrf.mxu0
    %v990 = vadd.f32 %v916, %v989
    %v991 = vpop.f32.mrf.mxu0
    %992 = vdwg.mxu0
    %v994 = vlaneseq
    %v995 = vshrl.u32 %v994, 7
    %v996 = vsub.s32 0, %v995
    %v997 = vrot.slane %v909, %v996
    %999 = vmatprep.subr.mxu0 0.0
    %1000 = vmatpush1.msra.mxu0 0.0
    %1001 = vmatprep.subr.mxu0 0.0
    %1002 = vmatpush1.msra.mxu0 0.0
    %1003 = vmatprep.subr.mxu0 0.0
    %1004 = vmatpush1.msra.mxu0 0.0
    %1005 = vmatprep.subr.mxu0 0.0
    %1006 = vmatpush1.msra.mxu0 0.0
    %1007 = vmatprep.subr.mxu0 0.0
    %1008 = vmatpush1.msra.mxu0 0.0
    %1009 = vmatprep.subr.mxu0 0.0
    %1010 = vmatpush1.msra.mxu0 0.0
    %1011 = vmatprep.subr.mxu0 0.0
    %1012 = vmatpush1.msra.mxu0 0.0
    %1013 = vmatprep.subr.mxu0 0.0
    %1014 = vmatpush1.msra.mxu0 0.0
    %1015 = vmatprep.subr.mxu0 0.0
    %1016 = vmatpush1.msra.mxu0 0.0
    %1017 = vmatprep.subr.mxu0 0.0
    %1018 = vmatpush1.msra.mxu0 0.0
    %1019 = vmatprep.subr.mxu0 0.0
    %1020 = vmatpush1.msra.mxu0 0.0
    %1021 = vmatprep.subr.mxu0 0.0
    %1022 = vmatpush1.msra.mxu0 0.0
    %1023 = vmatprep.subr.mxu0 0.0
    %1024 = vmatpush1.msra.mxu0 %v900
    %1025 = vmatprep.subr.mxu0 0.0
    %1026 = vmatpush1.msra.mxu0 %v899
    %1027 = vmatprep.subr.mxu0 0.0
    %1028 = vmatpush1.msra.mxu0 %v898
    %1029 = vmatprep.subr.mxu0 0.0
    %1030 = vmatpush1.msra.mxu0 %v897
    %1031 = vmatprep.subr.mxu0 0.0
    %1032 = vmatpush2.msra.mxu0 0.0
    %1033 = vmatprep.subr.mxu0 0.0
    %1034 = vmatpush2.msra.mxu0 0.0
    %1035 = vmatprep.subr.mxu0 0.0
    %1036 = vmatpush2.msra.mxu0 0.0
    %1037 = vmatprep.subr.mxu0 0.0
    %1038 = vmatpush2.msra.mxu0 0.0
    %1039 = vmatprep.subr.mxu0 0.0
    %1040 = vmatpush2.msra.mxu0 0.0
    %1041 = vmatprep.subr.mxu0 0.0
    %1042 = vmatpush2.msra.mxu0 0.0
    %1043 = vmatprep.subr.mxu0 0.0
    %1044 = vmatpush2.msra.mxu0 0.0
    %1045 = vmatprep.subr.mxu0 0.0
    %1046 = vmatpush2.msra.mxu0 0.0
    %1047 = vmatprep.subr.mxu0 0.0
    %1048 = vmatpush2.msra.mxu0 0.0
    %1049 = vmatprep.subr.mxu0 0.0
    %1050 = vmatpush2.msra.mxu0 0.0
    %1051 = vmatprep.subr.mxu0 0.0
    %1052 = vmatpush2.msra.mxu0 0.0
    %1053 = vmatprep.subr.mxu0 0.0
    %1054 = vmatpush2.msra.mxu0 0.0
    %1055 = vmatprep.subr.mxu0 0.0
    %1056 = vmatpush2.msra.mxu0 0.0
    %1057 = vmatprep.subr.mxu0 0.0
    %1058 = vmatpush2.msra.mxu0 0.0
    %1059 = vmatprep.subr.mxu0 0.0
    %1060 = vmatpush2.msra.mxu0 0.0
    %1061 = vmatprep.subr.mxu0 0.0
    %1062 = vmatpush2.msra.mxu0 0.0
    %1063 = vmatprep.mubr.f32.mxu0 0.0
    %1064 = vmatmul.mubr.f32.gmra.mxu0 %v242
    %v1065 = vpop.f32.mrf.mxu0
    %v1066 = vadd.f32 %v997, %v1065
    %v1067 = vpop.f32.mrf.mxu0
    %1068 = vmatprep.mubr.f32.mxu0 0.0
    %1069 = vmatmul.mubr.f32.gmra.mxu0 %v245
    %v1070 = vpop.f32.mrf.mxu0
    %v1071 = vadd.f32 %v997, %v1070
    %v1072 = vpop.f32.mrf.mxu0
    %1073 = vdwg.mxu0
    %v1075 = vlaneseq
    %v1076 = vshrl.u32 %v1075, 7
    %v1077 = vsub.s32 0, %v1076
    %v1078 = vrot.slane %v911, %v1077
    %1080 = vmatprep.subr.mxu0 0.0
    %1081 = vmatpush1.msra.mxu0 0.0
    %1082 = vmatprep.subr.mxu0 0.0
    %1083 = vmatpush1.msra.mxu0 0.0
    %1084 = vmatprep.subr.mxu0 0.0
    %1085 = vmatpush1.msra.mxu0 0.0
    %1086 = vmatprep.subr.mxu0 0.0
    %1087 = vmatpush1.msra.mxu0 0.0
    %1088 = vmatprep.subr.mxu0 0.0
    %1089 = vmatpush1.msra.mxu0 0.0
    %1090 = vmatprep.subr.mxu0 0.0
    %1091 = vmatpush1.msra.mxu0 0.0
    %1092 = vmatprep.subr.mxu0 0.0
    %1093 = vmatpush1.msra.mxu0 0.0
    %1094 = vmatprep.subr.mxu0 0.0
    %1095 = vmatpush1.msra.mxu0 0.0
    %1096 = vmatprep.subr.mxu0 0.0
    %1097 = vmatpush1.msra.mxu0 0.0
    %1098 = vmatprep.subr.mxu0 0.0
    %1099 = vmatpush1.msra.mxu0 0.0
    %1100 = vmatprep.subr.mxu0 0.0
    %1101 = vmatpush1.msra.mxu0 0.0
    %1102 = vmatprep.subr.mxu0 0.0
    %1103 = vmatpush1.msra.mxu0 0.0
    %1104 = vmatprep.subr.mxu0 0.0
    %1105 = vmatpush1.msra.mxu0 %v905
    %1106 = vmatprep.subr.mxu0 0.0
    %1107 = vmatpush1.msra.mxu0 %v904
    %1108 = vmatprep.subr.mxu0 0.0
    %1109 = vmatpush1.msra.mxu0 %v903
    %1110 = vmatprep.subr.mxu0 0.0
    %1111 = vmatpush1.msra.mxu0 %v902
    %1112 = vmatprep.subr.mxu0 0.0
    %1113 = vmatpush2.msra.mxu0 0.0
    %1114 = vmatprep.subr.mxu0 0.0
    %1115 = vmatpush2.msra.mxu0 0.0
    %1116 = vmatprep.subr.mxu0 0.0
    %1117 = vmatpush2.msra.mxu0 0.0
    %1118 = vmatprep.subr.mxu0 0.0
    %1119 = vmatpush2.msra.mxu0 0.0
    %1120 = vmatprep.subr.mxu0 0.0
    %1121 = vmatpush2.msra.mxu0 0.0
    %1122 = vmatprep.subr.mxu0 0.0
    %1123 = vmatpush2.msra.mxu0 0.0
    %1124 = vmatprep.subr.mxu0 0.0
    %1125 = vmatpush2.msra.mxu0 0.0
    %1126 = vmatprep.subr.mxu0 0.0
    %1127 = vmatpush2.msra.mxu0 0.0
    %1128 = vmatprep.subr.mxu0 0.0
    %1129 = vmatpush2.msra.mxu0 0.0
    %1130 = vmatprep.subr.mxu0 0.0
    %1131 = vmatpush2.msra.mxu0 0.0
    %1132 = vmatprep.subr.mxu0 0.0
    %1133 = vmatpush2.msra.mxu0 0.0
    %1134 = vmatprep.subr.mxu0 0.0
    %1135 = vmatpush2.msra.mxu0 0.0
    %1136 = vmatprep.subr.mxu0 0.0
    %1137 = vmatpush2.msra.mxu0 0.0
    %1138 = vmatprep.subr.mxu0 0.0
    %1139 = vmatpush2.msra.mxu0 0.0
    %1140 = vmatprep.subr.mxu0 0.0
    %1141 = vmatpush2.msra.mxu0 0.0
    %1142 = vmatprep.subr.mxu0 0.0
    %1143 = vmatpush2.msra.mxu0 0.0
    %1144 = vmatprep.mubr.f32.mxu0 0.0
    %1145 = vmatmul.mubr.f32.gmra.mxu0 %v242
    %v1146 = vpop.f32.mrf.mxu0
    %v1147 = vadd.f32 %v1078, %v1146
    %v1148 = vpop.f32.mrf.mxu0
    %1149 = vmatprep.mubr.f32.mxu0 0.0
    %1150 = vmatmul.mubr.f32.gmra.mxu0 %v245
    %v1151 = vpop.f32.mrf.mxu0
    %v1152 = vadd.f32 %v1078, %v1151
    %v1153 = vpop.f32.mrf.mxu0
    %1154 = vdwg.mxu0
    %v1156 = vsel %vm484, %v985, 0
    %v1159 = vsel %vm484, %v1066, 0
    %1161 = vmatprep.subr.mxu0 0.0
    %1162 = vmatpush1.xpose.msra.mxu0 0.0
    %1163 = vmatprep.subr.mxu0 0.0
    %1164 = vmatpush1.xpose.msra.mxu0 0.0
    %1165 = vmatprep.subr.mxu0 0.0
    %1166 = vmatpush1.xpose.msra.mxu0 0.0
    %1167 = vmatprep.subr.mxu0 0.0
    %1168 = vmatpush1.xpose.msra.mxu0 0.0
    %1169 = vmatprep.subr.mxu0 0.0
    %1170 = vmatpush1.xpose.msra.mxu0 0.0
    %1171 = vmatprep.subr.mxu0 0.0
    %1172 = vmatpush1.xpose.msra.mxu0 0.0
    %1173 = vmatprep.subr.mxu0 0.0
    %1174 = vmatpush1.xpose.msra.mxu0 0.0
    %1175 = vmatprep.subr.mxu0 0.0
    %1176 = vmatpush1.xpose.msra.mxu0 0.0
    %1177 = vmatprep.subr.mxu0 0.0
    %1178 = vmatpush1.xpose.msra.mxu0 0.0
    %1179 = vmatprep.subr.mxu0 0.0
    %1180 = vmatpush1.xpose.msra.mxu0 0.0
    %1181 = vmatprep.subr.mxu0 0.0
    %1182 = vmatpush1.xpose.msra.mxu0 0.0
    %1183 = vmatprep.subr.mxu0 0.0
    %1184 = vmatpush1.xpose.msra.mxu0 0.0
    %1185 = vmatprep.subr.mxu0 0.0
    %1186 = vmatpush1.xpose.msra.mxu0 0.0
    %1187 = vmatprep.subr.mxu0 0.0
    %1188 = vmatpush1.xpose.msra.mxu0 0.0
    %1189 = vmatprep.subr.mxu0 0.0
    %1190 = vmatpush1.xpose.msra.mxu0 0.0
    %1191 = vmatprep.subr.mxu0 0.0
    %1192 = vmatpush1.xpose.msra.mxu0 %v1159
    %1193 = vmatprep.subr.mxu0 0.0
    %1194 = vmatpush2.xpose.msra.mxu0 0.0
    %1195 = vmatprep.subr.mxu0 0.0
    %1196 = vmatpush2.xpose.msra.mxu0 0.0
    %1197 = vmatprep.subr.mxu0 0.0
    %1198 = vmatpush2.xpose.msra.mxu0 0.0
    %1199 = vmatprep.subr.mxu0 0.0
    %1200 = vmatpush2.xpose.msra.mxu0 0.0
    %1201 = vmatprep.subr.mxu0 0.0
    %1202 = vmatpush2.xpose.msra.mxu0 0.0
    %1203 = vmatprep.subr.mxu0 0.0
    %1204 = vmatpush2.xpose.msra.mxu0 0.0
    %1205 = vmatprep.subr.mxu0 0.0
    %1206 = vmatpush2.xpose.msra.mxu0 0.0
    %1207 = vmatprep.subr.mxu0 0.0
    %1208 = vmatpush2.xpose.msra.mxu0 0.0
    %1209 = vmatprep.subr.mxu0 0.0
    %1210 = vmatpush2.xpose.msra.mxu0 0.0
    %1211 = vmatprep.subr.mxu0 0.0
    %1212 = vmatpush2.xpose.msra.mxu0 0.0
    %1213 = vmatprep.subr.mxu0 0.0
    %1214 = vmatpush2.xpose.msra.mxu0 0.0
    %1215 = vmatprep.subr.mxu0 0.0
    %1216 = vmatpush2.xpose.msra.mxu0 0.0
    %1217 = vmatprep.subr.mxu0 0.0
    %1218 = vmatpush2.xpose.msra.mxu0 0.0
    %1219 = vmatprep.subr.mxu0 0.0
    %1220 = vmatpush2.xpose.msra.mxu0 0.0
    %1221 = vmatprep.subr.mxu0 0.0
    %1222 = vmatpush2.xpose.msra.mxu0 0.0
    %1223 = vmatprep.subr.mxu0 0.0
    %1224 = vmatpush2.xpose.msra.mxu0 0.0
    %1225 = vmatprep.mubr.f32.mxu0 0.0
    %1226 = vmatmul.mubr.f32.gmra.mxu0 %v1156
    %v1227 = vpop.f32.mrf.mxu0
    %v1228 = vadd.f32 0.0, %v1227
    %v1229 = vpop.f32.mrf.mxu0
    %1230 = vdwg.mxu0
    %v1232 = vsel %vm484, %v990, 0
    %v1235 = vsel %vm484, %v1071, 0
    %1237 = vmatprep.subr.mxu0 0.0
    %1238 = vmatpush1.xpose.msra.mxu0 0.0
    %1239 = vmatprep.subr.mxu0 0.0
    %1240 = vmatpush1.xpose.msra.mxu0 0.0
    %1241 = vmatprep.subr.mxu0 0.0
    %1242 = vmatpush1.xpose.msra.mxu0 0.0
    %1243 = vmatprep.subr.mxu0 0.0
    %1244 = vmatpush1.xpose.msra.mxu0 0.0
    %1245 = vmatprep.subr.mxu0 0.0
    %1246 = vmatpush1.xpose.msra.mxu0 0.0
    %1247 = vmatprep.subr.mxu0 0.0
    %1248 = vmatpush1.xpose.msra.mxu0 0.0
    %1249 = vmatprep.subr.mxu0 0.0
    %1250 = vmatpush1.xpose.msra.mxu0 0.0
    %1251 = vmatprep.subr.mxu0 0.0
    %1252 = vmatpush1.xpose.msra.mxu0 0.0
    %1253 = vmatprep.subr.mxu0 0.0
    %1254 = vmatpush1.xpose.msra.mxu0 0.0
    %1255 = vmatprep.subr.mxu0 0.0
    %1256 = vmatpush1.xpose.msra.mxu0 0.0
    %1257 = vmatprep.subr.mxu0 0.0
    %1258 = vmatpush1.xpose.msra.mxu0 0.0
    %1259 = vmatprep.subr.mxu0 0.0
    %1260 = vmatpush1.xpose.msra.mxu0 0.0
    %1261 = vmatprep.subr.mxu0 0.0
    %1262 = vmatpush1.xpose.msra.mxu0 0.0
    %1263 = vmatprep.subr.mxu0 0.0
    %1264 = vmatpush1.xpose.msra.mxu0 0.0
    %1265 = vmatprep.subr.mxu0 0.0
    %1266 = vmatpush1.xpose.msra.mxu0 0.0
    %1267 = vmatprep.subr.mxu0 0.0
    %1268 = vmatpush1.xpose.msra.mxu0 %v1235
    %1269 = vmatprep.subr.mxu0 0.0
    %1270 = vmatpush2.xpose.msra.mxu0 0.0
    %1271 = vmatprep.subr.mxu0 0.0
    %1272 = vmatpush2.xpose.msra.mxu0 0.0
    %1273 = vmatprep.subr.mxu0 0.0
    %1274 = vmatpush2.xpose.msra.mxu0 0.0
    %1275 = vmatprep.subr.mxu0 0.0
    %1276 = vmatpush2.xpose.msra.mxu0 0.0
    %1277 = vmatprep.subr.mxu0 0.0
    %1278 = vmatpush2.xpose.msra.mxu0 0.0
    %1279 = vmatprep.subr.mxu0 0.0
    %1280 = vmatpush2.xpose.msra.mxu0 0.0
    %1281 = vmatprep.subr.mxu0 0.0
    %1282 = vmatpush2.xpose.msra.mxu0 0.0
    %1283 = vmatprep.subr.mxu0 0.0
    %1284 = vmatpush2.xpose.msra.mxu0 0.0
    %1285 = vmatprep.subr.mxu0 0.0
    %1286 = vmatpush2.xpose.msra.mxu0 0.0
    %1287 = vmatprep.subr.mxu0 0.0
    %1288 = vmatpush2.xpose.msra.mxu0 0.0
    %1289 = vmatprep.subr.mxu0 0.0
    %1290 = vmatpush2.xpose.msra.mxu0 0.0
    %1291 = vmatprep.subr.mxu0 0.0
    %1292 = vmatpush2.xpose.msra.mxu0 0.0
    %1293 = vmatprep.subr.mxu0 0.0
    %1294 = vmatpush2.xpose.msra.mxu0 0.0
    %1295 = vmatprep.subr.mxu0 0.0
    %1296 = vmatpush2.xpose.msra.mxu0 0.0
    %1297 = vmatprep.subr.mxu0 0.0
    %1298 = vmatpush2.xpose.msra.mxu0 0.0
    %1299 = vmatprep.subr.mxu0 0.0
    %1300 = vmatpush2.xpose.msra.mxu0 0.0
    %1301 = vmatprep.mubr.f32.mxu0 0.0
    %1302 = vmatmul.mubr.f32.gmra.mxu0 %v1232
    %v1303 = vpop.f32.mrf.mxu0
    %v1304 = vadd.f32 0.0, %v1303
    %v1305 = vpop.f32.mrf.mxu0
    %1306 = vdwg.mxu0
    %v1307 = vmul.f32 %v1228, 0.35355338
    %v1308 = vmul.f32 %v1304, 0.35355338
    %v1309 = vsel %vm484, %v1307, -inf
    %1310 = vmax.xlane.f32.xlu0 %v1309
    %v1311 = vpop.xlane.xlu0 %1310
    %v1312 = vsel %vm484, %v1308, -inf
    %1313 = vmax.xlane.f32.xlu0 %v1312
    %v1314 = vpop.xlane.xlu0 %1313
    %v1315 = vsub.f32 %v1307, %v1311
    %v1316 = vsub.f32 %v1308, %v1314
    %v1317 = vmul.f32 %v1315, 1.442695
    %v1318 = vpow.pop %v1317
    %v1319 = vmul.f32 %v1316, 1.442695
    %v1320 = vpow.pop %v1319
    %v1321 = vsel %vm484, %v1318, 0.0
    %1322 = vadd.xlane.f32.xlu0 %v1321
    %v1323 = vpop.xlane.xlu0 %1322
    %v1324 = vsel %vm484, %v1320, 0.0
    %1325 = vadd.xlane.f32.xlu0 %v1324
    %v1326 = vpop.xlane.xlu0 %1325
    %v1327 = vrcp.pop %v1323
    %v1328 = vrcp.pop %v1326
    %v1329 = vmul.f32 %v1318, %v1327
    %v1330 = vmul.f32 %v1320, %v1328
    %v1332 = vsel %vm484, %v1329, 0
    %1334 = vmatprep.subr.mxu0 0.0
    %1335 = vmatpush1.msra.mxu0 0.0
    %1336 = vmatprep.subr.mxu0 0.0
    %1337 = vmatpush1.msra.mxu0 0.0
    %1338 = vmatprep.subr.mxu0 0.0
    %1339 = vmatpush1.msra.mxu0 0.0
    %1340 = vmatprep.subr.mxu0 0.0
    %1341 = vmatpush1.msra.mxu0 0.0
    %1342 = vmatprep.subr.mxu0 0.0
    %1343 = vmatpush1.msra.mxu0 0.0
    %1344 = vmatprep.subr.mxu0 0.0
    %1345 = vmatpush1.msra.mxu0 0.0
    %1346 = vmatprep.subr.mxu0 0.0
    %1347 = vmatpush1.msra.mxu0 0.0
    %1348 = vmatprep.subr.mxu0 0.0
    %1349 = vmatpush1.msra.mxu0 0.0
    %1350 = vmatprep.subr.mxu0 0.0
    %1351 = vmatpush1.msra.mxu0 0.0
    %1352 = vmatprep.subr.mxu0 0.0
    %1353 = vmatpush1.msra.mxu0 0.0
    %1354 = vmatprep.subr.mxu0 0.0
    %1355 = vmatpush1.msra.mxu0 0.0
    %1356 = vmatprep.subr.mxu0 0.0
    %1357 = vmatpush1.msra.mxu0 0.0
    %1358 = vmatprep.subr.mxu0 0.0
    %1359 = vmatpush1.msra.mxu0 0.0
    %1360 = vmatprep.subr.mxu0 0.0
    %1361 = vmatpush1.msra.mxu0 0.0
    %1362 = vmatprep.subr.mxu0 0.0
    %1363 = vmatpush1.msra.mxu0 0.0
    %1364 = vmatprep.subr.mxu0 0.0
    %1365 = vmatpush1.msra.mxu0 %v1147
    %1366 = vmatprep.subr.mxu0 0.0
    %1367 = vmatpush2.msra.mxu0 0.0
    %1368 = vmatprep.subr.mxu0 0.0
    %1369 = vmatpush2.msra.mxu0 0.0
    %1370 = vmatprep.subr.mxu0 0.0
    %1371 = vmatpush2.msra.mxu0 0.0
    %1372 = vmatprep.subr.mxu0 0.0
    %1373 = vmatpush2.msra.mxu0 0.0
    %1374 = vmatprep.subr.mxu0 0.0
    %1375 = vmatpush2.msra.mxu0 0.0
    %1376 = vmatprep.subr.mxu0 0.0
    %1377 = vmatpush2.msra.mxu0 0.0
    %1378 = vmatprep.subr.mxu0 0.0
    %1379 = vmatpush2.msra.mxu0 0.0
    %1380 = vmatprep.subr.mxu0 0.0
    %1381 = vmatpush2.msra.mxu0 0.0
    %1382 = vmatprep.subr.mxu0 0.0
    %1383 = vmatpush2.msra.mxu0 0.0
    %1384 = vmatprep.subr.mxu0 0.0
    %1385 = vmatpush2.msra.mxu0 0.0
    %1386 = vmatprep.subr.mxu0 0.0
    %1387 = vmatpush2.msra.mxu0 0.0
    %1388 = vmatprep.subr.mxu0 0.0
    %1389 = vmatpush2.msra.mxu0 0.0
    %1390 = vmatprep.subr.mxu0 0.0
    %1391 = vmatpush2.msra.mxu0 0.0
    %1392 = vmatprep.subr.mxu0 0.0
    %1393 = vmatpush2.msra.mxu0 0.0
    %1394 = vmatprep.subr.mxu0 0.0
    %1395 = vmatpush2.msra.mxu0 0.0
    %1396 = vmatprep.subr.mxu0 0.0
    %1397 = vmatpush2.msra.mxu0 0.0
    %1398 = vmatprep.mubr.f32.mxu0 0.0
    %1399 = vmatmul.mubr.f32.gmra.mxu0 %v1332
    %v1400 = vpop.f32.mrf.mxu0
    %v1401 = vadd.f32 0.0, %v1400
    %v1402 = vpop.f32.mrf.mxu0
    %1403 = vdwg.mxu0
    %v1405 = vsel %vm484, %v1330, 0
    %1407 = vmatprep.subr.mxu0 0.0
    %1408 = vmatpush1.msra.mxu0 0.0
    %1409 = vmatprep.subr.mxu0 0.0
    %1410 = vmatpush1.msra.mxu0 0.0
    %1411 = vmatprep.subr.mxu0 0.0
    %1412 = vmatpush1.msra.mxu0 0.0
    %1413 = vmatprep.subr.mxu0 0.0
    %1414 = vmatpush1.msra.mxu0 0.0
    %1415 = vmatprep.subr.mxu0 0.0
    %1416 = vmatpush1.msra.mxu0 0.0
    %1417 = vmatprep.subr.mxu0 0.0
    %1418 = vmatpush1.msra.mxu0 0.0
    %1419 = vmatprep.subr.mxu0 0.0
    %1420 = vmatpush1.msra.mxu0 0.0
    %1421 = vmatprep.subr.mxu0 0.0
    %1422 = vmatpush1.msra.mxu0 0.0
    %1423 = vmatprep.subr.mxu0 0.0
    %1424 = vmatpush1.msra.mxu0 0.0
    %1425 = vmatprep.subr.mxu0 0.0
    %1426 = vmatpush1.msra.mxu0 0.0
    %1427 = vmatprep.subr.mxu0 0.0
    %1428 = vmatpush1.msra.mxu0 0.0
    %1429 = vmatprep.subr.mxu0 0.0
    %1430 = vmatpush1.msra.mxu0 0.0
    %1431 = vmatprep.subr.mxu0 0.0
    %1432 = vmatpush1.msra.mxu0 0.0
    %1433 = vmatprep.subr.mxu0 0.0
    %1434 = vmatpush1.msra.mxu0 0.0
    %1435 = vmatprep.subr.mxu0 0.0
    %1436 = vmatpush1.msra.mxu0 0.0
    %1437 = vmatprep.subr.mxu0 0.0
    %1438 = vmatpush1.msra.mxu0 %v1152
    %1439 = vmatprep.subr.mxu0 0.0
    %1440 = vmatpush2.msra.mxu0 0.0
    %1441 = vmatprep.subr.mxu0 0.0
    %1442 = vmatpush2.msra.mxu0 0.0
    %1443 = vmatprep.subr.mxu0 0.0
    %1444 = vmatpush2.msra.mxu0 0.0
    %1445 = vmatprep.subr.mxu0 0.0
    %1446 = vmatpush2.msra.mxu0 0.0
    %1447 = vmatprep.subr.mxu0 0.0
    %1448 = vmatpush2.msra.mxu0 0.0
    %1449 = vmatprep.subr.mxu0 0.0
    %1450 = vmatpush2.msra.mxu0 0.0
    %1451 = vmatprep.subr.mxu0 0.0
    %1452 = vmatpush2.msra.mxu0 0.0
    %1453 = vmatprep.subr.mxu0 0.0
    %1454 = vmatpush2.msra.mxu0 0.0
    %1455 = vmatprep.subr.mxu0 0.0
    %1456 = vmatpush2.msra.mxu0 0.0
    %1457 = vmatprep.subr.mxu0 0.0
    %1458 = vmatpush2.msra.mxu0 0.0
    %1459 = vmatprep.subr.mxu0 0.0
    %1460 = vmatpush2.msra.mxu0 0.0
    %1461 = vmatprep.subr.mxu0 0.0
    %1462 = vmatpush2.msra.mxu0 0.0
    %1463 = vmatprep.subr.mxu0 0.0
    %1464 = vmatpush2.msra.mxu0 0.0
    %1465 = vmatprep.subr.mxu0 0.0
    %1466 = vmatpush2.msra.mxu0 0.0
    %1467 = vmatprep.subr.mxu0 0.0
    %1468 = vmatpush2.msra.mxu0 0.0
    %1469 = vmatprep.subr.mxu0 0.0
    %1470 = vmatpush2.msra.mxu0 0.0
    %1471 = vmatprep.mubr.f32.mxu0 0.0
    %1472 = vmatmul.mubr.f32.gmra.mxu0 %v1405
    %v1473 = vpop.f32.mrf.mxu0
    %v1474 = vadd.f32 0.0, %v1473
    %v1475 = vpop.f32.mrf.mxu0
    %1476 = vdwg.mxu0
    %s1477 = scalar_lea.vmem %s5, 8
    %v1478 = vld [vmem:[%s1477] sm:$0xff]
    %v1480 = vsel %vm484, %v1401, 0
    %v1483 = vsel %vm484, %v1474, 0
    %1485 = vmatprep.subr.mxu0 0.0
    %1486 = vmatpush1.msra.mxu0 0.0
    %1487 = vmatprep.subr.mxu0 0.0
    %1488 = vmatpush1.msra.mxu0 0.0
    %1489 = vmatprep.subr.mxu0 0.0
    %1490 = vmatpush1.msra.mxu0 0.0
    %1491 = vmatprep.subr.mxu0 0.0
    %1492 = vmatpush1.msra.mxu0 0.0
    %1493 = vmatprep.subr.mxu0 0.0
    %1494 = vmatpush1.msra.mxu0 0.0
    %1495 = vmatprep.subr.mxu0 0.0
    %1496 = vmatpush1.msra.mxu0 0.0
    %1497 = vmatprep.subr.mxu0 0.0
    %1498 = vmatpush1.msra.mxu0 0.0
    %1499 = vmatprep.subr.mxu0 0.0
    %1500 = vmatpush1.msra.mxu0 0.0
    %1501 = vmatprep.subr.mxu0 0.0
    %1502 = vmatpush1.msra.mxu0 0.0
    %1503 = vmatprep.subr.mxu0 0.0
    %1504 = vmatpush1.msra.mxu0 0.0
    %1505 = vmatprep.subr.mxu0 0.0
    %1506 = vmatpush1.msra.mxu0 0.0
    %1507 = vmatprep.subr.mxu0 0.0
    %1508 = vmatpush1.msra.mxu0 0.0
    %1509 = vmatprep.subr.mxu0 0.0
    %1510 = vmatpush1.msra.mxu0 0.0
    %1511 = vmatprep.subr.mxu0 0.0
    %1512 = vmatpush1.msra.mxu0 0.0
    %1513 = vmatprep.subr.mxu0 0.0
    %1514 = vmatpush1.msra.mxu0 0.0
    %1515 = vmatprep.subr.mxu0 0.0
    %1516 = vmatpush1.msra.mxu0 %v1478
    %1517 = vmatprep.subr.mxu0 0.0
    %1518 = vmatpush2.msra.mxu0 0.0
    %1519 = vmatprep.subr.mxu0 0.0
    %1520 = vmatpush2.msra.mxu0 0.0
    %1521 = vmatprep.subr.mxu0 0.0
    %1522 = vmatpush2.msra.mxu0 0.0
    %1523 = vmatprep.subr.mxu0 0.0
    %1524 = vmatpush2.msra.mxu0 0.0
    %1525 = vmatprep.subr.mxu0 0.0
    %1526 = vmatpush2.msra.mxu0 0.0
    %1527 = vmatprep.subr.mxu0 0.0
    %1528 = vmatpush2.msra.mxu0 0.0
    %1529 = vmatprep.subr.mxu0 0.0
    %1530 = vmatpush2.msra.mxu0 0.0
    %1531 = vmatprep.subr.mxu0 0.0
    %1532 = vmatpush2.msra.mxu0 0.0
    %1533 = vmatprep.subr.mxu0 0.0
    %1534 = vmatpush2.msra.mxu0 0.0
    %1535 = vmatprep.subr.mxu0 0.0
    %1536 = vmatpush2.msra.mxu0 0.0
    %1537 = vmatprep.subr.mxu0 0.0
    %1538 = vmatpush2.msra.mxu0 0.0
    %1539 = vmatprep.subr.mxu0 0.0
    %1540 = vmatpush2.msra.mxu0 0.0
    %1541 = vmatprep.subr.mxu0 0.0
    %1542 = vmatpush2.msra.mxu0 0.0
    %1543 = vmatprep.subr.mxu0 0.0
    %1544 = vmatpush2.msra.mxu0 0.0
    %1545 = vmatprep.subr.mxu0 0.0
    %1546 = vmatpush2.msra.mxu0 0.0
    %1547 = vmatprep.subr.mxu0 0.0
    %1548 = vmatpush2.msra.mxu0 0.0
    %1549 = vmatprep.mubr.f32.mxu0 0.0
    %1550 = vmatmul.mubr.f32.gmra.mxu0 %v1480
    %v1551 = vpop.f32.mrf.mxu0
    %v1552 = vadd.f32 0.0, %v1551
    %v1553 = vpop.f32.mrf.mxu0
    %1554 = vmatprep.mubr.f32.mxu0 0.0
    %1555 = vmatmul.mubr.f32.gmra.mxu0 %v1483
    %v1556 = vpop.f32.mrf.mxu0
    %v1557 = vadd.f32 0.0, %v1556
    %v1558 = vpop.f32.mrf.mxu0
    %1559 = vdwg.mxu0
    %v1560 = vadd.f32 %v889, %v1552
    %v1561 = vadd.f32 %v890, %v1557
    %s1562 = scalar_lea.vmem %s3, 64
    %v1563 = vld [vmem:[%s1562] sm:$0xff]
    %v1564 = vld [vmem:[%s1562 + $0x8] sm:$0xff]
    %v1565 = vld [vmem:[%s1562 + $0x10] sm:$0xff]
    %v1566 = vld [vmem:[%s1562 + $0x18] sm:$0xff]
    %s1567 = scalar_lea.vmem %s3, 192
    %v1568 = vld [vmem:[%s1567] sm:$0xff]
    %v1569 = vld [vmem:[%s1567 + $0x8] sm:$0xff]
    %v1570 = vld [vmem:[%s1567 + $0x10] sm:$0xff]
    %v1571 = vld [vmem:[%s1567 + $0x18] sm:$0xff]
    %s1572 = scalar_lea.vmem %s3, 320
    %v1573 = vld [vmem:[%s1572] sm:$0xff]
    %v1574 = vld [vmem:[%s1572 + $0x8] sm:$0xff]
    %v1575 = vld [vmem:[%s1572 + $0x10] sm:$0xff]
    %v1576 = vld [vmem:[%s1572 + $0x18] sm:$0xff]
    %s1577 = scalar_lea.vmem %s4, 2
    %v1578 = vld [vmem:[%s1577] sm:$0x1]
    %s1579 = scalar_lea.vmem %s4, 6
    %v1580 = vld [vmem:[%s1579] sm:$0x1]
    %s1581 = scalar_lea.vmem %s4, 10
    %v1582 = vld [vmem:[%s1581] sm:$0x1]
    %v1584 = vlaneseq
    %v1585 = vshrl.u32 %v1584, 7
    %v1586 = vsub.s32 0, %v1585
    %v1587 = vrot.slane %v1578, %v1586
    %1589 = vmatprep.subr.mxu0 0.0
    %1590 = vmatpush1.msra.mxu0 0.0
    %1591 = vmatprep.subr.mxu0 0.0
    %1592 = vmatpush1.msra.mxu0 0.0
    %1593 = vmatprep.subr.mxu0 0.0
    %1594 = vmatpush1.msra.mxu0 0.0
    %1595 = vmatprep.subr.mxu0 0.0
    %1596 = vmatpush1.msra.mxu0 0.0
    %1597 = vmatprep.subr.mxu0 0.0
    %1598 = vmatpush1.msra.mxu0 0.0
    %1599 = vmatprep.subr.mxu0 0.0
    %1600 = vmatpush1.msra.mxu0 0.0
    %1601 = vmatprep.subr.mxu0 0.0
    %1602 = vmatpush1.msra.mxu0 0.0
    %1603 = vmatprep.subr.mxu0 0.0
    %1604 = vmatpush1.msra.mxu0 0.0
    %1605 = vmatprep.subr.mxu0 0.0
    %1606 = vmatpush1.msra.mxu0 0.0
    %1607 = vmatprep.subr.mxu0 0.0
    %1608 = vmatpush1.msra.mxu0 0.0
    %1609 = vmatprep.subr.mxu0 0.0
    %1610 = vmatpush1.msra.mxu0 0.0
    %1611 = vmatprep.subr.mxu0 0.0
    %1612 = vmatpush1.msra.mxu0 0.0
    %1613 = vmatprep.subr.mxu0 0.0
    %1614 = vmatpush1.msra.mxu0 %v1566
    %1615 = vmatprep.subr.mxu0 0.0
    %1616 = vmatpush1.msra.mxu0 %v1565
    %1617 = vmatprep.subr.mxu0 0.0
    %1618 = vmatpush1.msra.mxu0 %v1564
    %1619 = vmatprep.subr.mxu0 0.0
    %1620 = vmatpush1.msra.mxu0 %v1563
    %1621 = vmatprep.subr.mxu0 0.0
    %1622 = vmatpush2.msra.mxu0 0.0
    %1623 = vmatprep.subr.mxu0 0.0
    %1624 = vmatpush2.msra.mxu0 0.0
    %1625 = vmatprep.subr.mxu0 0.0
    %1626 = vmatpush2.msra.mxu0 0.0
    %1627 = vmatprep.subr.mxu0 0.0
    %1628 = vmatpush2.msra.mxu0 0.0
    %1629 = vmatprep.subr.mxu0 0.0
    %1630 = vmatpush2.msra.mxu0 0.0
    %1631 = vmatprep.subr.mxu0 0.0
    %1632 = vmatpush2.msra.mxu0 0.0
    %1633 = vmatprep.subr.mxu0 0.0
    %1634 = vmatpush2.msra.mxu0 0.0
    %1635 = vmatprep.subr.mxu0 0.0
    %1636 = vmatpush2.msra.mxu0 0.0
    %1637 = vmatprep.subr.mxu0 0.0
    %1638 = vmatpush2.msra.mxu0 0.0
    %1639 = vmatprep.subr.mxu0 0.0
    %1640 = vmatpush2.msra.mxu0 0.0
    %1641 = vmatprep.subr.mxu0 0.0
    %1642 = vmatpush2.msra.mxu0 0.0
    %1643 = vmatprep.subr.mxu0 0.0
    %1644 = vmatpush2.msra.mxu0 0.0
    %1645 = vmatprep.subr.mxu0 0.0
    %1646 = vmatpush2.msra.mxu0 0.0
    %1647 = vmatprep.subr.mxu0 0.0
    %1648 = vmatpush2.msra.mxu0 0.0
    %1649 = vmatprep.subr.mxu0 0.0
    %1650 = vmatpush2.msra.mxu0 0.0
    %1651 = vmatprep.subr.mxu0 0.0
    %1652 = vmatpush2.msra.mxu0 0.0
    %1653 = vmatprep.mubr.f32.mxu0 0.0
    %1654 = vmatmul.mubr.f32.gmra.mxu0 %v242
    %v1655 = vpop.f32.mrf.mxu0
    %v1656 = vadd.f32 %v1587, %v1655
    %v1657 = vpop.f32.mrf.mxu0
    %1658 = vmatprep.mubr.f32.mxu0 0.0
    %1659 = vmatmul.mubr.f32.gmra.mxu0 %v245
    %v1660 = vpop.f32.mrf.mxu0
    %v1661 = vadd.f32 %v1587, %v1660
    %v1662 = vpop.f32.mrf.mxu0
    %1663 = vdwg.mxu0
    %v1665 = vlaneseq
    %v1666 = vshrl.u32 %v1665, 7
    %v1667 = vsub.s32 0, %v1666
    %v1668 = vrot.slane %v1580, %v1667
    %1670 = vmatprep.subr.mxu0 0.0
    %1671 = vmatpush1.msra.mxu0 0.0
    %1672 = vmatprep.subr.mxu0 0.0
    %1673 = vmatpush1.msra.mxu0 0.0
    %1674 = vmatprep.subr.mxu0 0.0
    %1675 = vmatpush1.msra.mxu0 0.0
    %1676 = vmatprep.subr.mxu0 0.0
    %1677 = vmatpush1.msra.mxu0 0.0
    %1678 = vmatprep.subr.mxu0 0.0
    %1679 = vmatpush1.msra.mxu0 0.0
    %1680 = vmatprep.subr.mxu0 0.0
    %1681 = vmatpush1.msra.mxu0 0.0
    %1682 = vmatprep.subr.mxu0 0.0
    %1683 = vmatpush1.msra.mxu0 0.0
    %1684 = vmatprep.subr.mxu0 0.0
    %1685 = vmatpush1.msra.mxu0 0.0
    %1686 = vmatprep.subr.mxu0 0.0
    %1687 = vmatpush1.msra.mxu0 0.0
    %1688 = vmatprep.subr.mxu0 0.0
    %1689 = vmatpush1.msra.mxu0 0.0
    %1690 = vmatprep.subr.mxu0 0.0
    %1691 = vmatpush1.msra.mxu0 0.0
    %1692 = vmatprep.subr.mxu0 0.0
    %1693 = vmatpush1.msra.mxu0 0.0
    %1694 = vmatprep.subr.mxu0 0.0
    %1695 = vmatpush1.msra.mxu0 %v1571
    %1696 = vmatprep.subr.mxu0 0.0
    %1697 = vmatpush1.msra.mxu0 %v1570
    %1698 = vmatprep.subr.mxu0 0.0
    %1699 = vmatpush1.msra.mxu0 %v1569
    %1700 = vmatprep.subr.mxu0 0.0
    %1701 = vmatpush1.msra.mxu0 %v1568
    %1702 = vmatprep.subr.mxu0 0.0
    %1703 = vmatpush2.msra.mxu0 0.0
    %1704 = vmatprep.subr.mxu0 0.0
    %1705 = vmatpush2.msra.mxu0 0.0
    %1706 = vmatprep.subr.mxu0 0.0
    %1707 = vmatpush2.msra.mxu0 0.0
    %1708 = vmatprep.subr.mxu0 0.0
    %1709 = vmatpush2.msra.mxu0 0.0
    %1710 = vmatprep.subr.mxu0 0.0
    %1711 = vmatpush2.msra.mxu0 0.0
    %1712 = vmatprep.subr.mxu0 0.0
    %1713 = vmatpush2.msra.mxu0 0.0
    %1714 = vmatprep.subr.mxu0 0.0
    %1715 = vmatpush2.msra.mxu0 0.0
    %1716 = vmatprep.subr.mxu0 0.0
    %1717 = vmatpush2.msra.mxu0 0.0
    %1718 = vmatprep.subr.mxu0 0.0
    %1719 = vmatpush2.msra.mxu0 0.0
    %1720 = vmatprep.subr.mxu0 0.0
    %1721 = vmatpush2.msra.mxu0 0.0
    %1722 = vmatprep.subr.mxu0 0.0
    %1723 = vmatpush2.msra.mxu0 0.0
    %1724 = vmatprep.subr.mxu0 0.0
    %1725 = vmatpush2.msra.mxu0 0.0
    %1726 = vmatprep.subr.mxu0 0.0
    %1727 = vmatpush2.msra.mxu0 0.0
    %1728 = vmatprep.subr.mxu0 0.0
    %1729 = vmatpush2.msra.mxu0 0.0
    %1730 = vmatprep.subr.mxu0 0.0
    %1731 = vmatpush2.msra.mxu0 0.0
    %1732 = vmatprep.subr.mxu0 0.0
    %1733 = vmatpush2.msra.mxu0 0.0
    %1734 = vmatprep.mubr.f32.mxu0 0.0
    %1735 = vmatmul.mubr.f32.gmra.mxu0 %v242
    %v1736 = vpop.f32.mrf.mxu0
    %v1737 = vadd.f32 %v1668, %v1736
    %v1738 = vpop.f32.mrf.mxu0
    %1739 = vmatprep.mubr.f32.mxu0 0.0
    %1740 = vmatmul.mubr.f32.gmra.mxu0 %v245
    %v1741 = vpop.f32.mrf.mxu0
    %v1742 = vadd.f32 %v1668, %v1741
    %v1743 = vpop.f32.mrf.mxu0
    %1744 = vdwg.mxu0
    %v1746 = vlaneseq
    %v1747 = vshrl.u32 %v1746, 7
    %v1748 = vsub.s32 0, %v1747
    %v1749 = vrot.slane %v1582, %v1748
    %1751 = vmatprep.subr.mxu0 0.0
    %1752 = vmatpush1.msra.mxu0 0.0
    %1753 = vmatprep.subr.mxu0 0.0
    %1754 = vmatpush1.msra.mxu0 0.0
    %1755 = vmatprep.subr.mxu0 0.0
    %1756 = vmatpush1.msra.mxu0 0.0
    %1757 = vmatprep.subr.mxu0 0.0
    %1758 = vmatpush1.msra.mxu0 0.0
    %1759 = vmatprep.subr.mxu0 0.0
    %1760 = vmatpush1.msra.mxu0 0.0
    %1761 = vmatprep.subr.mxu0 0.0
    %1762 = vmatpush1.msra.mxu0 0.0
    %1763 = vmatprep.subr.mxu0 0.0
    %1764 = vmatpush1.msra.mxu0 0.0
    %1765 = vmatprep.subr.mxu0 0.0
    %1766 = vmatpush1.msra.mxu0 0.0
    %1767 = vmatprep.subr.mxu0 0.0
    %1768 = vmatpush1.msra.mxu0 0.0
    %1769 = vmatprep.subr.mxu0 0.0
    %1770 = vmatpush1.msra.mxu0 0.0
    %1771 = vmatprep.subr.mxu0 0.0
    %1772 = vmatpush1.msra.mxu0 0.0
    %1773 = vmatprep.subr.mxu0 0.0
    %1774 = vmatpush1.msra.mxu0 0.0
    %1775 = vmatprep.subr.mxu0 0.0
    %1776 = vmatpush1.msra.mxu0 %v1576
    %1777 = vmatprep.subr.mxu0 0.0
    %1778 = vmatpush1.msra.mxu0 %v1575
    %1779 = vmatprep.subr.mxu0 0.0
    %1780 = vmatpush1.msra.mxu0 %v1574
    %1781 = vmatprep.subr.mxu0 0.0
    %1782 = vmatpush1.msra.mxu0 %v1573
    %1783 = vmatprep.subr.mxu0 0.0
    %1784 = vmatpush2.msra.mxu0 0.0
    %1785 = vmatprep.subr.mxu0 0.0
    %1786 = vmatpush2.msra.mxu0 0.0
    %1787 = vmatprep.subr.mxu0 0.0
    %1788 = vmatpush2.msra.mxu0 0.0
    %1789 = vmatprep.subr.mxu0 0.0
    %1790 = vmatpush2.msra.mxu0 0.0
    %1791 = vmatprep.subr.mxu0 0.0
    %1792 = vmatpush2.msra.mxu0 0.0
    %1793 = vmatprep.subr.mxu0 0.0
    %1794 = vmatpush2.msra.mxu0 0.0
    %1795 = vmatprep.subr.mxu0 0.0
    %1796 = vmatpush2.msra.mxu0 0.0
    %1797 = vmatprep.subr.mxu0 0.0
    %1798 = vmatpush2.msra.mxu0 0.0
    %1799 = vmatprep.subr.mxu0 0.0
    %1800 = vmatpush2.msra.mxu0 0.0
    %1801 = vmatprep.subr.mxu0 0.0
    %1802 = vmatpush2.msra.mxu0 0.0
    %1803 = vmatprep.subr.mxu0 0.0
    %1804 = vmatpush2.msra.mxu0 0.0
    %1805 = vmatprep.subr.mxu0 0.0
    %1806 = vmatpush2.msra.mxu0 0.0
    %1807 = vmatprep.subr.mxu0 0.0
    %1808 = vmatpush2.msra.mxu0 0.0
    %1809 = vmatprep.subr.mxu0 0.0
    %1810 = vmatpush2.msra.mxu0 0.0
    %1811 = vmatprep.subr.mxu0 0.0
    %1812 = vmatpush2.msra.mxu0 0.0
    %1813 = vmatprep.subr.mxu0 0.0
    %1814 = vmatpush2.msra.mxu0 0.0
    %1815 = vmatprep.mubr.f32.mxu0 0.0
    %1816 = vmatmul.mubr.f32.gmra.mxu0 %v242
    %v1817 = vpop.f32.mrf.mxu0
    %v1818 = vadd.f32 %v1749, %v1817
    %v1819 = vpop.f32.mrf.mxu0
    %1820 = vmatprep.mubr.f32.mxu0 0.0
    %1821 = vmatmul.mubr.f32.gmra.mxu0 %v245
    %v1822 = vpop.f32.mrf.mxu0
    %v1823 = vadd.f32 %v1749, %v1822
    %v1824 = vpop.f32.mrf.mxu0
    %1825 = vdwg.mxu0
    %v1827 = vsel %vm484, %v1656, 0
    %v1830 = vsel %vm484, %v1737, 0
    %1832 = vmatprep.subr.mxu0 0.0
    %1833 = vmatpush1.xpose.msra.mxu0 0.0
    %1834 = vmatprep.subr.mxu0 0.0
    %1835 = vmatpush1.xpose.msra.mxu0 0.0
    %1836 = vmatprep.subr.mxu0 0.0
    %1837 = vmatpush1.xpose.msra.mxu0 0.0
    %1838 = vmatprep.subr.mxu0 0.0
    %1839 = vmatpush1.xpose.msra.mxu0 0.0
    %1840 = vmatprep.subr.mxu0 0.0
    %1841 = vmatpush1.xpose.msra.mxu0 0.0
    %1842 = vmatprep.subr.mxu0 0.0
    %1843 = vmatpush1.xpose.msra.mxu0 0.0
    %1844 = vmatprep.subr.mxu0 0.0
    %1845 = vmatpush1.xpose.msra.mxu0 0.0
    %1846 = vmatprep.subr.mxu0 0.0
    %1847 = vmatpush1.xpose.msra.mxu0 0.0
    %1848 = vmatprep.subr.mxu0 0.0
    %1849 = vmatpush1.xpose.msra.mxu0 0.0
    %1850 = vmatprep.subr.mxu0 0.0
    %1851 = vmatpush1.xpose.msra.mxu0 0.0
    %1852 = vmatprep.subr.mxu0 0.0
    %1853 = vmatpush1.xpose.msra.mxu0 0.0
    %1854 = vmatprep.subr.mxu0 0.0
    %1855 = vmatpush1.xpose.msra.mxu0 0.0
    %1856 = vmatprep.subr.mxu0 0.0
    %1857 = vmatpush1.xpose.msra.mxu0 0.0
    %1858 = vmatprep.subr.mxu0 0.0
    %1859 = vmatpush1.xpose.msra.mxu0 0.0
    %1860 = vmatprep.subr.mxu0 0.0
    %1861 = vmatpush1.xpose.msra.mxu0 0.0
    %1862 = vmatprep.subr.mxu0 0.0
    %1863 = vmatpush1.xpose.msra.mxu0 %v1830
    %1864 = vmatprep.subr.mxu0 0.0
    %1865 = vmatpush2.xpose.msra.mxu0 0.0
    %1866 = vmatprep.subr.mxu0 0.0
    %1867 = vmatpush2.xpose.msra.mxu0 0.0
    %1868 = vmatprep.subr.mxu0 0.0
    %1869 = vmatpush2.xpose.msra.mxu0 0.0
    %1870 = vmatprep.subr.mxu0 0.0
    %1871 = vmatpush2.xpose.msra.mxu0 0.0
    %1872 = vmatprep.subr.mxu0 0.0
    %1873 = vmatpush2.xpose.msra.mxu0 0.0
    %1874 = vmatprep.subr.mxu0 0.0
    %1875 = vmatpush2.xpose.msra.mxu0 0.0
    %1876 = vmatprep.subr.mxu0 0.0
    %1877 = vmatpush2.xpose.msra.mxu0 0.0
    %1878 = vmatprep.subr.mxu0 0.0
    %1879 = vmatpush2.xpose.msra.mxu0 0.0
    %1880 = vmatprep.subr.mxu0 0.0
    %1881 = vmatpush2.xpose.msra.mxu0 0.0
    %1882 = vmatprep.subr.mxu0 0.0
    %1883 = vmatpush2.xpose.msra.mxu0 0.0
    %1884 = vmatprep.subr.mxu0 0.0
    %1885 = vmatpush2.xpose.msra.mxu0 0.0
    %1886 = vmatprep.subr.mxu0 0.0
    %1887 = vmatpush2.xpose.msra.mxu0 0.0
    %1888 = vmatprep.subr.mxu0 0.0
    %1889 = vmatpush2.xpose.msra.mxu0 0.0
    %1890 = vmatprep.subr.mxu0 0.0
    %1891 = vmatpush2.xpose.msra.mxu0 0.0
    %1892 = vmatprep.subr.mxu0 0.0
    %1893 = vmatpush2.xpose.msra.mxu0 0.0
    %1894 = vmatprep.subr.mxu0 0.0
    %1895 = vmatpush2.xpose.msra.mxu0 0.0
    %1896 = vmatprep.mubr.f32.mxu0 0.0
    %1897 = vmatmul.mubr.f32.gmra.mxu0 %v1827
    %v1898 = vpop.f32.mrf.mxu0
    %v1899 = vadd.f32 0.0, %v1898
    %v1900 = vpop.f32.mrf.mxu0
    %1901 = vdwg.mxu0
    %v1903 = vsel %vm484, %v1661, 0
    %v1906 = vsel %vm484, %v1742, 0
    %1908 = vmatprep.subr.mxu0 0.0
    %1909 = vmatpush1.xpose.msra.mxu0 0.0
    %1910 = vmatprep.subr.mxu0 0.0
    %1911 = vmatpush1.xpose.msra.mxu0 0.0
    %1912 = vmatprep.subr.mxu0 0.0
    %1913 = vmatpush1.xpose.msra.mxu0 0.0
    %1914 = vmatprep.subr.mxu0 0.0
    %1915 = vmatpush1.xpose.msra.mxu0 0.0
    %1916 = vmatprep.subr.mxu0 0.0
    %1917 = vmatpush1.xpose.msra.mxu0 0.0
    %1918 = vmatprep.subr.mxu0 0.0
    %1919 = vmatpush1.xpose.msra.mxu0 0.0
    %1920 = vmatprep.subr.mxu0 0.0
    %1921 = vmatpush1.xpose.msra.mxu0 0.0
    %1922 = vmatprep.subr.mxu0 0.0
    %1923 = vmatpush1.xpose.msra.mxu0 0.0
    %1924 = vmatprep.subr.mxu0 0.0
    %1925 = vmatpush1.xpose.msra.mxu0 0.0
    %1926 = vmatprep.subr.mxu0 0.0
    %1927 = vmatpush1.xpose.msra.mxu0 0.0
    %1928 = vmatprep.subr.mxu0 0.0
    %1929 = vmatpush1.xpose.msra.mxu0 0.0
    %1930 = vmatprep.subr.mxu0 0.0
    %1931 = vmatpush1.xpose.msra.mxu0 0.0
    %1932 = vmatprep.subr.mxu0 0.0
    %1933 = vmatpush1.xpose.msra.mxu0 0.0
    %1934 = vmatprep.subr.mxu0 0.0
    %1935 = vmatpush1.xpose.msra.mxu0 0.0
    %1936 = vmatprep.subr.mxu0 0.0
    %1937 = vmatpush1.xpose.msra.mxu0 0.0
    %1938 = vmatprep.subr.mxu0 0.0
    %1939 = vmatpush1.xpose.msra.mxu0 %v1906
    %1940 = vmatprep.subr.mxu0 0.0
    %1941 = vmatpush2.xpose.msra.mxu0 0.0
    %1942 = vmatprep.subr.mxu0 0.0
    %1943 = vmatpush2.xpose.msra.mxu0 0.0
    %1944 = vmatprep.subr.mxu0 0.0
    %1945 = vmatpush2.xpose.msra.mxu0 0.0
    %1946 = vmatprep.subr.mxu0 0.0
    %1947 = vmatpush2.xpose.msra.mxu0 0.0
    %1948 = vmatprep.subr.mxu0 0.0
    %1949 = vmatpush2.xpose.msra.mxu0 0.0
    %1950 = vmatprep.subr.mxu0 0.0
    %1951 = vmatpush2.xpose.msra.mxu0 0.0
    %1952 = vmatprep.subr.mxu0 0.0
    %1953 = vmatpush2.xpose.msra.mxu0 0.0
    %1954 = vmatprep.subr.mxu0 0.0
    %1955 = vmatpush2.xpose.msra.mxu0 0.0
    %1956 = vmatprep.subr.mxu0 0.0
    %1957 = vmatpush2.xpose.msra.mxu0 0.0
    %1958 = vmatprep.subr.mxu0 0.0
    %1959 = vmatpush2.xpose.msra.mxu0 0.0
    %1960 = vmatprep.subr.mxu0 0.0
    %1961 = vmatpush2.xpose.msra.mxu0 0.0
    %1962 = vmatprep.subr.mxu0 0.0
    %1963 = vmatpush2.xpose.msra.mxu0 0.0
    %1964 = vmatprep.subr.mxu0 0.0
    %1965 = vmatpush2.xpose.msra.mxu0 0.0
    %1966 = vmatprep.subr.mxu0 0.0
    %1967 = vmatpush2.xpose.msra.mxu0 0.0
    %1968 = vmatprep.subr.mxu0 0.0
    %1969 = vmatpush2.xpose.msra.mxu0 0.0
    %1970 = vmatprep.subr.mxu0 0.0
    %1971 = vmatpush2.xpose.msra.mxu0 0.0
    %1972 = vmatprep.mubr.f32.mxu0 0.0
    %1973 = vmatmul.mubr.f32.gmra.mxu0 %v1903
    %v1974 = vpop.f32.mrf.mxu0
    %v1975 = vadd.f32 0.0, %v1974
    %v1976 = vpop.f32.mrf.mxu0
    %1977 = vdwg.mxu0
    %v1978 = vmul.f32 %v1899, 0.35355338
    %v1979 = vmul.f32 %v1975, 0.35355338
    %v1980 = vsel %vm484, %v1978, -inf
    %1981 = vmax.xlane.f32.xlu0 %v1980
    %v1982 = vpop.xlane.xlu0 %1981
    %v1983 = vsel %vm484, %v1979, -inf
    %1984 = vmax.xlane.f32.xlu0 %v1983
    %v1985 = vpop.xlane.xlu0 %1984
    %v1986 = vsub.f32 %v1978, %v1982
    %v1987 = vsub.f32 %v1979, %v1985
    %v1988 = vmul.f32 %v1986, 1.442695
    %v1989 = vpow.pop %v1988
    %v1990 = vmul.f32 %v1987, 1.442695
    %v1991 = vpow.pop %v1990
    %v1992 = vsel %vm484, %v1989, 0.0
    %1993 = vadd.xlane.f32.xlu0 %v1992
    %v1994 = vpop.xlane.xlu0 %1993
    %v1995 = vsel %vm484, %v1991, 0.0
    %1996 = vadd.xlane.f32.xlu0 %v1995
    %v1997 = vpop.xlane.xlu0 %1996
    %v1998 = vrcp.pop %v1994
    %v1999 = vrcp.pop %v1997
    %v2000 = vmul.f32 %v1989, %v1998
    %v2001 = vmul.f32 %v1991, %v1999
    %v2003 = vsel %vm484, %v2000, 0
    %2005 = vmatprep.subr.mxu0 0.0
    %2006 = vmatpush1.msra.mxu0 0.0
    %2007 = vmatprep.subr.mxu0 0.0
    %2008 = vmatpush1.msra.mxu0 0.0
    %2009 = vmatprep.subr.mxu0 0.0
    %2010 = vmatpush1.msra.mxu0 0.0
    %2011 = vmatprep.subr.mxu0 0.0
    %2012 = vmatpush1.msra.mxu0 0.0
    %2013 = vmatprep.subr.mxu0 0.0
    %2014 = vmatpush1.msra.mxu0 0.0
    %2015 = vmatprep.subr.mxu0 0.0
    %2016 = vmatpush1.msra.mxu0 0.0
    %2017 = vmatprep.subr.mxu0 0.0
    %2018 = vmatpush1.msra.mxu0 0.0
    %2019 = vmatprep.subr.mxu0 0.0
    %2020 = vmatpush1.msra.mxu0 0.0
    %2021 = vmatprep.subr.mxu0 0.0
    %2022 = vmatpush1.msra.mxu0 0.0
    %2023 = vmatprep.subr.mxu0 0.0
    %2024 = vmatpush1.msra.mxu0 0.0
    %2025 = vmatprep.subr.mxu0 0.0
    %2026 = vmatpush1.msra.mxu0 0.0
    %2027 = vmatprep.subr.mxu0 0.0
    %2028 = vmatpush1.msra.mxu0 0.0
    %2029 = vmatprep.subr.mxu0 0.0
    %2030 = vmatpush1.msra.mxu0 0.0
    %2031 = vmatprep.subr.mxu0 0.0
    %2032 = vmatpush1.msra.mxu0 0.0
    %2033 = vmatprep.subr.mxu0 0.0
    %2034 = vmatpush1.msra.mxu0 0.0
    %2035 = vmatprep.subr.mxu0 0.0
    %2036 = vmatpush1.msra.mxu0 %v1818
    %2037 = vmatprep.subr.mxu0 0.0
    %2038 = vmatpush2.msra.mxu0 0.0
    %2039 = vmatprep.subr.mxu0 0.0
    %2040 = vmatpush2.msra.mxu0 0.0
    %2041 = vmatprep.subr.mxu0 0.0
    %2042 = vmatpush2.msra.mxu0 0.0
    %2043 = vmatprep.subr.mxu0 0.0
    %2044 = vmatpush2.msra.mxu0 0.0
    %2045 = vmatprep.subr.mxu0 0.0
    %2046 = vmatpush2.msra.mxu0 0.0
    %2047 = vmatprep.subr.mxu0 0.0
    %2048 = vmatpush2.msra.mxu0 0.0
    %2049 = vmatprep.subr.mxu0 0.0
    %2050 = vmatpush2.msra.mxu0 0.0
    %2051 = vmatprep.subr.mxu0 0.0
    %2052 = vmatpush2.msra.mxu0 0.0
    %2053 = vmatprep.subr.mxu0 0.0
    %2054 = vmatpush2.msra.mxu0 0.0
    %2055 = vmatprep.subr.mxu0 0.0
    %2056 = vmatpush2.msra.mxu0 0.0
    %2057 = vmatprep.subr.mxu0 0.0
    %2058 = vmatpush2.msra.mxu0 0.0
    %2059 = vmatprep.subr.mxu0 0.0
    %2060 = vmatpush2.msra.mxu0 0.0
    %2061 = vmatprep.subr.mxu0 0.0
    %2062 = vmatpush2.msra.mxu0 0.0
    %2063 = vmatprep.subr.mxu0 0.0
    %2064 = vmatpush2.msra.mxu0 0.0
    %2065 = vmatprep.subr.mxu0 0.0
    %2066 = vmatpush2.msra.mxu0 0.0
    %2067 = vmatprep.subr.mxu0 0.0
    %2068 = vmatpush2.msra.mxu0 0.0
    %2069 = vmatprep.mubr.f32.mxu0 0.0
    %2070 = vmatmul.mubr.f32.gmra.mxu0 %v2003
    %v2071 = vpop.f32.mrf.mxu0
    %v2072 = vadd.f32 0.0, %v2071
    %v2073 = vpop.f32.mrf.mxu0
    %2074 = vdwg.mxu0
    %v2076 = vsel %vm484, %v2001, 0
    %2078 = vmatprep.subr.mxu0 0.0
    %2079 = vmatpush1.msra.mxu0 0.0
    %2080 = vmatprep.subr.mxu0 0.0
    %2081 = vmatpush1.msra.mxu0 0.0
    %2082 = vmatprep.subr.mxu0 0.0
    %2083 = vmatpush1.msra.mxu0 0.0
    %2084 = vmatprep.subr.mxu0 0.0
    %2085 = vmatpush1.msra.mxu0 0.0
    %2086 = vmatprep.subr.mxu0 0.0
    %2087 = vmatpush1.msra.mxu0 0.0
    %2088 = vmatprep.subr.mxu0 0.0
    %2089 = vmatpush1.msra.mxu0 0.0
    %2090 = vmatprep.subr.mxu0 0.0
    %2091 = vmatpush1.msra.mxu0 0.0
    %2092 = vmatprep.subr.mxu0 0.0
    %2093 = vmatpush1.msra.mxu0 0.0
    %2094 = vmatprep.subr.mxu0 0.0
    %2095 = vmatpush1.msra.mxu0 0.0
    %2096 = vmatprep.subr.mxu0 0.0
    %2097 = vmatpush1.msra.mxu0 0.0
    %2098 = vmatprep.subr.mxu0 0.0
    %2099 = vmatpush1.msra.mxu0 0.0
    %2100 = vmatprep.subr.mxu0 0.0
    %2101 = vmatpush1.msra.mxu0 0.0
    %2102 = vmatprep.subr.mxu0 0.0
    %2103 = vmatpush1.msra.mxu0 0.0
    %2104 = vmatprep.subr.mxu0 0.0
    %2105 = vmatpush1.msra.mxu0 0.0
    %2106 = vmatprep.subr.mxu0 0.0
    %2107 = vmatpush1.msra.mxu0 0.0
    %2108 = vmatprep.subr.mxu0 0.0
    %2109 = vmatpush1.msra.mxu0 %v1823
    %2110 = vmatprep.subr.mxu0 0.0
    %2111 = vmatpush2.msra.mxu0 0.0
    %2112 = vmatprep.subr.mxu0 0.0
    %2113 = vmatpush2.msra.mxu0 0.0
    %2114 = vmatprep.subr.mxu0 0.0
    %2115 = vmatpush2.msra.mxu0 0.0
    %2116 = vmatprep.subr.mxu0 0.0
    %2117 = vmatpush2.msra.mxu0 0.0
    %2118 = vmatprep.subr.mxu0 0.0
    %2119 = vmatpush2.msra.mxu0 0.0
    %2120 = vmatprep.subr.mxu0 0.0
    %2121 = vmatpush2.msra.mxu0 0.0
    %2122 = vmatprep.subr.mxu0 0.0
    %2123 = vmatpush2.msra.mxu0 0.0
    %2124 = vmatprep.subr.mxu0 0.0
    %2125 = vmatpush2.msra.mxu0 0.0
    %2126 = vmatprep.subr.mxu0 0.0
    %2127 = vmatpush2.msra.mxu0 0.0
    %2128 = vmatprep.subr.mxu0 0.0
    %2129 = vmatpush2.msra.mxu0 0.0
    %2130 = vmatprep.subr.mxu0 0.0
    %2131 = vmatpush2.msra.mxu0 0.0
    %2132 = vmatprep.subr.mxu0 0.0
    %2133 = vmatpush2.msra.mxu0 0.0
    %2134 = vmatprep.subr.mxu0 0.0
    %2135 = vmatpush2.msra.mxu0 0.0
    %2136 = vmatprep.subr.mxu0 0.0
    %2137 = vmatpush2.msra.mxu0 0.0
    %2138 = vmatprep.subr.mxu0 0.0
    %2139 = vmatpush2.msra.mxu0 0.0
    %2140 = vmatprep.subr.mxu0 0.0
    %2141 = vmatpush2.msra.mxu0 0.0
    %2142 = vmatprep.mubr.f32.mxu0 0.0
    %2143 = vmatmul.mubr.f32.gmra.mxu0 %v2076
    %v2144 = vpop.f32.mrf.mxu0
    %v2145 = vadd.f32 0.0, %v2144
    %v2146 = vpop.f32.mrf.mxu0
    %2147 = vdwg.mxu0
    %s2148 = scalar_lea.vmem %s5, 16
    %v2149 = vld [vmem:[%s2148] sm:$0xff]
    %v2151 = vsel %vm484, %v2072, 0
    %v2154 = vsel %vm484, %v2145, 0
    %2156 = vmatprep.subr.mxu0 0.0
    %2157 = vmatpush1.msra.mxu0 0.0
    %2158 = vmatprep.subr.mxu0 0.0
    %2159 = vmatpush1.msra.mxu0 0.0
    %2160 = vmatprep.subr.mxu0 0.0
    %2161 = vmatpush1.msra.mxu0 0.0
    %2162 = vmatprep.subr.mxu0 0.0
    %2163 = vmatpush1.msra.mxu0 0.0
    %2164 = vmatprep.subr.mxu0 0.0
    %2165 = vmatpush1.msra.mxu0 0.0
    %2166 = vmatprep.subr.mxu0 0.0
    %2167 = vmatpush1.msra.mxu0 0.0
    %2168 = vmatprep.subr.mxu0 0.0
    %2169 = vmatpush1.msra.mxu0 0.0
    %2170 = vmatprep.subr.mxu0 0.0
    %2171 = vmatpush1.msra.mxu0 0.0
    %2172 = vmatprep.subr.mxu0 0.0
    %2173 = vmatpush1.msra.mxu0 0.0
    %2174 = vmatprep.subr.mxu0 0.0
    %2175 = vmatpush1.msra.mxu0 0.0
    %2176 = vmatprep.subr.mxu0 0.0
    %2177 = vmatpush1.msra.mxu0 0.0
    %2178 = vmatprep.subr.mxu0 0.0
    %2179 = vmatpush1.msra.mxu0 0.0
    %2180 = vmatprep.subr.mxu0 0.0
    %2181 = vmatpush1.msra.mxu0 0.0
    %2182 = vmatprep.subr.mxu0 0.0
    %2183 = vmatpush1.msra.mxu0 0.0
    %2184 = vmatprep.subr.mxu0 0.0
    %2185 = vmatpush1.msra.mxu0 0.0
    %2186 = vmatprep.subr.mxu0 0.0
    %2187 = vmatpush1.msra.mxu0 %v2149
    %2188 = vmatprep.subr.mxu0 0.0
    %2189 = vmatpush2.msra.mxu0 0.0
    %2190 = vmatprep.subr.mxu0 0.0
    %2191 = vmatpush2.msra.mxu0 0.0
    %2192 = vmatprep.subr.mxu0 0.0
    %2193 = vmatpush2.msra.mxu0 0.0
    %2194 = vmatprep.subr.mxu0 0.0
    %2195 = vmatpush2.msra.mxu0 0.0
    %2196 = vmatprep.subr.mxu0 0.0
    %2197 = vmatpush2.msra.mxu0 0.0
    %2198 = vmatprep.subr.mxu0 0.0
    %2199 = vmatpush2.msra.mxu0 0.0
    %2200 = vmatprep.subr.mxu0 0.0
    %2201 = vmatpush2.msra.mxu0 0.0
    %2202 = vmatprep.subr.mxu0 0.0
    %2203 = vmatpush2.msra.mxu0 0.0
    %2204 = vmatprep.subr.mxu0 0.0
    %2205 = vmatpush2.msra.mxu0 0.0
    %2206 = vmatprep.subr.mxu0 0.0
    %2207 = vmatpush2.msra.mxu0 0.0
    %2208 = vmatprep.subr.mxu0 0.0
    %2209 = vmatpush2.msra.mxu0 0.0
    %2210 = vmatprep.subr.mxu0 0.0
    %2211 = vmatpush2.msra.mxu0 0.0
    %2212 = vmatprep.subr.mxu0 0.0
    %2213 = vmatpush2.msra.mxu0 0.0
    %2214 = vmatprep.subr.mxu0 0.0
    %2215 = vmatpush2.msra.mxu0 0.0
    %2216 = vmatprep.subr.mxu0 0.0
    %2217 = vmatpush2.msra.mxu0 0.0
    %2218 = vmatprep.subr.mxu0 0.0
    %2219 = vmatpush2.msra.mxu0 0.0
    %2220 = vmatprep.mubr.f32.mxu0 0.0
    %2221 = vmatmul.mubr.f32.gmra.mxu0 %v2151
    %v2222 = vpop.f32.mrf.mxu0
    %v2223 = vadd.f32 0.0, %v2222
    %v2224 = vpop.f32.mrf.mxu0
    %2225 = vmatprep.mubr.f32.mxu0 0.0
    %2226 = vmatmul.mubr.f32.gmra.mxu0 %v2154
    %v2227 = vpop.f32.mrf.mxu0
    %v2228 = vadd.f32 0.0, %v2227
    %v2229 = vpop.f32.mrf.mxu0
    %2230 = vdwg.mxu0
    %v2231 = vadd.f32 %v1560, %v2223
    %v2232 = vadd.f32 %v1561, %v2228
    %s2233 = scalar_lea.vmem %s3, 96
    %v2234 = vld [vmem:[%s2233] sm:$0xff]
    %v2235 = vld [vmem:[%s2233 + $0x8] sm:$0xff]
    %v2236 = vld [vmem:[%s2233 + $0x10] sm:$0xff]
    %v2237 = vld [vmem:[%s2233 + $0x18] sm:$0xff]
    %s2238 = scalar_lea.vmem %s3, 224
    %v2239 = vld [vmem:[%s2238] sm:$0xff]
    %v2240 = vld [vmem:[%s2238 + $0x8] sm:$0xff]
    %v2241 = vld [vmem:[%s2238 + $0x10] sm:$0xff]
    %v2242 = vld [vmem:[%s2238 + $0x18] sm:$0xff]
    %s2243 = scalar_lea.vmem %s3, 352
    %v2244 = vld [vmem:[%s2243] sm:$0xff]
    %v2245 = vld [vmem:[%s2243 + $0x8] sm:$0xff]
    %v2246 = vld [vmem:[%s2243 + $0x10] sm:$0xff]
    %v2247 = vld [vmem:[%s2243 + $0x18] sm:$0xff]
    %s2248 = scalar_lea.vmem %s4, 3
    %v2249 = vld [vmem:[%s2248] sm:$0x1]
    %s2250 = scalar_lea.vmem %s4, 7
    %v2251 = vld [vmem:[%s2250] sm:$0x1]
    %s2252 = scalar_lea.vmem %s4, 11
    %v2253 = vld [vmem:[%s2252] sm:$0x1]
    %v2255 = vlaneseq
    %v2256 = vshrl.u32 %v2255, 7
    %v2257 = vsub.s32 0, %v2256
    %v2258 = vrot.slane %v2249, %v2257
    %2260 = vmatprep.subr.mxu0 0.0
    %2261 = vmatpush1.msra.mxu0 0.0
    %2262 = vmatprep.subr.mxu0 0.0
    %2263 = vmatpush1.msra.mxu0 0.0
    %2264 = vmatprep.subr.mxu0 0.0
    %2265 = vmatpush1.msra.mxu0 0.0
    %2266 = vmatprep.subr.mxu0 0.0
    %2267 = vmatpush1.msra.mxu0 0.0
    %2268 = vmatprep.subr.mxu0 0.0
    %2269 = vmatpush1.msra.mxu0 0.0
    %2270 = vmatprep.subr.mxu0 0.0
    %2271 = vmatpush1.msra.mxu0 0.0
    %2272 = vmatprep.subr.mxu0 0.0
    %2273 = vmatpush1.msra.mxu0 0.0
    %2274 = vmatprep.subr.mxu0 0.0
    %2275 = vmatpush1.msra.mxu0 0.0
    %2276 = vmatprep.subr.mxu0 0.0
    %2277 = vmatpush1.msra.mxu0 0.0
    %2278 = vmatprep.subr.mxu0 0.0
    %2279 = vmatpush1.msra.mxu0 0.0
    %2280 = vmatprep.subr.mxu0 0.0
    %2281 = vmatpush1.msra.mxu0 0.0
    %2282 = vmatprep.subr.mxu0 0.0
    %2283 = vmatpush1.msra.mxu0 0.0
    %2284 = vmatprep.subr.mxu0 0.0
    %2285 = vmatpush1.msra.mxu0 %v2237
    %2286 = vmatprep.subr.mxu0 0.0
    %2287 = vmatpush1.msra.mxu0 %v2236
    %2288 = vmatprep.subr.mxu0 0.0
    %2289 = vmatpush1.msra.mxu0 %v2235
    %2290 = vmatprep.subr.mxu0 0.0
    %2291 = vmatpush1.msra.mxu0 %v2234
    %2292 = vmatprep.subr.mxu0 0.0
    %2293 = vmatpush2.msra.mxu0 0.0
    %2294 = vmatprep.subr.mxu0 0.0
    %2295 = vmatpush2.msra.mxu0 0.0
    %2296 = vmatprep.subr.mxu0 0.0
    %2297 = vmatpush2.msra.mxu0 0.0
    %2298 = vmatprep.subr.mxu0 0.0
    %2299 = vmatpush2.msra.mxu0 0.0
    %2300 = vmatprep.subr.mxu0 0.0
    %2301 = vmatpush2.msra.mxu0 0.0
    %2302 = vmatprep.subr.mxu0 0.0
    %2303 = vmatpush2.msra.mxu0 0.0
    %2304 = vmatprep.subr.mxu0 0.0
    %2305 = vmatpush2.msra.mxu0 0.0
    %2306 = vmatprep.subr.mxu0 0.0
    %2307 = vmatpush2.msra.mxu0 0.0
    %2308 = vmatprep.subr.mxu0 0.0
    %2309 = vmatpush2.msra.mxu0 0.0
    %2310 = vmatprep.subr.mxu0 0.0
    %2311 = vmatpush2.msra.mxu0 0.0
    %2312 = vmatprep.subr.mxu0 0.0
    %2313 = vmatpush2.msra.mxu0 0.0
    %2314 = vmatprep.subr.mxu0 0.0
    %2315 = vmatpush2.msra.mxu0 0.0
    %2316 = vmatprep.subr.mxu0 0.0
    %2317 = vmatpush2.msra.mxu0 0.0
    %2318 = vmatprep.subr.mxu0 0.0
    %2319 = vmatpush2.msra.mxu0 0.0
    %2320 = vmatprep.subr.mxu0 0.0
    %2321 = vmatpush2.msra.mxu0 0.0
    %2322 = vmatprep.subr.mxu0 0.0
    %2323 = vmatpush2.msra.mxu0 0.0
    %2324 = vmatprep.mubr.f32.mxu0 0.0
    %2325 = vmatmul.mubr.f32.gmra.mxu0 %v242
    %v2326 = vpop.f32.mrf.mxu0
    %v2327 = vadd.f32 %v2258, %v2326
    %v2328 = vpop.f32.mrf.mxu0
    %2329 = vmatprep.mubr.f32.mxu0 0.0
    %2330 = vmatmul.mubr.f32.gmra.mxu0 %v245
    %v2331 = vpop.f32.mrf.mxu0
    %v2332 = vadd.f32 %v2258, %v2331
    %v2333 = vpop.f32.mrf.mxu0
    %2334 = vdwg.mxu0
    %v2336 = vlaneseq
    %v2337 = vshrl.u32 %v2336, 7
    %v2338 = vsub.s32 0, %v2337
    %v2339 = vrot.slane %v2251, %v2338
    %2341 = vmatprep.subr.mxu0 0.0
    %2342 = vmatpush1.msra.mxu0 0.0
    %2343 = vmatprep.subr.mxu0 0.0
    %2344 = vmatpush1.msra.mxu0 0.0
    %2345 = vmatprep.subr.mxu0 0.0
    %2346 = vmatpush1.msra.mxu0 0.0
    %2347 = vmatprep.subr.mxu0 0.0
    %2348 = vmatpush1.msra.mxu0 0.0
    %2349 = vmatprep.subr.mxu0 0.0
    %2350 = vmatpush1.msra.mxu0 0.0
    %2351 = vmatprep.subr.mxu0 0.0
    %2352 = vmatpush1.msra.mxu0 0.0
    %2353 = vmatprep.subr.mxu0 0.0
    %2354 = vmatpush1.msra.mxu0 0.0
    %2355 = vmatprep.subr.mxu0 0.0
    %2356 = vmatpush1.msra.mxu0 0.0
    %2357 = vmatprep.subr.mxu0 0.0
    %2358 = vmatpush1.msra.mxu0 0.0
    %2359 = vmatprep.subr.mxu0 0.0
    %2360 = vmatpush1.msra.mxu0 0.0
    %2361 = vmatprep.subr.mxu0 0.0
    %2362 = vmatpush1.msra.mxu0 0.0
    %2363 = vmatprep.subr.mxu0 0.0
    %2364 = vmatpush1.msra.mxu0 0.0
    %2365 = vmatprep.subr.mxu0 0.0
    %2366 = vmatpush1.msra.mxu0 %v2242
    %2367 = vmatprep.subr.mxu0 0.0
    %2368 = vmatpush1.msra.mxu0 %v2241
    %2369 = vmatprep.subr.mxu0 0.0
    %2370 = vmatpush1.msra.mxu0 %v2240
    %2371 = vmatprep.subr.mxu0 0.0
    %2372 = vmatpush1.msra.mxu0 %v2239
    %2373 = vmatprep.subr.mxu0 0.0
    %2374 = vmatpush2.msra.mxu0 0.0
    %2375 = vmatprep.subr.mxu0 0.0
    %2376 = vmatpush2.msra.mxu0 0.0
    %2377 = vmatprep.subr.mxu0 0.0
    %2378 = vmatpush2.msra.mxu0 0.0
    %2379 = vmatprep.subr.mxu0 0.0
    %2380 = vmatpush2.msra.mxu0 0.0
    %2381 = vmatprep.subr.mxu0 0.0
    %2382 = vmatpush2.msra.mxu0 0.0
    %2383 = vmatprep.subr.mxu0 0.0
    %2384 = vmatpush2.msra.mxu0 0.0
    %2385 = vmatprep.subr.mxu0 0.0
    %2386 = vmatpush2.msra.mxu0 0.0
    %2387 = vmatprep.subr.mxu0 0.0
    %2388 = vmatpush2.msra.mxu0 0.0
    %2389 = vmatprep.subr.mxu0 0.0
    %2390 = vmatpush2.msra.mxu0 0.0
    %2391 = vmatprep.subr.mxu0 0.0
    %2392 = vmatpush2.msra.mxu0 0.0
    %2393 = vmatprep.subr.mxu0 0.0
    %2394 = vmatpush2.msra.mxu0 0.0
    %2395 = vmatprep.subr.mxu0 0.0
    %2396 = vmatpush2.msra.mxu0 0.0
    %2397 = vmatprep.subr.mxu0 0.0
    %2398 = vmatpush2.msra.mxu0 0.0
    %2399 = vmatprep.subr.mxu0 0.0
    %2400 = vmatpush2.msra.mxu0 0.0
    %2401 = vmatprep.subr.mxu0 0.0
    %2402 = vmatpush2.msra.mxu0 0.0
    %2403 = vmatprep.subr.mxu0 0.0
    %2404 = vmatpush2.msra.mxu0 0.0
    %2405 = vmatprep.mubr.f32.mxu0 0.0
    %2406 = vmatmul.mubr.f32.gmra.mxu0 %v242
    %v2407 = vpop.f32.mrf.mxu0
    %v2408 = vadd.f32 %v2339, %v2407
    %v2409 = vpop.f32.mrf.mxu0
    %2410 = vmatprep.mubr.f32.mxu0 0.0
    %2411 = vmatmul.mubr.f32.gmra.mxu0 %v245
    %v2412 = vpop.f32.mrf.mxu0
    %v2413 = vadd.f32 %v2339, %v2412
    %v2414 = vpop.f32.mrf.mxu0
    %2415 = vdwg.mxu0
    %v2417 = vlaneseq
    %v2418 = vshrl.u32 %v2417, 7
    %v2419 = vsub.s32 0, %v2418
    %v2420 = vrot.slane %v2253, %v2419
    %2422 = vmatprep.subr.mxu0 0.0
    %2423 = vmatpush1.msra.mxu0 0.0
    %2424 = vmatprep.subr.mxu0 0.0
    %2425 = vmatpush1.msra.mxu0 0.0
    %2426 = vmatprep.subr.mxu0 0.0
    %2427 = vmatpush1.msra.mxu0 0.0
    %2428 = vmatprep.subr.mxu0 0.0
    %2429 = vmatpush1.msra.mxu0 0.0
    %2430 = vmatprep.subr.mxu0 0.0
    %2431 = vmatpush1.msra.mxu0 0.0
    %2432 = vmatprep.subr.mxu0 0.0
    %2433 = vmatpush1.msra.mxu0 0.0
    %2434 = vmatprep.subr.mxu0 0.0
    %2435 = vmatpush1.msra.mxu0 0.0
    %2436 = vmatprep.subr.mxu0 0.0
    %2437 = vmatpush1.msra.mxu0 0.0
    %2438 = vmatprep.subr.mxu0 0.0
    %2439 = vmatpush1.msra.mxu0 0.0
    %2440 = vmatprep.subr.mxu0 0.0
    %2441 = vmatpush1.msra.mxu0 0.0
    %2442 = vmatprep.subr.mxu0 0.0
    %2443 = vmatpush1.msra.mxu0 0.0
    %2444 = vmatprep.subr.mxu0 0.0
    %2445 = vmatpush1.msra.mxu0 0.0
    %2446 = vmatprep.subr.mxu0 0.0
    %2447 = vmatpush1.msra.mxu0 %v2247
    %2448 = vmatprep.subr.mxu0 0.0
    %2449 = vmatpush1.msra.mxu0 %v2246
    %2450 = vmatprep.subr.mxu0 0.0
    %2451 = vmatpush1.msra.mxu0 %v2245
    %2452 = vmatprep.subr.mxu0 0.0
    %2453 = vmatpush1.msra.mxu0 %v2244
    %2454 = vmatprep.subr.mxu0 0.0
    %2455 = vmatpush2.msra.mxu0 0.0
    %2456 = vmatprep.subr.mxu0 0.0
    %2457 = vmatpush2.msra.mxu0 0.0
    %2458 = vmatprep.subr.mxu0 0.0
    %2459 = vmatpush2.msra.mxu0 0.0
    %2460 = vmatprep.subr.mxu0 0.0
    %2461 = vmatpush2.msra.mxu0 0.0
    %2462 = vmatprep.subr.mxu0 0.0
    %2463 = vmatpush2.msra.mxu0 0.0
    %2464 = vmatprep.subr.mxu0 0.0
    %2465 = vmatpush2.msra.mxu0 0.0
    %2466 = vmatprep.subr.mxu0 0.0
    %2467 = vmatpush2.msra.mxu0 0.0
    %2468 = vmatprep.subr.mxu0 0.0
    %2469 = vmatpush2.msra.mxu0 0.0
    %2470 = vmatprep.subr.mxu0 0.0
    %2471 = vmatpush2.msra.mxu0 0.0
    %2472 = vmatprep.subr.mxu0 0.0
    %2473 = vmatpush2.msra.mxu0 0.0
    %2474 = vmatprep.subr.mxu0 0.0
    %2475 = vmatpush2.msra.mxu0 0.0
    %2476 = vmatprep.subr.mxu0 0.0
    %2477 = vmatpush2.msra.mxu0 0.0
    %2478 = vmatprep.subr.mxu0 0.0
    %2479 = vmatpush2.msra.mxu0 0.0
    %2480 = vmatprep.subr.mxu0 0.0
    %2481 = vmatpush2.msra.mxu0 0.0
    %2482 = vmatprep.subr.mxu0 0.0
    %2483 = vmatpush2.msra.mxu0 0.0
    %2484 = vmatprep.subr.mxu0 0.0
    %2485 = vmatpush2.msra.mxu0 0.0
    %2486 = vmatprep.mubr.f32.mxu0 0.0
    %2487 = vmatmul.mubr.f32.gmra.mxu0 %v242
    %v2488 = vpop.f32.mrf.mxu0
    %v2489 = vadd.f32 %v2420, %v2488
    %v2490 = vpop.f32.mrf.mxu0
    %2491 = vmatprep.mubr.f32.mxu0 0.0
    %2492 = vmatmul.mubr.f32.gmra.mxu0 %v245
    %v2493 = vpop.f32.mrf.mxu0
    %v2494 = vadd.f32 %v2420, %v2493
    %v2495 = vpop.f32.mrf.mxu0
    %2496 = vdwg.mxu0
    %v2498 = vsel %vm484, %v2327, 0
    %v2501 = vsel %vm484, %v2408, 0
    %2503 = vmatprep.subr.mxu0 0.0
    %2504 = vmatpush1.xpose.msra.mxu0 0.0
    %2505 = vmatprep.subr.mxu0 0.0
    %2506 = vmatpush1.xpose.msra.mxu0 0.0
    %2507 = vmatprep.subr.mxu0 0.0
    %2508 = vmatpush1.xpose.msra.mxu0 0.0
    %2509 = vmatprep.subr.mxu0 0.0
    %2510 = vmatpush1.xpose.msra.mxu0 0.0
    %2511 = vmatprep.subr.mxu0 0.0
    %2512 = vmatpush1.xpose.msra.mxu0 0.0
    %2513 = vmatprep.subr.mxu0 0.0
    %2514 = vmatpush1.xpose.msra.mxu0 0.0
    %2515 = vmatprep.subr.mxu0 0.0
    %2516 = vmatpush1.xpose.msra.mxu0 0.0
    %2517 = vmatprep.subr.mxu0 0.0
    %2518 = vmatpush1.xpose.msra.mxu0 0.0
    %2519 = vmatprep.subr.mxu0 0.0
    %2520 = vmatpush1.xpose.msra.mxu0 0.0
    %2521 = vmatprep.subr.mxu0 0.0
    %2522 = vmatpush1.xpose.msra.mxu0 0.0
    %2523 = vmatprep.subr.mxu0 0.0
    %2524 = vmatpush1.xpose.msra.mxu0 0.0
    %2525 = vmatprep.subr.mxu0 0.0
    %2526 = vmatpush1.xpose.msra.mxu0 0.0
    %2527 = vmatprep.subr.mxu0 0.0
    %2528 = vmatpush1.xpose.msra.mxu0 0.0
    %2529 = vmatprep.subr.mxu0 0.0
    %2530 = vmatpush1.xpose.msra.mxu0 0.0
    %2531 = vmatprep.subr.mxu0 0.0
    %2532 = vmatpush1.xpose.msra.mxu0 0.0
    %2533 = vmatprep.subr.mxu0 0.0
    %2534 = vmatpush1.xpose.msra.mxu0 %v2501
    %2535 = vmatprep.subr.mxu0 0.0
    %2536 = vmatpush2.xpose.msra.mxu0 0.0
    %2537 = vmatprep.subr.mxu0 0.0
    %2538 = vmatpush2.xpose.msra.mxu0 0.0
    %2539 = vmatprep.subr.mxu0 0.0
    %2540 = vmatpush2.xpose.msra.mxu0 0.0
    %2541 = vmatprep.subr.mxu0 0.0
    %2542 = vmatpush2.xpose.msra.mxu0 0.0
    %2543 = vmatprep.subr.mxu0 0.0
    %2544 = vmatpush2.xpose.msra.mxu0 0.0
    %2545 = vmatprep.subr.mxu0 0.0
    %2546 = vmatpush2.xpose.msra.mxu0 0.0
    %2547 = vmatprep.subr.mxu0 0.0
    %2548 = vmatpush2.xpose.msra.mxu0 0.0
    %2549 = vmatprep.subr.mxu0 0.0
    %2550 = vmatpush2.xpose.msra.mxu0 0.0
    %2551 = vmatprep.subr.mxu0 0.0
    %2552 = vmatpush2.xpose.msra.mxu0 0.0
    %2553 = vmatprep.subr.mxu0 0.0
    %2554 = vmatpush2.xpose.msra.mxu0 0.0
    %2555 = vmatprep.subr.mxu0 0.0
    %2556 = vmatpush2.xpose.msra.mxu0 0.0
    %2557 = vmatprep.subr.mxu0 0.0
    %2558 = vmatpush2.xpose.msra.mxu0 0.0
    %2559 = vmatprep.subr.mxu0 0.0
    %2560 = vmatpush2.xpose.msra.mxu0 0.0
    %2561 = vmatprep.subr.mxu0 0.0
    %2562 = vmatpush2.xpose.msra.mxu0 0.0
    %2563 = vmatprep.subr.mxu0 0.0
    %2564 = vmatpush2.xpose.msra.mxu0 0.0
    %2565 = vmatprep.subr.mxu0 0.0
    %2566 = vmatpush2.xpose.msra.mxu0 0.0
    %2567 = vmatprep.mubr.f32.mxu0 0.0
    %2568 = vmatmul.mubr.f32.gmra.mxu0 %v2498
    %v2569 = vpop.f32.mrf.mxu0
    %v2570 = vadd.f32 0.0, %v2569
    %v2571 = vpop.f32.mrf.mxu0
    %2572 = vdwg.mxu0
    %v2574 = vsel %vm484, %v2332, 0
    %v2577 = vsel %vm484, %v2413, 0
    %2579 = vmatprep.subr.mxu0 0.0
    %2580 = vmatpush1.xpose.msra.mxu0 0.0
    %2581 = vmatprep.subr.mxu0 0.0
    %2582 = vmatpush1.xpose.msra.mxu0 0.0
    %2583 = vmatprep.subr.mxu0 0.0
    %2584 = vmatpush1.xpose.msra.mxu0 0.0
    %2585 = vmatprep.subr.mxu0 0.0
    %2586 = vmatpush1.xpose.msra.mxu0 0.0
    %2587 = vmatprep.subr.mxu0 0.0
    %2588 = vmatpush1.xpose.msra.mxu0 0.0
    %2589 = vmatprep.subr.mxu0 0.0
    %2590 = vmatpush1.xpose.msra.mxu0 0.0
    %2591 = vmatprep.subr.mxu0 0.0
    %2592 = vmatpush1.xpose.msra.mxu0 0.0
    %2593 = vmatprep.subr.mxu0 0.0
    %2594 = vmatpush1.xpose.msra.mxu0 0.0
    %2595 = vmatprep.subr.mxu0 0.0
    %2596 = vmatpush1.xpose.msra.mxu0 0.0
    %2597 = vmatprep.subr.mxu0 0.0
    %2598 = vmatpush1.xpose.msra.mxu0 0.0
    %2599 = vmatprep.subr.mxu0 0.0
    %2600 = vmatpush1.xpose.msra.mxu0 0.0
    %2601 = vmatprep.subr.mxu0 0.0
    %2602 = vmatpush1.xpose.msra.mxu0 0.0
    %2603 = vmatprep.subr.mxu0 0.0
    %2604 = vmatpush1.xpose.msra.mxu0 0.0
    %2605 = vmatprep.subr.mxu0 0.0
    %2606 = vmatpush1.xpose.msra.mxu0 0.0
    %2607 = vmatprep.subr.mxu0 0.0
    %2608 = vmatpush1.xpose.msra.mxu0 0.0
    %2609 = vmatprep.subr.mxu0 0.0
    %2610 = vmatpush1.xpose.msra.mxu0 %v2577
    %2611 = vmatprep.subr.mxu0 0.0
    %2612 = vmatpush2.xpose.msra.mxu0 0.0
    %2613 = vmatprep.subr.mxu0 0.0
    %2614 = vmatpush2.xpose.msra.mxu0 0.0
    %2615 = vmatprep.subr.mxu0 0.0
    %2616 = vmatpush2.xpose.msra.mxu0 0.0
    %2617 = vmatprep.subr.mxu0 0.0
    %2618 = vmatpush2.xpose.msra.mxu0 0.0
    %2619 = vmatprep.subr.mxu0 0.0
    %2620 = vmatpush2.xpose.msra.mxu0 0.0
    %2621 = vmatprep.subr.mxu0 0.0
    %2622 = vmatpush2.xpose.msra.mxu0 0.0
    %2623 = vmatprep.subr.mxu0 0.0
    %2624 = vmatpush2.xpose.msra.mxu0 0.0
    %2625 = vmatprep.subr.mxu0 0.0
    %2626 = vmatpush2.xpose.msra.mxu0 0.0
    %2627 = vmatprep.subr.mxu0 0.0
    %2628 = vmatpush2.xpose.msra.mxu0 0.0
    %2629 = vmatprep.subr.mxu0 0.0
    %2630 = vmatpush2.xpose.msra.mxu0 0.0
    %2631 = vmatprep.subr.mxu0 0.0
    %2632 = vmatpush2.xpose.msra.mxu0 0.0
    %2633 = vmatprep.subr.mxu0 0.0
    %2634 = vmatpush2.xpose.msra.mxu0 0.0
    %2635 = vmatprep.subr.mxu0 0.0
    %2636 = vmatpush2.xpose.msra.mxu0 0.0
    %2637 = vmatprep.subr.mxu0 0.0
    %2638 = vmatpush2.xpose.msra.mxu0 0.0
    %2639 = vmatprep.subr.mxu0 0.0
    %2640 = vmatpush2.xpose.msra.mxu0 0.0
    %2641 = vmatprep.subr.mxu0 0.0
    %2642 = vmatpush2.xpose.msra.mxu0 0.0
    %2643 = vmatprep.mubr.f32.mxu0 0.0
    %2644 = vmatmul.mubr.f32.gmra.mxu0 %v2574
    %v2645 = vpop.f32.mrf.mxu0
    %v2646 = vadd.f32 0.0, %v2645
    %v2647 = vpop.f32.mrf.mxu0
    %2648 = vdwg.mxu0
    %v2649 = vmul.f32 %v2570, 0.35355338
    %v2650 = vmul.f32 %v2646, 0.35355338
    %v2651 = vsel %vm484, %v2649, -inf
    %2652 = vmax.xlane.f32.xlu0 %v2651
    %v2653 = vpop.xlane.xlu0 %2652
    %v2654 = vsel %vm484, %v2650, -inf
    %2655 = vmax.xlane.f32.xlu0 %v2654
    %v2656 = vpop.xlane.xlu0 %2655
    %v2657 = vsub.f32 %v2649, %v2653
    %v2658 = vsub.f32 %v2650, %v2656
    %v2659 = vmul.f32 %v2657, 1.442695
    %v2660 = vpow.pop %v2659
    %v2661 = vmul.f32 %v2658, 1.442695
    %v2662 = vpow.pop %v2661
    %v2663 = vsel %vm484, %v2660, 0.0
    %2664 = vadd.xlane.f32.xlu0 %v2663
    %v2665 = vpop.xlane.xlu0 %2664
    %v2666 = vsel %vm484, %v2662, 0.0
    %2667 = vadd.xlane.f32.xlu0 %v2666
    %v2668 = vpop.xlane.xlu0 %2667
    %v2669 = vrcp.pop %v2665
    %v2670 = vrcp.pop %v2668
    %v2671 = vmul.f32 %v2660, %v2669
    %v2672 = vmul.f32 %v2662, %v2670
    %v2674 = vsel %vm484, %v2671, 0
    %2676 = vmatprep.subr.mxu0 0.0
    %2677 = vmatpush1.msra.mxu0 0.0
    %2678 = vmatprep.subr.mxu0 0.0
    %2679 = vmatpush1.msra.mxu0 0.0
    %2680 = vmatprep.subr.mxu0 0.0
    %2681 = vmatpush1.msra.mxu0 0.0
    %2682 = vmatprep.subr.mxu0 0.0
    %2683 = vmatpush1.msra.mxu0 0.0
    %2684 = vmatprep.subr.mxu0 0.0
    %2685 = vmatpush1.msra.mxu0 0.0
    %2686 = vmatprep.subr.mxu0 0.0
    %2687 = vmatpush1.msra.mxu0 0.0
    %2688 = vmatprep.subr.mxu0 0.0
    %2689 = vmatpush1.msra.mxu0 0.0
    %2690 = vmatprep.subr.mxu0 0.0
    %2691 = vmatpush1.msra.mxu0 0.0
    %2692 = vmatprep.subr.mxu0 0.0
    %2693 = vmatpush1.msra.mxu0 0.0
    %2694 = vmatprep.subr.mxu0 0.0
    %2695 = vmatpush1.msra.mxu0 0.0
    %2696 = vmatprep.subr.mxu0 0.0
    %2697 = vmatpush1.msra.mxu0 0.0
    %2698 = vmatprep.subr.mxu0 0.0
    %2699 = vmatpush1.msra.mxu0 0.0
    %2700 = vmatprep.subr.mxu0 0.0
    %2701 = vmatpush1.msra.mxu0 0.0
    %2702 = vmatprep.subr.mxu0 0.0
    %2703 = vmatpush1.msra.mxu0 0.0
    %2704 = vmatprep.subr.mxu0 0.0
    %2705 = vmatpush1.msra.mxu0 0.0
    %2706 = vmatprep.subr.mxu0 0.0
    %2707 = vmatpush1.msra.mxu0 %v2489
    %2708 = vmatprep.subr.mxu0 0.0
    %2709 = vmatpush2.msra.mxu0 0.0
    %2710 = vmatprep.subr.mxu0 0.0
    %2711 = vmatpush2.msra.mxu0 0.0
    %2712 = vmatprep.subr.mxu0 0.0
    %2713 = vmatpush2.msra.mxu0 0.0
    %2714 = vmatprep.subr.mxu0 0.0
    %2715 = vmatpush2.msra.mxu0 0.0
    %2716 = vmatprep.subr.mxu0 0.0
    %2717 = vmatpush2.msra.mxu0 0.0
    %2718 = vmatprep.subr.mxu0 0.0
    %2719 = vmatpush2.msra.mxu0 0.0
    %2720 = vmatprep.subr.mxu0 0.0
    %2721 = vmatpush2.msra.mxu0 0.0
    %2722 = vmatprep.subr.mxu0 0.0
    %2723 = vmatpush2.msra.mxu0 0.0
    %2724 = vmatprep.subr.mxu0 0.0
    %2725 = vmatpush2.msra.mxu0 0.0
    %2726 = vmatprep.subr.mxu0 0.0
    %2727 = vmatpush2.msra.mxu0 0.0
    %2728 = vmatprep.subr.mxu0 0.0
    %2729 = vmatpush2.msra.mxu0 0.0
    %2730 = vmatprep.subr.mxu0 0.0
    %2731 = vmatpush2.msra.mxu0 0.0
    %2732 = vmatprep.subr.mxu0 0.0
    %2733 = vmatpush2.msra.mxu0 0.0
    %2734 = vmatprep.subr.mxu0 0.0
    %2735 = vmatpush2.msra.mxu0 0.0
    %2736 = vmatprep.subr.mxu0 0.0
    %2737 = vmatpush2.msra.mxu0 0.0
    %2738 = vmatprep.subr.mxu0 0.0
    %2739 = vmatpush2.msra.mxu0 0.0
    %2740 = vmatprep.mubr.f32.mxu0 0.0
    %2741 = vmatmul.mubr.f32.gmra.mxu0 %v2674
    %v2742 = vpop.f32.mrf.mxu0
    %v2743 = vadd.f32 0.0, %v2742
    %v2744 = vpop.f32.mrf.mxu0
    %2745 = vdwg.mxu0
    %v2747 = vsel %vm484, %v2672, 0
    %2749 = vmatprep.subr.mxu0 0.0
    %2750 = vmatpush1.msra.mxu0 0.0
    %2751 = vmatprep.subr.mxu0 0.0
    %2752 = vmatpush1.msra.mxu0 0.0
    %2753 = vmatprep.subr.mxu0 0.0
    %2754 = vmatpush1.msra.mxu0 0.0
    %2755 = vmatprep.subr.mxu0 0.0
    %2756 = vmatpush1.msra.mxu0 0.0
    %2757 = vmatprep.subr.mxu0 0.0
    %2758 = vmatpush1.msra.mxu0 0.0
    %2759 = vmatprep.subr.mxu0 0.0
    %2760 = vmatpush1.msra.mxu0 0.0
    %2761 = vmatprep.subr.mxu0 0.0
    %2762 = vmatpush1.msra.mxu0 0.0
    %2763 = vmatprep.subr.mxu0 0.0
    %2764 = vmatpush1.msra.mxu0 0.0
    %2765 = vmatprep.subr.mxu0 0.0
    %2766 = vmatpush1.msra.mxu0 0.0
    %2767 = vmatprep.subr.mxu0 0.0
    %2768 = vmatpush1.msra.mxu0 0.0
    %2769 = vmatprep.subr.mxu0 0.0
    %2770 = vmatpush1.msra.mxu0 0.0
    %2771 = vmatprep.subr.mxu0 0.0
    %2772 = vmatpush1.msra.mxu0 0.0
    %2773 = vmatprep.subr.mxu0 0.0
    %2774 = vmatpush1.msra.mxu0 0.0
    %2775 = vmatprep.subr.mxu0 0.0
    %2776 = vmatpush1.msra.mxu0 0.0
    %2777 = vmatprep.subr.mxu0 0.0
    %2778 = vmatpush1.msra.mxu0 0.0
    %2779 = vmatprep.subr.mxu0 0.0
    %2780 = vmatpush1.msra.mxu0 %v2494
    %2781 = vmatprep.subr.mxu0 0.0
    %2782 = vmatpush2.msra.mxu0 0.0
    %2783 = vmatprep.subr.mxu0 0.0
    %2784 = vmatpush2.msra.mxu0 0.0
    %2785 = vmatprep.subr.mxu0 0.0
    %2786 = vmatpush2.msra.mxu0 0.0
    %2787 = vmatprep.subr.mxu0 0.0
    %2788 = vmatpush2.msra.mxu0 0.0
    %2789 = vmatprep.subr.mxu0 0.0
    %2790 = vmatpush2.msra.mxu0 0.0
    %2791 = vmatprep.subr.mxu0 0.0
    %2792 = vmatpush2.msra.mxu0 0.0
    %2793 = vmatprep.subr.mxu0 0.0
    %2794 = vmatpush2.msra.mxu0 0.0
    %2795 = vmatprep.subr.mxu0 0.0
    %2796 = vmatpush2.msra.mxu0 0.0
    %2797 = vmatprep.subr.mxu0 0.0
    %2798 = vmatpush2.msra.mxu0 0.0
    %2799 = vmatprep.subr.mxu0 0.0
    %2800 = vmatpush2.msra.mxu0 0.0
    %2801 = vmatprep.subr.mxu0 0.0
    %2802 = vmatpush2.msra.mxu0 0.0
    %2803 = vmatprep.subr.mxu0 0.0
    %2804 = vmatpush2.msra.mxu0 0.0
    %2805 = vmatprep.subr.mxu0 0.0
    %2806 = vmatpush2.msra.mxu0 0.0
    %2807 = vmatprep.subr.mxu0 0.0
    %2808 = vmatpush2.msra.mxu0 0.0
    %2809 = vmatprep.subr.mxu0 0.0
    %2810 = vmatpush2.msra.mxu0 0.0
    %2811 = vmatprep.subr.mxu0 0.0
    %2812 = vmatpush2.msra.mxu0 0.0
    %2813 = vmatprep.mubr.f32.mxu0 0.0
    %2814 = vmatmul.mubr.f32.gmra.mxu0 %v2747
    %v2815 = vpop.f32.mrf.mxu0
    %v2816 = vadd.f32 0.0, %v2815
    %v2817 = vpop.f32.mrf.mxu0
    %2818 = vdwg.mxu0
    %s2819 = scalar_lea.vmem %s5, 24
    %v2820 = vld [vmem:[%s2819] sm:$0xff]
    %v2822 = vsel %vm484, %v2743, 0
    %v2825 = vsel %vm484, %v2816, 0
    %2827 = vmatprep.subr.mxu0 0.0
    %2828 = vmatpush1.msra.mxu0 0.0
    %2829 = vmatprep.subr.mxu0 0.0
    %2830 = vmatpush1.msra.mxu0 0.0
    %2831 = vmatprep.subr.mxu0 0.0
    %2832 = vmatpush1.msra.mxu0 0.0
    %2833 = vmatprep.subr.mxu0 0.0
    %2834 = vmatpush1.msra.mxu0 0.0
    %2835 = vmatprep.subr.mxu0 0.0
    %2836 = vmatpush1.msra.mxu0 0.0
    %2837 = vmatprep.subr.mxu0 0.0
    %2838 = vmatpush1.msra.mxu0 0.0
    %2839 = vmatprep.subr.mxu0 0.0
    %2840 = vmatpush1.msra.mxu0 0.0
    %2841 = vmatprep.subr.mxu0 0.0
    %2842 = vmatpush1.msra.mxu0 0.0
    %2843 = vmatprep.subr.mxu0 0.0
    %2844 = vmatpush1.msra.mxu0 0.0
    %2845 = vmatprep.subr.mxu0 0.0
    %2846 = vmatpush1.msra.mxu0 0.0
    %2847 = vmatprep.subr.mxu0 0.0
    %2848 = vmatpush1.msra.mxu0 0.0
    %2849 = vmatprep.subr.mxu0 0.0
    %2850 = vmatpush1.msra.mxu0 0.0
    %2851 = vmatprep.subr.mxu0 0.0
    %2852 = vmatpush1.msra.mxu0 0.0
    %2853 = vmatprep.subr.mxu0 0.0
    %2854 = vmatpush1.msra.mxu0 0.0
    %2855 = vmatprep.subr.mxu0 0.0
    %2856 = vmatpush1.msra.mxu0 0.0
    %2857 = vmatprep.subr.mxu0 0.0
    %2858 = vmatpush1.msra.mxu0 %v2820
    %2859 = vmatprep.subr.mxu0 0.0
    %2860 = vmatpush2.msra.mxu0 0.0
    %2861 = vmatprep.subr.mxu0 0.0
    %2862 = vmatpush2.msra.mxu0 0.0
    %2863 = vmatprep.subr.mxu0 0.0
    %2864 = vmatpush2.msra.mxu0 0.0
    %2865 = vmatprep.subr.mxu0 0.0
    %2866 = vmatpush2.msra.mxu0 0.0
    %2867 = vmatprep.subr.mxu0 0.0
    %2868 = vmatpush2.msra.mxu0 0.0
    %2869 = vmatprep.subr.mxu0 0.0
    %2870 = vmatpush2.msra.mxu0 0.0
    %2871 = vmatprep.subr.mxu0 0.0
    %2872 = vmatpush2.msra.mxu0 0.0
    %2873 = vmatprep.subr.mxu0 0.0
    %2874 = vmatpush2.msra.mxu0 0.0
    %2875 = vmatprep.subr.mxu0 0.0
    %2876 = vmatpush2.msra.mxu0 0.0
    %2877 = vmatprep.subr.mxu0 0.0
    %2878 = vmatpush2.msra.mxu0 0.0
    %2879 = vmatprep.subr.mxu0 0.0
    %2880 = vmatpush2.msra.mxu0 0.0
    %2881 = vmatprep.subr.mxu0 0.0
    %2882 = vmatpush2.msra.mxu0 0.0
    %2883 = vmatprep.subr.mxu0 0.0
    %2884 = vmatpush2.msra.mxu0 0.0
    %2885 = vmatprep.subr.mxu0 0.0
    %2886 = vmatpush2.msra.mxu0 0.0
    %2887 = vmatprep.subr.mxu0 0.0
    %2888 = vmatpush2.msra.mxu0 0.0
    %2889 = vmatprep.subr.mxu0 0.0
    %2890 = vmatpush2.msra.mxu0 0.0
    %2891 = vmatprep.mubr.f32.mxu0 0.0
    %2892 = vmatmul.mubr.f32.gmra.mxu0 %v2822
    %v2893 = vpop.f32.mrf.mxu0
    %v2894 = vadd.f32 0.0, %v2893
    %v2895 = vpop.f32.mrf.mxu0
    %2896 = vmatprep.mubr.f32.mxu0 0.0
    %2897 = vmatmul.mubr.f32.gmra.mxu0 %v2825
    %v2898 = vpop.f32.mrf.mxu0
    %v2899 = vadd.f32 0.0, %v2898
    %v2900 = vpop.f32.mrf.mxu0
    %2901 = vdwg.mxu0
    %v2902 = vadd.f32 %v2231, %v2894
    %v2903 = vadd.f32 %v2232, %v2899
    %s2904 = scalar_lea.vmem %s9, 7
    %v2905 = vld [vmem:[%s2904] sm:$0x1]
    %s2906 = scalar_lea.vmem %s9, 8
    %v2907 = vld [vmem:[%s2906] sm:$0x1]
    %v2908 = vsel %vm162, %v2902, 0.0
    %2909 = vadd.xlane.f32.xlu0 %v2908
    %v2910 = vpop.xlane.xlu0 %2909
    %v2911 = vsel %vm162, %v2903, 0.0
    %2912 = vadd.xlane.f32.xlu0 %v2911
    %v2913 = vpop.xlane.xlu0 %2912
    %v2914 = vmul.f32 %v2910, %v169
    %v2915 = vmul.f32 %v2913, %v169
    %v2916 = vsub.f32 %v2902, %v2914
    %v2917 = vsub.f32 %v2903, %v2915
    %v2918 = vmul.f32 %v2916, %v2916
    %v2919 = vmul.f32 %v2917, %v2917
    %v2920 = vsel %vm162, %v2918, 0.0
    %2921 = vadd.xlane.f32.xlu0 %v2920
    %v2922 = vpop.xlane.xlu0 %2921
    %v2923 = vsel %vm162, %v2919, 0.0
    %2924 = vadd.xlane.f32.xlu0 %v2923
    %v2925 = vpop.xlane.xlu0 %2924
    %v2926 = vmul.f32 %v2922, %v169
    %v2927 = vmul.f32 %v2925, %v169
    %v2928 = vadd.f32 %v2926, 1e-12
    %v2929 = vadd.f32 %v2927, 1e-12
    %v2930 = vrsqrt.pop %v2928
    %v2931 = vrsqrt.pop %v2929
    %v2932 = vmul.f32 %v2916, %v2930
    %v2933 = vmul.f32 %v2917, %v2931
    %v2935 = vlaneseq
    %v2936 = vshrl.u32 %v2935, 7
    %v2937 = vsub.s32 0, %v2936
    %v2938 = vrot.slane %v2905, %v2937
    %v2940 = vmul.f32 %v2932, %v2938
    %v2941 = vmul.f32 %v2933, %v2938
    %v2943 = vlaneseq
    %v2944 = vshrl.u32 %v2943, 7
    %v2945 = vsub.s32 0, %v2944
    %v2946 = vrot.slane %v2907, %v2945
    %v2948 = vadd.f32 %v2940, %v2946
    %v2949 = vadd.f32 %v2941, %v2946
    %s2950 = scalar_lea.vmem %s10, 1
    %v2951 = vld [vmem:[%s2950] sm:$0x1]
    %v2952 = vld [vmem:[%s6] sm:$0xff]
    %v2953 = vld [vmem:[%s6 + $0x8] sm:$0xff]
    %v2954 = vld [vmem:[%s6 + $0x10] sm:$0xff]
    %v2955 = vld [vmem:[%s6 + $0x18] sm:$0xff]
    %v2957 = vlaneseq
    %v2958 = vshrl.u32 %v2957, 7
    %v2959 = vsub.s32 0, %v2958
    %v2960 = vrot.slane %v2951, %v2959
    %v2963 = vsel %vm162, %v2948, 0
    %v2966 = vsel %vm162, %v2949, 0
    %2968 = vmatprep.subr.mxu0 0.0
    %2969 = vmatpush1.msra.mxu0 0.0
    %2970 = vmatprep.subr.mxu0 0.0
    %2971 = vmatpush1.msra.mxu0 0.0
    %2972 = vmatprep.subr.mxu0 0.0
    %2973 = vmatpush1.msra.mxu0 0.0
    %2974 = vmatprep.subr.mxu0 0.0
    %2975 = vmatpush1.msra.mxu0 0.0
    %2976 = vmatprep.subr.mxu0 0.0
    %2977 = vmatpush1.msra.mxu0 0.0
    %2978 = vmatprep.subr.mxu0 0.0
    %2979 = vmatpush1.msra.mxu0 0.0
    %2980 = vmatprep.subr.mxu0 0.0
    %2981 = vmatpush1.msra.mxu0 0.0
    %2982 = vmatprep.subr.mxu0 0.0
    %2983 = vmatpush1.msra.mxu0 0.0
    %2984 = vmatprep.subr.mxu0 0.0
    %2985 = vmatpush1.msra.mxu0 0.0
    %2986 = vmatprep.subr.mxu0 0.0
    %2987 = vmatpush1.msra.mxu0 0.0
    %2988 = vmatprep.subr.mxu0 0.0
    %2989 = vmatpush1.msra.mxu0 0.0
    %2990 = vmatprep.subr.mxu0 0.0
    %2991 = vmatpush1.msra.mxu0 0.0
    %2992 = vmatprep.subr.mxu0 0.0
    %2993 = vmatpush1.msra.mxu0 %v2955
    %2994 = vmatprep.subr.mxu0 0.0
    %2995 = vmatpush1.msra.mxu0 %v2954
    %2996 = vmatprep.subr.mxu0 0.0
    %2997 = vmatpush1.msra.mxu0 %v2953
    %2998 = vmatprep.subr.mxu0 0.0
    %2999 = vmatpush1.msra.mxu0 %v2952
    %3000 = vmatprep.subr.mxu0 0.0
    %3001 = vmatpush2.msra.mxu0 0.0
    %3002 = vmatprep.subr.mxu0 0.0
    %3003 = vmatpush2.msra.mxu0 0.0
    %3004 = vmatprep.subr.mxu0 0.0
    %3005 = vmatpush2.msra.mxu0 0.0
    %3006 = vmatprep.subr.mxu0 0.0
    %3007 = vmatpush2.msra.mxu0 0.0
    %3008 = vmatprep.subr.mxu0 0.0
    %3009 = vmatpush2.msra.mxu0 0.0
    %3010 = vmatprep.subr.mxu0 0.0
    %3011 = vmatpush2.msra.mxu0 0.0
    %3012 = vmatprep.subr.mxu0 0.0
    %3013 = vmatpush2.msra.mxu0 0.0
    %3014 = vmatprep.subr.mxu0 0.0
    %3015 = vmatpush2.msra.mxu0 0.0
    %3016 = vmatprep.subr.mxu0 0.0
    %3017 = vmatpush2.msra.mxu0 0.0
    %3018 = vmatprep.subr.mxu0 0.0
    %3019 = vmatpush2.msra.mxu0 0.0
    %3020 = vmatprep.subr.mxu0 0.0
    %3021 = vmatpush2.msra.mxu0 0.0
    %3022 = vmatprep.subr.mxu0 0.0
    %3023 = vmatpush2.msra.mxu0 0.0
    %3024 = vmatprep.subr.mxu0 0.0
    %3025 = vmatpush2.msra.mxu0 0.0
    %3026 = vmatprep.subr.mxu0 0.0
    %3027 = vmatpush2.msra.mxu0 0.0
    %3028 = vmatprep.subr.mxu0 0.0
    %3029 = vmatpush2.msra.mxu0 0.0
    %3030 = vmatprep.subr.mxu0 0.0
    %3031 = vmatpush2.msra.mxu0 0.0
    %3032 = vmatprep.mubr.f32.mxu0 0.0
    %3033 = vmatmul.mubr.f32.gmra.mxu0 %v2963
    %v3034 = vpop.f32.mrf.mxu0
    %v3035 = vadd.f32 %v2960, %v3034
    %v3036 = vpop.f32.mrf.mxu0
    %3037 = vmatprep.mubr.f32.mxu0 0.0
    %3038 = vmatmul.mubr.f32.gmra.mxu0 %v2966
    %v3039 = vpop.f32.mrf.mxu0
    %v3040 = vadd.f32 %v2960, %v3039
    %v3041 = vpop.f32.mrf.mxu0
    %3042 = vdwg.mxu0
    %v3043 = vmul.f32 %v3035, 0.5
    %v3044 = vmul.f32 %v3040, 0.5
    %v3045 = vmul.f32 %v3035, 0.044715
    %v3046 = vmul.f32 %v3040, 0.044715
    %v3047 = vmul.f32 %v3045, %v3035
    %v3048 = vmul.f32 %v3046, %v3040
    %v3049 = vmul.f32 %v3047, %v3035
    %v3050 = vmul.f32 %v3048, %v3040
    %v3051 = vadd.f32 %v3035, %v3049
    %v3052 = vadd.f32 %v3040, %v3050
    %v3053 = vmul.f32 %v3051, 0.7978846
    %v3054 = vmul.f32 %v3052, 0.7978846
    %v3055 = vtanh.pop %v3053
    %v3056 = vtanh.pop %v3054
    %v3057 = vadd.f32 %v3055, 1.0
    %v3058 = vadd.f32 %v3056, 1.0
    %v3059 = vmul.f32 %v3043, %v3057
    %v3060 = vmul.f32 %v3044, %v3058
    %v3061 = vld [vmem:[%s7] sm:$0xff]
    %v3062 = vld [vmem:[%s7 + $0x8] sm:$0xff]
    %v3063 = vld [vmem:[%s7 + $0x10] sm:$0xff]
    %v3064 = vld [vmem:[%s7 + $0x18] sm:$0xff]
    %v3065 = vld [vmem:[%s7 + $0x20] sm:$0xff]
    %v3066 = vld [vmem:[%s7 + $0x28] sm:$0xff]
    %v3067 = vld [vmem:[%s7 + $0x30] sm:$0xff]
    %v3068 = vld [vmem:[%s7 + $0x38] sm:$0xff]
    %s3069 = scalar_lea.vmem %s9, 9
    %v3070 = vld [vmem:[%s3069] sm:$0x1]
    %v3072 = vlaneseq
    %v3073 = vshrl.u32 %v3072, 7
    %v3074 = vsub.s32 0, %v3073
    %v3075 = vrot.slane %v3070, %v3074
    %vm3077 = vcmask 523264
    %v3079 = vsel %vm3077, %v3059, 0
    %v3082 = vsel %vm3077, %v3060, 0
    %3084 = vmatprep.subr.mxu0 0.0
    %3085 = vmatpush1.msra.mxu0 0.0
    %3086 = vmatprep.subr.mxu0 0.0
    %3087 = vmatpush1.msra.mxu0 0.0
    %3088 = vmatprep.subr.mxu0 0.0
    %3089 = vmatpush1.msra.mxu0 0.0
    %3090 = vmatprep.subr.mxu0 0.0
    %3091 = vmatpush1.msra.mxu0 0.0
    %3092 = vmatprep.subr.mxu0 0.0
    %3093 = vmatpush1.msra.mxu0 0.0
    %3094 = vmatprep.subr.mxu0 0.0
    %3095 = vmatpush1.msra.mxu0 0.0
    %3096 = vmatprep.subr.mxu0 0.0
    %3097 = vmatpush1.msra.mxu0 0.0
    %3098 = vmatprep.subr.mxu0 0.0
    %3099 = vmatpush1.msra.mxu0 0.0
    %3100 = vmatprep.subr.mxu0 0.0
    %3101 = vmatpush1.msra.mxu0 %v3068
    %3102 = vmatprep.subr.mxu0 0.0
    %3103 = vmatpush1.msra.mxu0 %v3067
    %3104 = vmatprep.subr.mxu0 0.0
    %3105 = vmatpush1.msra.mxu0 %v3066
    %3106 = vmatprep.subr.mxu0 0.0
    %3107 = vmatpush1.msra.mxu0 %v3065
    %3108 = vmatprep.subr.mxu0 0.0
    %3109 = vmatpush1.msra.mxu0 %v3064
    %3110 = vmatprep.subr.mxu0 0.0
    %3111 = vmatpush1.msra.mxu0 %v3063
    %3112 = vmatprep.subr.mxu0 0.0
    %3113 = vmatpush1.msra.mxu0 %v3062
    %3114 = vmatprep.subr.mxu0 0.0
    %3115 = vmatpush1.msra.mxu0 %v3061
    %3116 = vmatprep.subr.mxu0 0.0
    %3117 = vmatpush2.msra.mxu0 0.0
    %3118 = vmatprep.subr.mxu0 0.0
    %3119 = vmatpush2.msra.mxu0 0.0
    %3120 = vmatprep.subr.mxu0 0.0
    %3121 = vmatpush2.msra.mxu0 0.0
    %3122 = vmatprep.subr.mxu0 0.0
    %3123 = vmatpush2.msra.mxu0 0.0
    %3124 = vmatprep.subr.mxu0 0.0
    %3125 = vmatpush2.msra.mxu0 0.0
    %3126 = vmatprep.subr.mxu0 0.0
    %3127 = vmatpush2.msra.mxu0 0.0
    %3128 = vmatprep.subr.mxu0 0.0
    %3129 = vmatpush2.msra.mxu0 0.0
    %3130 = vmatprep.subr.mxu0 0.0
    %3131 = vmatpush2.msra.mxu0 0.0
    %3132 = vmatprep.subr.mxu0 0.0
    %3133 = vmatpush2.msra.mxu0 0.0
    %3134 = vmatprep.subr.mxu0 0.0
    %3135 = vmatpush2.msra.mxu0 0.0
    %3136 = vmatprep.subr.mxu0 0.0
    %3137 = vmatpush2.msra.mxu0 0.0
    %3138 = vmatprep.subr.mxu0 0.0
    %3139 = vmatpush2.msra.mxu0 0.0
    %3140 = vmatprep.subr.mxu0 0.0
    %3141 = vmatpush2.msra.mxu0 0.0
    %3142 = vmatprep.subr.mxu0 0.0
    %3143 = vmatpush2.msra.mxu0 0.0
    %3144 = vmatprep.subr.mxu0 0.0
    %3145 = vmatpush2.msra.mxu0 0.0
    %3146 = vmatprep.subr.mxu0 0.0
    %3147 = vmatpush2.msra.mxu0 0.0
    %3148 = vmatprep.mubr.f32.mxu0 0.0
    %3149 = vmatmul.mubr.f32.gmra.mxu0 %v3079
    %v3150 = vpop.f32.mrf.mxu0
    %v3151 = vadd.f32 %v3075, %v3150
    %v3152 = vpop.f32.mrf.mxu0
    %3153 = vmatprep.mubr.f32.mxu0 0.0
    %3154 = vmatmul.mubr.f32.gmra.mxu0 %v3082
    %v3155 = vpop.f32.mrf.mxu0
    %v3156 = vadd.f32 %v3075, %v3155
    %v3157 = vpop.f32.mrf.mxu0
    %3158 = vdwg.mxu0
    %v3159 = vadd.f32 %v3151, %v2948
    %v3160 = vadd.f32 %v3156, %v2949
    %s3161 = scalar_lea.vmem %s9, 10
    %v3162 = vld [vmem:[%s3161] sm:$0x1]
    %s3163 = scalar_lea.vmem %s9, 11
    %v3164 = vld [vmem:[%s3163] sm:$0x1]
    %v3165 = vsel %vm162, %v3159, 0.0
    %3166 = vadd.xlane.f32.xlu0 %v3165
    %v3167 = vpop.xlane.xlu0 %3166
    %v3168 = vsel %vm162, %v3160, 0.0
    %3169 = vadd.xlane.f32.xlu0 %v3168
    %v3170 = vpop.xlane.xlu0 %3169
    %v3171 = vmul.f32 %v3167, %v169
    %v3172 = vmul.f32 %v3170, %v169
    %v3173 = vsub.f32 %v3159, %v3171
    %v3174 = vsub.f32 %v3160, %v3172
    %v3175 = vmul.f32 %v3173, %v3173
    %v3176 = vmul.f32 %v3174, %v3174
    %v3177 = vsel %vm162, %v3175, 0.0
    %3178 = vadd.xlane.f32.xlu0 %v3177
    %v3179 = vpop.xlane.xlu0 %3178
    %v3180 = vsel %vm162, %v3176, 0.0
    %3181 = vadd.xlane.f32.xlu0 %v3180
    %v3182 = vpop.xlane.xlu0 %3181
    %v3183 = vmul.f32 %v3179, %v169
    %v3184 = vmul.f32 %v3182, %v169
    %v3185 = vadd.f32 %v3183, 1e-12
    %v3186 = vadd.f32 %v3184, 1e-12
    %v3187 = vrsqrt.pop %v3185
    %v3188 = vrsqrt.pop %v3186
    %v3189 = vmul.f32 %v3173, %v3187
    %v3190 = vmul.f32 %v3174, %v3188
    %v3192 = vlaneseq
    %v3193 = vshrl.u32 %v3192, 7
    %v3194 = vsub.s32 0, %v3193
    %v3195 = vrot.slane %v3162, %v3194
    %v3197 = vmul.f32 %v3189, %v3195
    %v3198 = vmul.f32 %v3190, %v3195
    %v3200 = vlaneseq
    %v3201 = vshrl.u32 %v3200, 7
    %v3202 = vsub.s32 0, %v3201
    %v3203 = vrot.slane %v3164, %v3202
    %v3205 = vadd.f32 %v3197, %v3203
    %v3206 = vadd.f32 %v3198, %v3203
    %s3207 = scalar_lea.vmem %s9, 12
    %v3208 = vld [vmem:[%s3207] sm:$0x1]
    %v3210 = vlaneseq
    %v3211 = vshrl.u32 %v3210, 7
    %v3212 = vsub.s32 0, %v3211
    %v3213 = vrot.slane %v3208, %v3212
    %v3215 = vadd.f32 %v3205, %v3213
    %v3216 = vadd.f32 %v3206, %v3213
    %s3217 = scalar_lea.vmem %s3, 384
    %v3218 = vld [vmem:[%s3217] sm:$0xff]
    %v3219 = vld [vmem:[%s3217 + $0x8] sm:$0xff]
    %v3220 = vld [vmem:[%s3217 + $0x10] sm:$0xff]
    %v3221 = vld [vmem:[%s3217 + $0x18] sm:$0xff]
    %s3222 = scalar_lea.vmem %s3, 512
    %v3223 = vld [vmem:[%s3222] sm:$0xff]
    %v3224 = vld [vmem:[%s3222 + $0x8] sm:$0xff]
    %v3225 = vld [vmem:[%s3222 + $0x10] sm:$0xff]
    %v3226 = vld [vmem:[%s3222 + $0x18] sm:$0xff]
    %s3227 = scalar_lea.vmem %s3, 640
    %v3228 = vld [vmem:[%s3227] sm:$0xff]
    %v3229 = vld [vmem:[%s3227 + $0x8] sm:$0xff]
    %v3230 = vld [vmem:[%s3227 + $0x10] sm:$0xff]
    %v3231 = vld [vmem:[%s3227 + $0x18] sm:$0xff]
    %s3232 = scalar_lea.vmem %s4, 12
    %v3233 = vld [vmem:[%s3232] sm:$0x1]
    %s3234 = scalar_lea.vmem %s4, 16
    %v3235 = vld [vmem:[%s3234] sm:$0x1]
    %s3236 = scalar_lea.vmem %s4, 20
    %v3237 = vld [vmem:[%s3236] sm:$0x1]
    %v3239 = vlaneseq
    %v3240 = vshrl.u32 %v3239, 7
    %v3241 = vsub.s32 0, %v3240
    %v3242 = vrot.slane %v3233, %v3241
    %v3245 = vsel %vm162, %v3205, 0
    %v3248 = vsel %vm162, %v3206, 0
    %3250 = vmatprep.subr.mxu0 0.0
    %3251 = vmatpush1.msra.mxu0 0.0
    %3252 = vmatprep.subr.mxu0 0.0
    %3253 = vmatpush1.msra.mxu0 0.0
    %3254 = vmatprep.subr.mxu0 0.0
    %3255 = vmatpush1.msra.mxu0 0.0
    %3256 = vmatprep.subr.mxu0 0.0
    %3257 = vmatpush1.msra.mxu0 0.0
    %3258 = vmatprep.subr.mxu0 0.0
    %3259 = vmatpush1.msra.mxu0 0.0
    %3260 = vmatprep.subr.mxu0 0.0
    %3261 = vmatpush1.msra.mxu0 0.0
    %3262 = vmatprep.subr.mxu0 0.0
    %3263 = vmatpush1.msra.mxu0 0.0
    %3264 = vmatprep.subr.mxu0 0.0
    %3265 = vmatpush1.msra.mxu0 0.0
    %3266 = vmatprep.subr.mxu0 0.0
    %3267 = vmatpush1.msra.mxu0 0.0
    %3268 = vmatprep.subr.mxu0 0.0
    %3269 = vmatpush1.msra.mxu0 0.0
    %3270 = vmatprep.subr.mxu0 0.0
    %3271 = vmatpush1.msra.mxu0 0.0
    %3272 = vmatprep.subr.mxu0 0.0
    %3273 = vmatpush1.msra.mxu0 0.0
    %3274 = vmatprep.subr.mxu0 0.0
    %3275 = vmatpush1.msra.mxu0 %v3221
    %3276 = vmatprep.subr.mxu0 0.0
    %3277 = vmatpush1.msra.mxu0 %v3220
    %3278 = vmatprep.subr.mxu0 0.0
    %3279 = vmatpush1.msra.mxu0 %v3219
    %3280 = vmatprep.subr.mxu0 0.0
    %3281 = vmatpush1.msra.mxu0 %v3218
    %3282 = vmatprep.subr.mxu0 0.0
    %3283 = vmatpush2.msra.mxu0 0.0
    %3284 = vmatprep.subr.mxu0 0.0
    %3285 = vmatpush2.msra.mxu0 0.0
    %3286 = vmatprep.subr.mxu0 0.0
    %3287 = vmatpush2.msra.mxu0 0.0
    %3288 = vmatprep.subr.mxu0 0.0
    %3289 = vmatpush2.msra.mxu0 0.0
    %3290 = vmatprep.subr.mxu0 0.0
    %3291 = vmatpush2.msra.mxu0 0.0
    %3292 = vmatprep.subr.mxu0 0.0
    %3293 = vmatpush2.msra.mxu0 0.0
    %3294 = vmatprep.subr.mxu0 0.0
    %3295 = vmatpush2.msra.mxu0 0.0
    %3296 = vmatprep.subr.mxu0 0.0
    %3297 = vmatpush2.msra.mxu0 0.0
    %3298 = vmatprep.subr.mxu0 0.0
    %3299 = vmatpush2.msra.mxu0 0.0
    %3300 = vmatprep.subr.mxu0 0.0
    %3301 = vmatpush2.msra.mxu0 0.0
    %3302 = vmatprep.subr.mxu0 0.0
    %3303 = vmatpush2.msra.mxu0 0.0
    %3304 = vmatprep.subr.mxu0 0.0
    %3305 = vmatpush2.msra.mxu0 0.0
    %3306 = vmatprep.subr.mxu0 0.0
    %3307 = vmatpush2.msra.mxu0 0.0
    %3308 = vmatprep.subr.mxu0 0.0
    %3309 = vmatpush2.msra.mxu0 0.0
    %3310 = vmatprep.subr.mxu0 0.0
    %3311 = vmatpush2.msra.mxu0 0.0
    %3312 = vmatprep.subr.mxu0 0.0
    %3313 = vmatpush2.msra.mxu0 0.0
    %3314 = vmatprep.mubr.f32.mxu0 0.0
    %3315 = vmatmul.mubr.f32.gmra.mxu0 %v3245
    %v3316 = vpop.f32.mrf.mxu0
    %v3317 = vadd.f32 %v3242, %v3316
    %v3318 = vpop.f32.mrf.mxu0
    %3319 = vmatprep.mubr.f32.mxu0 0.0
    %3320 = vmatmul.mubr.f32.gmra.mxu0 %v3248
    %v3321 = vpop.f32.mrf.mxu0
    %v3322 = vadd.f32 %v3242, %v3321
    %v3323 = vpop.f32.mrf.mxu0
    %3324 = vdwg.mxu0
    %v3326 = vlaneseq
    %v3327 = vshrl.u32 %v3326, 7
    %v3328 = vsub.s32 0, %v3327
    %v3329 = vrot.slane %v3235, %v3328
    %3331 = vmatprep.subr.mxu0 0.0
    %3332 = vmatpush1.msra.mxu0 0.0
    %3333 = vmatprep.subr.mxu0 0.0
    %3334 = vmatpush1.msra.mxu0 0.0
    %3335 = vmatprep.subr.mxu0 0.0
    %3336 = vmatpush1.msra.mxu0 0.0
    %3337 = vmatprep.subr.mxu0 0.0
    %3338 = vmatpush1.msra.mxu0 0.0
    %3339 = vmatprep.subr.mxu0 0.0
    %3340 = vmatpush1.msra.mxu0 0.0
    %3341 = vmatprep.subr.mxu0 0.0
    %3342 = vmatpush1.msra.mxu0 0.0
    %3343 = vmatprep.subr.mxu0 0.0
    %3344 = vmatpush1.msra.mxu0 0.0
    %3345 = vmatprep.subr.mxu0 0.0
    %3346 = vmatpush1.msra.mxu0 0.0
    %3347 = vmatprep.subr.mxu0 0.0
    %3348 = vmatpush1.msra.mxu0 0.0
    %3349 = vmatprep.subr.mxu0 0.0
    %3350 = vmatpush1.msra.mxu0 0.0
    %3351 = vmatprep.subr.mxu0 0.0
    %3352 = vmatpush1.msra.mxu0 0.0
    %3353 = vmatprep.subr.mxu0 0.0
    %3354 = vmatpush1.msra.mxu0 0.0
    %3355 = vmatprep.subr.mxu0 0.0
    %3356 = vmatpush1.msra.mxu0 %v3226
    %3357 = vmatprep.subr.mxu0 0.0
    %3358 = vmatpush1.msra.mxu0 %v3225
    %3359 = vmatprep.subr.mxu0 0.0
    %3360 = vmatpush1.msra.mxu0 %v3224
    %3361 = vmatprep.subr.mxu0 0.0
    %3362 = vmatpush1.msra.mxu0 %v3223
    %3363 = vmatprep.subr.mxu0 0.0
    %3364 = vmatpush2.msra.mxu0 0.0
    %3365 = vmatprep.subr.mxu0 0.0
    %3366 = vmatpush2.msra.mxu0 0.0
    %3367 = vmatprep.subr.mxu0 0.0
    %3368 = vmatpush2.msra.mxu0 0.0
    %3369 = vmatprep.subr.mxu0 0.0
    %3370 = vmatpush2.msra.mxu0 0.0
    %3371 = vmatprep.subr.mxu0 0.0
    %3372 = vmatpush2.msra.mxu0 0.0
    %3373 = vmatprep.subr.mxu0 0.0
    %3374 = vmatpush2.msra.mxu0 0.0
    %3375 = vmatprep.subr.mxu0 0.0
    %3376 = vmatpush2.msra.mxu0 0.0
    %3377 = vmatprep.subr.mxu0 0.0
    %3378 = vmatpush2.msra.mxu0 0.0
    %3379 = vmatprep.subr.mxu0 0.0
    %3380 = vmatpush2.msra.mxu0 0.0
    %3381 = vmatprep.subr.mxu0 0.0
    %3382 = vmatpush2.msra.mxu0 0.0
    %3383 = vmatprep.subr.mxu0 0.0
    %3384 = vmatpush2.msra.mxu0 0.0
    %3385 = vmatprep.subr.mxu0 0.0
    %3386 = vmatpush2.msra.mxu0 0.0
    %3387 = vmatprep.subr.mxu0 0.0
    %3388 = vmatpush2.msra.mxu0 0.0
    %3389 = vmatprep.subr.mxu0 0.0
    %3390 = vmatpush2.msra.mxu0 0.0
    %3391 = vmatprep.subr.mxu0 0.0
    %3392 = vmatpush2.msra.mxu0 0.0
    %3393 = vmatprep.subr.mxu0 0.0
    %3394 = vmatpush2.msra.mxu0 0.0
    %3395 = vmatprep.mubr.f32.mxu0 0.0
    %3396 = vmatmul.mubr.f32.gmra.mxu0 %v3245
    %v3397 = vpop.f32.mrf.mxu0
    %v3398 = vadd.f32 %v3329, %v3397
    %v3399 = vpop.f32.mrf.mxu0
    %3400 = vmatprep.mubr.f32.mxu0 0.0
    %3401 = vmatmul.mubr.f32.gmra.mxu0 %v3248
    %v3402 = vpop.f32.mrf.mxu0
    %v3403 = vadd.f32 %v3329, %v3402
    %v3404 = vpop.f32.mrf.mxu0
    %3405 = vdwg.mxu0
    %v3407 = vlaneseq
    %v3408 = vshrl.u32 %v3407, 7
    %v3409 = vsub.s32 0, %v3408
    %v3410 = vrot.slane %v3237, %v3409
    %3412 = vmatprep.subr.mxu0 0.0
    %3413 = vmatpush1.msra.mxu0 0.0
    %3414 = vmatprep.subr.mxu0 0.0
    %3415 = vmatpush1.msra.mxu0 0.0
    %3416 = vmatprep.subr.mxu0 0.0
    %3417 = vmatpush1.msra.mxu0 0.0
    %3418 = vmatprep.subr.mxu0 0.0
    %3419 = vmatpush1.msra.mxu0 0.0
    %3420 = vmatprep.subr.mxu0 0.0
    %3421 = vmatpush1.msra.mxu0 0.0
    %3422 = vmatprep.subr.mxu0 0.0
    %3423 = vmatpush1.msra.mxu0 0.0
    %3424 = vmatprep.subr.mxu0 0.0
    %3425 = vmatpush1.msra.mxu0 0.0
    %3426 = vmatprep.subr.mxu0 0.0
    %3427 = vmatpush1.msra.mxu0 0.0
    %3428 = vmatprep.subr.mxu0 0.0
    %3429 = vmatpush1.msra.mxu0 0.0
    %3430 = vmatprep.subr.mxu0 0.0
    %3431 = vmatpush1.msra.mxu0 0.0
    %3432 = vmatprep.subr.mxu0 0.0
    %3433 = vmatpush1.msra.mxu0 0.0
    %3434 = vmatprep.subr.mxu0 0.0
    %3435 = vmatpush1.msra.mxu0 0.0
    %3436 = vmatprep.subr.mxu0 0.0
    %3437 = vmatpush1.msra.mxu0 %v3231
    %3438 = vmatprep.subr.mxu0 0.0
    %3439 = vmatpush1.msra.mxu0 %v3230
    %3440 = vmatprep.subr.mxu0 0.0
    %3441 = vmatpush1.msra.mxu0 %v3229
    %3442 = vmatprep.subr.mxu0 0.0
    %3443 = vmatpush1.msra.mxu0 %v3228
    %3444 = vmatprep.subr.mxu0 0.0
    %3445 = vmatpush2.msra.mxu0 0.0
    %3446 = vmatprep.subr.mxu0 0.0
    %3447 = vmatpush2.msra.mxu0 0.0
    %3448 = vmatprep.subr.mxu0 0.0
    %3449 = vmatpush2.msra.mxu0 0.0
    %3450 = vmatprep.subr.mxu0 0.0
    %3451 = vmatpush2.msra.mxu0 0.0
    %3452 = vmatprep.subr.mxu0 0.0
    %3453 = vmatpush2.msra.mxu0 0.0
    %3454 = vmatprep.subr.mxu0 0.0
    %3455 = vmatpush2.msra.mxu0 0.0
    %3456 = vmatprep.subr.mxu0 0.0
    %3457 = vmatpush2.msra.mxu0 0.0
    %3458 = vmatprep.subr.mxu0 0.0
    %3459 = vmatpush2.msra.mxu0 0.0
    %3460 = vmatprep.subr.mxu0 0.0
    %3461 = vmatpush2.msra.mxu0 0.0
    %3462 = vmatprep.subr.mxu0 0.0
    %3463 = vmatpush2.msra.mxu0 0.0
    %3464 = vmatprep.subr.mxu0 0.0
    %3465 = vmatpush2.msra.mxu0 0.0
    %3466 = vmatprep.subr.mxu0 0.0
    %3467 = vmatpush2.msra.mxu0 0.0
    %3468 = vmatprep.subr.mxu0 0.0
    %3469 = vmatpush2.msra.mxu0 0.0
    %3470 = vmatprep.subr.mxu0 0.0
    %3471 = vmatpush2.msra.mxu0 0.0
    %3472 = vmatprep.subr.mxu0 0.0
    %3473 = vmatpush2.msra.mxu0 0.0
    %3474 = vmatprep.subr.mxu0 0.0
    %3475 = vmatpush2.msra.mxu0 0.0
    %3476 = vmatprep.mubr.f32.mxu0 0.0
    %3477 = vmatmul.mubr.f32.gmra.mxu0 %v3245
    %v3478 = vpop.f32.mrf.mxu0
    %v3479 = vadd.f32 %v3410, %v3478
    %v3480 = vpop.f32.mrf.mxu0
    %3481 = vmatprep.mubr.f32.mxu0 0.0
    %3482 = vmatmul.mubr.f32.gmra.mxu0 %v3248
    %v3483 = vpop.f32.mrf.mxu0
    %v3484 = vadd.f32 %v3410, %v3483
    %v3485 = vpop.f32.mrf.mxu0
    %3486 = vdwg.mxu0
    %v3488 = vsel %vm484, %v3317, 0
    %v3491 = vsel %vm484, %v3398, 0
    %3493 = vmatprep.subr.mxu0 0.0
    %3494 = vmatpush1.xpose.msra.mxu0 0.0
    %3495 = vmatprep.subr.mxu0 0.0
    %3496 = vmatpush1.xpose.msra.mxu0 0.0
    %3497 = vmatprep.subr.mxu0 0.0
    %3498 = vmatpush1.xpose.msra.mxu0 0.0
    %3499 = vmatprep.subr.mxu0 0.0
    %3500 = vmatpush1.xpose.msra.mxu0 0.0
    %3501 = vmatprep.subr.mxu0 0.0
    %3502 = vmatpush1.xpose.msra.mxu0 0.0
    %3503 = vmatprep.subr.mxu0 0.0
    %3504 = vmatpush1.xpose.msra.mxu0 0.0
    %3505 = vmatprep.subr.mxu0 0.0
    %3506 = vmatpush1.xpose.msra.mxu0 0.0
    %3507 = vmatprep.subr.mxu0 0.0
    %3508 = vmatpush1.xpose.msra.mxu0 0.0
    %3509 = vmatprep.subr.mxu0 0.0
    %3510 = vmatpush1.xpose.msra.mxu0 0.0
    %3511 = vmatprep.subr.mxu0 0.0
    %3512 = vmatpush1.xpose.msra.mxu0 0.0
    %3513 = vmatprep.subr.mxu0 0.0
    %3514 = vmatpush1.xpose.msra.mxu0 0.0
    %3515 = vmatprep.subr.mxu0 0.0
    %3516 = vmatpush1.xpose.msra.mxu0 0.0
    %3517 = vmatprep.subr.mxu0 0.0
    %3518 = vmatpush1.xpose.msra.mxu0 0.0
    %3519 = vmatprep.subr.mxu0 0.0
    %3520 = vmatpush1.xpose.msra.mxu0 0.0
    %3521 = vmatprep.subr.mxu0 0.0
    %3522 = vmatpush1.xpose.msra.mxu0 0.0
    %3523 = vmatprep.subr.mxu0 0.0
    %3524 = vmatpush1.xpose.msra.mxu0 %v3491
    %3525 = vmatprep.subr.mxu0 0.0
    %3526 = vmatpush2.xpose.msra.mxu0 0.0
    %3527 = vmatprep.subr.mxu0 0.0
    %3528 = vmatpush2.xpose.msra.mxu0 0.0
    %3529 = vmatprep.subr.mxu0 0.0
    %3530 = vmatpush2.xpose.msra.mxu0 0.0
    %3531 = vmatprep.subr.mxu0 0.0
    %3532 = vmatpush2.xpose.msra.mxu0 0.0
    %3533 = vmatprep.subr.mxu0 0.0
    %3534 = vmatpush2.xpose.msra.mxu0 0.0
    %3535 = vmatprep.subr.mxu0 0.0
    %3536 = vmatpush2.xpose.msra.mxu0 0.0
    %3537 = vmatprep.subr.mxu0 0.0
    %3538 = vmatpush2.xpose.msra.mxu0 0.0
    %3539 = vmatprep.subr.mxu0 0.0
    %3540 = vmatpush2.xpose.msra.mxu0 0.0
    %3541 = vmatprep.subr.mxu0 0.0
    %3542 = vmatpush2.xpose.msra.mxu0 0.0
    %3543 = vmatprep.subr.mxu0 0.0
    %3544 = vmatpush2.xpose.msra.mxu0 0.0
    %3545 = vmatprep.subr.mxu0 0.0
    %3546 = vmatpush2.xpose.msra.mxu0 0.0
    %3547 = vmatprep.subr.mxu0 0.0
    %3548 = vmatpush2.xpose.msra.mxu0 0.0
    %3549 = vmatprep.subr.mxu0 0.0
    %3550 = vmatpush2.xpose.msra.mxu0 0.0
    %3551 = vmatprep.subr.mxu0 0.0
    %3552 = vmatpush2.xpose.msra.mxu0 0.0
    %3553 = vmatprep.subr.mxu0 0.0
    %3554 = vmatpush2.xpose.msra.mxu0 0.0
    %3555 = vmatprep.subr.mxu0 0.0
    %3556 = vmatpush2.xpose.msra.mxu0 0.0
    %3557 = vmatprep.mubr.f32.mxu0 0.0
    %3558 = vmatmul.mubr.f32.gmra.mxu0 %v3488
    %v3559 = vpop.f32.mrf.mxu0
    %v3560 = vadd.f32 0.0, %v3559
    %v3561 = vpop.f32.mrf.mxu0
    %3562 = vdwg.mxu0
    %v3564 = vsel %vm484, %v3322, 0
    %v3567 = vsel %vm484, %v3403, 0
    %3569 = vmatprep.subr.mxu0 0.0
    %3570 = vmatpush1.xpose.msra.mxu0 0.0
    %3571 = vmatprep.subr.mxu0 0.0
    %3572 = vmatpush1.xpose.msra.mxu0 0.0
    %3573 = vmatprep.subr.mxu0 0.0
    %3574 = vmatpush1.xpose.msra.mxu0 0.0
    %3575 = vmatprep.subr.mxu0 0.0
    %3576 = vmatpush1.xpose.msra.mxu0 0.0
    %3577 = vmatprep.subr.mxu0 0.0
    %3578 = vmatpush1.xpose.msra.mxu0 0.0
    %3579 = vmatprep.subr.mxu0 0.0
    %3580 = vmatpush1.xpose.msra.mxu0 0.0
    %3581 = vmatprep.subr.mxu0 0.0
    %3582 = vmatpush1.xpose.msra.mxu0 0.0
    %3583 = vmatprep.subr.mxu0 0.0
    %3584 = vmatpush1.xpose.msra.mxu0 0.0
    %3585 = vmatprep.subr.mxu0 0.0
    %3586 = vmatpush1.xpose.msra.mxu0 0.0
    %3587 = vmatprep.subr.mxu0 0.0
    %3588 = vmatpush1.xpose.msra.mxu0 0.0
    %3589 = vmatprep.subr.mxu0 0.0
    %3590 = vmatpush1.xpose.msra.mxu0 0.0
    %3591 = vmatprep.subr.mxu0 0.0
    %3592 = vmatpush1.xpose.msra.mxu0 0.0
    %3593 = vmatprep.subr.mxu0 0.0
    %3594 = vmatpush1.xpose.msra.mxu0 0.0
    %3595 = vmatprep.subr.mxu0 0.0
    %3596 = vmatpush1.xpose.msra.mxu0 0.0
    %3597 = vmatprep.subr.mxu0 0.0
    %3598 = vmatpush1.xpose.msra.mxu0 0.0
    %3599 = vmatprep.subr.mxu0 0.0
    %3600 = vmatpush1.xpose.msra.mxu0 %v3567
    %3601 = vmatprep.subr.mxu0 0.0
    %3602 = vmatpush2.xpose.msra.mxu0 0.0
    %3603 = vmatprep.subr.mxu0 0.0
    %3604 = vmatpush2.xpose.msra.mxu0 0.0
    %3605 = vmatprep.subr.mxu0 0.0
    %3606 = vmatpush2.xpose.msra.mxu0 0.0
    %3607 = vmatprep.subr.mxu0 0.0
    %3608 = vmatpush2.xpose.msra.mxu0 0.0
    %3609 = vmatprep.subr.mxu0 0.0
    %3610 = vmatpush2.xpose.msra.mxu0 0.0
    %3611 = vmatprep.subr.mxu0 0.0
    %3612 = vmatpush2.xpose.msra.mxu0 0.0
    %3613 = vmatprep.subr.mxu0 0.0
    %3614 = vmatpush2.xpose.msra.mxu0 0.0
    %3615 = vmatprep.subr.mxu0 0.0
    %3616 = vmatpush2.xpose.msra.mxu0 0.0
    %3617 = vmatprep.subr.mxu0 0.0
    %3618 = vmatpush2.xpose.msra.mxu0 0.0
    %3619 = vmatprep.subr.mxu0 0.0
    %3620 = vmatpush2.xpose.msra.mxu0 0.0
    %3621 = vmatprep.subr.mxu0 0.0
    %3622 = vmatpush2.xpose.msra.mxu0 0.0
    %3623 = vmatprep.subr.mxu0 0.0
    %3624 = vmatpush2.xpose.msra.mxu0 0.0
    %3625 = vmatprep.subr.mxu0 0.0
    %3626 = vmatpush2.xpose.msra.mxu0 0.0
    %3627 = vmatprep.subr.mxu0 0.0
    %3628 = vmatpush2.xpose.msra.mxu0 0.0
    %3629 = vmatprep.subr.mxu0 0.0
    %3630 = vmatpush2.xpose.msra.mxu0 0.0
    %3631 = vmatprep.subr.mxu0 0.0
    %3632 = vmatpush2.xpose.msra.mxu0 0.0
    %3633 = vmatprep.mubr.f32.mxu0 0.0
    %3634 = vmatmul.mubr.f32.gmra.mxu0 %v3564
    %v3635 = vpop.f32.mrf.mxu0
    %v3636 = vadd.f32 0.0, %v3635
    %v3637 = vpop.f32.mrf.mxu0
    %3638 = vdwg.mxu0
    %v3639 = vmul.f32 %v3560, 0.35355338
    %v3640 = vmul.f32 %v3636, 0.35355338
    %v3641 = vsel %vm484, %v3639, -inf
    %3642 = vmax.xlane.f32.xlu0 %v3641
    %v3643 = vpop.xlane.xlu0 %3642
    %v3644 = vsel %vm484, %v3640, -inf
    %3645 = vmax.xlane.f32.xlu0 %v3644
    %v3646 = vpop.xlane.xlu0 %3645
    %v3647 = vsub.f32 %v3639, %v3643
    %v3648 = vsub.f32 %v3640, %v3646
    %v3649 = vmul.f32 %v3647, 1.442695
    %v3650 = vpow.pop %v3649
    %v3651 = vmul.f32 %v3648, 1.442695
    %v3652 = vpow.pop %v3651
    %v3653 = vsel %vm484, %v3650, 0.0
    %3654 = vadd.xlane.f32.xlu0 %v3653
    %v3655 = vpop.xlane.xlu0 %3654
    %v3656 = vsel %vm484, %v3652, 0.0
    %3657 = vadd.xlane.f32.xlu0 %v3656
    %v3658 = vpop.xlane.xlu0 %3657
    %v3659 = vrcp.pop %v3655
    %v3660 = vrcp.pop %v3658
    %v3661 = vmul.f32 %v3650, %v3659
    %v3662 = vmul.f32 %v3652, %v3660
    %v3664 = vsel %vm484, %v3661, 0
    %3666 = vmatprep.subr.mxu0 0.0
    %3667 = vmatpush1.msra.mxu0 0.0
    %3668 = vmatprep.subr.mxu0 0.0
    %3669 = vmatpush1.msra.mxu0 0.0
    %3670 = vmatprep.subr.mxu0 0.0
    %3671 = vmatpush1.msra.mxu0 0.0
    %3672 = vmatprep.subr.mxu0 0.0
    %3673 = vmatpush1.msra.mxu0 0.0
    %3674 = vmatprep.subr.mxu0 0.0
    %3675 = vmatpush1.msra.mxu0 0.0
    %3676 = vmatprep.subr.mxu0 0.0
    %3677 = vmatpush1.msra.mxu0 0.0
    %3678 = vmatprep.subr.mxu0 0.0
    %3679 = vmatpush1.msra.mxu0 0.0
    %3680 = vmatprep.subr.mxu0 0.0
    %3681 = vmatpush1.msra.mxu0 0.0
    %3682 = vmatprep.subr.mxu0 0.0
    %3683 = vmatpush1.msra.mxu0 0.0
    %3684 = vmatprep.subr.mxu0 0.0
    %3685 = vmatpush1.msra.mxu0 0.0
    %3686 = vmatprep.subr.mxu0 0.0
    %3687 = vmatpush1.msra.mxu0 0.0
    %3688 = vmatprep.subr.mxu0 0.0
    %3689 = vmatpush1.msra.mxu0 0.0
    %3690 = vmatprep.subr.mxu0 0.0
    %3691 = vmatpush1.msra.mxu0 0.0
    %3692 = vmatprep.subr.mxu0 0.0
    %3693 = vmatpush1.msra.mxu0 0.0
    %3694 = vmatprep.subr.mxu0 0.0
    %3695 = vmatpush1.msra.mxu0 0.0
    %3696 = vmatprep.subr.mxu0 0.0
    %3697 = vmatpush1.msra.mxu0 %v3479
    %3698 = vmatprep.subr.mxu0 0.0
    %3699 = vmatpush2.msra.mxu0 0.0
    %3700 = vmatprep.subr.mxu0 0.0
    %3701 = vmatpush2.msra.mxu0 0.0
    %3702 = vmatprep.subr.mxu0 0.0
    %3703 = vmatpush2.msra.mxu0 0.0
    %3704 = vmatprep.subr.mxu0 0.0
    %3705 = vmatpush2.msra.mxu0 0.0
    %3706 = vmatprep.subr.mxu0 0.0
    %3707 = vmatpush2.msra.mxu0 0.0
    %3708 = vmatprep.subr.mxu0 0.0
    %3709 = vmatpush2.msra.mxu0 0.0
    %3710 = vmatprep.subr.mxu0 0.0
    %3711 = vmatpush2.msra.mxu0 0.0
    %3712 = vmatprep.subr.mxu0 0.0
    %3713 = vmatpush2.msra.mxu0 0.0
    %3714 = vmatprep.subr.mxu0 0.0
    %3715 = vmatpush2.msra.mxu0 0.0
    %3716 = vmatprep.subr.mxu0 0.0
    %3717 = vmatpush2.msra.mxu0 0.0
    %3718 = vmatprep.subr.mxu0 0.0
    %3719 = vmatpush2.msra.mxu0 0.0
    %3720 = vmatprep.subr.mxu0 0.0
    %3721 = vmatpush2.msra.mxu0 0.0
    %3722 = vmatprep.subr.mxu0 0.0
    %3723 = vmatpush2.msra.mxu0 0.0
    %3724 = vmatprep.subr.mxu0 0.0
    %3725 = vmatpush2.msra.mxu0 0.0
    %3726 = vmatprep.subr.mxu0 0.0
    %3727 = vmatpush2.msra.mxu0 0.0
    %3728 = vmatprep.subr.mxu0 0.0
    %3729 = vmatpush2.msra.mxu0 0.0
    %3730 = vmatprep.mubr.f32.mxu0 0.0
    %3731 = vmatmul.mubr.f32.gmra.mxu0 %v3664
    %v3732 = vpop.f32.mrf.mxu0
    %v3733 = vadd.f32 0.0, %v3732
    %v3734 = vpop.f32.mrf.mxu0
    %3735 = vdwg.mxu0
    %v3737 = vsel %vm484, %v3662, 0
    %3739 = vmatprep.subr.mxu0 0.0
    %3740 = vmatpush1.msra.mxu0 0.0
    %3741 = vmatprep.subr.mxu0 0.0
    %3742 = vmatpush1.msra.mxu0 0.0
    %3743 = vmatprep.subr.mxu0 0.0
    %3744 = vmatpush1.msra.mxu0 0.0
    %3745 = vmatprep.subr.mxu0 0.0
    %3746 = vmatpush1.msra.mxu0 0.0
    %3747 = vmatprep.subr.mxu0 0.0
    %3748 = vmatpush1.msra.mxu0 0.0
    %3749 = vmatprep.subr.mxu0 0.0
    %3750 = vmatpush1.msra.mxu0 0.0
    %3751 = vmatprep.subr.mxu0 0.0
    %3752 = vmatpush1.msra.mxu0 0.0
    %3753 = vmatprep.subr.mxu0 0.0
    %3754 = vmatpush1.msra.mxu0 0.0
    %3755 = vmatprep.subr.mxu0 0.0
    %3756 = vmatpush1.msra.mxu0 0.0
    %3757 = vmatprep.subr.mxu0 0.0
    %3758 = vmatpush1.msra.mxu0 0.0
    %3759 = vmatprep.subr.mxu0 0.0
    %3760 = vmatpush1.msra.mxu0 0.0
    %3761 = vmatprep.subr.mxu0 0.0
    %3762 = vmatpush1.msra.mxu0 0.0
    %3763 = vmatprep.subr.mxu0 0.0
    %3764 = vmatpush1.msra.mxu0 0.0
    %3765 = vmatprep.subr.mxu0 0.0
    %3766 = vmatpush1.msra.mxu0 0.0
    %3767 = vmatprep.subr.mxu0 0.0
    %3768 = vmatpush1.msra.mxu0 0.0
    %3769 = vmatprep.subr.mxu0 0.0
    %3770 = vmatpush1.msra.mxu0 %v3484
    %3771 = vmatprep.subr.mxu0 0.0
    %3772 = vmatpush2.msra.mxu0 0.0
    %3773 = vmatprep.subr.mxu0 0.0
    %3774 = vmatpush2.msra.mxu0 0.0
    %3775 = vmatprep.subr.mxu0 0.0
    %3776 = vmatpush2.msra.mxu0 0.0
    %3777 = vmatprep.subr.mxu0 0.0
    %3778 = vmatpush2.msra.mxu0 0.0
    %3779 = vmatprep.subr.mxu0 0.0
    %3780 = vmatpush2.msra.mxu0 0.0
    %3781 = vmatprep.subr.mxu0 0.0
    %3782 = vmatpush2.msra.mxu0 0.0
    %3783 = vmatprep.subr.mxu0 0.0
    %3784 = vmatpush2.msra.mxu0 0.0
    %3785 = vmatprep.subr.mxu0 0.0
    %3786 = vmatpush2.msra.mxu0 0.0
    %3787 = vmatprep.subr.mxu0 0.0
    %3788 = vmatpush2.msra.mxu0 0.0
    %3789 = vmatprep.subr.mxu0 0.0
    %3790 = vmatpush2.msra.mxu0 0.0
    %3791 = vmatprep.subr.mxu0 0.0
    %3792 = vmatpush2.msra.mxu0 0.0
    %3793 = vmatprep.subr.mxu0 0.0
    %3794 = vmatpush2.msra.mxu0 0.0
    %3795 = vmatprep.subr.mxu0 0.0
    %3796 = vmatpush2.msra.mxu0 0.0
    %3797 = vmatprep.subr.mxu0 0.0
    %3798 = vmatpush2.msra.mxu0 0.0
    %3799 = vmatprep.subr.mxu0 0.0
    %3800 = vmatpush2.msra.mxu0 0.0
    %3801 = vmatprep.subr.mxu0 0.0
    %3802 = vmatpush2.msra.mxu0 0.0
    %3803 = vmatprep.mubr.f32.mxu0 0.0
    %3804 = vmatmul.mubr.f32.gmra.mxu0 %v3737
    %v3805 = vpop.f32.mrf.mxu0
    %v3806 = vadd.f32 0.0, %v3805
    %v3807 = vpop.f32.mrf.mxu0
    %3808 = vdwg.mxu0
    %s3809 = scalar_lea.vmem %s5, 32
    %v3810 = vld [vmem:[%s3809] sm:$0xff]
    %v3812 = vsel %vm484, %v3733, 0
    %v3815 = vsel %vm484, %v3806, 0
    %3817 = vmatprep.subr.mxu0 0.0
    %3818 = vmatpush1.msra.mxu0 0.0
    %3819 = vmatprep.subr.mxu0 0.0
    %3820 = vmatpush1.msra.mxu0 0.0
    %3821 = vmatprep.subr.mxu0 0.0
    %3822 = vmatpush1.msra.mxu0 0.0
    %3823 = vmatprep.subr.mxu0 0.0
    %3824 = vmatpush1.msra.mxu0 0.0
    %3825 = vmatprep.subr.mxu0 0.0
    %3826 = vmatpush1.msra.mxu0 0.0
    %3827 = vmatprep.subr.mxu0 0.0
    %3828 = vmatpush1.msra.mxu0 0.0
    %3829 = vmatprep.subr.mxu0 0.0
    %3830 = vmatpush1.msra.mxu0 0.0
    %3831 = vmatprep.subr.mxu0 0.0
    %3832 = vmatpush1.msra.mxu0 0.0
    %3833 = vmatprep.subr.mxu0 0.0
    %3834 = vmatpush1.msra.mxu0 0.0
    %3835 = vmatprep.subr.mxu0 0.0
    %3836 = vmatpush1.msra.mxu0 0.0
    %3837 = vmatprep.subr.mxu0 0.0
    %3838 = vmatpush1.msra.mxu0 0.0
    %3839 = vmatprep.subr.mxu0 0.0
    %3840 = vmatpush1.msra.mxu0 0.0
    %3841 = vmatprep.subr.mxu0 0.0
    %3842 = vmatpush1.msra.mxu0 0.0
    %3843 = vmatprep.subr.mxu0 0.0
    %3844 = vmatpush1.msra.mxu0 0.0
    %3845 = vmatprep.subr.mxu0 0.0
    %3846 = vmatpush1.msra.mxu0 0.0
    %3847 = vmatprep.subr.mxu0 0.0
    %3848 = vmatpush1.msra.mxu0 %v3810
    %3849 = vmatprep.subr.mxu0 0.0
    %3850 = vmatpush2.msra.mxu0 0.0
    %3851 = vmatprep.subr.mxu0 0.0
    %3852 = vmatpush2.msra.mxu0 0.0
    %3853 = vmatprep.subr.mxu0 0.0
    %3854 = vmatpush2.msra.mxu0 0.0
    %3855 = vmatprep.subr.mxu0 0.0
    %3856 = vmatpush2.msra.mxu0 0.0
    %3857 = vmatprep.subr.mxu0 0.0
    %3858 = vmatpush2.msra.mxu0 0.0
    %3859 = vmatprep.subr.mxu0 0.0
    %3860 = vmatpush2.msra.mxu0 0.0
    %3861 = vmatprep.subr.mxu0 0.0
    %3862 = vmatpush2.msra.mxu0 0.0
    %3863 = vmatprep.subr.mxu0 0.0
    %3864 = vmatpush2.msra.mxu0 0.0
    %3865 = vmatprep.subr.mxu0 0.0
    %3866 = vmatpush2.msra.mxu0 0.0
    %3867 = vmatprep.subr.mxu0 0.0
    %3868 = vmatpush2.msra.mxu0 0.0
    %3869 = vmatprep.subr.mxu0 0.0
    %3870 = vmatpush2.msra.mxu0 0.0
    %3871 = vmatprep.subr.mxu0 0.0
    %3872 = vmatpush2.msra.mxu0 0.0
    %3873 = vmatprep.subr.mxu0 0.0
    %3874 = vmatpush2.msra.mxu0 0.0
    %3875 = vmatprep.subr.mxu0 0.0
    %3876 = vmatpush2.msra.mxu0 0.0
    %3877 = vmatprep.subr.mxu0 0.0
    %3878 = vmatpush2.msra.mxu0 0.0
    %3879 = vmatprep.subr.mxu0 0.0
    %3880 = vmatpush2.msra.mxu0 0.0
    %3881 = vmatprep.mubr.f32.mxu0 0.0
    %3882 = vmatmul.mubr.f32.gmra.mxu0 %v3812
    %v3883 = vpop.f32.mrf.mxu0
    %v3884 = vadd.f32 0.0, %v3883
    %v3885 = vpop.f32.mrf.mxu0
    %3886 = vmatprep.mubr.f32.mxu0 0.0
    %3887 = vmatmul.mubr.f32.gmra.mxu0 %v3815
    %v3888 = vpop.f32.mrf.mxu0
    %v3889 = vadd.f32 0.0, %v3888
    %v3890 = vpop.f32.mrf.mxu0
    %3891 = vdwg.mxu0
    %v3892 = vadd.f32 %v3215, %v3884
    %v3893 = vadd.f32 %v3216, %v3889
    %s3894 = scalar_lea.vmem %s3, 416
    %v3895 = vld [vmem:[%s3894] sm:$0xff]
    %v3896 = vld [vmem:[%s3894 + $0x8] sm:$0xff]
    %v3897 = vld [vmem:[%s3894 + $0x10] sm:$0xff]
    %v3898 = vld [vmem:[%s3894 + $0x18] sm:$0xff]
    %s3899 = scalar_lea.vmem %s3, 544
    %v3900 = vld [vmem:[%s3899] sm:$0xff]
    %v3901 = vld [vmem:[%s3899 + $0x8] sm:$0xff]
    %v3902 = vld [vmem:[%s3899 + $0x10] sm:$0xff]
    %v3903 = vld [vmem:[%s3899 + $0x18] sm:$0xff]
    %s3904 = scalar_lea.vmem %s3, 672
    %v3905 = vld [vmem:[%s3904] sm:$0xff]
    %v3906 = vld [vmem:[%s3904 + $0x8] sm:$0xff]
    %v3907 = vld [vmem:[%s3904 + $0x10] sm:$0xff]
    %v3908 = vld [vmem:[%s3904 + $0x18] sm:$0xff]
    %s3909 = scalar_lea.vmem %s4, 13
    %v3910 = vld [vmem:[%s3909] sm:$0x1]
    %s3911 = scalar_lea.vmem %s4, 17
    %v3912 = vld [vmem:[%s3911] sm:$0x1]
    %s3913 = scalar_lea.vmem %s4, 21
    %v3914 = vld [vmem:[%s3913] sm:$0x1]
    %v3916 = vlaneseq
    %v3917 = vshrl.u32 %v3916, 7
    %v3918 = vsub.s32 0, %v3917
    %v3919 = vrot.slane %v3910, %v3918
    %3921 = vmatprep.subr.mxu0 0.0
    %3922 = vmatpush1.msra.mxu0 0.0
    %3923 = vmatprep.subr.mxu0 0.0
    %3924 = vmatpush1.msra.mxu0 0.0
    %3925 = vmatprep.subr.mxu0 0.0
    %3926 = vmatpush1.msra.mxu0 0.0
    %3927 = vmatprep.subr.mxu0 0.0
    %3928 = vmatpush1.msra.mxu0 0.0
    %3929 = vmatprep.subr.mxu0 0.0
    %3930 = vmatpush1.msra.mxu0 0.0
    %3931 = vmatprep.subr.mxu0 0.0
    %3932 = vmatpush1.msra.mxu0 0.0
    %3933 = vmatprep.subr.mxu0 0.0
    %3934 = vmatpush1.msra.mxu0 0.0
    %3935 = vmatprep.subr.mxu0 0.0
    %3936 = vmatpush1.msra.mxu0 0.0
    %3937 = vmatprep.subr.mxu0 0.0
    %3938 = vmatpush1.msra.mxu0 0.0
    %3939 = vmatprep.subr.mxu0 0.0
    %3940 = vmatpush1.msra.mxu0 0.0
    %3941 = vmatprep.subr.mxu0 0.0
    %3942 = vmatpush1.msra.mxu0 0.0
    %3943 = vmatprep.subr.mxu0 0.0
    %3944 = vmatpush1.msra.mxu0 0.0
    %3945 = vmatprep.subr.mxu0 0.0
    %3946 = vmatpush1.msra.mxu0 %v3898
    %3947 = vmatprep.subr.mxu0 0.0
    %3948 = vmatpush1.msra.mxu0 %v3897
    %3949 = vmatprep.subr.mxu0 0.0
    %3950 = vmatpush1.msra.mxu0 %v3896
    %3951 = vmatprep.subr.mxu0 0.0
    %3952 = vmatpush1.msra.mxu0 %v3895
    %3953 = vmatprep.subr.mxu0 0.0
    %3954 = vmatpush2.msra.mxu0 0.0
    %3955 = vmatprep.subr.mxu0 0.0
    %3956 = vmatpush2.msra.mxu0 0.0
    %3957 = vmatprep.subr.mxu0 0.0
    %3958 = vmatpush2.msra.mxu0 0.0
    %3959 = vmatprep.subr.mxu0 0.0
    %3960 = vmatpush2.msra.mxu0 0.0
    %3961 = vmatprep.subr.mxu0 0.0
    %3962 = vmatpush2.msra.mxu0 0.0
    %3963 = vmatprep.subr.mxu0 0.0
    %3964 = vmatpush2.msra.mxu0 0.0
    %3965 = vmatprep.subr.mxu0 0.0
    %3966 = vmatpush2.msra.mxu0 0.0
    %3967 = vmatprep.subr.mxu0 0.0
    %3968 = vmatpush2.msra.mxu0 0.0
    %3969 = vmatprep.subr.mxu0 0.0
    %3970 = vmatpush2.msra.mxu0 0.0
    %3971 = vmatprep.subr.mxu0 0.0
    %3972 = vmatpush2.msra.mxu0 0.0
    %3973 = vmatprep.subr.mxu0 0.0
    %3974 = vmatpush2.msra.mxu0 0.0
    %3975 = vmatprep.subr.mxu0 0.0
    %3976 = vmatpush2.msra.mxu0 0.0
    %3977 = vmatprep.subr.mxu0 0.0
    %3978 = vmatpush2.msra.mxu0 0.0
    %3979 = vmatprep.subr.mxu0 0.0
    %3980 = vmatpush2.msra.mxu0 0.0
    %3981 = vmatprep.subr.mxu0 0.0
    %3982 = vmatpush2.msra.mxu0 0.0
    %3983 = vmatprep.subr.mxu0 0.0
    %3984 = vmatpush2.msra.mxu0 0.0
    %3985 = vmatprep.mubr.f32.mxu0 0.0
    %3986 = vmatmul.mubr.f32.gmra.mxu0 %v3245
    %v3987 = vpop.f32.mrf.mxu0
    %v3988 = vadd.f32 %v3919, %v3987
    %v3989 = vpop.f32.mrf.mxu0
    %3990 = vmatprep.mubr.f32.mxu0 0.0
    %3991 = vmatmul.mubr.f32.gmra.mxu0 %v3248
    %v3992 = vpop.f32.mrf.mxu0
    %v3993 = vadd.f32 %v3919, %v3992
    %v3994 = vpop.f32.mrf.mxu0
    %3995 = vdwg.mxu0
    %v3997 = vlaneseq
    %v3998 = vshrl.u32 %v3997, 7
    %v3999 = vsub.s32 0, %v3998
    %v4000 = vrot.slane %v3912, %v3999
    %4002 = vmatprep.subr.mxu0 0.0
    %4003 = vmatpush1.msra.mxu0 0.0
    %4004 = vmatprep.subr.mxu0 0.0
    %4005 = vmatpush1.msra.mxu0 0.0
    %4006 = vmatprep.subr.mxu0 0.0
    %4007 = vmatpush1.msra.mxu0 0.0
    %4008 = vmatprep.subr.mxu0 0.0
    %4009 = vmatpush1.msra.mxu0 0.0
    %4010 = vmatprep.subr.mxu0 0.0
    %4011 = vmatpush1.msra.mxu0 0.0
    %4012 = vmatprep.subr.mxu0 0.0
    %4013 = vmatpush1.msra.mxu0 0.0
    %4014 = vmatprep.subr.mxu0 0.0
    %4015 = vmatpush1.msra.mxu0 0.0
    %4016 = vmatprep.subr.mxu0 0.0
    %4017 = vmatpush1.msra.mxu0 0.0
    %4018 = vmatprep.subr.mxu0 0.0
    %4019 = vmatpush1.msra.mxu0 0.0
    %4020 = vmatprep.subr.mxu0 0.0
    %4021 = vmatpush1.msra.mxu0 0.0
    %4022 = vmatprep.subr.mxu0 0.0
    %4023 = vmatpush1.msra.mxu0 0.0
    %4024 = vmatprep.subr.mxu0 0.0
    %4025 = vmatpush1.msra.mxu0 0.0
    %4026 = vmatprep.subr.mxu0 0.0
    %4027 = vmatpush1.msra.mxu0 %v3903
    %4028 = vmatprep.subr.mxu0 0.0
    %4029 = vmatpush1.msra.mxu0 %v3902
    %4030 = vmatprep.subr.mxu0 0.0
    %4031 = vmatpush1.msra.mxu0 %v3901
    %4032 = vmatprep.subr.mxu0 0.0
    %4033 = vmatpush1.msra.mxu0 %v3900
    %4034 = vmatprep.subr.mxu0 0.0
    %4035 = vmatpush2.msra.mxu0 0.0
    %4036 = vmatprep.subr.mxu0 0.0
    %4037 = vmatpush2.msra.mxu0 0.0
    %4038 = vmatprep.subr.mxu0 0.0
    %4039 = vmatpush2.msra.mxu0 0.0
    %4040 = vmatprep.subr.mxu0 0.0
    %4041 = vmatpush2.msra.mxu0 0.0
    %4042 = vmatprep.subr.mxu0 0.0
    %4043 = vmatpush2.msra.mxu0 0.0
    %4044 = vmatprep.subr.mxu0 0.0
    %4045 = vmatpush2.msra.mxu0 0.0
    %4046 = vmatprep.subr.mxu0 0.0
    %4047 = vmatpush2.msra.mxu0 0.0
    %4048 = vmatprep.subr.mxu0 0.0
    %4049 = vmatpush2.msra.mxu0 0.0
    %4050 = vmatprep.subr.mxu0 0.0
    %4051 = vmatpush2.msra.mxu0 0.0
    %4052 = vmatprep.subr.mxu0 0.0
    %4053 = vmatpush2.msra.mxu0 0.0
    %4054 = vmatprep.subr.mxu0 0.0
    %4055 = vmatpush2.msra.mxu0 0.0
    %4056 = vmatprep.subr.mxu0 0.0
    %4057 = vmatpush2.msra.mxu0 0.0
    %4058 = vmatprep.subr.mxu0 0.0
    %4059 = vmatpush2.msra.mxu0 0.0
    %4060 = vmatprep.subr.mxu0 0.0
    %4061 = vmatpush2.msra.mxu0 0.0
    %4062 = vmatprep.subr.mxu0 0.0
    %4063 = vmatpush2.msra.mxu0 0.0
    %4064 = vmatprep.subr.mxu0 0.0
    %4065 = vmatpush2.msra.mxu0 0.0
    %4066 = vmatprep.mubr.f32.mxu0 0.0
    %4067 = vmatmul.mubr.f32.gmra.mxu0 %v3245
    %v4068 = vpop.f32.mrf.mxu0
    %v4069 = vadd.f32 %v4000, %v4068
    %v4070 = vpop.f32.mrf.mxu0
    %4071 = vmatprep.mubr.f32.mxu0 0.0
    %4072 = vmatmul.mubr.f32.gmra.mxu0 %v3248
    %v4073 = vpop.f32.mrf.mxu0
    %v4074 = vadd.f32 %v4000, %v4073
    %v4075 = vpop.f32.mrf.mxu0
    %4076 = vdwg.mxu0
    %v4078 = vlaneseq
    %v4079 = vshrl.u32 %v4078, 7
    %v4080 = vsub.s32 0, %v4079
    %v4081 = vrot.slane %v3914, %v4080
    %4083 = vmatprep.subr.mxu0 0.0
    %4084 = vmatpush1.msra.mxu0 0.0
    %4085 = vmatprep.subr.mxu0 0.0
    %4086 = vmatpush1.msra.mxu0 0.0
    %4087 = vmatprep.subr.mxu0 0.0
    %4088 = vmatpush1.msra.mxu0 0.0
    %4089 = vmatprep.subr.mxu0 0.0
    %4090 = vmatpush1.msra.mxu0 0.0
    %4091 = vmatprep.subr.mxu0 0.0
    %4092 = vmatpush1.msra.mxu0 0.0
    %4093 = vmatprep.subr.mxu0 0.0
    %4094 = vmatpush1.msra.mxu0 0.0
    %4095 = vmatprep.subr.mxu0 0.0
    %4096 = vmatpush1.msra.mxu0 0.0
    %4097 = vmatprep.subr.mxu0 0.0
    %4098 = vmatpush1.msra.mxu0 0.0
    %4099 = vmatprep.subr.mxu0 0.0
    %4100 = vmatpush1.msra.mxu0 0.0
    %4101 = vmatprep.subr.mxu0 0.0
    %4102 = vmatpush1.msra.mxu0 0.0
    %4103 = vmatprep.subr.mxu0 0.0
    %4104 = vmatpush1.msra.mxu0 0.0
    %4105 = vmatprep.subr.mxu0 0.0
    %4106 = vmatpush1.msra.mxu0 0.0
    %4107 = vmatprep.subr.mxu0 0.0
    %4108 = vmatpush1.msra.mxu0 %v3908
    %4109 = vmatprep.subr.mxu0 0.0
    %4110 = vmatpush1.msra.mxu0 %v3907
    %4111 = vmatprep.subr.mxu0 0.0
    %4112 = vmatpush1.msra.mxu0 %v3906
    %4113 = vmatprep.subr.mxu0 0.0
    %4114 = vmatpush1.msra.mxu0 %v3905
    %4115 = vmatprep.subr.mxu0 0.0
    %4116 = vmatpush2.msra.mxu0 0.0
    %4117 = vmatprep.subr.mxu0 0.0
    %4118 = vmatpush2.msra.mxu0 0.0
    %4119 = vmatprep.subr.mxu0 0.0
    %4120 = vmatpush2.msra.mxu0 0.0
    %4121 = vmatprep.subr.mxu0 0.0
    %4122 = vmatpush2.msra.mxu0 0.0
    %4123 = vmatprep.subr.mxu0 0.0
    %4124 = vmatpush2.msra.mxu0 0.0
    %4125 = vmatprep.subr.mxu0 0.0
    %4126 = vmatpush2.msra.mxu0 0.0
    %4127 = vmatprep.subr.mxu0 0.0
    %4128 = vmatpush2.msra.mxu0 0.0
    %4129 = vmatprep.subr.mxu0 0.0
    %4130 = vmatpush2.msra.mxu0 0.0
    %4131 = vmatprep.subr.mxu0 0.0
    %4132 = vmatpush2.msra.mxu0 0.0
    %4133 = vmatprep.subr.mxu0 0.0
    %4134 = vmatpush2.msra.mxu0 0.0
    %4135 = vmatprep.subr.mxu0 0.0
    %4136 = vmatpush2.msra.mxu0 0.0
    %4137 = vmatprep.subr.mxu0 0.0
    %4138 = vmatpush2.msra.mxu0 0.0
    %4139 = vmatprep.subr.mxu0 0.0
    %4140 = vmatpush2.msra.mxu0 0.0
    %4141 = vmatprep.subr.mxu0 0.0
    %4142 = vmatpush2.msra.mxu0 0.0
    %4143 = vmatprep.subr.mxu0 0.0
    %4144 = vmatpush2.msra.mxu0 0.0
    %4145 = vmatprep.subr.mxu0 0.0
    %4146 = vmatpush2.msra.mxu0 0.0
    %4147 = vmatprep.mubr.f32.mxu0 0.0
    %4148 = vmatmul.mubr.f32.gmra.mxu0 %v3245
    %v4149 = vpop.f32.mrf.mxu0
    %v4150 = vadd.f32 %v4081, %v4149
    %v4151 = vpop.f32.mrf.mxu0
    %4152 = vmatprep.mubr.f32.mxu0 0.0
    %4153 = vmatmul.mubr.f32.gmra.mxu0 %v3248
    %v4154 = vpop.f32.mrf.mxu0
    %v4155 = vadd.f32 %v4081, %v4154
    %v4156 = vpop.f32.mrf.mxu0
    %4157 = vdwg.mxu0
    %v4159 = vsel %vm484, %v3988, 0
    %v4162 = vsel %vm484, %v4069, 0
    %4164 = vmatprep.subr.mxu0 0.0
    %4165 = vmatpush1.xpose.msra.mxu0 0.0
    %4166 = vmatprep.subr.mxu0 0.0
    %4167 = vmatpush1.xpose.msra.mxu0 0.0
    %4168 = vmatprep.subr.mxu0 0.0
    %4169 = vmatpush1.xpose.msra.mxu0 0.0
    %4170 = vmatprep.subr.mxu0 0.0
    %4171 = vmatpush1.xpose.msra.mxu0 0.0
    %4172 = vmatprep.subr.mxu0 0.0
    %4173 = vmatpush1.xpose.msra.mxu0 0.0
    %4174 = vmatprep.subr.mxu0 0.0
    %4175 = vmatpush1.xpose.msra.mxu0 0.0
    %4176 = vmatprep.subr.mxu0 0.0
    %4177 = vmatpush1.xpose.msra.mxu0 0.0
    %4178 = vmatprep.subr.mxu0 0.0
    %4179 = vmatpush1.xpose.msra.mxu0 0.0
    %4180 = vmatprep.subr.mxu0 0.0
    %4181 = vmatpush1.xpose.msra.mxu0 0.0
    %4182 = vmatprep.subr.mxu0 0.0
    %4183 = vmatpush1.xpose.msra.mxu0 0.0
    %4184 = vmatprep.subr.mxu0 0.0
    %4185 = vmatpush1.xpose.msra.mxu0 0.0
    %4186 = vmatprep.subr.mxu0 0.0
    %4187 = vmatpush1.xpose.msra.mxu0 0.0
    %4188 = vmatprep.subr.mxu0 0.0
    %4189 = vmatpush1.xpose.msra.mxu0 0.0
    %4190 = vmatprep.subr.mxu0 0.0
    %4191 = vmatpush1.xpose.msra.mxu0 0.0
    %4192 = vmatprep.subr.mxu0 0.0
    %4193 = vmatpush1.xpose.msra.mxu0 0.0
    %4194 = vmatprep.subr.mxu0 0.0
    %4195 = vmatpush1.xpose.msra.mxu0 %v4162
    %4196 = vmatprep.subr.mxu0 0.0
    %4197 = vmatpush2.xpose.msra.mxu0 0.0
    %4198 = vmatprep.subr.mxu0 0.0
    %4199 = vmatpush2.xpose.msra.mxu0 0.0
    %4200 = vmatprep.subr.mxu0 0.0
    %4201 = vmatpush2.xpose.msra.mxu0 0.0
    %4202 = vmatprep.subr.mxu0 0.0
    %4203 = vmatpush2.xpose.msra.mxu0 0.0
    %4204 = vmatprep.subr.mxu0 0.0
    %4205 = vmatpush2.xpose.msra.mxu0 0.0
    %4206 = vmatprep.subr.mxu0 0.0
    %4207 = vmatpush2.xpose.msra.mxu0 0.0
    %4208 = vmatprep.subr.mxu0 0.0
    %4209 = vmatpush2.xpose.msra.mxu0 0.0
    %4210 = vmatprep.subr.mxu0 0.0
    %4211 = vmatpush2.xpose.msra.mxu0 0.0
    %4212 = vmatprep.subr.mxu0 0.0
    %4213 = vmatpush2.xpose.msra.mxu0 0.0
    %4214 = vmatprep.subr.mxu0 0.0
    %4215 = vmatpush2.xpose.msra.mxu0 0.0
    %4216 = vmatprep.subr.mxu0 0.0
    %4217 = vmatpush2.xpose.msra.mxu0 0.0
    %4218 = vmatprep.subr.mxu0 0.0
    %4219 = vmatpush2.xpose.msra.mxu0 0.0
    %4220 = vmatprep.subr.mxu0 0.0
    %4221 = vmatpush2.xpose.msra.mxu0 0.0
    %4222 = vmatprep.subr.mxu0 0.0
    %4223 = vmatpush2.xpose.msra.mxu0 0.0
    %4224 = vmatprep.subr.mxu0 0.0
    %4225 = vmatpush2.xpose.msra.mxu0 0.0
    %4226 = vmatprep.subr.mxu0 0.0
    %4227 = vmatpush2.xpose.msra.mxu0 0.0
    %4228 = vmatprep.mubr.f32.mxu0 0.0
    %4229 = vmatmul.mubr.f32.gmra.mxu0 %v4159
    %v4230 = vpop.f32.mrf.mxu0
    %v4231 = vadd.f32 0.0, %v4230
    %v4232 = vpop.f32.mrf.mxu0
    %4233 = vdwg.mxu0
    %v4235 = vsel %vm484, %v3993, 0
    %v4238 = vsel %vm484, %v4074, 0
    %4240 = vmatprep.subr.mxu0 0.0
    %4241 = vmatpush1.xpose.msra.mxu0 0.0
    %4242 = vmatprep.subr.mxu0 0.0
    %4243 = vmatpush1.xpose.msra.mxu0 0.0
    %4244 = vmatprep.subr.mxu0 0.0
    %4245 = vmatpush1.xpose.msra.mxu0 0.0
    %4246 = vmatprep.subr.mxu0 0.0
    %4247 = vmatpush1.xpose.msra.mxu0 0.0
    %4248 = vmatprep.subr.mxu0 0.0
    %4249 = vmatpush1.xpose.msra.mxu0 0.0
    %4250 = vmatprep.subr.mxu0 0.0
    %4251 = vmatpush1.xpose.msra.mxu0 0.0
    %4252 = vmatprep.subr.mxu0 0.0
    %4253 = vmatpush1.xpose.msra.mxu0 0.0
    %4254 = vmatprep.subr.mxu0 0.0
    %4255 = vmatpush1.xpose.msra.mxu0 0.0
    %4256 = vmatprep.subr.mxu0 0.0
    %4257 = vmatpush1.xpose.msra.mxu0 0.0
    %4258 = vmatprep.subr.mxu0 0.0
    %4259 = vmatpush1.xpose.msra.mxu0 0.0
    %4260 = vmatprep.subr.mxu0 0.0
    %4261 = vmatpush1.xpose.msra.mxu0 0.0
    %4262 = vmatprep.subr.mxu0 0.0
    %4263 = vmatpush1.xpose.msra.mxu0 0.0
    %4264 = vmatprep.subr.mxu0 0.0
    %4265 = vmatpush1.xpose.msra.mxu0 0.0
    %4266 = vmatprep.subr.mxu0 0.0
    %4267 = vmatpush1.xpose.msra.mxu0 0.0
    %4268 = vmatprep.subr.mxu0 0.0
    %4269 = vmatpush1.xpose.msra.mxu0 0.0
    %4270 = vmatprep.subr.mxu0 0.0
    %4271 = vmatpush1.xpose.msra.mxu0 %v4238
    %4272 = vmatprep.subr.mxu0 0.0
    %4273 = vmatpush2.xpose.msra.mxu0 0.0
    %4274 = vmatprep.subr.mxu0 0.0
    %4275 = vmatpush2.xpose.msra.mxu0 0.0
    %4276 = vmatprep.subr.mxu0 0.0
    %4277 = vmatpush2.xpose.msra.mxu0 0.0
    %4278 = vmatprep.subr.mxu0 0.0
    %4279 = vmatpush2.xpose.msra.mxu0 0.0
    %4280 = vmatprep.subr.mxu0 0.0
    %4281 = vmatpush2.xpose.msra.mxu0 0.0
    %4282 = vmatprep.subr.mxu0 0.0
    %4283 = vmatpush2.xpose.msra.mxu0 0.0
    %4284 = vmatprep.subr.mxu0 0.0
    %4285 = vmatpush2.xpose.msra.mxu0 0.0
    %4286 = vmatprep.subr.mxu0 0.0
    %4287 = vmatpush2.xpose.msra.mxu0 0.0
    %4288 = vmatprep.subr.mxu0 0.0
    %4289 = vmatpush2.xpose.msra.mxu0 0.0
    %4290 = vmatprep.subr.mxu0 0.0
    %4291 = vmatpush2.xpose.msra.mxu0 0.0
    %4292 = vmatprep.subr.mxu0 0.0
    %4293 = vmatpush2.xpose.msra.mxu0 0.0
    %4294 = vmatprep.subr.mxu0 0.0
    %4295 = vmatpush2.xpose.msra.mxu0 0.0
    %4296 = vmatprep.subr.mxu0 0.0
    %4297 = vmatpush2.xpose.msra.mxu0 0.0
    %4298 = vmatprep.subr.mxu0 0.0
    %4299 = vmatpush2.xpose.msra.mxu0 0.0
    %4300 = vmatprep.subr.mxu0 0.0
    %4301 = vmatpush2.xpose.msra.mxu0 0.0
    %4302 = vmatprep.subr.mxu0 0.0
    %4303 = vmatpush2.xpose.msra.mxu0 0.0
    %4304 = vmatprep.mubr.f32.mxu0 0.0
    %4305 = vmatmul.mubr.f32.gmra.mxu0 %v4235
    %v4306 = vpop.f32.mrf.mxu0
    %v4307 = vadd.f32 0.0, %v4306
    %v4308 = vpop.f32.mrf.mxu0
    %4309 = vdwg.mxu0
    %v4310 = vmul.f32 %v4231, 0.35355338
    %v4311 = vmul.f32 %v4307, 0.35355338
    %v4312 = vsel %vm484, %v4310, -inf
    %4313 = vmax.xlane.f32.xlu0 %v4312
    %v4314 = vpop.xlane.xlu0 %4313
    %v4315 = vsel %vm484, %v4311, -inf
    %4316 = vmax.xlane.f32.xlu0 %v4315
    %v4317 = vpop.xlane.xlu0 %4316
    %v4318 = vsub.f32 %v4310, %v4314
    %v4319 = vsub.f32 %v4311, %v4317
    %v4320 = vmul.f32 %v4318, 1.442695
    %v4321 = vpow.pop %v4320
    %v4322 = vmul.f32 %v4319, 1.442695
    %v4323 = vpow.pop %v4322
    %v4324 = vsel %vm484, %v4321, 0.0
    %4325 = vadd.xlane.f32.xlu0 %v4324
    %v4326 = vpop.xlane.xlu0 %4325
    %v4327 = vsel %vm484, %v4323, 0.0
    %4328 = vadd.xlane.f32.xlu0 %v4327
    %v4329 = vpop.xlane.xlu0 %4328
    %v4330 = vrcp.pop %v4326
    %v4331 = vrcp.pop %v4329
    %v4332 = vmul.f32 %v4321, %v4330
    %v4333 = vmul.f32 %v4323, %v4331
    %v4335 = vsel %vm484, %v4332, 0
    %4337 = vmatprep.subr.mxu0 0.0
    %4338 = vmatpush1.msra.mxu0 0.0
    %4339 = vmatprep.subr.mxu0 0.0
    %4340 = vmatpush1.msra.mxu0 0.0
    %4341 = vmatprep.subr.mxu0 0.0
    %4342 = vmatpush1.msra.mxu0 0.0
    %4343 = vmatprep.subr.mxu0 0.0
    %4344 = vmatpush1.msra.mxu0 0.0
    %4345 = vmatprep.subr.mxu0 0.0
    %4346 = vmatpush1.msra.mxu0 0.0
    %4347 = vmatprep.subr.mxu0 0.0
    %4348 = vmatpush1.msra.mxu0 0.0
    %4349 = vmatprep.subr.mxu0 0.0
    %4350 = vmatpush1.msra.mxu0 0.0
    %4351 = vmatprep.subr.mxu0 0.0
    %4352 = vmatpush1.msra.mxu0 0.0
    %4353 = vmatprep.subr.mxu0 0.0
    %4354 = vmatpush1.msra.mxu0 0.0
    %4355 = vmatprep.subr.mxu0 0.0
    %4356 = vmatpush1.msra.mxu0 0.0
    %4357 = vmatprep.subr.mxu0 0.0
    %4358 = vmatpush1.msra.mxu0 0.0
    %4359 = vmatprep.subr.mxu0 0.0
    %4360 = vmatpush1.msra.mxu0 0.0
    %4361 = vmatprep.subr.mxu0 0.0
    %4362 = vmatpush1.msra.mxu0 0.0
    %4363 = vmatprep.subr.mxu0 0.0
    %4364 = vmatpush1.msra.mxu0 0.0
    %4365 = vmatprep.subr.mxu0 0.0
    %4366 = vmatpush1.msra.mxu0 0.0
    %4367 = vmatprep.subr.mxu0 0.0
    %4368 = vmatpush1.msra.mxu0 %v4150
    %4369 = vmatprep.subr.mxu0 0.0
    %4370 = vmatpush2.msra.mxu0 0.0
    %4371 = vmatprep.subr.mxu0 0.0
    %4372 = vmatpush2.msra.mxu0 0.0
    %4373 = vmatprep.subr.mxu0 0.0
    %4374 = vmatpush2.msra.mxu0 0.0
    %4375 = vmatprep.subr.mxu0 0.0
    %4376 = vmatpush2.msra.mxu0 0.0
    %4377 = vmatprep.subr.mxu0 0.0
    %4378 = vmatpush2.msra.mxu0 0.0
    %4379 = vmatprep.subr.mxu0 0.0
    %4380 = vmatpush2.msra.mxu0 0.0
    %4381 = vmatprep.subr.mxu0 0.0
    %4382 = vmatpush2.msra.mxu0 0.0
    %4383 = vmatprep.subr.mxu0 0.0
    %4384 = vmatpush2.msra.mxu0 0.0
    %4385 = vmatprep.subr.mxu0 0.0
    %4386 = vmatpush2.msra.mxu0 0.0
    %4387 = vmatprep.subr.mxu0 0.0
    %4388 = vmatpush2.msra.mxu0 0.0
    %4389 = vmatprep.subr.mxu0 0.0
    %4390 = vmatpush2.msra.mxu0 0.0
    %4391 = vmatprep.subr.mxu0 0.0
    %4392 = vmatpush2.msra.mxu0 0.0
    %4393 = vmatprep.subr.mxu0 0.0
    %4394 = vmatpush2.msra.mxu0 0.0
    %4395 = vmatprep.subr.mxu0 0.0
    %4396 = vmatpush2.msra.mxu0 0.0
    %4397 = vmatprep.subr.mxu0 0.0
    %4398 = vmatpush2.msra.mxu0 0.0
    %4399 = vmatprep.subr.mxu0 0.0
    %4400 = vmatpush2.msra.mxu0 0.0
    %4401 = vmatprep.mubr.f32.mxu0 0.0
    %4402 = vmatmul.mubr.f32.gmra.mxu0 %v4335
    %v4403 = vpop.f32.mrf.mxu0
    %v4404 = vadd.f32 0.0, %v4403
    %v4405 = vpop.f32.mrf.mxu0
    %4406 = vdwg.mxu0
    %v4408 = vsel %vm484, %v4333, 0
    %4410 = vmatprep.subr.mxu0 0.0
    %4411 = vmatpush1.msra.mxu0 0.0
    %4412 = vmatprep.subr.mxu0 0.0
    %4413 = vmatpush1.msra.mxu0 0.0
    %4414 = vmatprep.subr.mxu0 0.0
    %4415 = vmatpush1.msra.mxu0 0.0
    %4416 = vmatprep.subr.mxu0 0.0
    %4417 = vmatpush1.msra.mxu0 0.0
    %4418 = vmatprep.subr.mxu0 0.0
    %4419 = vmatpush1.msra.mxu0 0.0
    %4420 = vmatprep.subr.mxu0 0.0
    %4421 = vmatpush1.msra.mxu0 0.0
    %4422 = vmatprep.subr.mxu0 0.0
    %4423 = vmatpush1.msra.mxu0 0.0
    %4424 = vmatprep.subr.mxu0 0.0
    %4425 = vmatpush1.msra.mxu0 0.0
    %4426 = vmatprep.subr.mxu0 0.0
    %4427 = vmatpush1.msra.mxu0 0.0
    %4428 = vmatprep.subr.mxu0 0.0
    %4429 = vmatpush1.msra.mxu0 0.0
    %4430 = vmatprep.subr.mxu0 0.0
    %4431 = vmatpush1.msra.mxu0 0.0
    %4432 = vmatprep.subr.mxu0 0.0
    %4433 = vmatpush1.msra.mxu0 0.0
    %4434 = vmatprep.subr.mxu0 0.0
    %4435 = vmatpush1.msra.mxu0 0.0
    %4436 = vmatprep.subr.mxu0 0.0
    %4437 = vmatpush1.msra.mxu0 0.0
    %4438 = vmatprep.subr.mxu0 0.0
    %4439 = vmatpush1.msra.mxu0 0.0
    %4440 = vmatprep.subr.mxu0 0.0
    %4441 = vmatpush1.msra.mxu0 %v4155
    %4442 = vmatprep.subr.mxu0 0.0
    %4443 = vmatpush2.msra.mxu0 0.0
    %4444 = vmatprep.subr.mxu0 0.0
    %4445 = vmatpush2.msra.mxu0 0.0
    %4446 = vmatprep.subr.mxu0 0.0
    %4447 = vmatpush2.msra.mxu0 0.0
    %4448 = vmatprep.subr.mxu0 0.0
    %4449 = vmatpush2.msra.mxu0 0.0
    %4450 = vmatprep.subr.mxu0 0.0
    %4451 = vmatpush2.msra.mxu0 0.0
    %4452 = vmatprep.subr.mxu0 0.0
    %4453 = vmatpush2.msra.mxu0 0.0
    %4454 = vmatprep.subr.mxu0 0.0
    %4455 = vmatpush2.msra.mxu0 0.0
    %4456 = vmatprep.subr.mxu0 0.0
    %4457 = vmatpush2.msra.mxu0 0.0
    %4458 = vmatprep.subr.mxu0 0.0
    %4459 = vmatpush2.msra.mxu0 0.0
    %4460 = vmatprep.subr.mxu0 0.0
    %4461 = vmatpush2.msra.mxu0 0.0
    %4462 = vmatprep.subr.mxu0 0.0
    %4463 = vmatpush2.msra.mxu0 0.0
    %4464 = vmatprep.subr.mxu0 0.0
    %4465 = vmatpush2.msra.mxu0 0.0
    %4466 = vmatprep.subr.mxu0 0.0
    %4467 = vmatpush2.msra.mxu0 0.0
    %4468 = vmatprep.subr.mxu0 0.0
    %4469 = vmatpush2.msra.mxu0 0.0
    %4470 = vmatprep.subr.mxu0 0.0
    %4471 = vmatpush2.msra.mxu0 0.0
    %4472 = vmatprep.subr.mxu0 0.0
    %4473 = vmatpush2.msra.mxu0 0.0
    %4474 = vmatprep.mubr.f32.mxu0 0.0
    %4475 = vmatmul.mubr.f32.gmra.mxu0 %v4408
    %v4476 = vpop.f32.mrf.mxu0
    %v4477 = vadd.f32 0.0, %v4476
    %v4478 = vpop.f32.mrf.mxu0
    %4479 = vdwg.mxu0
    %s4480 = scalar_lea.vmem %s5, 40
    %v4481 = vld [vmem:[%s4480] sm:$0xff]
    %v4483 = vsel %vm484, %v4404, 0
    %v4486 = vsel %vm484, %v4477, 0
    %4488 = vmatprep.subr.mxu0 0.0
    %4489 = vmatpush1.msra.mxu0 0.0
    %4490 = vmatprep.subr.mxu0 0.0
    %4491 = vmatpush1.msra.mxu0 0.0
    %4492 = vmatprep.subr.mxu0 0.0
    %4493 = vmatpush1.msra.mxu0 0.0
    %4494 = vmatprep.subr.mxu0 0.0
    %4495 = vmatpush1.msra.mxu0 0.0
    %4496 = vmatprep.subr.mxu0 0.0
    %4497 = vmatpush1.msra.mxu0 0.0
    %4498 = vmatprep.subr.mxu0 0.0
    %4499 = vmatpush1.msra.mxu0 0.0
    %4500 = vmatprep.subr.mxu0 0.0
    %4501 = vmatpush1.msra.mxu0 0.0
    %4502 = vmatprep.subr.mxu0 0.0
    %4503 = vmatpush1.msra.mxu0 0.0
    %4504 = vmatprep.subr.mxu0 0.0
    %4505 = vmatpush1.msra.mxu0 0.0
    %4506 = vmatprep.subr.mxu0 0.0
    %4507 = vmatpush1.msra.mxu0 0.0
    %4508 = vmatprep.subr.mxu0 0.0
    %4509 = vmatpush1.msra.mxu0 0.0
    %4510 = vmatprep.subr.mxu0 0.0
    %4511 = vmatpush1.msra.mxu0 0.0
    %4512 = vmatprep.subr.mxu0 0.0
    %4513 = vmatpush1.msra.mxu0 0.0
    %4514 = vmatprep.subr.mxu0 0.0
    %4515 = vmatpush1.msra.mxu0 0.0
    %4516 = vmatprep.subr.mxu0 0.0
    %4517 = vmatpush1.msra.mxu0 0.0
    %4518 = vmatprep.subr.mxu0 0.0
    %4519 = vmatpush1.msra.mxu0 %v4481
    %4520 = vmatprep.subr.mxu0 0.0
    %4521 = vmatpush2.msra.mxu0 0.0
    %4522 = vmatprep.subr.mxu0 0.0
    %4523 = vmatpush2.msra.mxu0 0.0
    %4524 = vmatprep.subr.mxu0 0.0
    %4525 = vmatpush2.msra.mxu0 0.0
    %4526 = vmatprep.subr.mxu0 0.0
    %4527 = vmatpush2.msra.mxu0 0.0
    %4528 = vmatprep.subr.mxu0 0.0
    %4529 = vmatpush2.msra.mxu0 0.0
    %4530 = vmatprep.subr.mxu0 0.0
    %4531 = vmatpush2.msra.mxu0 0.0
    %4532 = vmatprep.subr.mxu0 0.0
    %4533 = vmatpush2.msra.mxu0 0.0
    %4534 = vmatprep.subr.mxu0 0.0
    %4535 = vmatpush2.msra.mxu0 0.0
    %4536 = vmatprep.subr.mxu0 0.0
    %4537 = vmatpush2.msra.mxu0 0.0
    %4538 = vmatprep.subr.mxu0 0.0
    %4539 = vmatpush2.msra.mxu0 0.0
    %4540 = vmatprep.subr.mxu0 0.0
    %4541 = vmatpush2.msra.mxu0 0.0
    %4542 = vmatprep.subr.mxu0 0.0
    %4543 = vmatpush2.msra.mxu0 0.0
    %4544 = vmatprep.subr.mxu0 0.0
    %4545 = vmatpush2.msra.mxu0 0.0
    %4546 = vmatprep.subr.mxu0 0.0
    %4547 = vmatpush2.msra.mxu0 0.0
    %4548 = vmatprep.subr.mxu0 0.0
    %4549 = vmatpush2.msra.mxu0 0.0
    %4550 = vmatprep.subr.mxu0 0.0
    %4551 = vmatpush2.msra.mxu0 0.0
    %4552 = vmatprep.mubr.f32.mxu0 0.0
    %4553 = vmatmul.mubr.f32.gmra.mxu0 %v4483
    %v4554 = vpop.f32.mrf.mxu0
    %v4555 = vadd.f32 0.0, %v4554
    %v4556 = vpop.f32.mrf.mxu0
    %4557 = vmatprep.mubr.f32.mxu0 0.0
    %4558 = vmatmul.mubr.f32.gmra.mxu0 %v4486
    %v4559 = vpop.f32.mrf.mxu0
    %v4560 = vadd.f32 0.0, %v4559
    %v4561 = vpop.f32.mrf.mxu0
    %4562 = vdwg.mxu0
    %v4563 = vadd.f32 %v3892, %v4555
    %v4564 = vadd.f32 %v3893, %v4560
    %s4565 = scalar_lea.vmem %s3, 448
    %v4566 = vld [vmem:[%s4565] sm:$0xff]
    %v4567 = vld [vmem:[%s4565 + $0x8] sm:$0xff]
    %v4568 = vld [vmem:[%s4565 + $0x10] sm:$0xff]
    %v4569 = vld [vmem:[%s4565 + $0x18] sm:$0xff]
    %s4570 = scalar_lea.vmem %s3, 576
    %v4571 = vld [vmem:[%s4570] sm:$0xff]
    %v4572 = vld [vmem:[%s4570 + $0x8] sm:$0xff]
    %v4573 = vld [vmem:[%s4570 + $0x10] sm:$0xff]
    %v4574 = vld [vmem:[%s4570 + $0x18] sm:$0xff]
    %s4575 = scalar_lea.vmem %s3, 704
    %v4576 = vld [vmem:[%s4575] sm:$0xff]
    %v4577 = vld [vmem:[%s4575 + $0x8] sm:$0xff]
    %v4578 = vld [vmem:[%s4575 + $0x10] sm:$0xff]
    %v4579 = vld [vmem:[%s4575 + $0x18] sm:$0xff]
    %s4580 = scalar_lea.vmem %s4, 14
    %v4581 = vld [vmem:[%s4580] sm:$0x1]
    %s4582 = scalar_lea.vmem %s4, 18
    %v4583 = vld [vmem:[%s4582] sm:$0x1]
    %s4584 = scalar_lea.vmem %s4, 22
    %v4585 = vld [vmem:[%s4584] sm:$0x1]
    %v4587 = vlaneseq
    %v4588 = vshrl.u32 %v4587, 7
    %v4589 = vsub.s32 0, %v4588
    %v4590 = vrot.slane %v4581, %v4589
    %4592 = vmatprep.subr.mxu0 0.0
    %4593 = vmatpush1.msra.mxu0 0.0
    %4594 = vmatprep.subr.mxu0 0.0
    %4595 = vmatpush1.msra.mxu0 0.0
    %4596 = vmatprep.subr.mxu0 0.0
    %4597 = vmatpush1.msra.mxu0 0.0
    %4598 = vmatprep.subr.mxu0 0.0
    %4599 = vmatpush1.msra.mxu0 0.0
    %4600 = vmatprep.subr.mxu0 0.0
    %4601 = vmatpush1.msra.mxu0 0.0
    %4602 = vmatprep.subr.mxu0 0.0
    %4603 = vmatpush1.msra.mxu0 0.0
    %4604 = vmatprep.subr.mxu0 0.0
    %4605 = vmatpush1.msra.mxu0 0.0
    %4606 = vmatprep.subr.mxu0 0.0
    %4607 = vmatpush1.msra.mxu0 0.0
    %4608 = vmatprep.subr.mxu0 0.0
    %4609 = vmatpush1.msra.mxu0 0.0
    %4610 = vmatprep.subr.mxu0 0.0
    %4611 = vmatpush1.msra.mxu0 0.0
    %4612 = vmatprep.subr.mxu0 0.0
    %4613 = vmatpush1.msra.mxu0 0.0
    %4614 = vmatprep.subr.mxu0 0.0
    %4615 = vmatpush1.msra.mxu0 0.0
    %4616 = vmatprep.subr.mxu0 0.0
    %4617 = vmatpush1.msra.mxu0 %v4569
    %4618 = vmatprep.subr.mxu0 0.0
    %4619 = vmatpush1.msra.mxu0 %v4568
    %4620 = vmatprep.subr.mxu0 0.0
    %4621 = vmatpush1.msra.mxu0 %v4567
    %4622 = vmatprep.subr.mxu0 0.0
    %4623 = vmatpush1.msra.mxu0 %v4566
    %4624 = vmatprep.subr.mxu0 0.0
    %4625 = vmatpush2.msra.mxu0 0.0
    %4626 = vmatprep.subr.mxu0 0.0
    %4627 = vmatpush2.msra.mxu0 0.0
    %4628 = vmatprep.subr.mxu0 0.0
    %4629 = vmatpush2.msra.mxu0 0.0
    %4630 = vmatprep.subr.mxu0 0.0
    %4631 = vmatpush2.msra.mxu0 0.0
    %4632 = vmatprep.subr.mxu0 0.0
    %4633 = vmatpush2.msra.mxu0 0.0
    %4634 = vmatprep.subr.mxu0 0.0
    %4635 = vmatpush2.msra.mxu0 0.0
    %4636 = vmatprep.subr.mxu0 0.0
    %4637 = vmatpush2.msra.mxu0 0.0
    %4638 = vmatprep.subr.mxu0 0.0
    %4639 = vmatpush2.msra.mxu0 0.0
    %4640 = vmatprep.subr.mxu0 0.0
    %4641 = vmatpush2.msra.mxu0 0.0
    %4642 = vmatprep.subr.mxu0 0.0
    %4643 = vmatpush2.msra.mxu0 0.0
    %4644 = vmatprep.subr.mxu0 0.0
    %4645 = vmatpush2.msra.mxu0 0.0
    %4646 = vmatprep.subr.mxu0 0.0
    %4647 = vmatpush2.msra.mxu0 0.0
    %4648 = vmatprep.subr.mxu0 0.0
    %4649 = vmatpush2.msra.mxu0 0.0
    %4650 = vmatprep.subr.mxu0 0.0
    %4651 = vmatpush2.msra.mxu0 0.0
    %4652 = vmatprep.subr.mxu0 0.0
    %4653 = vmatpush2.msra.mxu0 0.0
    %4654 = vmatprep.subr.mxu0 0.0
    %4655 = vmatpush2.msra.mxu0 0.0
    %4656 = vmatprep.mubr.f32.mxu0 0.0
    %4657 = vmatmul.mubr.f32.gmra.mxu0 %v3245
    %v4658 = vpop.f32.mrf.mxu0
    %v4659 = vadd.f32 %v4590, %v4658
    %v4660 = vpop.f32.mrf.mxu0
    %4661 = vmatprep.mubr.f32.mxu0 0.0
    %4662 = vmatmul.mubr.f32.gmra.mxu0 %v3248
    %v4663 = vpop.f32.mrf.mxu0
    %v4664 = vadd.f32 %v4590, %v4663
    %v4665 = vpop.f32.mrf.mxu0
    %4666 = vdwg.mxu0
    %v4668 = vlaneseq
    %v4669 = vshrl.u32 %v4668, 7
    %v4670 = vsub.s32 0, %v4669
    %v4671 = vrot.slane %v4583, %v4670
    %4673 = vmatprep.subr.mxu0 0.0
    %4674 = vmatpush1.msra.mxu0 0.0
    %4675 = vmatprep.subr.mxu0 0.0
    %4676 = vmatpush1.msra.mxu0 0.0
    %4677 = vmatprep.subr.mxu0 0.0
    %4678 = vmatpush1.msra.mxu0 0.0
    %4679 = vmatprep.subr.mxu0 0.0
    %4680 = vmatpush1.msra.mxu0 0.0
    %4681 = vmatprep.subr.mxu0 0.0
    %4682 = vmatpush1.msra.mxu0 0.0
    %4683 = vmatprep.subr.mxu0 0.0
    %4684 = vmatpush1.msra.mxu0 0.0
    %4685 = vmatprep.subr.mxu0 0.0
    %4686 = vmatpush1.msra.mxu0 0.0
    %4687 = vmatprep.subr.mxu0 0.0
    %4688 = vmatpush1.msra.mxu0 0.0
    %4689 = vmatprep.subr.mxu0 0.0
    %4690 = vmatpush1.msra.mxu0 0.0
    %4691 = vmatprep.subr.mxu0 0.0
    %4692 = vmatpush1.msra.mxu0 0.0
    %4693 = vmatprep.subr.mxu0 0.0
    %4694 = vmatpush1.msra.mxu0 0.0
    %4695 = vmatprep.subr.mxu0 0.0
    %4696 = vmatpush1.msra.mxu0 0.0
    %4697 = vmatprep.subr.mxu0 0.0
    %4698 = vmatpush1.msra.mxu0 %v4574
    %4699 = vmatprep.subr.mxu0 0.0
    %4700 = vmatpush1.msra.mxu0 %v4573
    %4701 = vmatprep.subr.mxu0 0.0
    %4702 = vmatpush1.msra.mxu0 %v4572
    %4703 = vmatprep.subr.mxu0 0.0
    %4704 = vmatpush1.msra.mxu0 %v4571
    %4705 = vmatprep.subr.mxu0 0.0
    %4706 = vmatpush2.msra.mxu0 0.0
    %4707 = vmatprep.subr.mxu0 0.0
    %4708 = vmatpush2.msra.mxu0 0.0
    %4709 = vmatprep.subr.mxu0 0.0
    %4710 = vmatpush2.msra.mxu0 0.0
    %4711 = vmatprep.subr.mxu0 0.0
    %4712 = vmatpush2.msra.mxu0 0.0
    %4713 = vmatprep.subr.mxu0 0.0
    %4714 = vmatpush2.msra.mxu0 0.0
    %4715 = vmatprep.subr.mxu0 0.0
    %4716 = vmatpush2.msra.mxu0 0.0
    %4717 = vmatprep.subr.mxu0 0.0
    %4718 = vmatpush2.msra.mxu0 0.0
    %4719 = vmatprep.subr.mxu0 0.0
    %4720 = vmatpush2.msra.mxu0 0.0
    %4721 = vmatprep.subr.mxu0 0.0
    %4722 = vmatpush2.msra.mxu0 0.0
    %4723 = vmatprep.subr.mxu0 0.0
    %4724 = vmatpush2.msra.mxu0 0.0
    %4725 = vmatprep.subr.mxu0 0.0
    %4726 = vmatpush2.msra.mxu0 0.0
    %4727 = vmatprep.subr.mxu0 0.0
    %4728 = vmatpush2.msra.mxu0 0.0
    %4729 = vmatprep.subr.mxu0 0.0
    %4730 = vmatpush2.msra.mxu0 0.0
    %4731 = vmatprep.subr.mxu0 0.0
    %4732 = vmatpush2.msra.mxu0 0.0
    %4733 = vmatprep.subr.mxu0 0.0
    %4734 = vmatpush2.msra.mxu0 0.0
    %4735 = vmatprep.subr.mxu0 0.0
    %4736 = vmatpush2.msra.mxu0 0.0
    %4737 = vmatprep.mubr.f32.mxu0 0.0
    %4738 = vmatmul.mubr.f32.gmra.mxu0 %v3245
    %v4739 = vpop.f32.mrf.mxu0
    %v4740 = vadd.f32 %v4671, %v4739
    %v4741 = vpop.f32.mrf.mxu0
    %4742 = vmatprep.mubr.f32.mxu0 0.0
    %4743 = vmatmul.mubr.f32.gmra.mxu0 %v3248
    %v4744 = vpop.f32.mrf.mxu0
    %v4745 = vadd.f32 %v4671, %v4744
    %v4746 = vpop.f32.mrf.mxu0
    %4747 = vdwg.mxu0
    %v4749 = vlaneseq
    %v4750 = vshrl.u32 %v4749, 7
    %v4751 = vsub.s32 0, %v4750
    %v4752 = vrot.slane %v4585, %v4751
    %4754 = vmatprep.subr.mxu0 0.0
    %4755 = vmatpush1.msra.mxu0 0.0
    %4756 = vmatprep.subr.mxu0 0.0
    %4757 = vmatpush1.msra.mxu0 0.0
    %4758 = vmatprep.subr.mxu0 0.0
    %4759 = vmatpush1.msra.mxu0 0.0
    %4760 = vmatprep.subr.mxu0 0.0
    %4761 = vmatpush1.msra.mxu0 0.0
    %4762 = vmatprep.subr.mxu0 0.0
    %4763 = vmatpush1.msra.mxu0 0.0
    %4764 = vmatprep.subr.mxu0 0.0
    %4765 = vmatpush1.msra.mxu0 0.0
    %4766 = vmatprep.subr.mxu0 0.0
    %4767 = vmatpush1.msra.mxu0 0.0
    %4768 = vmatprep.subr.mxu0 0.0
    %4769 = vmatpush1.msra.mxu0 0.0
    %4770 = vmatprep.subr.mxu0 0.0
    %4771 = vmatpush1.msra.mxu0 0.0
    %4772 = vmatprep.subr.mxu0 0.0
    %4773 = vmatpush1.msra.mxu0 0.0
    %4774 = vmatprep.subr.mxu0 0.0
    %4775 = vmatpush1.msra.mxu0 0.0
    %4776 = vmatprep.subr.mxu0 0.0
    %4777 = vmatpush1.msra.mxu0 0.0
    %4778 = vmatprep.subr.mxu0 0.0
    %4779 = vmatpush1.msra.mxu0 %v4579
    %4780 = vmatprep.subr.mxu0 0.0
    %4781 = vmatpush1.msra.mxu0 %v4578
    %4782 = vmatprep.subr.mxu0 0.0
    %4783 = vmatpush1.msra.mxu0 %v4577
    %4784 = vmatprep.subr.mxu0 0.0
    %4785 = vmatpush1.msra.mxu0 %v4576
    %4786 = vmatprep.subr.mxu0 0.0
    %4787 = vmatpush2.msra.mxu0 0.0
    %4788 = vmatprep.subr.mxu0 0.0
    %4789 = vmatpush2.msra.mxu0 0.0
    %4790 = vmatprep.subr.mxu0 0.0
    %4791 = vmatpush2.msra.mxu0 0.0
    %4792 = vmatprep.subr.mxu0 0.0
    %4793 = vmatpush2.msra.mxu0 0.0
    %4794 = vmatprep.subr.mxu0 0.0
    %4795 = vmatpush2.msra.mxu0 0.0
    %4796 = vmatprep.subr.mxu0 0.0
    %4797 = vmatpush2.msra.mxu0 0.0
    %4798 = vmatprep.subr.mxu0 0.0
    %4799 = vmatpush2.msra.mxu0 0.0
    %4800 = vmatprep.subr.mxu0 0.0
    %4801 = vmatpush2.msra.mxu0 0.0
    %4802 = vmatprep.subr.mxu0 0.0
    %4803 = vmatpush2.msra.mxu0 0.0
    %4804 = vmatprep.subr.mxu0 0.0
    %4805 = vmatpush2.msra.mxu0 0.0
    %4806 = vmatprep.subr.mxu0 0.0
    %4807 = vmatpush2.msra.mxu0 0.0
    %4808 = vmatprep.subr.mxu0 0.0
    %4809 = vmatpush2.msra.mxu0 0.0
    %4810 = vmatprep.subr.mxu0 0.0
    %4811 = vmatpush2.msra.mxu0 0.0
    %4812 = vmatprep.subr.mxu0 0.0
    %4813 = vmatpush2.msra.mxu0 0.0
    %4814 = vmatprep.subr.mxu0 0.0
    %4815 = vmatpush2.msra.mxu0 0.0
    %4816 = vmatprep.subr.mxu0 0.0
    %4817 = vmatpush2.msra.mxu0 0.0
    %4818 = vmatprep.mubr.f32.mxu0 0.0
    %4819 = vmatmul.mubr.f32.gmra.mxu0 %v3245
    %v4820 = vpop.f32.mrf.mxu0
    %v4821 = vadd.f32 %v4752, %v4820
    %v4822 = vpop.f32.mrf.mxu0
    %4823 = vmatprep.mubr.f32.mxu0 0.0
    %4824 = vmatmul.mubr.f32.gmra.mxu0 %v3248
    %v4825 = vpop.f32.mrf.mxu0
    %v4826 = vadd.f32 %v4752, %v4825
    %v4827 = vpop.f32.mrf.mxu0
    %4828 = vdwg.mxu0
    %v4830 = vsel %vm484, %v4659, 0
    %v4833 = vsel %vm484, %v4740, 0
    %4835 = vmatprep.subr.mxu0 0.0
    %4836 = vmatpush1.xpose.msra.mxu0 0.0
    %4837 = vmatprep.subr.mxu0 0.0
    %4838 = vmatpush1.xpose.msra.mxu0 0.0
    %4839 = vmatprep.subr.mxu0 0.0
    %4840 = vmatpush1.xpose.msra.mxu0 0.0
    %4841 = vmatprep.subr.mxu0 0.0
    %4842 = vmatpush1.xpose.msra.mxu0 0.0
    %4843 = vmatprep.subr.mxu0 0.0
    %4844 = vmatpush1.xpose.msra.mxu0 0.0
    %4845 = vmatprep.subr.mxu0 0.0
    %4846 = vmatpush1.xpose.msra.mxu0 0.0
    %4847 = vmatprep.subr.mxu0 0.0
    %4848 = vmatpush1.xpose.msra.mxu0 0.0
    %4849 = vmatprep.subr.mxu0 0.0
    %4850 = vmatpush1.xpose.msra.mxu0 0.0
    %4851 = vmatprep.subr.mxu0 0.0
    %4852 = vmatpush1.xpose.msra.mxu0 0.0
    %4853 = vmatprep.subr.mxu0 0.0
    %4854 = vmatpush1.xpose.msra.mxu0 0.0
    %4855 = vmatprep.subr.mxu0 0.0
    %4856 = vmatpush1.xpose.msra.mxu0 0.0
    %4857 = vmatprep.subr.mxu0 0.0
    %4858 = vmatpush1.xpose.msra.mxu0 0.0
    %4859 = vmatprep.subr.mxu0 0.0
    %4860 = vmatpush1.xpose.msra.mxu0 0.0
    %4861 = vmatprep.subr.mxu0 0.0
    %4862 = vmatpush1.xpose.msra.mxu0 0.0
    %4863 = vmatprep.subr.mxu0 0.0
    %4864 = vmatpush1.xpose.msra.mxu0 0.0
    %4865 = vmatprep.subr.mxu0 0.0
    %4866 = vmatpush1.xpose.msra.mxu0 %v4833
    %4867 = vmatprep.subr.mxu0 0.0
    %4868 = vmatpush2.xpose.msra.mxu0 0.0
    %4869 = vmatprep.subr.mxu0 0.0
    %4870 = vmatpush2.xpose.msra.mxu0 0.0
    %4871 = vmatprep.subr.mxu0 0.0
    %4872 = vmatpush2.xpose.msra.mxu0 0.0
    %4873 = vmatprep.subr.mxu0 0.0
    %4874 = vmatpush2.xpose.msra.mxu0 0.0
    %4875 = vmatprep.subr.mxu0 0.0
    %4876 = vmatpush2.xpose.msra.mxu0 0.0
    %4877 = vmatprep.subr.mxu0 0.0
    %4878 = vmatpush2.xpose.msra.mxu0 0.0
    %4879 = vmatprep.subr.mxu0 0.0
    %4880 = vmatpush2.xpose.msra.mxu0 0.0
    %4881 = vmatprep.subr.mxu0 0.0
    %4882 = vmatpush2.xpose.msra.mxu0 0.0
    %4883 = vmatprep.subr.mxu0 0.0
    %4884 = vmatpush2.xpose.msra.mxu0 0.0
    %4885 = vmatprep.subr.mxu0 0.0
    %4886 = vmatpush2.xpose.msra.mxu0 0.0
    %4887 = vmatprep.subr.mxu0 0.0
    %4888 = vmatpush2.xpose.msra.mxu0 0.0
    %4889 = vmatprep.subr.mxu0 0.0
    %4890 = vmatpush2.xpose.msra.mxu0 0.0
    %4891 = vmatprep.subr.mxu0 0.0
    %4892 = vmatpush2.xpose.msra.mxu0 0.0
    %4893 = vmatprep.subr.mxu0 0.0
    %4894 = vmatpush2.xpose.msra.mxu0 0.0
    %4895 = vmatprep.subr.mxu0 0.0
    %4896 = vmatpush2.xpose.msra.mxu0 0.0
    %4897 = vmatprep.subr.mxu0 0.0
    %4898 = vmatpush2.xpose.msra.mxu0 0.0
    %4899 = vmatprep.mubr.f32.mxu0 0.0
    %4900 = vmatmul.mubr.f32.gmra.mxu0 %v4830
    %v4901 = vpop.f32.mrf.mxu0
    %v4902 = vadd.f32 0.0, %v4901
    %v4903 = vpop.f32.mrf.mxu0
    %4904 = vdwg.mxu0
    %v4906 = vsel %vm484, %v4664, 0
    %v4909 = vsel %vm484, %v4745, 0
    %4911 = vmatprep.subr.mxu0 0.0
    %4912 = vmatpush1.xpose.msra.mxu0 0.0
    %4913 = vmatprep.subr.mxu0 0.0
    %4914 = vmatpush1.xpose.msra.mxu0 0.0
    %4915 = vmatprep.subr.mxu0 0.0
    %4916 = vmatpush1.xpose.msra.mxu0 0.0
    %4917 = vmatprep.subr.mxu0 0.0
    %4918 = vmatpush1.xpose.msra.mxu0 0.0
    %4919 = vmatprep.subr.mxu0 0.0
    %4920 = vmatpush1.xpose.msra.mxu0 0.0
    %4921 = vmatprep.subr.mxu0 0.0
    %4922 = vmatpush1.xpose.msra.mxu0 0.0
    %4923 = vmatprep.subr.mxu0 0.0
    %4924 = vmatpush1.xpose.msra.mxu0 0.0
    %4925 = vmatprep.subr.mxu0 0.0
    %4926 = vmatpush1.xpose.msra.mxu0 0.0
    %4927 = vmatprep.subr.mxu0 0.0
    %4928 = vmatpush1.xpose.msra.mxu0 0.0
    %4929 = vmatprep.subr.mxu0 0.0
    %4930 = vmatpush1.xpose.msra.mxu0 0.0
    %4931 = vmatprep.subr.mxu0 0.0
    %4932 = vmatpush1.xpose.msra.mxu0 0.0
    %4933 = vmatprep.subr.mxu0 0.0
    %4934 = vmatpush1.xpose.msra.mxu0 0.0
    %4935 = vmatprep.subr.mxu0 0.0
    %4936 = vmatpush1.xpose.msra.mxu0 0.0
    %4937 = vmatprep.subr.mxu0 0.0
    %4938 = vmatpush1.xpose.msra.mxu0 0.0
    %4939 = vmatprep.subr.mxu0 0.0
    %4940 = vmatpush1.xpose.msra.mxu0 0.0
    %4941 = vmatprep.subr.mxu0 0.0
    %4942 = vmatpush1.xpose.msra.mxu0 %v4909
    %4943 = vmatprep.subr.mxu0 0.0
    %4944 = vmatpush2.xpose.msra.mxu0 0.0
    %4945 = vmatprep.subr.mxu0 0.0
    %4946 = vmatpush2.xpose.msra.mxu0 0.0
    %4947 = vmatprep.subr.mxu0 0.0
    %4948 = vmatpush2.xpose.msra.mxu0 0.0
    %4949 = vmatprep.subr.mxu0 0.0
    %4950 = vmatpush2.xpose.msra.mxu0 0.0
    %4951 = vmatprep.subr.mxu0 0.0
    %4952 = vmatpush2.xpose.msra.mxu0 0.0
    %4953 = vmatprep.subr.mxu0 0.0
    %4954 = vmatpush2.xpose.msra.mxu0 0.0
    %4955 = vmatprep.subr.mxu0 0.0
    %4956 = vmatpush2.xpose.msra.mxu0 0.0
    %4957 = vmatprep.subr.mxu0 0.0
    %4958 = vmatpush2.xpose.msra.mxu0 0.0
    %4959 = vmatprep.subr.mxu0 0.0
    %4960 = vmatpush2.xpose.msra.mxu0 0.0
    %4961 = vmatprep.subr.mxu0 0.0
    %4962 = vmatpush2.xpose.msra.mxu0 0.0
    %4963 = vmatprep.subr.mxu0 0.0
    %4964 = vmatpush2.xpose.msra.mxu0 0.0
    %4965 = vmatprep.subr.mxu0 0.0
    %4966 = vmatpush2.xpose.msra.mxu0 0.0
    %4967 = vmatprep.subr.mxu0 0.0
    %4968 = vmatpush2.xpose.msra.mxu0 0.0
    %4969 = vmatprep.subr.mxu0 0.0
    %4970 = vmatpush2.xpose.msra.mxu0 0.0
    %4971 = vmatprep.subr.mxu0 0.0
    %4972 = vmatpush2.xpose.msra.mxu0 0.0
    %4973 = vmatprep.subr.mxu0 0.0
    %4974 = vmatpush2.xpose.msra.mxu0 0.0
    %4975 = vmatprep.mubr.f32.mxu0 0.0
    %4976 = vmatmul.mubr.f32.gmra.mxu0 %v4906
    %v4977 = vpop.f32.mrf.mxu0
    %v4978 = vadd.f32 0.0, %v4977
    %v4979 = vpop.f32.mrf.mxu0
    %4980 = vdwg.mxu0
    %v4981 = vmul.f32 %v4902, 0.35355338
    %v4982 = vmul.f32 %v4978, 0.35355338
    %v4983 = vsel %vm484, %v4981, -inf
    %4984 = vmax.xlane.f32.xlu0 %v4983
    %v4985 = vpop.xlane.xlu0 %4984
    %v4986 = vsel %vm484, %v4982, -inf
    %4987 = vmax.xlane.f32.xlu0 %v4986
    %v4988 = vpop.xlane.xlu0 %4987
    %v4989 = vsub.f32 %v4981, %v4985
    %v4990 = vsub.f32 %v4982, %v4988
    %v4991 = vmul.f32 %v4989, 1.442695
    %v4992 = vpow.pop %v4991
    %v4993 = vmul.f32 %v4990, 1.442695
    %v4994 = vpow.pop %v4993
    %v4995 = vsel %vm484, %v4992, 0.0
    %4996 = vadd.xlane.f32.xlu0 %v4995
    %v4997 = vpop.xlane.xlu0 %4996
    %v4998 = vsel %vm484, %v4994, 0.0
    %4999 = vadd.xlane.f32.xlu0 %v4998
    %v5000 = vpop.xlane.xlu0 %4999
    %v5001 = vrcp.pop %v4997
    %v5002 = vrcp.pop %v5000
    %v5003 = vmul.f32 %v4992, %v5001
    %v5004 = vmul.f32 %v4994, %v5002
    %v5006 = vsel %vm484, %v5003, 0
    %5008 = vmatprep.subr.mxu0 0.0
    %5009 = vmatpush1.msra.mxu0 0.0
    %5010 = vmatprep.subr.mxu0 0.0
    %5011 = vmatpush1.msra.mxu0 0.0
    %5012 = vmatprep.subr.mxu0 0.0
    %5013 = vmatpush1.msra.mxu0 0.0
    %5014 = vmatprep.subr.mxu0 0.0
    %5015 = vmatpush1.msra.mxu0 0.0
    %5016 = vmatprep.subr.mxu0 0.0
    %5017 = vmatpush1.msra.mxu0 0.0
    %5018 = vmatprep.subr.mxu0 0.0
    %5019 = vmatpush1.msra.mxu0 0.0
    %5020 = vmatprep.subr.mxu0 0.0
    %5021 = vmatpush1.msra.mxu0 0.0
    %5022 = vmatprep.subr.mxu0 0.0
    %5023 = vmatpush1.msra.mxu0 0.0
    %5024 = vmatprep.subr.mxu0 0.0
    %5025 = vmatpush1.msra.mxu0 0.0
    %5026 = vmatprep.subr.mxu0 0.0
    %5027 = vmatpush1.msra.mxu0 0.0
    %5028 = vmatprep.subr.mxu0 0.0
    %5029 = vmatpush1.msra.mxu0 0.0
    %5030 = vmatprep.subr.mxu0 0.0
    %5031 = vmatpush1.msra.mxu0 0.0
    %5032 = vmatprep.subr.mxu0 0.0
    %5033 = vmatpush1.msra.mxu0 0.0
    %5034 = vmatprep.subr.mxu0 0.0
    %5035 = vmatpush1.msra.mxu0 0.0
    %5036 = vmatprep.subr.mxu0 0.0
    %5037 = vmatpush1.msra.mxu0 0.0
    %5038 = vmatprep.subr.mxu0 0.0
    %5039 = vmatpush1.msra.mxu0 %v4821
    %5040 = vmatprep.subr.mxu0 0.0
    %5041 = vmatpush2.msra.mxu0 0.0
    %5042 = vmatprep.subr.mxu0 0.0
    %5043 = vmatpush2.msra.mxu0 0.0
    %5044 = vmatprep.subr.mxu0 0.0
    %5045 = vmatpush2.msra.mxu0 0.0
    %5046 = vmatprep.subr.mxu0 0.0
    %5047 = vmatpush2.msra.mxu0 0.0
    %5048 = vmatprep.subr.mxu0 0.0
    %5049 = vmatpush2.msra.mxu0 0.0
    %5050 = vmatprep.subr.mxu0 0.0
    %5051 = vmatpush2.msra.mxu0 0.0
    %5052 = vmatprep.subr.mxu0 0.0
    %5053 = vmatpush2.msra.mxu0 0.0
    %5054 = vmatprep.subr.mxu0 0.0
    %5055 = vmatpush2.msra.mxu0 0.0
    %5056 = vmatprep.subr.mxu0 0.0
    %5057 = vmatpush2.msra.mxu0 0.0
    %5058 = vmatprep.subr.mxu0 0.0
    %5059 = vmatpush2.msra.mxu0 0.0
    %5060 = vmatprep.subr.mxu0 0.0
    %5061 = vmatpush2.msra.mxu0 0.0
    %5062 = vmatprep.subr.mxu0 0.0
    %5063 = vmatpush2.msra.mxu0 0.0
    %5064 = vmatprep.subr.mxu0 0.0
    %5065 = vmatpush2.msra.mxu0 0.0
    %5066 = vmatprep.subr.mxu0 0.0
    %5067 = vmatpush2.msra.mxu0 0.0
    %5068 = vmatprep.subr.mxu0 0.0
    %5069 = vmatpush2.msra.mxu0 0.0
    %5070 = vmatprep.subr.mxu0 0.0
    %5071 = vmatpush2.msra.mxu0 0.0
    %5072 = vmatprep.mubr.f32.mxu0 0.0
    %5073 = vmatmul.mubr.f32.gmra.mxu0 %v5006
    %v5074 = vpop.f32.mrf.mxu0
    %v5075 = vadd.f32 0.0, %v5074
    %v5076 = vpop.f32.mrf.mxu0
    %5077 = vdwg.mxu0
    %v5079 = vsel %vm484, %v5004, 0
    %5081 = vmatprep.subr.mxu0 0.0
    %5082 = vmatpush1.msra.mxu0 0.0
    %5083 = vmatprep.subr.mxu0 0.0
    %5084 = vmatpush1.msra.mxu0 0.0
    %5085 = vmatprep.subr.mxu0 0.0
    %5086 = vmatpush1.msra.mxu0 0.0
    %5087 = vmatprep.subr.mxu0 0.0
    %5088 = vmatpush1.msra.mxu0 0.0
    %5089 = vmatprep.subr.mxu0 0.0
    %5090 = vmatpush1.msra.mxu0 0.0
    %5091 = vmatprep.subr.mxu0 0.0
    %5092 = vmatpush1.msra.mxu0 0.0
    %5093 = vmatprep.subr.mxu0 0.0
    %5094 = vmatpush1.msra.mxu0 0.0
    %5095 = vmatprep.subr.mxu0 0.0
    %5096 = vmatpush1.msra.mxu0 0.0
    %5097 = vmatprep.subr.mxu0 0.0
    %5098 = vmatpush1.msra.mxu0 0.0
    %5099 = vmatprep.subr.mxu0 0.0
    %5100 = vmatpush1.msra.mxu0 0.0
    %5101 = vmatprep.subr.mxu0 0.0
    %5102 = vmatpush1.msra.mxu0 0.0
    %5103 = vmatprep.subr.mxu0 0.0
    %5104 = vmatpush1.msra.mxu0 0.0
    %5105 = vmatprep.subr.mxu0 0.0
    %5106 = vmatpush1.msra.mxu0 0.0
    %5107 = vmatprep.subr.mxu0 0.0
    %5108 = vmatpush1.msra.mxu0 0.0
    %5109 = vmatprep.subr.mxu0 0.0
    %5110 = vmatpush1.msra.mxu0 0.0
    %5111 = vmatprep.subr.mxu0 0.0
    %5112 = vmatpush1.msra.mxu0 %v4826
    %5113 = vmatprep.subr.mxu0 0.0
    %5114 = vmatpush2.msra.mxu0 0.0
    %5115 = vmatprep.subr.mxu0 0.0
    %5116 = vmatpush2.msra.mxu0 0.0
    %5117 = vmatprep.subr.mxu0 0.0
    %5118 = vmatpush2.msra.mxu0 0.0
    %5119 = vmatprep.subr.mxu0 0.0
    %5120 = vmatpush2.msra.mxu0 0.0
    %5121 = vmatprep.subr.mxu0 0.0
    %5122 = vmatpush2.msra.mxu0 0.0
    %5123 = vmatprep.subr.mxu0 0.0
    %5124 = vmatpush2.msra.mxu0 0.0
    %5125 = vmatprep.subr.mxu0 0.0
    %5126 = vmatpush2.msra.mxu0 0.0
    %5127 = vmatprep.subr.mxu0 0.0
    %5128 = vmatpush2.msra.mxu0 0.0
    %5129 = vmatprep.subr.mxu0 0.0
    %5130 = vmatpush2.msra.mxu0 0.0
    %5131 = vmatprep.subr.mxu0 0.0
    %5132 = vmatpush2.msra.mxu0 0.0
    %5133 = vmatprep.subr.mxu0 0.0
    %5134 = vmatpush2.msra.mxu0 0.0
    %5135 = vmatprep.subr.mxu0 0.0
    %5136 = vmatpush2.msra.mxu0 0.0
    %5137 = vmatprep.subr.mxu0 0.0
    %5138 = vmatpush2.msra.mxu0 0.0
    %5139 = vmatprep.subr.mxu0 0.0
    %5140 = vmatpush2.msra.mxu0 0.0
    %5141 = vmatprep.subr.mxu0 0.0
    %5142 = vmatpush2.msra.mxu0 0.0
    %5143 = vmatprep.subr.mxu0 0.0
    %5144 = vmatpush2.msra.mxu0 0.0
    %5145 = vmatprep.mubr.f32.mxu0 0.0
    %5146 = vmatmul.mubr.f32.gmra.mxu0 %v5079
    %v5147 = vpop.f32.mrf.mxu0
    %v5148 = vadd.f32 0.0, %v5147
    %v5149 = vpop.f32.mrf.mxu0
    %5150 = vdwg.mxu0
    %s5151 = scalar_lea.vmem %s5, 48
    %v5152 = vld [vmem:[%s5151] sm:$0xff]
    %v5154 = vsel %vm484, %v5075, 0
    %v5157 = vsel %vm484, %v5148, 0
    %5159 = vmatprep.subr.mxu0 0.0
    %5160 = vmatpush1.msra.mxu0 0.0
    %5161 = vmatprep.subr.mxu0 0.0
    %5162 = vmatpush1.msra.mxu0 0.0
    %5163 = vmatprep.subr.mxu0 0.0
    %5164 = vmatpush1.msra.mxu0 0.0
    %5165 = vmatprep.subr.mxu0 0.0
    %5166 = vmatpush1.msra.mxu0 0.0
    %5167 = vmatprep.subr.mxu0 0.0
    %5168 = vmatpush1.msra.mxu0 0.0
    %5169 = vmatprep.subr.mxu0 0.0
    %5170 = vmatpush1.msra.mxu0 0.0
    %5171 = vmatprep.subr.mxu0 0.0
    %5172 = vmatpush1.msra.mxu0 0.0
    %5173 = vmatprep.subr.mxu0 0.0
    %5174 = vmatpush1.msra.mxu0 0.0
    %5175 = vmatprep.subr.mxu0 0.0
    %5176 = vmatpush1.msra.mxu0 0.0
    %5177 = vmatprep.subr.mxu0 0.0
    %5178 = vmatpush1.msra.mxu0 0.0
    %5179 = vmatprep.subr.mxu0 0.0
    %5180 = vmatpush1.msra.mxu0 0.0
    %5181 = vmatprep.subr.mxu0 0.0
    %5182 = vmatpush1.msra.mxu0 0.0
    %5183 = vmatprep.subr.mxu0 0.0
    %5184 = vmatpush1.msra.mxu0 0.0
    %5185 = vmatprep.subr.mxu0 0.0
    %5186 = vmatpush1.msra.mxu0 0.0
    %5187 = vmatprep.subr.mxu0 0.0
    %5188 = vmatpush1.msra.mxu0 0.0
    %5189 = vmatprep.subr.mxu0 0.0
    %5190 = vmatpush1.msra.mxu0 %v5152
    %5191 = vmatprep.subr.mxu0 0.0
    %5192 = vmatpush2.msra.mxu0 0.0
    %5193 = vmatprep.subr.mxu0 0.0
    %5194 = vmatpush2.msra.mxu0 0.0
    %5195 = vmatprep.subr.mxu0 0.0
    %5196 = vmatpush2.msra.mxu0 0.0
    %5197 = vmatprep.subr.mxu0 0.0
    %5198 = vmatpush2.msra.mxu0 0.0
    %5199 = vmatprep.subr.mxu0 0.0
    %5200 = vmatpush2.msra.mxu0 0.0
    %5201 = vmatprep.subr.mxu0 0.0
    %5202 = vmatpush2.msra.mxu0 0.0
    %5203 = vmatprep.subr.mxu0 0.0
    %5204 = vmatpush2.msra.mxu0 0.0
    %5205 = vmatprep.subr.mxu0 0.0
    %5206 = vmatpush2.msra.mxu0 0.0
    %5207 = vmatprep.subr.mxu0 0.0
    %5208 = vmatpush2.msra.mxu0 0.0
    %5209 = vmatprep.subr.mxu0 0.0
    %5210 = vmatpush2.msra.mxu0 0.0
    %5211 = vmatprep.subr.mxu0 0.0
    %5212 = vmatpush2.msra.mxu0 0.0
    %5213 = vmatprep.subr.mxu0 0.0
    %5214 = vmatpush2.msra.mxu0 0.0
    %5215 = vmatprep.subr.mxu0 0.0
    %5216 = vmatpush2.msra.mxu0 0.0
    %5217 = vmatprep.subr.mxu0 0.0
    %5218 = vmatpush2.msra.mxu0 0.0
    %5219 = vmatprep.subr.mxu0 0.0
    %5220 = vmatpush2.msra.mxu0 0.0
    %5221 = vmatprep.subr.mxu0 0.0
    %5222 = vmatpush2.msra.mxu0 0.0
    %5223 = vmatprep.mubr.f32.mxu0 0.0
    %5224 = vmatmul.mubr.f32.gmra.mxu0 %v5154
    %v5225 = vpop.f32.mrf.mxu0
    %v5226 = vadd.f32 0.0, %v5225
    %v5227 = vpop.f32.mrf.mxu0
    %5228 = vmatprep.mubr.f32.mxu0 0.0
    %5229 = vmatmul.mubr.f32.gmra.mxu0 %v5157
    %v5230 = vpop.f32.mrf.mxu0
    %v5231 = vadd.f32 0.0, %v5230
    %v5232 = vpop.f32.mrf.mxu0
    %5233 = vdwg.mxu0
    %v5234 = vadd.f32 %v4563, %v5226
    %v5235 = vadd.f32 %v4564, %v5231
    %s5236 = scalar_lea.vmem %s3, 480
    %v5237 = vld [vmem:[%s5236] sm:$0xff]
    %v5238 = vld [vmem:[%s5236 + $0x8] sm:$0xff]
    %v5239 = vld [vmem:[%s5236 + $0x10] sm:$0xff]
    %v5240 = vld [vmem:[%s5236 + $0x18] sm:$0xff]
    %s5241 = scalar_lea.vmem %s3, 608
    %v5242 = vld [vmem:[%s5241] sm:$0xff]
    %v5243 = vld [vmem:[%s5241 + $0x8] sm:$0xff]
    %v5244 = vld [vmem:[%s5241 + $0x10] sm:$0xff]
    %v5245 = vld [vmem:[%s5241 + $0x18] sm:$0xff]
    %s5246 = scalar_lea.vmem %s3, 736
    %v5247 = vld [vmem:[%s5246] sm:$0xff]
    %v5248 = vld [vmem:[%s5246 + $0x8] sm:$0xff]
    %v5249 = vld [vmem:[%s5246 + $0x10] sm:$0xff]
    %v5250 = vld [vmem:[%s5246 + $0x18] sm:$0xff]
    %s5251 = scalar_lea.vmem %s4, 15
    %v5252 = vld [vmem:[%s5251] sm:$0x1]
    %s5253 = scalar_lea.vmem %s4, 19
    %v5254 = vld [vmem:[%s5253] sm:$0x1]
    %s5255 = scalar_lea.vmem %s4, 23
    %v5256 = vld [vmem:[%s5255] sm:$0x1]
    %v5258 = vlaneseq
    %v5259 = vshrl.u32 %v5258, 7
    %v5260 = vsub.s32 0, %v5259
    %v5261 = vrot.slane %v5252, %v5260
    %5263 = vmatprep.subr.mxu0 0.0
    %5264 = vmatpush1.msra.mxu0 0.0
    %5265 = vmatprep.subr.mxu0 0.0
    %5266 = vmatpush1.msra.mxu0 0.0
    %5267 = vmatprep.subr.mxu0 0.0
    %5268 = vmatpush1.msra.mxu0 0.0
    %5269 = vmatprep.subr.mxu0 0.0
    %5270 = vmatpush1.msra.mxu0 0.0
    %5271 = vmatprep.subr.mxu0 0.0
    %5272 = vmatpush1.msra.mxu0 0.0
    %5273 = vmatprep.subr.mxu0 0.0
    %5274 = vmatpush1.msra.mxu0 0.0
    %5275 = vmatprep.subr.mxu0 0.0
    %5276 = vmatpush1.msra.mxu0 0.0
    %5277 = vmatprep.subr.mxu0 0.0
    %5278 = vmatpush1.msra.mxu0 0.0
    %5279 = vmatprep.subr.mxu0 0.0
    %5280 = vmatpush1.msra.mxu0 0.0
    %5281 = vmatprep.subr.mxu0 0.0
    %5282 = vmatpush1.msra.mxu0 0.0
    %5283 = vmatprep.subr.mxu0 0.0
    %5284 = vmatpush1.msra.mxu0 0.0
    %5285 = vmatprep.subr.mxu0 0.0
    %5286 = vmatpush1.msra.mxu0 0.0
    %5287 = vmatprep.subr.mxu0 0.0
    %5288 = vmatpush1.msra.mxu0 %v5240
    %5289 = vmatprep.subr.mxu0 0.0
    %5290 = vmatpush1.msra.mxu0 %v5239
    %5291 = vmatprep.subr.mxu0 0.0
    %5292 = vmatpush1.msra.mxu0 %v5238
    %5293 = vmatprep.subr.mxu0 0.0
    %5294 = vmatpush1.msra.mxu0 %v5237
    %5295 = vmatprep.subr.mxu0 0.0
    %5296 = vmatpush2.msra.mxu0 0.0
    %5297 = vmatprep.subr.mxu0 0.0
    %5298 = vmatpush2.msra.mxu0 0.0
    %5299 = vmatprep.subr.mxu0 0.0
    %5300 = vmatpush2.msra.mxu0 0.0
    %5301 = vmatprep.subr.mxu0 0.0
    %5302 = vmatpush2.msra.mxu0 0.0
    %5303 = vmatprep.subr.mxu0 0.0
    %5304 = vmatpush2.msra.mxu0 0.0
    %5305 = vmatprep.subr.mxu0 0.0
    %5306 = vmatpush2.msra.mxu0 0.0
    %5307 = vmatprep.subr.mxu0 0.0
    %5308 = vmatpush2.msra.mxu0 0.0
    %5309 = vmatprep.subr.mxu0 0.0
    %5310 = vmatpush2.msra.mxu0 0.0
    %5311 = vmatprep.subr.mxu0 0.0
    %5312 = vmatpush2.msra.mxu0 0.0
    %5313 = vmatprep.subr.mxu0 0.0
    %5314 = vmatpush2.msra.mxu0 0.0
    %5315 = vmatprep.subr.mxu0 0.0
    %5316 = vmatpush2.msra.mxu0 0.0
    %5317 = vmatprep.subr.mxu0 0.0
    %5318 = vmatpush2.msra.mxu0 0.0
    %5319 = vmatprep.subr.mxu0 0.0
    %5320 = vmatpush2.msra.mxu0 0.0
    %5321 = vmatprep.subr.mxu0 0.0
    %5322 = vmatpush2.msra.mxu0 0.0
    %5323 = vmatprep.subr.mxu0 0.0
    %5324 = vmatpush2.msra.mxu0 0.0
    %5325 = vmatprep.subr.mxu0 0.0
    %5326 = vmatpush2.msra.mxu0 0.0
    %5327 = vmatprep.mubr.f32.mxu0 0.0
    %5328 = vmatmul.mubr.f32.gmra.mxu0 %v3245
    %v5329 = vpop.f32.mrf.mxu0
    %v5330 = vadd.f32 %v5261, %v5329
    %v5331 = vpop.f32.mrf.mxu0
    %5332 = vmatprep.mubr.f32.mxu0 0.0
    %5333 = vmatmul.mubr.f32.gmra.mxu0 %v3248
    %v5334 = vpop.f32.mrf.mxu0
    %v5335 = vadd.f32 %v5261, %v5334
    %v5336 = vpop.f32.mrf.mxu0
    %5337 = vdwg.mxu0
    %v5339 = vlaneseq
    %v5340 = vshrl.u32 %v5339, 7
    %v5341 = vsub.s32 0, %v5340
    %v5342 = vrot.slane %v5254, %v5341
    %5344 = vmatprep.subr.mxu0 0.0
    %5345 = vmatpush1.msra.mxu0 0.0
    %5346 = vmatprep.subr.mxu0 0.0
    %5347 = vmatpush1.msra.mxu0 0.0
    %5348 = vmatprep.subr.mxu0 0.0
    %5349 = vmatpush1.msra.mxu0 0.0
    %5350 = vmatprep.subr.mxu0 0.0
    %5351 = vmatpush1.msra.mxu0 0.0
    %5352 = vmatprep.subr.mxu0 0.0
    %5353 = vmatpush1.msra.mxu0 0.0
    %5354 = vmatprep.subr.mxu0 0.0
    %5355 = vmatpush1.msra.mxu0 0.0
    %5356 = vmatprep.subr.mxu0 0.0
    %5357 = vmatpush1.msra.mxu0 0.0
    %5358 = vmatprep.subr.mxu0 0.0
    %5359 = vmatpush1.msra.mxu0 0.0
    %5360 = vmatprep.subr.mxu0 0.0
    %5361 = vmatpush1.msra.mxu0 0.0
    %5362 = vmatprep.subr.mxu0 0.0
    %5363 = vmatpush1.msra.mxu0 0.0
    %5364 = vmatprep.subr.mxu0 0.0
    %5365 = vmatpush1.msra.mxu0 0.0
    %5366 = vmatprep.subr.mxu0 0.0
    %5367 = vmatpush1.msra.mxu0 0.0
    %5368 = vmatprep.subr.mxu0 0.0
    %5369 = vmatpush1.msra.mxu0 %v5245
    %5370 = vmatprep.subr.mxu0 0.0
    %5371 = vmatpush1.msra.mxu0 %v5244
    %5372 = vmatprep.subr.mxu0 0.0
    %5373 = vmatpush1.msra.mxu0 %v5243
    %5374 = vmatprep.subr.mxu0 0.0
    %5375 = vmatpush1.msra.mxu0 %v5242
    %5376 = vmatprep.subr.mxu0 0.0
    %5377 = vmatpush2.msra.mxu0 0.0
    %5378 = vmatprep.subr.mxu0 0.0
    %5379 = vmatpush2.msra.mxu0 0.0
    %5380 = vmatprep.subr.mxu0 0.0
    %5381 = vmatpush2.msra.mxu0 0.0
    %5382 = vmatprep.subr.mxu0 0.0
    %5383 = vmatpush2.msra.mxu0 0.0
    %5384 = vmatprep.subr.mxu0 0.0
    %5385 = vmatpush2.msra.mxu0 0.0
    %5386 = vmatprep.subr.mxu0 0.0
    %5387 = vmatpush2.msra.mxu0 0.0
    %5388 = vmatprep.subr.mxu0 0.0
    %5389 = vmatpush2.msra.mxu0 0.0
    %5390 = vmatprep.subr.mxu0 0.0
    %5391 = vmatpush2.msra.mxu0 0.0
    %5392 = vmatprep.subr.mxu0 0.0
    %5393 = vmatpush2.msra.mxu0 0.0
    %5394 = vmatprep.subr.mxu0 0.0
    %5395 = vmatpush2.msra.mxu0 0.0
    %5396 = vmatprep.subr.mxu0 0.0
    %5397 = vmatpush2.msra.mxu0 0.0
    %5398 = vmatprep.subr.mxu0 0.0
    %5399 = vmatpush2.msra.mxu0 0.0
    %5400 = vmatprep.subr.mxu0 0.0
    %5401 = vmatpush2.msra.mxu0 0.0
    %5402 = vmatprep.subr.mxu0 0.0
    %5403 = vmatpush2.msra.mxu0 0.0
    %5404 = vmatprep.subr.mxu0 0.0
    %5405 = vmatpush2.msra.mxu0 0.0
    %5406 = vmatprep.subr.mxu0 0.0
    %5407 = vmatpush2.msra.mxu0 0.0
    %5408 = vmatprep.mubr.f32.mxu0 0.0
    %5409 = vmatmul.mubr.f32.gmra.mxu0 %v3245
    %v5410 = vpop.f32.mrf.mxu0
    %v5411 = vadd.f32 %v5342, %v5410
    %v5412 = vpop.f32.mrf.mxu0
    %5413 = vmatprep.mubr.f32.mxu0 0.0
    %5414 = vmatmul.mubr.f32.gmra.mxu0 %v3248
    %v5415 = vpop.f32.mrf.mxu0
    %v5416 = vadd.f32 %v5342, %v5415
    %v5417 = vpop.f32.mrf.mxu0
    %5418 = vdwg.mxu0
    %v5420 = vlaneseq
    %v5421 = vshrl.u32 %v5420, 7
    %v5422 = vsub.s32 0, %v5421
    %v5423 = vrot.slane %v5256, %v5422
    %5425 = vmatprep.subr.mxu0 0.0
    %5426 = vmatpush1.msra.mxu0 0.0
    %5427 = vmatprep.subr.mxu0 0.0
    %5428 = vmatpush1.msra.mxu0 0.0
    %5429 = vmatprep.subr.mxu0 0.0
    %5430 = vmatpush1.msra.mxu0 0.0
    %5431 = vmatprep.subr.mxu0 0.0
    %5432 = vmatpush1.msra.mxu0 0.0
    %5433 = vmatprep.subr.mxu0 0.0
    %5434 = vmatpush1.msra.mxu0 0.0
    %5435 = vmatprep.subr.mxu0 0.0
    %5436 = vmatpush1.msra.mxu0 0.0
    %5437 = vmatprep.subr.mxu0 0.0
    %5438 = vmatpush1.msra.mxu0 0.0
    %5439 = vmatprep.subr.mxu0 0.0
    %5440 = vmatpush1.msra.mxu0 0.0
    %5441 = vmatprep.subr.mxu0 0.0
    %5442 = vmatpush1.msra.mxu0 0.0
    %5443 = vmatprep.subr.mxu0 0.0
    %5444 = vmatpush1.msra.mxu0 0.0
    %5445 = vmatprep.subr.mxu0 0.0
    %5446 = vmatpush1.msra.mxu0 0.0
    %5447 = vmatprep.subr.mxu0 0.0
    %5448 = vmatpush1.msra.mxu0 0.0
    %5449 = vmatprep.subr.mxu0 0.0
    %5450 = vmatpush1.msra.mxu0 %v5250
    %5451 = vmatprep.subr.mxu0 0.0
    %5452 = vmatpush1.msra.mxu0 %v5249
    %5453 = vmatprep.subr.mxu0 0.0
    %5454 = vmatpush1.msra.mxu0 %v5248
    %5455 = vmatprep.subr.mxu0 0.0
    %5456 = vmatpush1.msra.mxu0 %v5247
    %5457 = vmatprep.subr.mxu0 0.0
    %5458 = vmatpush2.msra.mxu0 0.0
    %5459 = vmatprep.subr.mxu0 0.0
    %5460 = vmatpush2.msra.mxu0 0.0
    %5461 = vmatprep.subr.mxu0 0.0
    %5462 = vmatpush2.msra.mxu0 0.0
    %5463 = vmatprep.subr.mxu0 0.0
    %5464 = vmatpush2.msra.mxu0 0.0
    %5465 = vmatprep.subr.mxu0 0.0
    %5466 = vmatpush2.msra.mxu0 0.0
    %5467 = vmatprep.subr.mxu0 0.0
    %5468 = vmatpush2.msra.mxu0 0.0
    %5469 = vmatprep.subr.mxu0 0.0
    %5470 = vmatpush2.msra.mxu0 0.0
    %5471 = vmatprep.subr.mxu0 0.0
    %5472 = vmatpush2.msra.mxu0 0.0
    %5473 = vmatprep.subr.mxu0 0.0
    %5474 = vmatpush2.msra.mxu0 0.0
    %5475 = vmatprep.subr.mxu0 0.0
    %5476 = vmatpush2.msra.mxu0 0.0
    %5477 = vmatprep.subr.mxu0 0.0
    %5478 = vmatpush2.msra.mxu0 0.0
    %5479 = vmatprep.subr.mxu0 0.0
    %5480 = vmatpush2.msra.mxu0 0.0
    %5481 = vmatprep.subr.mxu0 0.0
    %5482 = vmatpush2.msra.mxu0 0.0
    %5483 = vmatprep.subr.mxu0 0.0
    %5484 = vmatpush2.msra.mxu0 0.0
    %5485 = vmatprep.subr.mxu0 0.0
    %5486 = vmatpush2.msra.mxu0 0.0
    %5487 = vmatprep.subr.mxu0 0.0
    %5488 = vmatpush2.msra.mxu0 0.0
    %5489 = vmatprep.mubr.f32.mxu0 0.0
    %5490 = vmatmul.mubr.f32.gmra.mxu0 %v3245
    %v5491 = vpop.f32.mrf.mxu0
    %v5492 = vadd.f32 %v5423, %v5491
    %v5493 = vpop.f32.mrf.mxu0
    %5494 = vmatprep.mubr.f32.mxu0 0.0
    %5495 = vmatmul.mubr.f32.gmra.mxu0 %v3248
    %v5496 = vpop.f32.mrf.mxu0
    %v5497 = vadd.f32 %v5423, %v5496
    %v5498 = vpop.f32.mrf.mxu0
    %5499 = vdwg.mxu0
    %v5501 = vsel %vm484, %v5330, 0
    %v5504 = vsel %vm484, %v5411, 0
    %5506 = vmatprep.subr.mxu0 0.0
    %5507 = vmatpush1.xpose.msra.mxu0 0.0
    %5508 = vmatprep.subr.mxu0 0.0
    %5509 = vmatpush1.xpose.msra.mxu0 0.0
    %5510 = vmatprep.subr.mxu0 0.0
    %5511 = vmatpush1.xpose.msra.mxu0 0.0
    %5512 = vmatprep.subr.mxu0 0.0
    %5513 = vmatpush1.xpose.msra.mxu0 0.0
    %5514 = vmatprep.subr.mxu0 0.0
    %5515 = vmatpush1.xpose.msra.mxu0 0.0
    %5516 = vmatprep.subr.mxu0 0.0
    %5517 = vmatpush1.xpose.msra.mxu0 0.0
    %5518 = vmatprep.subr.mxu0 0.0
    %5519 = vmatpush1.xpose.msra.mxu0 0.0
    %5520 = vmatprep.subr.mxu0 0.0
    %5521 = vmatpush1.xpose.msra.mxu0 0.0
    %5522 = vmatprep.subr.mxu0 0.0
    %5523 = vmatpush1.xpose.msra.mxu0 0.0
    %5524 = vmatprep.subr.mxu0 0.0
    %5525 = vmatpush1.xpose.msra.mxu0 0.0
    %5526 = vmatprep.subr.mxu0 0.0
    %5527 = vmatpush1.xpose.msra.mxu0 0.0
    %5528 = vmatprep.subr.mxu0 0.0
    %5529 = vmatpush1.xpose.msra.mxu0 0.0
    %5530 = vmatprep.subr.mxu0 0.0
    %5531 = vmatpush1.xpose.msra.mxu0 0.0
    %5532 = vmatprep.subr.mxu0 0.0
    %5533 = vmatpush1.xpose.msra.mxu0 0.0
    %5534 = vmatprep.subr.mxu0 0.0
    %5535 = vmatpush1.xpose.msra.mxu0 0.0
    %5536 = vmatprep.subr.mxu0 0.0
    %5537 = vmatpush1.xpose.msra.mxu0 %v5504
    %5538 = vmatprep.subr.mxu0 0.0
    %5539 = vmatpush2.xpose.msra.mxu0 0.0
    %5540 = vmatprep.subr.mxu0 0.0
    %5541 = vmatpush2.xpose.msra.mxu0 0.0
    %5542 = vmatprep.subr.mxu0 0.0
    %5543 = vmatpush2.xpose.msra.mxu0 0.0
    %5544 = vmatprep.subr.mxu0 0.0
    %5545 = vmatpush2.xpose.msra.mxu0 0.0
    %5546 = vmatprep.subr.mxu0 0.0
    %5547 = vmatpush2.xpose.msra.mxu0 0.0
    %5548 = vmatprep.subr.mxu0 0.0
    %5549 = vmatpush2.xpose.msra.mxu0 0.0
    %5550 = vmatprep.subr.mxu0 0.0
    %5551 = vmatpush2.xpose.msra.mxu0 0.0
    %5552 = vmatprep.subr.mxu0 0.0
    %5553 = vmatpush2.xpose.msra.mxu0 0.0
    %5554 = vmatprep.subr.mxu0 0.0
    %5555 = vmatpush2.xpose.msra.mxu0 0.0
    %5556 = vmatprep.subr.mxu0 0.0
    %5557 = vmatpush2.xpose.msra.mxu0 0.0
    %5558 = vmatprep.subr.mxu0 0.0
    %5559 = vmatpush2.xpose.msra.mxu0 0.0
    %5560 = vmatprep.subr.mxu0 0.0
    %5561 = vmatpush2.xpose.msra.mxu0 0.0
    %5562 = vmatprep.subr.mxu0 0.0
    %5563 = vmatpush2.xpose.msra.mxu0 0.0
    %5564 = vmatprep.subr.mxu0 0.0
    %5565 = vmatpush2.xpose.msra.mxu0 0.0
    %5566 = vmatprep.subr.mxu0 0.0
    %5567 = vmatpush2.xpose.msra.mxu0 0.0
    %5568 = vmatprep.subr.mxu0 0.0
    %5569 = vmatpush2.xpose.msra.mxu0 0.0
    %5570 = vmatprep.mubr.f32.mxu0 0.0
    %5571 = vmatmul.mubr.f32.gmra.mxu0 %v5501
    %v5572 = vpop.f32.mrf.mxu0
    %v5573 = vadd.f32 0.0, %v5572
    %v5574 = vpop.f32.mrf.mxu0
    %5575 = vdwg.mxu0
    %v5577 = vsel %vm484, %v5335, 0
    %v5580 = vsel %vm484, %v5416, 0
    %5582 = vmatprep.subr.mxu0 0.0
    %5583 = vmatpush1.xpose.msra.mxu0 0.0
    %5584 = vmatprep.subr.mxu0 0.0
    %5585 = vmatpush1.xpose.msra.mxu0 0.0
    %5586 = vmatprep.subr.mxu0 0.0
    %5587 = vmatpush1.xpose.msra.mxu0 0.0
    %5588 = vmatprep.subr.mxu0 0.0
    %5589 = vmatpush1.xpose.msra.mxu0 0.0
    %5590 = vmatprep.subr.mxu0 0.0
    %5591 = vmatpush1.xpose.msra.mxu0 0.0
    %5592 = vmatprep.subr.mxu0 0.0
    %5593 = vmatpush1.xpose.msra.mxu0 0.0
    %5594 = vmatprep.subr.mxu0 0.0
    %5595 = vmatpush1.xpose.msra.mxu0 0.0
    %5596 = vmatprep.subr.mxu0 0.0
    %5597 = vmatpush1.xpose.msra.mxu0 0.0
    %5598 = vmatprep.subr.mxu0 0.0
    %5599 = vmatpush1.xpose.msra.mxu0 0.0
    %5600 = vmatprep.subr.mxu0 0.0
    %5601 = vmatpush1.xpose.msra.mxu0 0.0
    %5602 = vmatprep.subr.mxu0 0.0
    %5603 = vmatpush1.xpose.msra.mxu0 0.0
    %5604 = vmatprep.subr.mxu0 0.0
    %5605 = vmatpush1.xpose.msra.mxu0 0.0
    %5606 = vmatprep.subr.mxu0 0.0
    %5607 = vmatpush1.xpose.msra.mxu0 0.0
    %5608 = vmatprep.subr.mxu0 0.0
    %5609 = vmatpush1.xpose.msra.mxu0 0.0
    %5610 = vmatprep.subr.mxu0 0.0
    %5611 = vmatpush1.xpose.msra.mxu0 0.0
    %5612 = vmatprep.subr.mxu0 0.0
    %5613 = vmatpush1.xpose.msra.mxu0 %v5580
    %5614 = vmatprep.subr.mxu0 0.0
    %5615 = vmatpush2.xpose.msra.mxu0 0.0
    %5616 = vmatprep.subr.mxu0 0.0
    %5617 = vmatpush2.xpose.msra.mxu0 0.0
    %5618 = vmatprep.subr.mxu0 0.0
    %5619 = vmatpush2.xpose.msra.mxu0 0.0
    %5620 = vmatprep.subr.mxu0 0.0
    %5621 = vmatpush2.xpose.msra.mxu0 0.0
    %5622 = vmatprep.subr.mxu0 0.0
    %5623 = vmatpush2.xpose.msra.mxu0 0.0
    %5624 = vmatprep.subr.mxu0 0.0
    %5625 = vmatpush2.xpose.msra.mxu0 0.0
    %5626 = vmatprep.subr.mxu0 0.0
    %5627 = vmatpush2.xpose.msra.mxu0 0.0
    %5628 = vmatprep.subr.mxu0 0.0
    %5629 = vmatpush2.xpose.msra.mxu0 0.0
    %5630 = vmatprep.subr.mxu0 0.0
    %5631 = vmatpush2.xpose.msra.mxu0 0.0
    %5632 = vmatprep.subr.mxu0 0.0
    %5633 = vmatpush2.xpose.msra.mxu0 0.0
    %5634 = vmatprep.subr.mxu0 0.0
    %5635 = vmatpush2.xpose.msra.mxu0 0.0
    %5636 = vmatprep.subr.mxu0 0.0
    %5637 = vmatpush2.xpose.msra.mxu0 0.0
    %5638 = vmatprep.subr.mxu0 0.0
    %5639 = vmatpush2.xpose.msra.mxu0 0.0
    %5640 = vmatprep.subr.mxu0 0.0
    %5641 = vmatpush2.xpose.msra.mxu0 0.0
    %5642 = vmatprep.subr.mxu0 0.0
    %5643 = vmatpush2.xpose.msra.mxu0 0.0
    %5644 = vmatprep.subr.mxu0 0.0
    %5645 = vmatpush2.xpose.msra.mxu0 0.0
    %5646 = vmatprep.mubr.f32.mxu0 0.0
    %5647 = vmatmul.mubr.f32.gmra.mxu0 %v5577
    %v5648 = vpop.f32.mrf.mxu0
    %v5649 = vadd.f32 0.0, %v5648
    %v5650 = vpop.f32.mrf.mxu0
    %5651 = vdwg.mxu0
    %v5652 = vmul.f32 %v5573, 0.35355338
    %v5653 = vmul.f32 %v5649, 0.35355338
    %v5654 = vsel %vm484, %v5652, -inf
    %5655 = vmax.xlane.f32.xlu0 %v5654
    %v5656 = vpop.xlane.xlu0 %5655
    %v5657 = vsel %vm484, %v5653, -inf
    %5658 = vmax.xlane.f32.xlu0 %v5657
    %v5659 = vpop.xlane.xlu0 %5658
    %v5660 = vsub.f32 %v5652, %v5656
    %v5661 = vsub.f32 %v5653, %v5659
    %v5662 = vmul.f32 %v5660, 1.442695
    %v5663 = vpow.pop %v5662
    %v5664 = vmul.f32 %v5661, 1.442695
    %v5665 = vpow.pop %v5664
    %v5666 = vsel %vm484, %v5663, 0.0
    %5667 = vadd.xlane.f32.xlu0 %v5666
    %v5668 = vpop.xlane.xlu0 %5667
    %v5669 = vsel %vm484, %v5665, 0.0
    %5670 = vadd.xlane.f32.xlu0 %v5669
    %v5671 = vpop.xlane.xlu0 %5670
    %v5672 = vrcp.pop %v5668
    %v5673 = vrcp.pop %v5671
    %v5674 = vmul.f32 %v5663, %v5672
    %v5675 = vmul.f32 %v5665, %v5673
    %v5677 = vsel %vm484, %v5674, 0
    %5679 = vmatprep.subr.mxu0 0.0
    %5680 = vmatpush1.msra.mxu0 0.0
    %5681 = vmatprep.subr.mxu0 0.0
    %5682 = vmatpush1.msra.mxu0 0.0
    %5683 = vmatprep.subr.mxu0 0.0
    %5684 = vmatpush1.msra.mxu0 0.0
    %5685 = vmatprep.subr.mxu0 0.0
    %5686 = vmatpush1.msra.mxu0 0.0
    %5687 = vmatprep.subr.mxu0 0.0
    %5688 = vmatpush1.msra.mxu0 0.0
    %5689 = vmatprep.subr.mxu0 0.0
    %5690 = vmatpush1.msra.mxu0 0.0
    %5691 = vmatprep.subr.mxu0 0.0
    %5692 = vmatpush1.msra.mxu0 0.0
    %5693 = vmatprep.subr.mxu0 0.0
    %5694 = vmatpush1.msra.mxu0 0.0
    %5695 = vmatprep.subr.mxu0 0.0
    %5696 = vmatpush1.msra.mxu0 0.0
    %5697 = vmatprep.subr.mxu0 0.0
    %5698 = vmatpush1.msra.mxu0 0.0
    %5699 = vmatprep.subr.mxu0 0.0
    %5700 = vmatpush1.msra.mxu0 0.0
    %5701 = vmatprep.subr.mxu0 0.0
    %5702 = vmatpush1.msra.mxu0 0.0
    %5703 = vmatprep.subr.mxu0 0.0
    %5704 = vmatpush1.msra.mxu0 0.0
    %5705 = vmatprep.subr.mxu0 0.0
    %5706 = vmatpush1.msra.mxu0 0.0
    %5707 = vmatprep.subr.mxu0 0.0
    %5708 = vmatpush1.msra.mxu0 0.0
    %5709 = vmatprep.subr.mxu0 0.0
    %5710 = vmatpush1.msra.mxu0 %v5492
    %5711 = vmatprep.subr.mxu0 0.0
    %5712 = vmatpush2.msra.mxu0 0.0
    %5713 = vmatprep.subr.mxu0 0.0
    %5714 = vmatpush2.msra.mxu0 0.0
    %5715 = vmatprep.subr.mxu0 0.0
    %5716 = vmatpush2.msra.mxu0 0.0
    %5717 = vmatprep.subr.mxu0 0.0
    %5718 = vmatpush2.msra.mxu0 0.0
    %5719 = vmatprep.subr.mxu0 0.0
    %5720 = vmatpush2.msra.mxu0 0.0
    %5721 = vmatprep.subr.mxu0 0.0
    %5722 = vmatpush2.msra.mxu0 0.0
    %5723 = vmatprep.subr.mxu0 0.0
    %5724 = vmatpush2.msra.mxu0 0.0
    %5725 = vmatprep.subr.mxu0 0.0
    %5726 = vmatpush2.msra.mxu0 0.0
    %5727 = vmatprep.subr.mxu0 0.0
    %5728 = vmatpush2.msra.mxu0 0.0
    %5729 = vmatprep.subr.mxu0 0.0
    %5730 = vmatpush2.msra.mxu0 0.0
    %5731 = vmatprep.subr.mxu0 0.0
    %5732 = vmatpush2.msra.mxu0 0.0
    %5733 = vmatprep.subr.mxu0 0.0
    %5734 = vmatpush2.msra.mxu0 0.0
    %5735 = vmatprep.subr.mxu0 0.0
    %5736 = vmatpush2.msra.mxu0 0.0
    %5737 = vmatprep.subr.mxu0 0.0
    %5738 = vmatpush2.msra.mxu0 0.0
    %5739 = vmatprep.subr.mxu0 0.0
    %5740 = vmatpush2.msra.mxu0 0.0
    %5741 = vmatprep.subr.mxu0 0.0
    %5742 = vmatpush2.msra.mxu0 0.0
    %5743 = vmatprep.mubr.f32.mxu0 0.0
    %5744 = vmatmul.mubr.f32.gmra.mxu0 %v5677
    %v5745 = vpop.f32.mrf.mxu0
    %v5746 = vadd.f32 0.0, %v5745
    %v5747 = vpop.f32.mrf.mxu0
    %5748 = vdwg.mxu0
    %v5750 = vsel %vm484, %v5675, 0
    %5752 = vmatprep.subr.mxu0 0.0
    %5753 = vmatpush1.msra.mxu0 0.0
    %5754 = vmatprep.subr.mxu0 0.0
    %5755 = vmatpush1.msra.mxu0 0.0
    %5756 = vmatprep.subr.mxu0 0.0
    %5757 = vmatpush1.msra.mxu0 0.0
    %5758 = vmatprep.subr.mxu0 0.0
    %5759 = vmatpush1.msra.mxu0 0.0
    %5760 = vmatprep.subr.mxu0 0.0
    %5761 = vmatpush1.msra.mxu0 0.0
    %5762 = vmatprep.subr.mxu0 0.0
    %5763 = vmatpush1.msra.mxu0 0.0
    %5764 = vmatprep.subr.mxu0 0.0
    %5765 = vmatpush1.msra.mxu0 0.0
    %5766 = vmatprep.subr.mxu0 0.0
    %5767 = vmatpush1.msra.mxu0 0.0
    %5768 = vmatprep.subr.mxu0 0.0
    %5769 = vmatpush1.msra.mxu0 0.0
    %5770 = vmatprep.subr.mxu0 0.0
    %5771 = vmatpush1.msra.mxu0 0.0
    %5772 = vmatprep.subr.mxu0 0.0
    %5773 = vmatpush1.msra.mxu0 0.0
    %5774 = vmatprep.subr.mxu0 0.0
    %5775 = vmatpush1.msra.mxu0 0.0
    %5776 = vmatprep.subr.mxu0 0.0
    %5777 = vmatpush1.msra.mxu0 0.0
    %5778 = vmatprep.subr.mxu0 0.0
    %5779 = vmatpush1.msra.mxu0 0.0
    %5780 = vmatprep.subr.mxu0 0.0
    %5781 = vmatpush1.msra.mxu0 0.0
    %5782 = vmatprep.subr.mxu0 0.0
    %5783 = vmatpush1.msra.mxu0 %v5497
    %5784 = vmatprep.subr.mxu0 0.0
    %5785 = vmatpush2.msra.mxu0 0.0
    %5786 = vmatprep.subr.mxu0 0.0
    %5787 = vmatpush2.msra.mxu0 0.0
    %5788 = vmatprep.subr.mxu0 0.0
    %5789 = vmatpush2.msra.mxu0 0.0
    %5790 = vmatprep.subr.mxu0 0.0
    %5791 = vmatpush2.msra.mxu0 0.0
    %5792 = vmatprep.subr.mxu0 0.0
    %5793 = vmatpush2.msra.mxu0 0.0
    %5794 = vmatprep.subr.mxu0 0.0
    %5795 = vmatpush2.msra.mxu0 0.0
    %5796 = vmatprep.subr.mxu0 0.0
    %5797 = vmatpush2.msra.mxu0 0.0
    %5798 = vmatprep.subr.mxu0 0.0
    %5799 = vmatpush2.msra.mxu0 0.0
    %5800 = vmatprep.subr.mxu0 0.0
    %5801 = vmatpush2.msra.mxu0 0.0
    %5802 = vmatprep.subr.mxu0 0.0
    %5803 = vmatpush2.msra.mxu0 0.0
    %5804 = vmatprep.subr.mxu0 0.0
    %5805 = vmatpush2.msra.mxu0 0.0
    %5806 = vmatprep.subr.mxu0 0.0
    %5807 = vmatpush2.msra.mxu0 0.0
    %5808 = vmatprep.subr.mxu0 0.0
    %5809 = vmatpush2.msra.mxu0 0.0
    %5810 = vmatprep.subr.mxu0 0.0
    %5811 = vmatpush2.msra.mxu0 0.0
    %5812 = vmatprep.subr.mxu0 0.0
    %5813 = vmatpush2.msra.mxu0 0.0
    %5814 = vmatprep.subr.mxu0 0.0
    %5815 = vmatpush2.msra.mxu0 0.0
    %5816 = vmatprep.mubr.f32.mxu0 0.0
    %5817 = vmatmul.mubr.f32.gmra.mxu0 %v5750
    %v5818 = vpop.f32.mrf.mxu0
    %v5819 = vadd.f32 0.0, %v5818
    %v5820 = vpop.f32.mrf.mxu0
    %5821 = vdwg.mxu0
    %s5822 = scalar_lea.vmem %s5, 56
    %v5823 = vld [vmem:[%s5822] sm:$0xff]
    %v5825 = vsel %vm484, %v5746, 0
    %v5828 = vsel %vm484, %v5819, 0
    %5830 = vmatprep.subr.mxu0 0.0
    %5831 = vmatpush1.msra.mxu0 0.0
    %5832 = vmatprep.subr.mxu0 0.0
    %5833 = vmatpush1.msra.mxu0 0.0
    %5834 = vmatprep.subr.mxu0 0.0
    %5835 = vmatpush1.msra.mxu0 0.0
    %5836 = vmatprep.subr.mxu0 0.0
    %5837 = vmatpush1.msra.mxu0 0.0
    %5838 = vmatprep.subr.mxu0 0.0
    %5839 = vmatpush1.msra.mxu0 0.0
    %5840 = vmatprep.subr.mxu0 0.0
    %5841 = vmatpush1.msra.mxu0 0.0
    %5842 = vmatprep.subr.mxu0 0.0
    %5843 = vmatpush1.msra.mxu0 0.0
    %5844 = vmatprep.subr.mxu0 0.0
    %5845 = vmatpush1.msra.mxu0 0.0
    %5846 = vmatprep.subr.mxu0 0.0
    %5847 = vmatpush1.msra.mxu0 0.0
    %5848 = vmatprep.subr.mxu0 0.0
    %5849 = vmatpush1.msra.mxu0 0.0
    %5850 = vmatprep.subr.mxu0 0.0
    %5851 = vmatpush1.msra.mxu0 0.0
    %5852 = vmatprep.subr.mxu0 0.0
    %5853 = vmatpush1.msra.mxu0 0.0
    %5854 = vmatprep.subr.mxu0 0.0
    %5855 = vmatpush1.msra.mxu0 0.0
    %5856 = vmatprep.subr.mxu0 0.0
    %5857 = vmatpush1.msra.mxu0 0.0
    %5858 = vmatprep.subr.mxu0 0.0
    %5859 = vmatpush1.msra.mxu0 0.0
    %5860 = vmatprep.subr.mxu0 0.0
    %5861 = vmatpush1.msra.mxu0 %v5823
    %5862 = vmatprep.subr.mxu0 0.0
    %5863 = vmatpush2.msra.mxu0 0.0
    %5864 = vmatprep.subr.mxu0 0.0
    %5865 = vmatpush2.msra.mxu0 0.0
    %5866 = vmatprep.subr.mxu0 0.0
    %5867 = vmatpush2.msra.mxu0 0.0
    %5868 = vmatprep.subr.mxu0 0.0
    %5869 = vmatpush2.msra.mxu0 0.0
    %5870 = vmatprep.subr.mxu0 0.0
    %5871 = vmatpush2.msra.mxu0 0.0
    %5872 = vmatprep.subr.mxu0 0.0
    %5873 = vmatpush2.msra.mxu0 0.0
    %5874 = vmatprep.subr.mxu0 0.0
    %5875 = vmatpush2.msra.mxu0 0.0
    %5876 = vmatprep.subr.mxu0 0.0
    %5877 = vmatpush2.msra.mxu0 0.0
    %5878 = vmatprep.subr.mxu0 0.0
    %5879 = vmatpush2.msra.mxu0 0.0
    %5880 = vmatprep.subr.mxu0 0.0
    %5881 = vmatpush2.msra.mxu0 0.0
    %5882 = vmatprep.subr.mxu0 0.0
    %5883 = vmatpush2.msra.mxu0 0.0
    %5884 = vmatprep.subr.mxu0 0.0
    %5885 = vmatpush2.msra.mxu0 0.0
    %5886 = vmatprep.subr.mxu0 0.0
    %5887 = vmatpush2.msra.mxu0 0.0
    %5888 = vmatprep.subr.mxu0 0.0
    %5889 = vmatpush2.msra.mxu0 0.0
    %5890 = vmatprep.subr.mxu0 0.0
    %5891 = vmatpush2.msra.mxu0 0.0
    %5892 = vmatprep.subr.mxu0 0.0
    %5893 = vmatpush2.msra.mxu0 0.0
    %5894 = vmatprep.mubr.f32.mxu0 0.0
    %5895 = vmatmul.mubr.f32.gmra.mxu0 %v5825
    %v5896 = vpop.f32.mrf.mxu0
    %v5897 = vadd.f32 0.0, %v5896
    %v5898 = vpop.f32.mrf.mxu0
    %5899 = vmatprep.mubr.f32.mxu0 0.0
    %5900 = vmatmul.mubr.f32.gmra.mxu0 %v5828
    %v5901 = vpop.f32.mrf.mxu0
    %v5902 = vadd.f32 0.0, %v5901
    %v5903 = vpop.f32.mrf.mxu0
    %5904 = vdwg.mxu0
    %v5905 = vadd.f32 %v5234, %v5897
    %v5906 = vadd.f32 %v5235, %v5902
    %s5907 = scalar_lea.vmem %s9, 13
    %v5908 = vld [vmem:[%s5907] sm:$0x1]
    %s5909 = scalar_lea.vmem %s9, 14
    %v5910 = vld [vmem:[%s5909] sm:$0x1]
    %v5911 = vsel %vm162, %v5905, 0.0
    %5912 = vadd.xlane.f32.xlu0 %v5911
    %v5913 = vpop.xlane.xlu0 %5912
    %v5914 = vsel %vm162, %v5906, 0.0
    %5915 = vadd.xlane.f32.xlu0 %v5914
    %v5916 = vpop.xlane.xlu0 %5915
    %v5917 = vmul.f32 %v5913, %v169
    %v5918 = vmul.f32 %v5916, %v169
    %v5919 = vsub.f32 %v5905, %v5917
    %v5920 = vsub.f32 %v5906, %v5918
    %v5921 = vmul.f32 %v5919, %v5919
    %v5922 = vmul.f32 %v5920, %v5920
    %v5923 = vsel %vm162, %v5921, 0.0
    %5924 = vadd.xlane.f32.xlu0 %v5923
    %v5925 = vpop.xlane.xlu0 %5924
    %v5926 = vsel %vm162, %v5922, 0.0
    %5927 = vadd.xlane.f32.xlu0 %v5926
    %v5928 = vpop.xlane.xlu0 %5927
    %v5929 = vmul.f32 %v5925, %v169
    %v5930 = vmul.f32 %v5928, %v169
    %v5931 = vadd.f32 %v5929, 1e-12
    %v5932 = vadd.f32 %v5930, 1e-12
    %v5933 = vrsqrt.pop %v5931
    %v5934 = vrsqrt.pop %v5932
    %v5935 = vmul.f32 %v5919, %v5933
    %v5936 = vmul.f32 %v5920, %v5934
    %v5938 = vlaneseq
    %v5939 = vshrl.u32 %v5938, 7
    %v5940 = vsub.s32 0, %v5939
    %v5941 = vrot.slane %v5908, %v5940
    %v5943 = vmul.f32 %v5935, %v5941
    %v5944 = vmul.f32 %v5936, %v5941
    %v5946 = vlaneseq
    %v5947 = vshrl.u32 %v5946, 7
    %v5948 = vsub.s32 0, %v5947
    %v5949 = vrot.slane %v5910, %v5948
    %v5951 = vadd.f32 %v5943, %v5949
    %v5952 = vadd.f32 %v5944, %v5949
    %s5953 = scalar_lea.vmem %s10, 2
    %v5954 = vld [vmem:[%s5953] sm:$0x1]
    %s5955 = scalar_lea.vmem %s6, 32
    %v5956 = vld [vmem:[%s5955] sm:$0xff]
    %v5957 = vld [vmem:[%s5955 + $0x8] sm:$0xff]
    %v5958 = vld [vmem:[%s5955 + $0x10] sm:$0xff]
    %v5959 = vld [vmem:[%s5955 + $0x18] sm:$0xff]
    %v5961 = vlaneseq
    %v5962 = vshrl.u32 %v5961, 7
    %v5963 = vsub.s32 0, %v5962
    %v5964 = vrot.slane %v5954, %v5963
    %v5967 = vsel %vm162, %v5951, 0
    %v5970 = vsel %vm162, %v5952, 0
    %5972 = vmatprep.subr.mxu0 0.0
    %5973 = vmatpush1.msra.mxu0 0.0
    %5974 = vmatprep.subr.mxu0 0.0
    %5975 = vmatpush1.msra.mxu0 0.0
    %5976 = vmatprep.subr.mxu0 0.0
    %5977 = vmatpush1.msra.mxu0 0.0
    %5978 = vmatprep.subr.mxu0 0.0
    %5979 = vmatpush1.msra.mxu0 0.0
    %5980 = vmatprep.subr.mxu0 0.0
    %5981 = vmatpush1.msra.mxu0 0.0
    %5982 = vmatprep.subr.mxu0 0.0
    %5983 = vmatpush1.msra.mxu0 0.0
    %5984 = vmatprep.subr.mxu0 0.0
    %5985 = vmatpush1.msra.mxu0 0.0
    %5986 = vmatprep.subr.mxu0 0.0
    %5987 = vmatpush1.msra.mxu0 0.0
    %5988 = vmatprep.subr.mxu0 0.0
    %5989 = vmatpush1.msra.mxu0 0.0
    %5990 = vmatprep.subr.mxu0 0.0
    %5991 = vmatpush1.msra.mxu0 0.0
    %5992 = vmatprep.subr.mxu0 0.0
    %5993 = vmatpush1.msra.mxu0 0.0
    %5994 = vmatprep.subr.mxu0 0.0
    %5995 = vmatpush1.msra.mxu0 0.0
    %5996 = vmatprep.subr.mxu0 0.0
    %5997 = vmatpush1.msra.mxu0 %v5959
    %5998 = vmatprep.subr.mxu0 0.0
    %5999 = vmatpush1.msra.mxu0 %v5958
    %6000 = vmatprep.subr.mxu0 0.0
    %6001 = vmatpush1.msra.mxu0 %v5957
    %6002 = vmatprep.subr.mxu0 0.0
    %6003 = vmatpush1.msra.mxu0 %v5956
    %6004 = vmatprep.subr.mxu0 0.0
    %6005 = vmatpush2.msra.mxu0 0.0
    %6006 = vmatprep.subr.mxu0 0.0
    %6007 = vmatpush2.msra.mxu0 0.0
    %6008 = vmatprep.subr.mxu0 0.0
    %6009 = vmatpush2.msra.mxu0 0.0
    %6010 = vmatprep.subr.mxu0 0.0
    %6011 = vmatpush2.msra.mxu0 0.0
    %6012 = vmatprep.subr.mxu0 0.0
    %6013 = vmatpush2.msra.mxu0 0.0
    %6014 = vmatprep.subr.mxu0 0.0
    %6015 = vmatpush2.msra.mxu0 0.0
    %6016 = vmatprep.subr.mxu0 0.0
    %6017 = vmatpush2.msra.mxu0 0.0
    %6018 = vmatprep.subr.mxu0 0.0
    %6019 = vmatpush2.msra.mxu0 0.0
    %6020 = vmatprep.subr.mxu0 0.0
    %6021 = vmatpush2.msra.mxu0 0.0
    %6022 = vmatprep.subr.mxu0 0.0
    %6023 = vmatpush2.msra.mxu0 0.0
    %6024 = vmatprep.subr.mxu0 0.0
    %6025 = vmatpush2.msra.mxu0 0.0
    %6026 = vmatprep.subr.mxu0 0.0
    %6027 = vmatpush2.msra.mxu0 0.0
    %6028 = vmatprep.subr.mxu0 0.0
    %6029 = vmatpush2.msra.mxu0 0.0
    %6030 = vmatprep.subr.mxu0 0.0
    %6031 = vmatpush2.msra.mxu0 0.0
    %6032 = vmatprep.subr.mxu0 0.0
    %6033 = vmatpush2.msra.mxu0 0.0
    %6034 = vmatprep.subr.mxu0 0.0
    %6035 = vmatpush2.msra.mxu0 0.0
    %6036 = vmatprep.mubr.f32.mxu0 0.0
    %6037 = vmatmul.mubr.f32.gmra.mxu0 %v5967
    %v6038 = vpop.f32.mrf.mxu0
    %v6039 = vadd.f32 %v5964, %v6038
    %v6040 = vpop.f32.mrf.mxu0
    %6041 = vmatprep.mubr.f32.mxu0 0.0
    %6042 = vmatmul.mubr.f32.gmra.mxu0 %v5970
    %v6043 = vpop.f32.mrf.mxu0
    %v6044 = vadd.f32 %v5964, %v6043
    %v6045 = vpop.f32.mrf.mxu0
    %6046 = vdwg.mxu0
    %v6047 = vmul.f32 %v6039, 0.5
    %v6048 = vmul.f32 %v6044, 0.5
    %v6049 = vmul.f32 %v6039, 0.044715
    %v6050 = vmul.f32 %v6044, 0.044715
    %v6051 = vmul.f32 %v6049, %v6039
    %v6052 = vmul.f32 %v6050, %v6044
    %v6053 = vmul.f32 %v6051, %v6039
    %v6054 = vmul.f32 %v6052, %v6044
    %v6055 = vadd.f32 %v6039, %v6053
    %v6056 = vadd.f32 %v6044, %v6054
    %v6057 = vmul.f32 %v6055, 0.7978846
    %v6058 = vmul.f32 %v6056, 0.7978846
    %v6059 = vtanh.pop %v6057
    %v6060 = vtanh.pop %v6058
    %v6061 = vadd.f32 %v6059, 1.0
    %v6062 = vadd.f32 %v6060, 1.0
    %v6063 = vmul.f32 %v6047, %v6061
    %v6064 = vmul.f32 %v6048, %v6062
    %s6065 = scalar_lea.vmem %s7, 64
    %v6066 = vld [vmem:[%s6065] sm:$0xff]
    %v6067 = vld [vmem:[%s6065 + $0x8] sm:$0xff]
    %v6068 = vld [vmem:[%s6065 + $0x10] sm:$0xff]
    %v6069 = vld [vmem:[%s6065 + $0x18] sm:$0xff]
    %v6070 = vld [vmem:[%s6065 + $0x20] sm:$0xff]
    %v6071 = vld [vmem:[%s6065 + $0x28] sm:$0xff]
    %v6072 = vld [vmem:[%s6065 + $0x30] sm:$0xff]
    %v6073 = vld [vmem:[%s6065 + $0x38] sm:$0xff]
    %s6074 = scalar_lea.vmem %s9, 15
    %v6075 = vld [vmem:[%s6074] sm:$0x1]
    %v6077 = vlaneseq
    %v6078 = vshrl.u32 %v6077, 7
    %v6079 = vsub.s32 0, %v6078
    %v6080 = vrot.slane %v6075, %v6079
    %v6083 = vsel %vm3077, %v6063, 0
    %v6086 = vsel %vm3077, %v6064, 0
    %6088 = vmatprep.subr.mxu0 0.0
    %6089 = vmatpush1.msra.mxu0 0.0
    %6090 = vmatprep.subr.mxu0 0.0
    %6091 = vmatpush1.msra.mxu0 0.0
    %6092 = vmatprep.subr.mxu0 0.0
    %6093 = vmatpush1.msra.mxu0 0.0
    %6094 = vmatprep.subr.mxu0 0.0
    %6095 = vmatpush1.msra.mxu0 0.0
    %6096 = vmatprep.subr.mxu0 0.0
    %6097 = vmatpush1.msra.mxu0 0.0
    %6098 = vmatprep.subr.mxu0 0.0
    %6099 = vmatpush1.msra.mxu0 0.0
    %6100 = vmatprep.subr.mxu0 0.0
    %6101 = vmatpush1.msra.mxu0 0.0
    %6102 = vmatprep.subr.mxu0 0.0
    %6103 = vmatpush1.msra.mxu0 0.0
    %6104 = vmatprep.subr.mxu0 0.0
    %6105 = vmatpush1.msra.mxu0 %v6073
    %6106 = vmatprep.subr.mxu0 0.0
    %6107 = vmatpush1.msra.mxu0 %v6072
    %6108 = vmatprep.subr.mxu0 0.0
    %6109 = vmatpush1.msra.mxu0 %v6071
    %6110 = vmatprep.subr.mxu0 0.0
    %6111 = vmatpush1.msra.mxu0 %v6070
    %6112 = vmatprep.subr.mxu0 0.0
    %6113 = vmatpush1.msra.mxu0 %v6069
    %6114 = vmatprep.subr.mxu0 0.0
    %6115 = vmatpush1.msra.mxu0 %v6068
    %6116 = vmatprep.subr.mxu0 0.0
    %6117 = vmatpush1.msra.mxu0 %v6067
    %6118 = vmatprep.subr.mxu0 0.0
    %6119 = vmatpush1.msra.mxu0 %v6066
    %6120 = vmatprep.subr.mxu0 0.0
    %6121 = vmatpush2.msra.mxu0 0.0
    %6122 = vmatprep.subr.mxu0 0.0
    %6123 = vmatpush2.msra.mxu0 0.0
    %6124 = vmatprep.subr.mxu0 0.0
    %6125 = vmatpush2.msra.mxu0 0.0
    %6126 = vmatprep.subr.mxu0 0.0
    %6127 = vmatpush2.msra.mxu0 0.0
    %6128 = vmatprep.subr.mxu0 0.0
    %6129 = vmatpush2.msra.mxu0 0.0
    %6130 = vmatprep.subr.mxu0 0.0
    %6131 = vmatpush2.msra.mxu0 0.0
    %6132 = vmatprep.subr.mxu0 0.0
    %6133 = vmatpush2.msra.mxu0 0.0
    %6134 = vmatprep.subr.mxu0 0.0
    %6135 = vmatpush2.msra.mxu0 0.0
    %6136 = vmatprep.subr.mxu0 0.0
    %6137 = vmatpush2.msra.mxu0 0.0
    %6138 = vmatprep.subr.mxu0 0.0
    %6139 = vmatpush2.msra.mxu0 0.0
    %6140 = vmatprep.subr.mxu0 0.0
    %6141 = vmatpush2.msra.mxu0 0.0
    %6142 = vmatprep.subr.mxu0 0.0
    %6143 = vmatpush2.msra.mxu0 0.0
    %6144 = vmatprep.subr.mxu0 0.0
    %6145 = vmatpush2.msra.mxu0 0.0
    %6146 = vmatprep.subr.mxu0 0.0
    %6147 = vmatpush2.msra.mxu0 0.0
    %6148 = vmatprep.subr.mxu0 0.0
    %6149 = vmatpush2.msra.mxu0 0.0
    %6150 = vmatprep.subr.mxu0 0.0
    %6151 = vmatpush2.msra.mxu0 0.0
    %6152 = vmatprep.mubr.f32.mxu0 0.0
    %6153 = vmatmul.mubr.f32.gmra.mxu0 %v6083
    %v6154 = vpop.f32.mrf.mxu0
    %v6155 = vadd.f32 %v6080, %v6154
    %v6156 = vpop.f32.mrf.mxu0
    %6157 = vmatprep.mubr.f32.mxu0 0.0
    %6158 = vmatmul.mubr.f32.gmra.mxu0 %v6086
    %v6159 = vpop.f32.mrf.mxu0
    %v6160 = vadd.f32 %v6080, %v6159
    %v6161 = vpop.f32.mrf.mxu0
    %6162 = vdwg.mxu0
    %v6163 = vadd.f32 %v6155, %v5951
    %v6164 = vadd.f32 %v6160, %v5952
    %s6165 = scalar_lea.vmem %s9, 16
    %v6166 = vld [vmem:[%s6165] sm:$0x1]
    %s6167 = scalar_lea.vmem %s9, 17
    %v6168 = vld [vmem:[%s6167] sm:$0x1]
    %v6169 = vsel %vm162, %v6163, 0.0
    %6170 = vadd.xlane.f32.xlu0 %v6169
    %v6171 = vpop.xlane.xlu0 %6170
    %v6172 = vsel %vm162, %v6164, 0.0
    %6173 = vadd.xlane.f32.xlu0 %v6172
    %v6174 = vpop.xlane.xlu0 %6173
    %v6175 = vmul.f32 %v6171, %v169
    %v6176 = vmul.f32 %v6174, %v169
    %v6177 = vsub.f32 %v6163, %v6175
    %v6178 = vsub.f32 %v6164, %v6176
    %v6179 = vmul.f32 %v6177, %v6177
    %v6180 = vmul.f32 %v6178, %v6178
    %v6181 = vsel %vm162, %v6179, 0.0
    %6182 = vadd.xlane.f32.xlu0 %v6181
    %v6183 = vpop.xlane.xlu0 %6182
    %v6184 = vsel %vm162, %v6180, 0.0
    %6185 = vadd.xlane.f32.xlu0 %v6184
    %v6186 = vpop.xlane.xlu0 %6185
    %v6187 = vmul.f32 %v6183, %v169
    %v6188 = vmul.f32 %v6186, %v169
    %v6189 = vadd.f32 %v6187, 1e-12
    %v6190 = vadd.f32 %v6188, 1e-12
    %v6191 = vrsqrt.pop %v6189
    %v6192 = vrsqrt.pop %v6190
    %v6193 = vmul.f32 %v6177, %v6191
    %v6194 = vmul.f32 %v6178, %v6192
    %v6196 = vlaneseq
    %v6197 = vshrl.u32 %v6196, 7
    %v6198 = vsub.s32 0, %v6197
    %v6199 = vrot.slane %v6166, %v6198
    %v6201 = vmul.f32 %v6193, %v6199
    %v6202 = vmul.f32 %v6194, %v6199
    %v6204 = vlaneseq
    %v6205 = vshrl.u32 %v6204, 7
    %v6206 = vsub.s32 0, %v6205
    %v6207 = vrot.slane %v6168, %v6206
    %v6209 = vadd.f32 %v6201, %v6207
    %v6210 = vadd.f32 %v6202, %v6207
    %v6211 = vld [vmem:[%s8] sm:$0xff]
    %v6212 = vld [vmem:[%s8 + $0x8] sm:$0xff]
    %v6213 = vld [vmem:[%s8 + $0x10] sm:$0xff]
    %v6214 = vld [vmem:[%s8 + $0x18] sm:$0xff]
    %s6215 = scalar_lea.vmem %s9, 3
    %v6216 = vld [vmem:[%s6215] sm:$0x1]
    %v6218 = vlaneseq
    %v6219 = vshrl.u32 %v6218, 7
    %v6220 = vsub.s32 0, %v6219
    %v6221 = vrot.slane %v6216, %v6220
    %v6224 = vsel %vm162, %v6209, 0
    %v6227 = vsel %vm162, %v6210, 0
    %6229 = vmatprep.subr.mxu0 0.0
    %6230 = vmatpush1.msra.mxu0 0.0
    %6231 = vmatprep.subr.mxu0 0.0
    %6232 = vmatpush1.msra.mxu0 0.0
    %6233 = vmatprep.subr.mxu0 0.0
    %6234 = vmatpush1.msra.mxu0 0.0
    %6235 = vmatprep.subr.mxu0 0.0
    %6236 = vmatpush1.msra.mxu0 0.0
    %6237 = vmatprep.subr.mxu0 0.0
    %6238 = vmatpush1.msra.mxu0 0.0
    %6239 = vmatprep.subr.mxu0 0.0
    %6240 = vmatpush1.msra.mxu0 0.0
    %6241 = vmatprep.subr.mxu0 0.0
    %6242 = vmatpush1.msra.mxu0 0.0
    %6243 = vmatprep.subr.mxu0 0.0
    %6244 = vmatpush1.msra.mxu0 0.0
    %6245 = vmatprep.subr.mxu0 0.0
    %6246 = vmatpush1.msra.mxu0 0.0
    %6247 = vmatprep.subr.mxu0 0.0
    %6248 = vmatpush1.msra.mxu0 0.0
    %6249 = vmatprep.subr.mxu0 0.0
    %6250 = vmatpush1.msra.mxu0 0.0
    %6251 = vmatprep.subr.mxu0 0.0
    %6252 = vmatpush1.msra.mxu0 0.0
    %6253 = vmatprep.subr.mxu0 0.0
    %6254 = vmatpush1.msra.mxu0 %v6214
    %6255 = vmatprep.subr.mxu0 0.0
    %6256 = vmatpush1.msra.mxu0 %v6213
    %6257 = vmatprep.subr.mxu0 0.0
    %6258 = vmatpush1.msra.mxu0 %v6212
    %6259 = vmatprep.subr.mxu0 0.0
    %6260 = vmatpush1.msra.mxu0 %v6211
    %6261 = vmatprep.subr.mxu0 0.0
    %6262 = vmatpush2.msra.mxu0 0.0
    %6263 = vmatprep.subr.mxu0 0.0
    %6264 = vmatpush2.msra.mxu0 0.0
    %6265 = vmatprep.subr.mxu0 0.0
    %6266 = vmatpush2.msra.mxu0 0.0
    %6267 = vmatprep.subr.mxu0 0.0
    %6268 = vmatpush2.msra.mxu0 0.0
    %6269 = vmatprep.subr.mxu0 0.0
    %6270 = vmatpush2.msra.mxu0 0.0
    %6271 = vmatprep.subr.mxu0 0.0
    %6272 = vmatpush2.msra.mxu0 0.0
    %6273 = vmatprep.subr.mxu0 0.0
    %6274 = vmatpush2.msra.mxu0 0.0
    %6275 = vmatprep.subr.mxu0 0.0
    %6276 = vmatpush2.msra.mxu0 0.0
    %6277 = vmatprep.subr.mxu0 0.0
    %6278 = vmatpush2.msra.mxu0 0.0
    %6279 = vmatprep.subr.mxu0 0.0
    %6280 = vmatpush2.msra.mxu0 0.0
    %6281 = vmatprep.subr.mxu0 0.0
    %6282 = vmatpush2.msra.mxu0 0.0
    %6283 = vmatprep.subr.mxu0 0.0
    %6284 = vmatpush2.msra.mxu0 0.0
    %6285 = vmatprep.subr.mxu0 0.0
    %6286 = vmatpush2.msra.mxu0 0.0
    %6287 = vmatprep.subr.mxu0 0.0
    %6288 = vmatpush2.msra.mxu0 0.0
    %6289 = vmatprep.subr.mxu0 0.0
    %6290 = vmatpush2.msra.mxu0 0.0
    %6291 = vmatprep.subr.mxu0 0.0
    %6292 = vmatpush2.msra.mxu0 0.0
    %6293 = vmatprep.mubr.f32.mxu0 0.0
    %6294 = vmatmul.mubr.f32.gmra.mxu0 %v6224
    %v6295 = vpop.f32.mrf.mxu0
    %v6296 = vadd.f32 %v6221, %v6295
    %v6297 = vpop.f32.mrf.mxu0
    %6298 = vmatprep.mubr.f32.mxu0 0.0
    %6299 = vmatmul.mubr.f32.gmra.mxu0 %v6227
    %v6300 = vpop.f32.mrf.mxu0
    %v6301 = vadd.f32 %v6221, %v6300
    %v6302 = vpop.f32.mrf.mxu0
    %6303 = vdwg.mxu0
    %v6304 = vmul.f32 %v6296, 0.5
    %v6305 = vmul.f32 %v6301, 0.5
    %v6306 = vmul.f32 %v6296, 0.044715
    %v6307 = vmul.f32 %v6301, 0.044715
    %v6308 = vmul.f32 %v6306, %v6296
    %v6309 = vmul.f32 %v6307, %v6301
    %v6310 = vmul.f32 %v6308, %v6296
    %v6311 = vmul.f32 %v6309, %v6301
    %v6312 = vadd.f32 %v6296, %v6310
    %v6313 = vadd.f32 %v6301, %v6311
    %v6314 = vmul.f32 %v6312, 0.7978846
    %v6315 = vmul.f32 %v6313, 0.7978846
    %v6316 = vtanh.pop %v6314
    %v6317 = vtanh.pop %v6315
    %v6318 = vadd.f32 %v6316, 1.0
    %v6319 = vadd.f32 %v6317, 1.0
    %v6320 = vmul.f32 %v6304, %v6318
    %v6321 = vmul.f32 %v6305, %v6319
    %s6322 = scalar_lea.vmem %s9, 4
    %v6323 = vld [vmem:[%s6322] sm:$0x1]
    %s6324 = scalar_lea.vmem %s9, 5
    %v6325 = vld [vmem:[%s6324] sm:$0x1]
    %v6326 = vsel %vm162, %v6320, 0.0
    %6327 = vadd.xlane.f32.xlu0 %v6326
    %v6328 = vpop.xlane.xlu0 %6327
    %v6329 = vsel %vm162, %v6321, 0.0
    %6330 = vadd.xlane.f32.xlu0 %v6329
    %v6331 = vpop.xlane.xlu0 %6330
    %v6332 = vmul.f32 %v6328, %v169
    %v6333 = vmul.f32 %v6331, %v169
    %v6334 = vsub.f32 %v6320, %v6332
    %v6335 = vsub.f32 %v6321, %v6333
    %v6336 = vmul.f32 %v6334, %v6334
    %v6337 = vmul.f32 %v6335, %v6335
    %v6338 = vsel %vm162, %v6336, 0.0
    %6339 = vadd.xlane.f32.xlu0 %v6338
    %v6340 = vpop.xlane.xlu0 %6339
    %v6341 = vsel %vm162, %v6337, 0.0
    %6342 = vadd.xlane.f32.xlu0 %v6341
    %v6343 = vpop.xlane.xlu0 %6342
    %v6344 = vmul.f32 %v6340, %v169
    %v6345 = vmul.f32 %v6343, %v169
    %v6346 = vadd.f32 %v6344, 1e-12
    %v6347 = vadd.f32 %v6345, 1e-12
    %v6348 = vrsqrt.pop %v6346
    %v6349 = vrsqrt.pop %v6347
    %v6350 = vmul.f32 %v6334, %v6348
    %v6351 = vmul.f32 %v6335, %v6349
    %v6353 = vlaneseq
    %v6354 = vshrl.u32 %v6353, 7
    %v6355 = vsub.s32 0, %v6354
    %v6356 = vrot.slane %v6323, %v6355
    %v6358 = vmul.f32 %v6350, %v6356
    %v6359 = vmul.f32 %v6351, %v6356
    %v6361 = vlaneseq
    %v6362 = vshrl.u32 %v6361, 7
    %v6363 = vsub.s32 0, %v6362
    %v6364 = vrot.slane %v6325, %v6363
    %v6366 = vadd.f32 %v6358, %v6364
    %v6367 = vadd.f32 %v6359, %v6364
    %v6368 = vld [vmem:[%s10] sm:$0x1]
    %v6370 = vlaneseq
    %v6371 = vshrl.u32 %v6370, 7
    %v6372 = vsub.s32 0, %v6371
    %v6373 = vrot.slane %v6368, %v6372
    %v6376 = vsel %vm162, %v6366, 0
    %v6379 = vsel %vm162, %v6367, 0
    %v6382 = vsel %vm162, %v39, 0
    %v6385 = vsel %vm162, %v40, 0
    %v6388 = vsel %vm162, %v41, 0
    %v6391 = vsel %vm162, %v42, 0
    %v6394 = vsel %vm162, %v43, 0
    %v6397 = vsel %vm162, %v44, 0
    %v6400 = vsel %vm162, %v45, 0
    %v6403 = vsel %vm162, %v46, 0
    %v6406 = vsel %vm162, %v47, 0
    %v6409 = vsel %vm162, %v48, 0
    %v6412 = vsel %vm162, %v49, 0
    %v6415 = vsel %vm162, %v50, 0
    %v6418 = vsel %vm162, %v51, 0
    %v6421 = vsel %vm162, %v52, 0
    %v6424 = vsel %vm162, %v53, 0
    %v6427 = vsel %vm162, %v54, 0
    %6429 = vmatprep.subr.mxu0 0.0
    %6430 = vmatpush1.xpose.msra.mxu0 %v6427
    %6431 = vmatprep.subr.mxu0 0.0
    %6432 = vmatpush1.xpose.msra.mxu0 %v6424
    %6433 = vmatprep.subr.mxu0 0.0
    %6434 = vmatpush1.xpose.msra.mxu0 %v6421
    %6435 = vmatprep.subr.mxu0 0.0
    %6436 = vmatpush1.xpose.msra.mxu0 %v6418
    %6437 = vmatprep.subr.mxu0 0.0
    %6438 = vmatpush1.xpose.msra.mxu0 %v6415
    %6439 = vmatprep.subr.mxu0 0.0
    %6440 = vmatpush1.xpose.msra.mxu0 %v6412
    %6441 = vmatprep.subr.mxu0 0.0
    %6442 = vmatpush1.xpose.msra.mxu0 %v6409
    %6443 = vmatprep.subr.mxu0 0.0
    %6444 = vmatpush1.xpose.msra.mxu0 %v6406
    %6445 = vmatprep.subr.mxu0 0.0
    %6446 = vmatpush1.xpose.msra.mxu0 %v6403
    %6447 = vmatprep.subr.mxu0 0.0
    %6448 = vmatpush1.xpose.msra.mxu0 %v6400
    %6449 = vmatprep.subr.mxu0 0.0
    %6450 = vmatpush1.xpose.msra.mxu0 %v6397
    %6451 = vmatprep.subr.mxu0 0.0
    %6452 = vmatpush1.xpose.msra.mxu0 %v6394
    %6453 = vmatprep.subr.mxu0 0.0
    %6454 = vmatpush1.xpose.msra.mxu0 %v6391
    %6455 = vmatprep.subr.mxu0 0.0
    %6456 = vmatpush1.xpose.msra.mxu0 %v6388
    %6457 = vmatprep.subr.mxu0 0.0
    %6458 = vmatpush1.xpose.msra.mxu0 %v6385
    %6459 = vmatprep.subr.mxu0 0.0
    %6460 = vmatpush1.xpose.msra.mxu0 %v6382
    %6461 = vmatprep.subr.mxu0 0.0
    %6462 = vmatpush2.xpose.msra.mxu0 0.0
    %6463 = vmatprep.subr.mxu0 0.0
    %6464 = vmatpush2.xpose.msra.mxu0 0.0
    %6465 = vmatprep.subr.mxu0 0.0
    %6466 = vmatpush2.xpose.msra.mxu0 0.0
    %6467 = vmatprep.subr.mxu0 0.0
    %6468 = vmatpush2.xpose.msra.mxu0 0.0
    %6469 = vmatprep.subr.mxu0 0.0
    %6470 = vmatpush2.xpose.msra.mxu0 0.0
    %6471 = vmatprep.subr.mxu0 0.0
    %6472 = vmatpush2.xpose.msra.mxu0 0.0
    %6473 = vmatprep.subr.mxu0 0.0
    %6474 = vmatpush2.xpose.msra.mxu0 0.0
    %6475 = vmatprep.subr.mxu0 0.0
    %6476 = vmatpush2.xpose.msra.mxu0 0.0
    %6477 = vmatprep.subr.mxu0 0.0
    %6478 = vmatpush2.xpose.msra.mxu0 0.0
    %6479 = vmatprep.subr.mxu0 0.0
    %6480 = vmatpush2.xpose.msra.mxu0 0.0
    %6481 = vmatprep.subr.mxu0 0.0
    %6482 = vmatpush2.xpose.msra.mxu0 0.0
    %6483 = vmatprep.subr.mxu0 0.0
    %6484 = vmatpush2.xpose.msra.mxu0 0.0
    %6485 = vmatprep.subr.mxu0 0.0
    %6486 = vmatpush2.xpose.msra.mxu0 0.0
    %6487 = vmatprep.subr.mxu0 0.0
    %6488 = vmatpush2.xpose.msra.mxu0 0.0
    %6489 = vmatprep.subr.mxu0 0.0
    %6490 = vmatpush2.xpose.msra.mxu0 0.0
    %6491 = vmatprep.subr.mxu0 0.0
    %6492 = vmatpush2.xpose.msra.mxu0 0.0
    %6493 = vmatprep.mubr.f32.mxu0 0.0
    %6494 = vmatmul.mubr.f32.gmra.mxu0 %v6376
    %v6495 = vpop.f32.mrf.mxu0
    %v6496 = vadd.f32 %v6373, %v6495
    %v6497 = vpop.f32.mrf.mxu0
    %6498 = vmatprep.mubr.f32.mxu0 0.0
    %6499 = vmatmul.mubr.f32.gmra.mxu0 %v6379
    %v6500 = vpop.f32.mrf.mxu0
    %v6501 = vadd.f32 %v6373, %v6500
    %v6502 = vpop.f32.mrf.mxu0
    %6503 = vdwg.mxu0
    %v6504 = vld [vmem:[%s1] sm:$0xff]
    %v6505 = vld [vmem:[%s1 + $0x8] sm:$0xff]
    %6506 = vmax.xlane.f32.xlu0 %v6496
    %v6507 = vpop.xlane.xlu0 %6506
    %6508 = vmax.xlane.f32.xlu0 %v6501
    %v6509 = vpop.xlane.xlu0 %6508
    %v6510 = vsub.f32 %v6496, %v6507
    %v6511 = vsub.f32 %v6501, %v6509
    %v6512 = vmul.f32 %v6510, 1.442695
    %v6513 = vpow.pop %v6512
    %v6514 = vmul.f32 %v6511, 1.442695
    %v6515 = vpow.pop %v6514
    %6516 = vadd.xlane.f32.xlu0 %v6513
    %v6517 = vpop.xlane.xlu0 %6516
    %6518 = vadd.xlane.f32.xlu0 %v6515
    %v6519 = vpop.xlane.xlu0 %6518
    %v6520 = vlog2.pop %v6517
    %v6521 = vmul.f32 %v6520, 0.6931472
    %v6522 = vlog2.pop %v6519
    %v6523 = vmul.f32 %v6522, 0.6931472
    %v6524 = vadd.f32 %v6521, %v6507
    %v6525 = vadd.f32 %v6523, %v6509
    %6526 = vset.pattern.permute.xlu0 0
    %6527 = vperm.xlu0 %6526, %v6504
    %v6528 = vpop.permute.xlu0 %6527
    %6529 = vset.pattern.permute.xlu0 0
    %6530 = vperm.xlu0 %6529, %v6505
    %v6531 = vpop.permute.xlu0 %6530
    %vm6532 = vcmp.eq.s32.totalorder %v59, %v6528
    %vm6533 = vcmp.eq.s32.totalorder %v59, %v6531
    %v6534 = vsel %vm6532, %v6496, 0.0
    %v6535 = vsel %vm6533, %v6501, 0.0
    %6536 = vadd.xlane.f32.xlu0 %v6534
    %v6537 = vpop.xlane.xlu0 %6536
    %6538 = vadd.xlane.f32.xlu0 %v6535
    %v6539 = vpop.xlane.xlu0 %6538
    %vm6540 = vcmp.ge.s32.totalorder %v6504, 0
    %vm6541 = vcmp.ge.s32.totalorder %v6505, 0
    %v6542 = vsub.f32 %v6524, %v6537
    %v6543 = vsub.f32 %v6525, %v6539
    %v6544 = vsel %vm6540, %v6542, 0.0
    %v6545 = vsel %vm6541, %v6543, 0.0
    %vm6546 = vcmask 7168
    %v6547 = vsel %vm6546, %v6544, 0.0
    %v6548 = vsel %vm6546, %v6545, 0.0
    %v6549 = vadd.f32 %v6547, %v6548
    %v6550 = vrot.slane %v6549, 4
    %v6551 = vadd.f32 %v6549, %v6550
    %v6552 = vrot.slane %v6551, 2
    %v6553 = vadd.f32 %v6551, %v6552
    %v6554 = vrot.slane %v6553, 1
    %v6555 = vadd.f32 %v6553, %v6554
    %v6556 = vmul.f32 %v6555, 0.0625
    %vm6557 = vcmask 0
    %6558 = vst.msk [vmem:[#allocation2] sm:$0x1] %vm6557, %v6556
    // Predicated region
    $region46: #{pretrained_bert_forward.1} parent=1 // pred_check
      _
    $region47: #{pretrained_bert_forward.1} parent=1 // pred_check_branch
      %6560 = sbr.rel (0) target = $region49
    $region48: #{pretrained_bert_forward.1} parent=1 // pred_region
      %s6562 = ssub.s32 16, 16
      %6563 = vsyncadd [#allocation3], %s6562
      %s6565 = sshll.u32 [#allocation2], 4
      %s6566 = int_to_ptr.vmem [resolvable:$true] %s6565
      %6568 = dma.vmem_to_hbm [thread:$0]  %s6566, 16, %s11, [#allocation3]
    $region49: #{pretrained_bert_forward.1} parent=1 // pred_fallthru
      _
    // Predicated region
    $region50: #{pretrained_bert_forward.1} parent=1 // pred_check
      _
    $region51: #{pretrained_bert_forward.1} parent=1 // pred_check_branch
      %6570 = sbr.rel (0) target = $region53
    $region52: #{pretrained_bert_forward.1} parent=1 // pred_region
      %6571 = dma.done [#allocation3], 16
    $region53: #{pretrained_bert_forward.1} parent=1 // pred_fallthru
      _
    %6572 = vsyncpa [#allocation3], 1

</llo_original>
